<compile_context>
chip_gen: v6e
topology: v6e:2x2x1
jax: 0.10.0
libtpu: 0.0.40
codegen_flags: <defaults>
</compile_context>

<pallas_src>
import jax
import jax.numpy as jnp
import numpy as np
from jax.experimental import pallas as pl
from jax.experimental.pallas import tpu as pltpu

EPS = 1e-5
LANE = 128


# ------------------------------ small helpers ------------------------------

def _round_up(x, m):
    return (x + m - 1) // m * m


def _fold_bn(bn):
    scale = bn['gamma'] * jax.lax.rsqrt(bn['var'] + EPS)
    bias = bn['beta'] - bn['mean'] * scale
    return scale, bias


def _weight_to_mat(w_pt, cpi, cpo):
    # (Cout, Cin, 3, 3) -> (3, 3, Cin, Cout) -> zero-pad channels ->
    # (9*Cpi, Cpo) bf16.  K is ordered (tap, cin) to match the im2col buffer.
    cout, cin = w_pt.shape[0], w_pt.shape[1]
    w = jnp.transpose(w_pt, (2, 3, 1, 0))
    w = jnp.pad(w, ((0, 0), (0, 0), (0, cpi - cin), (0, cpo - cout)))
    return w.reshape(9 * cpi, cpo).astype(jnp.bfloat16)


def _vmem_capacity_bytes():
    try:
        return int(pltpu.get_tpu_info().vmem_capacity_bytes)
    except Exception:
        return 64 * 1024 * 1024      # conservative (v7x-sized) fallback


# ------------------------------ Pallas kernel -------------------------------

def _make_block_kernel(*, bb, s, ho, wo, cpi, cpo, off, has_shortcut):
    """Fused pre-activation block kernel for one batch block of `bb` images."""
    m = bb * ho * wo

    def zero_halo(buf, o):
        # Zero ONLY the halo ring of a padded (bb, P, Hp, Wp, C) stage; the
        # interior is fully rewritten each grid step, so no full memset.
        shp = buf.shape
        hdim, wdim = len(shp) - 3, len(shp) - 2

        def strip(dim, lo):
            idx = [slice(None)] * len(shp)
            idx[dim] = slice(lo, lo + 1)
            zshape = list(shp)
            zshape[dim] = 1
            buf[tuple(idx)] = jnp.zeros(zshape, buf.dtype)

        if o == 1:                       # stride-1 style: full ring
            strip(hdim, 0)
            strip(wdim, 0)
        strip(hdim, shp[hdim] - 1)       # bottom / right pad (both strides)
        strip(wdim, shp[wdim] - 1)

    def kernel(*refs):
        if has_shortcut:
            (x_ref, w1_ref, w2_ref, wsc_ref, s0_ref, b0_ref, s1_ref, b1_ref,
             o_ref, a0p, a1p, col_i, col_o, xsp) = refs
        else:
            (x_ref, w1_ref, w2_ref, s0_ref, b0_ref, s1_ref, b1_ref,
             o_ref, a0p, a1p, col_i, col_o) = refs
            wsc_ref = None
            xsp = None

        zero_halo(a0p, off)
        zero_halo(a1p, 1)
        if has_shortcut:
            zero_halo(xsp, off)

        # ---- BN0 + ReLU0 prologue (f32 math on bf16-loaded x) ---------------
        s0 = s0_ref[...].reshape(1, 1, 1, cpi)
        b0 = b0_ref[...].reshape(1, 1, 1, cpi)
        for p in range(s * s):
            xv = x_ref[:, p, :, :, :]                         # (bb,ho,wo,cpi) bf16
            a0 = jnp.maximum(xv.astype(jnp.float32) * s0 + b0, 0.0)
            a0p[:, p, off:off + ho, off:off + wo, :] = a0.astype(jnp.bfloat16)
            if has_shortcut:
                xsp[:, p, off:off + ho, off:off + wo, :] = xv

        def im2col(src, col_ref, c, cs):
            # Write the 9 shifted (M, C) windows side by side -> (M, 9*C),
            # so each 3x3 conv is a single K-fused MXU matmul.
            for kh in range(3):
                for kw in range(3):
                    p = (kh % cs) * cs + (kw % cs)
                    win = src[:, p,
                              kh // cs: kh // cs + ho,
                              kw // cs: kw // cs + wo, :]
                    t = kh * 3 + kw
                    col_ref[:, t * c:(t + 1) * c] = win.reshape(m, c)

        # ---- conv1 (stride s): one matmul, K = 9*cpi -------------------------
        im2col(a0p, col_i, cpi, s)
        h1 = jnp.dot(col_i[...], w1_ref[...],
                     preferred_element_type=jnp.float32)

        # ---- BN1 + ReLU1 (f32 epilogue), staged zero-padded for conv2 --------
        a1 = jnp.maximum(h1 * s1_ref[...] + b1_ref[...], 0.0)
        a1p[:, 0, 1:1 + ho, 1:1 + wo, :] = (
            a1.astype(jnp.bfloat16).reshape(bb, ho, wo, cpo))

        # ---- conv2 (stride 1): one matmul, K = 9*cpo -------------------------
        im2col(a1p, col_o, cpo, 1)
        out = jnp.dot(col_o[...], w2_ref[...],
                      preferred_element_type=jnp.float32)

        # ---- shortcut: 3x3 conv (one matmul) or identity, added value-level --
        if has_shortcut:
            im2col(xsp, col_i, cpi, s)
            out = out + jnp.dot(col_i[...], wsc_ref[...],
                                preferred_element_type=jnp.float32)
        else:
            out = out + x_ref[:, 0, :, :, :].reshape(m, cpi).astype(jnp.float32)

        # Lane-dense (cpo = multiple of 128) bf16 output store.
        o_ref[...] = out.reshape(bb, ho, wo, cpo).astype(o_ref.dtype)

    return kernel


# ------------------------------ Pallas wrapper ------------------------------

def preact_block_forward(x_nchw, params, stride):
    if stride not in (1, 2):
        raise ValueError('Unsupported `stride`.')
    s = stride
    n, cin, h, w = x_nchw.shape
    cout = params['w1'].shape[0]
    if h % s or w % s:
        raise ValueError('H and W must be divisible by the stride.')
    ho, wo = h // s, w // s
    has_shortcut = (s != 1) or (cin != cout)

    cpi = _round_up(cin, LANE)
    cpo = _round_up(cout, LANE)

    # Padded (halo) scratch spatial extents for the stride-s convs.
    if s == 1:
        hp, wp, off = h + 2, w + 2, 1
    else:
        hp, wp, off = ho + 1, wo + 1, 0

    # ---- hardware-aware block sizing (v7x: 64 MiB VMEM, v5e/v6e: 128 MiB) ----
    vmem_cap = _vmem_capacity_bytes()
    vmem_limit = min(vmem_cap * 3 // 4, 100 * 1024 * 1024)
    rows_target = 512 if vmem_cap <= 64 * 1024 * 1024 else 1024

    def est_vmem(bb):
        mm = bb * ho * wo
        x_blk = bb * s * s * ho * wo * cpi * 2
        o_blk = bb * ho * wo * cpo * 2
        a0p_b = bb * s * s * hp * wp * cpi * 2
        a1p_b = bb * (ho + 2) * (wo + 2) * cpo * 2
        cols = mm * 9 * (cpi + cpo) * 2
        temps = 3 * mm * cpo * 4
        w_b = 9 * (cpi * cpo + cpo * cpo
                   + (cpi * cpo if has_shortcut else 0)) * 2
        return (2 * (x_blk + o_blk) + a0p_b * (2 if has_shortcut else 1)
                + a1p_b + cols + temps + 2 * w_b)

    bb = max(1, min(n, rows_target // (ho * wo)))
    if n >= 2:
        bb = min(bb, (n + 1) // 2)   # >= 2 grid steps: keep both v7x TCs busy
    while bb > 1 and est_vmem(bb) > vmem_limit:
        bb -= 1
    n_pad = _round_up(n, bb)         # batch zero-padding instead of `bb | n`

    # ---- single relayout pass: NCHW f32 -> phase-split lane-padded NHWC bf16.
    # xph[n, ph*s+pw, i, j, c] == x[n, c, s*i+ph, s*j+pw]; keeps every in-kernel
    # window slice contiguous (no strided loads).
    x = x_nchw.astype(jnp.bfloat16)
    if n_pad != n:
        x = jnp.pad(x, ((0, n_pad - n), (0, 0), (0, 0), (0, 0)))
    xph = x.reshape(n_pad, cin, ho, s, wo, s)
    xph = jnp.transpose(xph, (0, 3, 5, 2, 4, 1))       # (n, ph, pw, ho, wo, c)
    xph = xph.reshape(n_pad, s * s, ho, wo, cin)
    xph = jnp.pad(xph, ((0, 0), (0, 0), (0, 0), (0, 0), (0, cpi - cin)))

    # Folded inference-mode BN affines, zero-padded to lane-padded channels.
    s0, b0 = _fold_bn(params['bn0'])
    s1, b1 = _fold_bn(params['bn1'])
    s0 = jnp.pad(s0, (0, cpi - cin)).reshape(1, cpi)
    b0 = jnp.pad(b0, (0, cpi - cin)).reshape(1, cpi)
    s1 = jnp.pad(s1, (0, cpo - cout)).reshape(1, cpo)
    b1 = jnp.pad(b1, (0, cpo - cout)).reshape(1, cpo)

    w1m = _weight_to_mat(params['w1'], cpi, cpo)
    w2m = _weight_to_mat(params['w2'], cpo, cpo)

    kernel = _make_block_kernel(bb=bb, s=s, ho=ho, wo=wo, cpi=cpi, cpo=cpo,
                                off=off, has_shortcut=has_shortcut)

    inputs = [xph, w1m, w2m]
    # NOTE: weight/BN index_maps are grid-constant, so their blocks are DMA'd
    # once and re-used across steps; single-buffering them (pl.Buffered(1))
    # would additionally halve their VMEM footprint on wide v7x layers.
    in_specs = [
        pl.BlockSpec((bb, s * s, ho, wo, cpi), lambda b: (b, 0, 0, 0, 0)),
        pl.BlockSpec((9 * cpi, cpo), lambda b: (0, 0)),
        pl.BlockSpec((9 * cpo, cpo), lambda b: (0, 0)),
    ]
    if has_shortcut:
        inputs.append(_weight_to_mat(params['w_sc'], cpi, cpo))
        in_specs.append(pl.BlockSpec((9 * cpi, cpo), lambda b: (0, 0)))
    inputs += [s0, b0, s1, b1]
    in_specs += [
        pl.BlockSpec((1, cpi), lambda b: (0, 0)),
        pl.BlockSpec((1, cpi), lambda b: (0, 0)),
        pl.BlockSpec((1, cpo), lambda b: (0, 0)),
        pl.BlockSpec((1, cpo), lambda b: (0, 0)),
    ]

    m = bb * ho * wo
    scratch_shapes = [
        pltpu.VMEM((bb, s * s, hp, wp, cpi), jnp.bfloat16),      # BN0/ReLU0(x), halo-padded
        pltpu.VMEM((bb, 1, ho + 2, wo + 2, cpo), jnp.bfloat16),  # BN1/ReLU1(conv1), halo-padded
        pltpu.VMEM((m, 9 * cpi), jnp.bfloat16),                  # K-fused im2col (conv1 / shortcut)
        pltpu.VMEM((m, 9 * cpo), jnp.bfloat16),                  # K-fused im2col (conv2)
    ]
    if has_shortcut:
        scratch_shapes.append(
            pltpu.VMEM((bb, s * s, hp, wp, cpi), jnp.bfloat16))  # raw x, halo-padded

    out = pl.pallas_call(
        kernel,
        out_shape=jax.ShapeDtypeStruct((n_pad, ho, wo, cpo), jnp.bfloat16),
        grid=(n_pad // bb,),
        in_specs=in_specs,
        out_specs=pl.BlockSpec((bb, ho, wo, cpo), lambda b: (b, 0, 0, 0)),
        scratch_shapes=scratch_shapes,
        compiler_params=pltpu.CompilerParams(
            dimension_semantics=("parallel",),
            vmem_limit_bytes=int(vmem_limit)),
    )(*inputs)

    # Inverse relayout (one pass).  In a full network the kernel-native
    # lane-padded NHWC bf16 output would be consumed directly by the next block.
    out = out[:n, :, :, :cout]
    return jnp.transpose(out, (0, 3, 1, 2)).astype(jnp.float32)


# ---------------------------- pure-JAX reference ----------------------------

def _pad_for_stride(x_nhwc, stride):
    if stride == 1:
        return jnp.pad(x_nhwc, ((0, 0), (1, 1), (1, 1), (0, 0)))
    if stride == 2:
        return jnp.pad(x_nhwc, ((0, 0), (0, 1), (0, 1), (0, 0)))
    raise ValueError('Unsupported `stride`.')


def _conv3x3_ref(x_nhwc, w_pt, stride, conv_dtype):
    w = jnp.transpose(w_pt, (2, 3, 1, 0)).astype(conv_dtype)       # HWIO
    return jax.lax.conv_general_dilated(
        x_nhwc.astype(conv_dtype), w, window_strides=(stride, stride),
        padding=[(0, 0), (0, 0)],
        dimension_numbers=('NHWC', 'HWIO', 'NHWC'),
        preferred_element_type=jnp.float32)


def ref_forward(x_nchw, params, stride, conv_dtype=jnp.float32,
                quantize_input=False):
    x = jnp.transpose(x_nchw, (0, 2, 3, 1)).astype(jnp.float32)
    if quantize_input:        # match the kernel's bf16 HBM boundary
        x = x.astype(jnp.bfloat16).astype(jnp.float32)
    cin = x.shape[-1]
    cout = params['w1'].shape[0]
    has_shortcut = (stride != 1) or (cin != cout)

    s0, b0 = _fold_bn(params['bn0'])
    s1, b1 = _fold_bn(params['bn1'])

    a0 = jax.nn.relu(x * s0 + b0)
    if has_shortcut:
        shortcut = _conv3x3_ref(_pad_for_stride(x, stride), params['w_sc'],
                                stride, conv_dtype)
    else:
        shortcut = x
    o1 = _conv3x3_ref(_pad_for_stride(a0, stride), params['w1'], stride,
                      conv_dtype)
    a1 = jax.nn.relu(o1 * s1 + b1)
    o2 = _conv3x3_ref(jnp.pad(a1, ((0, 0), (1, 1), (1, 1), (0, 0))),
                      params['w2'], 1, conv_dtype)
    return jnp.transpose(o2 + shortcut, (0, 3, 1, 2))


# ----------------------------------- main -----------------------------------

def _bn_params(keys, c):
    k1, k2, k3, k4 = keys
    return dict(
        gamma=1.0 + 0.1 * jax.random.normal(k1, (c,), jnp.float32),
        beta=0.1 * jax.random.normal(k2, (c,), jnp.float32),
        mean=0.1 * jax.random.normal(k3, (c,), jnp.float32),
        var=jax.random.uniform(k4, (c,), jnp.float32, 0.5, 1.5),
    )


def _make_params(key, cin, cout, has_shortcut):
    ks = jax.random.split(key, 11)
    p = dict(
        bn0=_bn_params(ks[0:4], cin),
        bn1=_bn_params(ks[4:8], cout),
        w1=0.1 * jax.random.normal(ks[8], (cout, cin, 3, 3), jnp.float32),
        w2=0.1 * jax.random.normal(ks[9], (cout, cout, 3, 3), jnp.float32),
    )
    if has_shortcut:
        p['w_sc'] = 0.1 * jax.random.normal(ks[10], (cout, cin, 3, 3),
                                            jnp.float32)
    return p


def _run_case(key, n, cin, cout, hw, stride):
    has_shortcut = (stride != 1) or (cin != cout)
    kp, kx = jax.random.split(key)
    params = _make_params(kp, cin, cout, has_shortcut)
    x = jax.random.normal(kx, (n, cin, hw, hw), jnp.float32)

    out = jax.block_until_ready(preact_block_forward(x, params, stride))
    ref_bf16 = ref_forward(x, params, stride, jnp.bfloat16, quantize_input=True)
    ref_f32 = ref_forward(x, params, stride, jnp.float32)

    assert out.shape == (n, cout, hw // stride, hw // stride), out.shape
    # Tight check vs. a numerics-matched reference (bf16 operands, f32 acc).
    np.testing.assert_allclose(np.asarray(out), np.asarray(ref_bf16),
                               rtol=1e-2, atol=1e-2)
    # Looser sanity check vs. the pure-f32 reference.
    np.testing.assert_allclose(np.asarray(out), np.asarray(ref_f32),
                               rtol=5e-2, atol=5e-2)


if __name__ == "__main__":
    key = jax.random.PRNGKey(0)
    k1, k2 = jax.random.split(key)
    # stride-2 block with conv shortcut (in_planes != out_planes).
    _run_case(k1, n=2, cin=4, cout=8, hw=16, stride=2)
    # stride-1 block with identity shortcut (in_planes == out_planes).
    _run_case(k2, n=2, cin=8, cout=8, hw=16, stride=1)
    print("KERNEL_OK")
</pallas_src>

<mosaic_0001>
module attributes {stable_mosaic.version = 11 : i64} {
  func.func @kernel(%arg0: i32, %arg1: memref<1x4x8x8x128xbf16, #tpu.memory_space<vmem>>, %arg2: memref<1152x128xbf16, #tpu.memory_space<vmem>>, %arg3: memref<1152x128xbf16, #tpu.memory_space<vmem>>, %arg4: memref<1152x128xbf16, #tpu.memory_space<vmem>>, %arg5: memref<1x128xf32, #tpu.memory_space<vmem>>, %arg6: memref<1x128xf32, #tpu.memory_space<vmem>>, %arg7: memref<1x128xf32, #tpu.memory_space<vmem>>, %arg8: memref<1x128xf32, #tpu.memory_space<vmem>>, %arg9: memref<1x8x8x128xbf16, #tpu.memory_space<vmem>>, %arg10: memref<1x4x9x9x128xbf16, #tpu.memory_space<vmem>>, %arg11: memref<1x1x10x10x128xbf16, #tpu.memory_space<vmem>>, %arg12: memref<64x1152xbf16, #tpu.memory_space<vmem>>, %arg13: memref<64x1152xbf16, #tpu.memory_space<vmem>>, %arg14: memref<1x4x9x9x128xbf16, #tpu.memory_space<vmem>>) attributes {dimension_semantics = [#tpu.dimension_semantics<parallel>], iteration_bounds = array<i64: 2>, scalar_prefetch = 0 : i64, scratch_operands = 5 : i64, tpu.core_type = #tpu.core_type<tc>, window_params = [{transform_indices = @transform_0, window_bounds = array<i64: 1, 4, 8, 8, 128>}, {pipeline_mode = #tpu.pipeline_mode<synchronous>, transform_indices = @transform_1, window_bounds = array<i64: 1152, 128>}, {pipeline_mode = #tpu.pipeline_mode<synchronous>, transform_indices = @transform_2, window_bounds = array<i64: 1152, 128>}, {pipeline_mode = #tpu.pipeline_mode<synchronous>, transform_indices = @transform_3, window_bounds = array<i64: 1152, 128>}, {pipeline_mode = #tpu.pipeline_mode<synchronous>, transform_indices = @transform_4, window_bounds = array<i64: 1, 128>}, {pipeline_mode = #tpu.pipeline_mode<synchronous>, transform_indices = @transform_5, window_bounds = array<i64: 1, 128>}, {pipeline_mode = #tpu.pipeline_mode<synchronous>, transform_indices = @transform_6, window_bounds = array<i64: 1, 128>}, {pipeline_mode = #tpu.pipeline_mode<synchronous>, transform_indices = @transform_7, window_bounds = array<i64: 1, 128>}, {transform_indices = @transform_8, window_bounds = array<i64: 1, 8, 8, 128>}]} {
    %cst = arith.constant 0.000000e+00 : bf16
    %0 = vector.broadcast %cst : bf16 to vector<1x4x1x9x128xbf16>
    %c0 = arith.constant 0 : index
    %c0_0 = arith.constant 0 : index
    %c8 = arith.constant 8 : index
    %c0_1 = arith.constant 0 : index
    %c0_2 = arith.constant 0 : index
    %1 = vector.load %arg10[%c0, %c0_0, %c8, %c0_1, %c0_2] : memref<1x4x9x9x128xbf16, #tpu.memory_space<vmem>>, vector<1x4x1x9x128xbf16>
    tpu.vector_store %arg10[%c0, %c0_0, %c8, %c0_1, %c0_2], %0 {strides = array<i32>} : memref<1x4x9x9x128xbf16, #tpu.memory_space<vmem>>, vector<1x4x1x9x128xbf16>,
    %cst_3 = arith.constant 0.000000e+00 : bf16
    %2 = vector.broadcast %cst_3 : bf16 to vector<1x4x9x1x128xbf16>
    %c0_4 = arith.constant 0 : index
    %c0_5 = arith.constant 0 : index
    %c0_6 = arith.constant 0 : index
    %c8_7 = arith.constant 8 : index
    %c0_8 = arith.constant 0 : index
    %3 = vector.load %arg10[%c0_4, %c0_5, %c0_6, %c8_7, %c0_8] : memref<1x4x9x9x128xbf16, #tpu.memory_space<vmem>>, vector<1x4x9x1x128xbf16>
    tpu.vector_store %arg10[%c0_4, %c0_5, %c0_6, %c8_7, %c0_8], %2 {strides = array<i32>} : memref<1x4x9x9x128xbf16, #tpu.memory_space<vmem>>, vector<1x4x9x1x128xbf16>,
    %cst_9 = arith.constant 0.000000e+00 : bf16
    %4 = vector.broadcast %cst_9 : bf16 to vector<1x1x1x10x128xbf16>
    %c0_10 = arith.constant 0 : index
    %c0_11 = arith.constant 0 : index
    %c0_12 = arith.constant 0 : index
    %c0_13 = arith.constant 0 : index
    %c0_14 = arith.constant 0 : index
    %5 = vector.load %arg11[%c0_10, %c0_11, %c0_12, %c0_13, %c0_14] : memref<1x1x10x10x128xbf16, #tpu.memory_space<vmem>>, vector<1x1x1x10x128xbf16>
    tpu.vector_store %arg11[%c0_10, %c0_11, %c0_12, %c0_13, %c0_14], %4 {strides = array<i32>} : memref<1x1x10x10x128xbf16, #tpu.memory_space<vmem>>, vector<1x1x1x10x128xbf16>,
    %cst_15 = arith.constant 0.000000e+00 : bf16
    %6 = vector.broadcast %cst_15 : bf16 to vector<1x1x10x1x128xbf16>
    %c0_16 = arith.constant 0 : index
    %c0_17 = arith.constant 0 : index
    %c0_18 = arith.constant 0 : index
    %c0_19 = arith.constant 0 : index
    %c0_20 = arith.constant 0 : index
    %7 = vector.load %arg11[%c0_16, %c0_17, %c0_18, %c0_19, %c0_20] : memref<1x1x10x10x128xbf16, #tpu.memory_space<vmem>>, vector<1x1x10x1x128xbf16>
    tpu.vector_store %arg11[%c0_16, %c0_17, %c0_18, %c0_19, %c0_20], %6 {strides = array<i32>} : memref<1x1x10x10x128xbf16, #tpu.memory_space<vmem>>, vector<1x1x10x1x128xbf16>,
    %cst_21 = arith.constant 0.000000e+00 : bf16
    %8 = vector.broadcast %cst_21 : bf16 to vector<1x1x1x10x128xbf16>
    %c0_22 = arith.constant 0 : index
    %c0_23 = arith.constant 0 : index
    %c9 = arith.constant 9 : index
    %c0_24 = arith.constant 0 : index
    %c0_25 = arith.constant 0 : index
    %9 = vector.load %arg11[%c0_22, %c0_23, %c9, %c0_24, %c0_25] : memref<1x1x10x10x128xbf16, #tpu.memory_space<vmem>>, vector<1x1x1x10x128xbf16>
    tpu.vector_store %arg11[%c0_22, %c0_23, %c9, %c0_24, %c0_25], %8 {strides = array<i32>} : memref<1x1x10x10x128xbf16, #tpu.memory_space<vmem>>, vector<1x1x1x10x128xbf16>,
    %cst_26 = arith.constant 0.000000e+00 : bf16
    %10 = vector.broadcast %cst_26 : bf16 to vector<1x1x10x1x128xbf16>
    %c0_27 = arith.constant 0 : index
    %c0_28 = arith.constant 0 : index
    %c0_29 = arith.constant 0 : index
    %c9_30 = arith.constant 9 : index
    %c0_31 = arith.constant 0 : index
    %11 = vector.load %arg11[%c0_27, %c0_28, %c0_29, %c9_30, %c0_31] : memref<1x1x10x10x128xbf16, #tpu.memory_space<vmem>>, vector<1x1x10x1x128xbf16>
    tpu.vector_store %arg11[%c0_27, %c0_28, %c0_29, %c9_30, %c0_31], %10 {strides = array<i32>} : memref<1x1x10x10x128xbf16, #tpu.memory_space<vmem>>, vector<1x1x10x1x128xbf16>,
    %cst_32 = arith.constant 0.000000e+00 : bf16
    %12 = vector.broadcast %cst_32 : bf16 to vector<1x4x1x9x128xbf16>
    %c0_33 = arith.constant 0 : index
    %c0_34 = arith.constant 0 : index
    %c8_35 = arith.constant 8 : index
    %c0_36 = arith.constant 0 : index
    %c0_37 = arith.constant 0 : index
    %13 = vector.load %arg14[%c0_33, %c0_34, %c8_35, %c0_36, %c0_37] : memref<1x4x9x9x128xbf16, #tpu.memory_space<vmem>>, vector<1x4x1x9x128xbf16>
    tpu.vector_store %arg14[%c0_33, %c0_34, %c8_35, %c0_36, %c0_37], %12 {strides = array<i32>} : memref<1x4x9x9x128xbf16, #tpu.memory_space<vmem>>, vector<1x4x1x9x128xbf16>,
    %cst_38 = arith.constant 0.000000e+00 : bf16
    %14 = vector.broadcast %cst_38 : bf16 to vector<1x4x9x1x128xbf16>
    %c0_39 = arith.constant 0 : index
    %c0_40 = arith.constant 0 : index
    %c0_41 = arith.constant 0 : index
    %c8_42 = arith.constant 8 : index
    %c0_43 = arith.constant 0 : index
    %15 = vector.load %arg14[%c0_39, %c0_40, %c0_41, %c8_42, %c0_43] : memref<1x4x9x9x128xbf16, #tpu.memory_space<vmem>>, vector<1x4x9x1x128xbf16>
    tpu.vector_store %arg14[%c0_39, %c0_40, %c0_41, %c8_42, %c0_43], %14 {strides = array<i32>} : memref<1x4x9x9x128xbf16, #tpu.memory_space<vmem>>, vector<1x4x9x1x128xbf16>,
    %c0_44 = arith.constant 0 : index
    %c0_45 = arith.constant 0 : index
    %16 = vector.load %arg5[%c0_44, %c0_45] : memref<1x128xf32, #tpu.memory_space<vmem>>, vector<1x128xf32>
    %17 = vector.shape_cast %16 : vector<1x128xf32> to vector<1x1x1x128xf32>
    %c0_46 = arith.constant 0 : index
    %c0_47 = arith.constant 0 : index
    %18 = vector.load %arg6[%c0_46, %c0_47] : memref<1x128xf32, #tpu.memory_space<vmem>>, vector<1x128xf32>
    %19 = vector.shape_cast %18 : vector<1x128xf32> to vector<1x1x1x128xf32>
    %c0_48 = arith.constant 0 : index
    %c0_49 = arith.constant 0 : index
    %c0_50 = arith.constant 0 : index
    %c0_51 = arith.constant 0 : index
    %c0_52 = arith.constant 0 : index
    %20 = vector.load %arg1[%c0_48, %c0_49, %c0_50, %c0_51, %c0_52] : memref<1x4x8x8x128xbf16, #tpu.memory_space<vmem>>, vector<1x1x8x8x128xbf16>
    %21 = vector.shape_cast %20 : vector<1x1x8x8x128xbf16> to vector<1x8x8x128xbf16>
    %22 = arith.extf %21 : vector<1x8x8x128xbf16> to vector<1x8x8x128xf32>
    %23 = vector.broadcast %17 : vector<1x1x1x128xf32> to vector<1x8x8x128xf32>
    %24 = arith.mulf %22, %23 : vector<1x8x8x128xf32>
    %25 = vector.broadcast %19 : vector<1x1x1x128xf32> to vector<1x8x8x128xf32>
    %26 = arith.addf %24, %25 : vector<1x8x8x128xf32>
    %cst_53 = arith.constant 0.000000e+00 : f32
    %27 = vector.broadcast %cst_53 : f32 to vector<1x8x8x128xf32>
    %28 = arith.maximumf %26, %27 : vector<1x8x8x128xf32>
    %29 = arith.truncf %28 : vector<1x8x8x128xf32> to vector<1x8x8x128xbf16>
    %c0_54 = arith.constant 0 : index
    %c0_55 = arith.constant 0 : index
    %c0_56 = arith.constant 0 : index
    %c0_57 = arith.constant 0 : index
    %c0_58 = arith.constant 0 : index
    %30 = vector.load %arg10[%c0_54, %c0_55, %c0_56, %c0_57, %c0_58] : memref<1x4x9x9x128xbf16, #tpu.memory_space<vmem>>, vector<1x1x8x8x128xbf16>
    %31 = vector.shape_cast %30 : vector<1x1x8x8x128xbf16> to vector<1x8x8x128xbf16>
    %32 = vector.shape_cast %29 : vector<1x8x8x128xbf16> to vector<1x1x8x8x128xbf16>
    tpu.vector_store %arg10[%c0_54, %c0_55, %c0_56, %c0_57, %c0_58], %32 {strides = array<i32>} : memref<1x4x9x9x128xbf16, #tpu.memory_space<vmem>>, vector<1x1x8x8x128xbf16>,
    %c0_59 = arith.constant 0 : index
    %c0_60 = arith.constant 0 : index
    %c0_61 = arith.constant 0 : index
    %c0_62 = arith.constant 0 : index
    %c0_63 = arith.constant 0 : index
    %33 = vector.load %arg14[%c0_59, %c0_60, %c0_61, %c0_62, %c0_63] : memref<1x4x9x9x128xbf16, #tpu.memory_space<vmem>>, vector<1x1x8x8x128xbf16>
    %34 = vector.shape_cast %33 : vector<1x1x8x8x128xbf16> to vector<1x8x8x128xbf16>
    %35 = vector.shape_cast %21 : vector<1x8x8x128xbf16> to vector<1x1x8x8x128xbf16>
    tpu.vector_store %arg14[%c0_59, %c0_60, %c0_61, %c0_62, %c0_63], %35 {strides = array<i32>} : memref<1x4x9x9x128xbf16, #tpu.memory_space<vmem>>, vector<1x1x8x8x128xbf16>,
    %c0_64 = arith.constant 0 : index
    %c1 = arith.constant 1 : index
    %c0_65 = arith.constant 0 : index
    %c0_66 = arith.constant 0 : index
    %c0_67 = arith.constant 0 : index
    %36 = vector.load %arg1[%c0_64, %c1, %c0_65, %c0_66, %c0_67] : memref<1x4x8x8x128xbf16, #tpu.memory_space<vmem>>, vector<1x1x8x8x128xbf16>
    %37 = vector.shape_cast %36 : vector<1x1x8x8x128xbf16> to vector<1x8x8x128xbf16>
    %38 = arith.extf %37 : vector<1x8x8x128xbf16> to vector<1x8x8x128xf32>
    %39 = vector.broadcast %17 : vector<1x1x1x128xf32> to vector<1x8x8x128xf32>
    %40 = arith.mulf %38, %39 : vector<1x8x8x128xf32>
    %41 = vector.broadcast %19 : vector<1x1x1x128xf32> to vector<1x8x8x128xf32>
    %42 = arith.addf %40, %41 : vector<1x8x8x128xf32>
    %cst_68 = arith.constant 0.000000e+00 : f32
    %43 = vector.broadcast %cst_68 : f32 to vector<1x8x8x128xf32>
    %44 = arith.maximumf %42, %43 : vector<1x8x8x128xf32>
    %45 = arith.truncf %44 : vector<1x8x8x128xf32> to vector<1x8x8x128xbf16>
    %c0_69 = arith.constant 0 : index
    %c1_70 = arith.constant 1 : index
    %c0_71 = arith.constant 0 : index
    %c0_72 = arith.constant 0 : index
    %c0_73 = arith.constant 0 : index
    %46 = vector.load %arg10[%c0_69, %c1_70, %c0_71, %c0_72, %c0_73] : memref<1x4x9x9x128xbf16, #tpu.memory_space<vmem>>, vector<1x1x8x8x128xbf16>
    %47 = vector.shape_cast %46 : vector<1x1x8x8x128xbf16> to vector<1x8x8x128xbf16>
    %48 = vector.shape_cast %45 : vector<1x8x8x128xbf16> to vector<1x1x8x8x128xbf16>
    tpu.vector_store %arg10[%c0_69, %c1_70, %c0_71, %c0_72, %c0_73], %48 {strides = array<i32>} : memref<1x4x9x9x128xbf16, #tpu.memory_space<vmem>>, vector<1x1x8x8x128xbf16>,
    %c0_74 = arith.constant 0 : index
    %c1_75 = arith.constant 1 : index
    %c0_76 = arith.constant 0 : index
    %c0_77 = arith.constant 0 : index
    %c0_78 = arith.constant 0 : index
    %49 = vector.load %arg14[%c0_74, %c1_75, %c0_76, %c0_77, %c0_78] : memref<1x4x9x9x128xbf16, #tpu.memory_space<vmem>>, vector<1x1x8x8x128xbf16>
    %50 = vector.shape_cast %49 : vector<1x1x8x8x128xbf16> to vector<1x8x8x128xbf16>
    %51 = vector.shape_cast %37 : vector<1x8x8x128xbf16> to vector<1x1x8x8x128xbf16>
    tpu.vector_store %arg14[%c0_74, %c1_75, %c0_76, %c0_77, %c0_78], %51 {strides = array<i32>} : memref<1x4x9x9x128xbf16, #tpu.memory_space<vmem>>, vector<1x1x8x8x128xbf16>,
    %c0_79 = arith.constant 0 : index
    %c2 = arith.constant 2 : index
    %c0_80 = arith.constant 0 : index
    %c0_81 = arith.constant 0 : index
    %c0_82 = arith.constant 0 : index
    %52 = vector.load %arg1[%c0_79, %c2, %c0_80, %c0_81, %c0_82] : memref<1x4x8x8x128xbf16, #tpu.memory_space<vmem>>, vector<1x1x8x8x128xbf16>
    %53 = vector.shape_cast %52 : vector<1x1x8x8x128xbf16> to vector<1x8x8x128xbf16>
    %54 = arith.extf %53 : vector<1x8x8x128xbf16> to vector<1x8x8x128xf32>
    %55 = vector.broadcast %17 : vector<1x1x1x128xf32> to vector<1x8x8x128xf32>
    %56 = arith.mulf %54, %55 : vector<1x8x8x128xf32>
    %57 = vector.broadcast %19 : vector<1x1x1x128xf32> to vector<1x8x8x128xf32>
    %58 = arith.addf %56, %57 : vector<1x8x8x128xf32>
    %cst_83 = arith.constant 0.000000e+00 : f32
    %59 = vector.broadcast %cst_83 : f32 to vector<1x8x8x128xf32>
    %60 = arith.maximumf %58, %59 : vector<1x8x8x128xf32>
    %61 = arith.truncf %60 : vector<1x8x8x128xf32> to vector<1x8x8x128xbf16>
    %c0_84 = arith.constant 0 : index
    %c2_85 = arith.constant 2 : index
    %c0_86 = arith.constant 0 : index
    %c0_87 = arith.constant 0 : index
    %c0_88 = arith.constant 0 : index
    %62 = vector.load %arg10[%c0_84, %c2_85, %c0_86, %c0_87, %c0_88] : memref<1x4x9x9x128xbf16, #tpu.memory_space<vmem>>, vector<1x1x8x8x128xbf16>
    %63 = vector.shape_cast %62 : vector<1x1x8x8x128xbf16> to vector<1x8x8x128xbf16>
    %64 = vector.shape_cast %61 : vector<1x8x8x128xbf16> to vector<1x1x8x8x128xbf16>
    tpu.vector_store %arg10[%c0_84, %c2_85, %c0_86, %c0_87, %c0_88], %64 {strides = array<i32>} : memref<1x4x9x9x128xbf16, #tpu.memory_space<vmem>>, vector<1x1x8x8x128xbf16>,
    %c0_89 = arith.constant 0 : index
    %c2_90 = arith.constant 2 : index
    %c0_91 = arith.constant 0 : index
    %c0_92 = arith.constant 0 : index
    %c0_93 = arith.constant 0 : index
    %65 = vector.load %arg14[%c0_89, %c2_90, %c0_91, %c0_92, %c0_93] : memref<1x4x9x9x128xbf16, #tpu.memory_space<vmem>>, vector<1x1x8x8x128xbf16>
    %66 = vector.shape_cast %65 : vector<1x1x8x8x128xbf16> to vector<1x8x8x128xbf16>
    %67 = vector.shape_cast %53 : vector<1x8x8x128xbf16> to vector<1x1x8x8x128xbf16>
    tpu.vector_store %arg14[%c0_89, %c2_90, %c0_91, %c0_92, %c0_93], %67 {strides = array<i32>} : memref<1x4x9x9x128xbf16, #tpu.memory_space<vmem>>, vector<1x1x8x8x128xbf16>,
    %c0_94 = arith.constant 0 : index
    %c3 = arith.constant 3 : index
    %c0_95 = arith.constant 0 : index
    %c0_96 = arith.constant 0 : index
    %c0_97 = arith.constant 0 : index
    %68 = vector.load %arg1[%c0_94, %c3, %c0_95, %c0_96, %c0_97] : memref<1x4x8x8x128xbf16, #tpu.memory_space<vmem>>, vector<1x1x8x8x128xbf16>
    %69 = vector.shape_cast %68 : vector<1x1x8x8x128xbf16> to vector<1x8x8x128xbf16>
    %70 = arith.extf %69 : vector<1x8x8x128xbf16> to vector<1x8x8x128xf32>
    %71 = vector.broadcast %17 : vector<1x1x1x128xf32> to vector<1x8x8x128xf32>
    %72 = arith.mulf %70, %71 : vector<1x8x8x128xf32>
    %73 = vector.broadcast %19 : vector<1x1x1x128xf32> to vector<1x8x8x128xf32>
    %74 = arith.addf %72, %73 : vector<1x8x8x128xf32>
    %cst_98 = arith.constant 0.000000e+00 : f32
    %75 = vector.broadcast %cst_98 : f32 to vector<1x8x8x128xf32>
    %76 = arith.maximumf %74, %75 : vector<1x8x8x128xf32>
    %77 = arith.truncf %76 : vector<1x8x8x128xf32> to vector<1x8x8x128xbf16>
    %c0_99 = arith.constant 0 : index
    %c3_100 = arith.constant 3 : index
    %c0_101 = arith.constant 0 : index
    %c0_102 = arith.constant 0 : index
    %c0_103 = arith.constant 0 : index
    %78 = vector.load %arg10[%c0_99, %c3_100, %c0_101, %c0_102, %c0_103] : memref<1x4x9x9x128xbf16, #tpu.memory_space<vmem>>, vector<1x1x8x8x128xbf16>
    %79 = vector.shape_cast %78 : vector<1x1x8x8x128xbf16> to vector<1x8x8x128xbf16>
    %80 = vector.shape_cast %77 : vector<1x8x8x128xbf16> to vector<1x1x8x8x128xbf16>
    tpu.vector_store %arg10[%c0_99, %c3_100, %c0_101, %c0_102, %c0_103], %80 {strides = array<i32>} : memref<1x4x9x9x128xbf16, #tpu.memory_space<vmem>>, vector<1x1x8x8x128xbf16>,
    %c0_104 = arith.constant 0 : index
    %c3_105 = arith.constant 3 : index
    %c0_106 = arith.constant 0 : index
    %c0_107 = arith.constant 0 : index
    %c0_108 = arith.constant 0 : index
    %81 = vector.load %arg14[%c0_104, %c3_105, %c0_106, %c0_107, %c0_108] : memref<1x4x9x9x128xbf16, #tpu.memory_space<vmem>>, vector<1x1x8x8x128xbf16>
    %82 = vector.shape_cast %81 : vector<1x1x8x8x128xbf16> to vector<1x8x8x128xbf16>
    %83 = vector.shape_cast %69 : vector<1x8x8x128xbf16> to vector<1x1x8x8x128xbf16>
    tpu.vector_store %arg14[%c0_104, %c3_105, %c0_106, %c0_107, %c0_108], %83 {strides = array<i32>} : memref<1x4x9x9x128xbf16, #tpu.memory_space<vmem>>, vector<1x1x8x8x128xbf16>,
    %c0_109 = arith.constant 0 : index
    %c0_110 = arith.constant 0 : index
    %c0_111 = arith.constant 0 : index
    %c0_112 = arith.constant 0 : index
    %c0_113 = arith.constant 0 : index
    %84 = vector.load %arg10[%c0_109, %c0_110, %c0_111, %c0_112, %c0_113] : memref<1x4x9x9x128xbf16, #tpu.memory_space<vmem>>, vector<1x1x8x8x128xbf16>
    %85 = vector.shape_cast %84 : vector<1x1x8x8x128xbf16> to vector<1x8x8x128xbf16>
    %86 = vector.shape_cast %85 : vector<1x8x8x128xbf16> to vector<64x128xbf16>
    %c0_114 = arith.constant 0 : index
    %c0_115 = arith.constant 0 : index
    %87 = vector.load %arg12[%c0_114, %c0_115] : memref<64x1152xbf16, #tpu.memory_space<vmem>>, vector<64x128xbf16>
    tpu.vector_store %arg12[%c0_114, %c0_115], %86 {strides = array<i32>} : memref<64x1152xbf16, #tpu.memory_space<vmem>>, vector<64x128xbf16>,
    %c0_116 = arith.constant 0 : index
    %c1_117 = arith.constant 1 : index
    %c0_118 = arith.constant 0 : index
    %c0_119 = arith.constant 0 : index
    %c0_120 = arith.constant 0 : index
    %88 = vector.load %arg10[%c0_116, %c1_117, %c0_118, %c0_119, %c0_120] : memref<1x4x9x9x128xbf16, #tpu.memory_space<vmem>>, vector<1x1x8x8x128xbf16>
    %89 = vector.shape_cast %88 : vector<1x1x8x8x128xbf16> to vector<1x8x8x128xbf16>
    %90 = vector.shape_cast %89 : vector<1x8x8x128xbf16> to vector<64x128xbf16>
    %c0_121 = arith.constant 0 : index
    %c128 = arith.constant 128 : index
    %91 = vector.load %arg12[%c0_121, %c128] : memref<64x1152xbf16, #tpu.memory_space<vmem>>, vector<64x128xbf16>
    tpu.vector_store %arg12[%c0_121, %c128], %90 {strides = array<i32>} : memref<64x1152xbf16, #tpu.memory_space<vmem>>, vector<64x128xbf16>,
    %c0_122 = arith.constant 0 : index
    %c0_123 = arith.constant 0 : index
    %c0_124 = arith.constant 0 : index
    %c1_125 = arith.constant 1 : index
    %c0_126 = arith.constant 0 : index
    %92 = vector.load %arg10[%c0_122, %c0_123, %c0_124, %c1_125, %c0_126] : memref<1x4x9x9x128xbf16, #tpu.memory_space<vmem>>, vector<1x1x8x8x128xbf16>
    %93 = vector.shape_cast %92 : vector<1x1x8x8x128xbf16> to vector<1x8x8x128xbf16>
    %94 = vector.shape_cast %93 : vector<1x8x8x128xbf16> to vector<64x128xbf16>
    %c0_127 = arith.constant 0 : index
    %c256 = arith.constant 256 : index
    %95 = vector.load %arg12[%c0_127, %c256] : memref<64x1152xbf16, #tpu.memory_space<vmem>>, vector<64x128xbf16>
    tpu.vector_store %arg12[%c0_127, %c256], %94 {strides = array<i32>} : memref<64x1152xbf16, #tpu.memory_space<vmem>>, vector<64x128xbf16>,
    %c0_128 = arith.constant 0 : index
    %c2_129 = arith.constant 2 : index
    %c0_130 = arith.constant 0 : index
    %c0_131 = arith.constant 0 : index
    %c0_132 = arith.constant 0 : index
    %96 = vector.load %arg10[%c0_128, %c2_129, %c0_130, %c0_131, %c0_132] : memref<1x4x9x9x128xbf16, #tpu.memory_space<vmem>>, vector<1x1x8x8x128xbf16>
    %97 = vector.shape_cast %96 : vector<1x1x8x8x128xbf16> to vector<1x8x8x128xbf16>
    %98 = vector.shape_cast %97 : vector<1x8x8x128xbf16> to vector<64x128xbf16>
    %c0_133 = arith.constant 0 : index
    %c384 = arith.constant 384 : index
    %99 = vector.load %arg12[%c0_133, %c384] : memref<64x1152xbf16, #tpu.memory_space<vmem>>, vector<64x128xbf16>
    tpu.vector_store %arg12[%c0_133, %c384], %98 {strides = array<i32>} : memref<64x1152xbf16, #tpu.memory_space<vmem>>, vector<64x128xbf16>,
    %c0_134 = arith.constant 0 : index
    %c3_135 = arith.constant 3 : index
    %c0_136 = arith.constant 0 : index
    %c0_137 = arith.constant 0 : index
    %c0_138 = arith.constant 0 : index
    %100 = vector.load %arg10[%c0_134, %c3_135, %c0_136, %c0_137, %c0_138] : memref<1x4x9x9x128xbf16, #tpu.memory_space<vmem>>, vector<1x1x8x8x128xbf16>
    %101 = vector.shape_cast %100 : vector<1x1x8x8x128xbf16> to vector<1x8x8x128xbf16>
    %102 = vector.shape_cast %101 : vector<1x8x8x128xbf16> to vector<64x128xbf16>
    %c0_139 = arith.constant 0 : index
    %c512 = arith.constant 512 : index
    %103 = vector.load %arg12[%c0_139, %c512] : memref<64x1152xbf16, #tpu.memory_space<vmem>>, vector<64x128xbf16>
    tpu.vector_store %arg12[%c0_139, %c512], %102 {strides = array<i32>} : memref<64x1152xbf16, #tpu.memory_space<vmem>>, vector<64x128xbf16>,
    %c0_140 = arith.constant 0 : index
    %c2_141 = arith.constant 2 : index
    %c0_142 = arith.constant 0 : index
    %c1_143 = arith.constant 1 : index
    %c0_144 = arith.constant 0 : index
    %104 = vector.load %arg10[%c0_140, %c2_141, %c0_142, %c1_143, %c0_144] : memref<1x4x9x9x128xbf16, #tpu.memory_space<vmem>>, vector<1x1x8x8x128xbf16>
    %105 = vector.shape_cast %104 : vector<1x1x8x8x128xbf16> to vector<1x8x8x128xbf16>
    %106 = vector.shape_cast %105 : vector<1x8x8x128xbf16> to vector<64x128xbf16>
    %c0_145 = arith.constant 0 : index
    %c640 = arith.constant 640 : index
    %107 = vector.load %arg12[%c0_145, %c640] : memref<64x1152xbf16, #tpu.memory_space<vmem>>, vector<64x128xbf16>
    tpu.vector_store %arg12[%c0_145, %c640], %106 {strides = array<i32>} : memref<64x1152xbf16, #tpu.memory_space<vmem>>, vector<64x128xbf16>,
    %c0_146 = arith.constant 0 : index
    %c0_147 = arith.constant 0 : index
    %c1_148 = arith.constant 1 : index
    %c0_149 = arith.constant 0 : index
    %c0_150 = arith.constant 0 : index
    %108 = vector.load %arg10[%c0_146, %c0_147, %c1_148, %c0_149, %c0_150] : memref<1x4x9x9x128xbf16, #tpu.memory_space<vmem>>, vector<1x1x8x8x128xbf16>
    %109 = vector.shape_cast %108 : vector<1x1x8x8x128xbf16> to vector<1x8x8x128xbf16>
    %110 = vector.shape_cast %109 : vector<1x8x8x128xbf16> to vector<64x128xbf16>
    %c0_151 = arith.constant 0 : index
    %c768 = arith.constant 768 : index
    %111 = vector.load %arg12[%c0_151, %c768] : memref<64x1152xbf16, #tpu.memory_space<vmem>>, vector<64x128xbf16>
    tpu.vector_store %arg12[%c0_151, %c768], %110 {strides = array<i32>} : memref<64x1152xbf16, #tpu.memory_space<vmem>>, vector<64x128xbf16>,
    %c0_152 = arith.constant 0 : index
    %c1_153 = arith.constant 1 : index
    %c1_154 = arith.constant 1 : index
    %c0_155 = arith.constant 0 : index
    %c0_156 = arith.constant 0 : index
    %112 = vector.load %arg10[%c0_152, %c1_153, %c1_154, %c0_155, %c0_156] : memref<1x4x9x9x128xbf16, #tpu.memory_space<vmem>>, vector<1x1x8x8x128xbf16>
    %113 = vector.shape_cast %112 : vector<1x1x8x8x128xbf16> to vector<1x8x8x128xbf16>
    %114 = vector.shape_cast %113 : vector<1x8x8x128xbf16> to vector<64x128xbf16>
    %c0_157 = arith.constant 0 : index
    %c896 = arith.constant 896 : index
    %115 = vector.load %arg12[%c0_157, %c896] : memref<64x1152xbf16, #tpu.memory_space<vmem>>, vector<64x128xbf16>
    tpu.vector_store %arg12[%c0_157, %c896], %114 {strides = array<i32>} : memref<64x1152xbf16, #tpu.memory_space<vmem>>, vector<64x128xbf16>,
    %c0_158 = arith.constant 0 : index
    %c0_159 = arith.constant 0 : index
    %c1_160 = arith.constant 1 : index
    %c1_161 = arith.constant 1 : index
    %c0_162 = arith.constant 0 : index
    %116 = vector.load %arg10[%c0_158, %c0_159, %c1_160, %c1_161, %c0_162] : memref<1x4x9x9x128xbf16, #tpu.memory_space<vmem>>, vector<1x1x8x8x128xbf16>
    %117 = vector.shape_cast %116 : vector<1x1x8x8x128xbf16> to vector<1x8x8x128xbf16>
    %118 = vector.shape_cast %117 : vector<1x8x8x128xbf16> to vector<64x128xbf16>
    %c0_163 = arith.constant 0 : index
    %c1024 = arith.constant 1024 : index
    %119 = vector.load %arg12[%c0_163, %c1024] : memref<64x1152xbf16, #tpu.memory_space<vmem>>, vector<64x128xbf16>
    tpu.vector_store %arg12[%c0_163, %c1024], %118 {strides = array<i32>} : memref<64x1152xbf16, #tpu.memory_space<vmem>>, vector<64x128xbf16>,
    %c0_164 = arith.constant 0 : index
    %c0_165 = arith.constant 0 : index
    %120 = vector.load %arg12[%c0_164, %c0_165] : memref<64x1152xbf16, #tpu.memory_space<vmem>>, vector<64x1152xbf16>
    %c0_166 = arith.constant 0 : index
    %c0_167 = arith.constant 0 : index
    %121 = vector.load %arg2[%c0_166, %c0_167] : memref<1152x128xbf16, #tpu.memory_space<vmem>>, vector<1152x128xbf16>
    %cst_168 = arith.constant dense<0.000000e+00> : vector<64x128xf32>
    %122 = tpu.matmul %120, %121, %cst_168 {dimension_numbers = #tpu.dot_dimension_numbers<[1], [0], [0], [1], [0, 0, 1, 1], [], []>} : vector<64x1152xbf16>, vector<1152x128xbf16>, vector<64x128xf32> -> vector<64x128xf32>
    %c0_169 = arith.constant 0 : index
    %c0_170 = arith.constant 0 : index
    %123 = vector.load %arg7[%c0_169, %c0_170] : memref<1x128xf32, #tpu.memory_space<vmem>>, vector<1x128xf32>
    %124 = vector.broadcast %123 : vector<1x128xf32> to vector<64x128xf32>
    %125 = arith.mulf %122, %124 : vector<64x128xf32>
    %c0_171 = arith.constant 0 : index
    %c0_172 = arith.constant 0 : index
    %126 = vector.load %arg8[%c0_171, %c0_172] : memref<1x128xf32, #tpu.memory_space<vmem>>, vector<1x128xf32>
    %127 = vector.broadcast %126 : vector<1x128xf32> to vector<64x128xf32>
    %128 = arith.addf %125, %127 : vector<64x128xf32>
    %cst_173 = arith.constant 0.000000e+00 : f32
    %129 = vector.broadcast %cst_173 : f32 to vector<64x128xf32>
    %130 = arith.maximumf %128, %129 : vector<64x128xf32>
    %131 = arith.truncf %130 : vector<64x128xf32> to vector<64x128xbf16>
    %132 = vector.shape_cast %131 : vector<64x128xbf16> to vector<1x8x8x128xbf16>
    %c0_174 = arith.constant 0 : index
    %c0_175 = arith.constant 0 : index
    %c1_176 = arith.constant 1 : index
    %c1_177 = arith.constant 1 : index
    %c0_178 = arith.constant 0 : index
    %133 = vector.load %arg11[%c0_174, %c0_175, %c1_176, %c1_177, %c0_178] : memref<1x1x10x10x128xbf16, #tpu.memory_space<vmem>>, vector<1x1x8x8x128xbf16>
    %134 = vector.shape_cast %133 : vector<1x1x8x8x128xbf16> to vector<1x8x8x128xbf16>
    %135 = vector.shape_cast %132 : vector<1x8x8x128xbf16> to vector<1x1x8x8x128xbf16>
    tpu.vector_store %arg11[%c0_174, %c0_175, %c1_176, %c1_177, %c0_178], %135 {strides = array<i32>} : memref<1x1x10x10x128xbf16, #tpu.memory_space<vmem>>, vector<1x1x8x8x128xbf16>,
    %c0_179 = arith.constant 0 : index
    %c0_180 = arith.constant 0 : index
    %c0_181 = arith.constant 0 : index
    %c0_182 = arith.constant 0 : index
    %c0_183 = arith.constant 0 : index
    %136 = vector.load %arg11[%c0_179, %c0_180, %c0_181, %c0_182, %c0_183] : memref<1x1x10x10x128xbf16, #tpu.memory_space<vmem>>, vector<1x1x8x8x128xbf16>
    %137 = vector.shape_cast %136 : vector<1x1x8x8x128xbf16> to vector<1x8x8x128xbf16>
    %138 = vector.shape_cast %137 : vector<1x8x8x128xbf16> to vector<64x128xbf16>
    %c0_184 = arith.constant 0 : index
    %c0_185 = arith.constant 0 : index
    %139 = vector.load %arg13[%c0_184, %c0_185] : memref<64x1152xbf16, #tpu.memory_space<vmem>>, vector<64x128xbf16>
    tpu.vector_store %arg13[%c0_184, %c0_185], %138 {strides = array<i32>} : memref<64x1152xbf16, #tpu.memory_space<vmem>>, vector<64x128xbf16>,
    %c0_186 = arith.constant 0 : index
    %c0_187 = arith.constant 0 : index
    %c0_188 = arith.constant 0 : index
    %c1_189 = arith.constant 1 : index
    %c0_190 = arith.constant 0 : index
    %140 = vector.load %arg11[%c0_186, %c0_187, %c0_188, %c1_189, %c0_190] : memref<1x1x10x10x128xbf16, #tpu.memory_space<vmem>>, vector<1x1x8x8x128xbf16>
    %141 = vector.shape_cast %140 : vector<1x1x8x8x128xbf16> to vector<1x8x8x128xbf16>
    %142 = vector.shape_cast %141 : vector<1x8x8x128xbf16> to vector<64x128xbf16>
    %c0_191 = arith.constant 0 : index
    %c128_192 = arith.constant 128 : index
    %143 = vector.load %arg13[%c0_191, %c128_192] : memref<64x1152xbf16, #tpu.memory_space<vmem>>, vector<64x128xbf16>
    tpu.vector_store %arg13[%c0_191, %c128_192], %142 {strides = array<i32>} : memref<64x1152xbf16, #tpu.memory_space<vmem>>, vector<64x128xbf16>,
    %c0_193 = arith.constant 0 : index
    %c0_194 = arith.constant 0 : index
    %c0_195 = arith.constant 0 : index
    %c2_196 = arith.constant 2 : index
    %c0_197 = arith.constant 0 : index
    %144 = vector.load %arg11[%c0_193, %c0_194, %c0_195, %c2_196, %c0_197] : memref<1x1x10x10x128xbf16, #tpu.memory_space<vmem>>, vector<1x1x8x8x128xbf16>
    %145 = vector.shape_cast %144 : vector<1x1x8x8x128xbf16> to vector<1x8x8x128xbf16>
    %146 = vector.shape_cast %145 : vector<1x8x8x128xbf16> to vector<64x128xbf16>
    %c0_198 = arith.constant 0 : index
    %c256_199 = arith.constant 256 : index
    %147 = vector.load %arg13[%c0_198, %c256_199] : memref<64x1152xbf16, #tpu.memory_space<vmem>>, vector<64x128xbf16>
    tpu.vector_store %arg13[%c0_198, %c256_199], %146 {strides = array<i32>} : memref<64x1152xbf16, #tpu.memory_space<vmem>>, vector<64x128xbf16>,
    %c0_200 = arith.constant 0 : index
    %c0_201 = arith.constant 0 : index
    %c1_202 = arith.constant 1 : index
    %c0_203 = arith.constant 0 : index
    %c0_204 = arith.constant 0 : index
    %148 = vector.load %arg11[%c0_200, %c0_201, %c1_202, %c0_203, %c0_204] : memref<1x1x10x10x128xbf16, #tpu.memory_space<vmem>>, vector<1x1x8x8x128xbf16>
    %149 = vector.shape_cast %148 : vector<1x1x8x8x128xbf16> to vector<1x8x8x128xbf16>
    %150 = vector.shape_cast %149 : vector<1x8x8x128xbf16> to vector<64x128xbf16>
    %c0_205 = arith.constant 0 : index
    %c384_206 = arith.constant 384 : index
    %151 = vector.load %arg13[%c0_205, %c384_206] : memref<64x1152xbf16, #tpu.memory_space<vmem>>, vector<64x128xbf16>
    tpu.vector_store %arg13[%c0_205, %c384_206], %150 {strides = array<i32>} : memref<64x1152xbf16, #tpu.memory_space<vmem>>, vector<64x128xbf16>,
    %c0_207 = arith.constant 0 : index
    %c0_208 = arith.constant 0 : index
    %c1_209 = arith.constant 1 : index
    %c1_210 = arith.constant 1 : index
    %c0_211 = arith.constant 0 : index
    %152 = vector.load %arg11[%c0_207, %c0_208, %c1_209, %c1_210, %c0_211] : memref<1x1x10x10x128xbf16, #tpu.memory_space<vmem>>, vector<1x1x8x8x128xbf16>
    %153 = vector.shape_cast %152 : vector<1x1x8x8x128xbf16> to vector<1x8x8x128xbf16>
    %154 = vector.shape_cast %153 : vector<1x8x8x128xbf16> to vector<64x128xbf16>
    %c0_212 = arith.constant 0 : index
    %c512_213 = arith.constant 512 : index
    %155 = vector.load %arg13[%c0_212, %c512_213] : memref<64x1152xbf16, #tpu.memory_space<vmem>>, vector<64x128xbf16>
    tpu.vector_store %arg13[%c0_212, %c512_213], %154 {strides = array<i32>} : memref<64x1152xbf16, #tpu.memory_space<vmem>>, vector<64x128xbf16>,
    %c0_214 = arith.constant 0 : index
    %c0_215 = arith.constant 0 : index
    %c1_216 = arith.constant 1 : index
    %c2_217 = arith.constant 2 : index
    %c0_218 = arith.constant 0 : index
    %156 = vector.load %arg11[%c0_214, %c0_215, %c1_216, %c2_217, %c0_218] : memref<1x1x10x10x128xbf16, #tpu.memory_space<vmem>>, vector<1x1x8x8x128xbf16>
    %157 = vector.shape_cast %156 : vector<1x1x8x8x128xbf16> to vector<1x8x8x128xbf16>
    %158 = vector.shape_cast %157 : vector<1x8x8x128xbf16> to vector<64x128xbf16>
    %c0_219 = arith.constant 0 : index
    %c640_220 = arith.constant 640 : index
    %159 = vector.load %arg13[%c0_219, %c640_220] : memref<64x1152xbf16, #tpu.memory_space<vmem>>, vector<64x128xbf16>
    tpu.vector_store %arg13[%c0_219, %c640_220], %158 {strides = array<i32>} : memref<64x1152xbf16, #tpu.memory_space<vmem>>, vector<64x128xbf16>,
    %c0_221 = arith.constant 0 : index
    %c0_222 = arith.constant 0 : index
    %c2_223 = arith.constant 2 : index
    %c0_224 = arith.constant 0 : index
    %c0_225 = arith.constant 0 : index
    %160 = vector.load %arg11[%c0_221, %c0_222, %c2_223, %c0_224, %c0_225] : memref<1x1x10x10x128xbf16, #tpu.memory_space<vmem>>, vector<1x1x8x8x128xbf16>
    %161 = vector.shape_cast %160 : vector<1x1x8x8x128xbf16> to vector<1x8x8x128xbf16>
    %162 = vector.shape_cast %161 : vector<1x8x8x128xbf16> to vector<64x128xbf16>
    %c0_226 = arith.constant 0 : index
    %c768_227 = arith.constant 768 : index
    %163 = vector.load %arg13[%c0_226, %c768_227] : memref<64x1152xbf16, #tpu.memory_space<vmem>>, vector<64x128xbf16>
    tpu.vector_store %arg13[%c0_226, %c768_227], %162 {strides = array<i32>} : memref<64x1152xbf16, #tpu.memory_space<vmem>>, vector<64x128xbf16>,
    %c0_228 = arith.constant 0 : index
    %c0_229 = arith.constant 0 : index
    %c2_230 = arith.constant 2 : index
    %c1_231 = arith.constant 1 : index
    %c0_232 = arith.constant 0 : index
    %164 = vector.load %arg11[%c0_228, %c0_229, %c2_230, %c1_231, %c0_232] : memref<1x1x10x10x128xbf16, #tpu.memory_space<vmem>>, vector<1x1x8x8x128xbf16>
    %165 = vector.shape_cast %164 : vector<1x1x8x8x128xbf16> to vector<1x8x8x128xbf16>
    %166 = vector.shape_cast %165 : vector<1x8x8x128xbf16> to vector<64x128xbf16>
    %c0_233 = arith.constant 0 : index
    %c896_234 = arith.constant 896 : index
    %167 = vector.load %arg13[%c0_233, %c896_234] : memref<64x1152xbf16, #tpu.memory_space<vmem>>, vector<64x128xbf16>
    tpu.vector_store %arg13[%c0_233, %c896_234], %166 {strides = array<i32>} : memref<64x1152xbf16, #tpu.memory_space<vmem>>, vector<64x128xbf16>,
    %c0_235 = arith.constant 0 : index
    %c0_236 = arith.constant 0 : index
    %c2_237 = arith.constant 2 : index
    %c2_238 = arith.constant 2 : index
    %c0_239 = arith.constant 0 : index
    %168 = vector.load %arg11[%c0_235, %c0_236, %c2_237, %c2_238, %c0_239] : memref<1x1x10x10x128xbf16, #tpu.memory_space<vmem>>, vector<1x1x8x8x128xbf16>
    %169 = vector.shape_cast %168 : vector<1x1x8x8x128xbf16> to vector<1x8x8x128xbf16>
    %170 = vector.shape_cast %169 : vector<1x8x8x128xbf16> to vector<64x128xbf16>
    %c0_240 = arith.constant 0 : index
    %c1024_241 = arith.constant 1024 : index
    %171 = vector.load %arg13[%c0_240, %c1024_241] : memref<64x1152xbf16, #tpu.memory_space<vmem>>, vector<64x128xbf16>
    tpu.vector_store %arg13[%c0_240, %c1024_241], %170 {strides = array<i32>} : memref<64x1152xbf16, #tpu.memory_space<vmem>>, vector<64x128xbf16>,
    %c0_242 = arith.constant 0 : index
    %c0_243 = arith.constant 0 : index
    %172 = vector.load %arg13[%c0_242, %c0_243] : memref<64x1152xbf16, #tpu.memory_space<vmem>>, vector<64x1152xbf16>
    %c0_244 = arith.constant 0 : index
    %c0_245 = arith.constant 0 : index
    %173 = vector.load %arg3[%c0_244, %c0_245] : memref<1152x128xbf16, #tpu.memory_space<vmem>>, vector<1152x128xbf16>
    %cst_246 = arith.constant dense<0.000000e+00> : vector<64x128xf32>
    %174 = tpu.matmul %172, %173, %cst_246 {dimension_numbers = #tpu.dot_dimension_numbers<[1], [0], [0], [1], [0, 0, 1, 1], [], []>} : vector<64x1152xbf16>, vector<1152x128xbf16>, vector<64x128xf32> -> vector<64x128xf32>
    %c0_247 = arith.constant 0 : index
    %c0_248 = arith.constant 0 : index
    %c0_249 = arith.constant 0 : index
    %c0_250 = arith.constant 0 : index
    %c0_251 = arith.constant 0 : index
    %175 = vector.load %arg14[%c0_247, %c0_248, %c0_249, %c0_250, %c0_251] : memref<1x4x9x9x128xbf16, #tpu.memory_space<vmem>>, vector<1x1x8x8x128xbf16>
    %176 = vector.shape_cast %175 : vector<1x1x8x8x128xbf16> to vector<1x8x8x128xbf16>
    %177 = vector.shape_cast %176 : vector<1x8x8x128xbf16> to vector<64x128xbf16>
    %c0_252 = arith.constant 0 : index
    %c0_253 = arith.constant 0 : index
    %178 = vector.load %arg12[%c0_252, %c0_253] : memref<64x1152xbf16, #tpu.memory_space<vmem>>, vector<64x128xbf16>
    tpu.vector_store %arg12[%c0_252, %c0_253], %177 {strides = array<i32>} : memref<64x1152xbf16, #tpu.memory_space<vmem>>, vector<64x128xbf16>,
    %c0_254 = arith.constant 0 : index
    %c1_255 = arith.constant 1 : index
    %c0_256 = arith.constant 0 : index
    %c0_257 = arith.constant 0 : index
    %c0_258 = arith.constant 0 : index
    %179 = vector.load %arg14[%c0_254, %c1_255, %c0_256, %c0_257, %c0_258] : memref<1x4x9x9x128xbf16, #tpu.memory_space<vmem>>, vector<1x1x8x8x128xbf16>
    %180 = vector.shape_cast %179 : vector<1x1x8x8x128xbf16> to vector<1x8x8x128xbf16>
    %181 = vector.shape_cast %180 : vector<1x8x8x128xbf16> to vector<64x128xbf16>
    %c0_259 = arith.constant 0 : index
    %c128_260 = arith.constant 128 : index
    %182 = vector.load %arg12[%c0_259, %c128_260] : memref<64x1152xbf16, #tpu.memory_space<vmem>>, vector<64x128xbf16>
    tpu.vector_store %arg12[%c0_259, %c128_260], %181 {strides = array<i32>} : memref<64x1152xbf16, #tpu.memory_space<vmem>>, vector<64x128xbf16>,
    %c0_261 = arith.constant 0 : index
    %c0_262 = arith.constant 0 : index
    %c0_263 = arith.constant 0 : index
    %c1_264 = arith.constant 1 : index
    %c0_265 = arith.constant 0 : index
    %183 = vector.load %arg14[%c0_261, %c0_262, %c0_263, %c1_264, %c0_265] : memref<1x4x9x9x128xbf16, #tpu.memory_space<vmem>>, vector<1x1x8x8x128xbf16>
    %184 = vector.shape_cast %183 : vector<1x1x8x8x128xbf16> to vector<1x8x8x128xbf16>
    %185 = vector.shape_cast %184 : vector<1x8x8x128xbf16> to vector<64x128xbf16>
    %c0_266 = arith.constant 0 : index
    %c256_267 = arith.constant 256 : index
    %186 = vector.load %arg12[%c0_266, %c256_267] : memref<64x1152xbf16, #tpu.memory_space<vmem>>, vector<64x128xbf16>
    tpu.vector_store %arg12[%c0_266, %c256_267], %185 {strides = array<i32>} : memref<64x1152xbf16, #tpu.memory_space<vmem>>, vector<64x128xbf16>,
    %c0_268 = arith.constant 0 : index
    %c2_269 = arith.constant 2 : index
    %c0_270 = arith.constant 0 : index
    %c0_271 = arith.constant 0 : index
    %c0_272 = arith.constant 0 : index
    %187 = vector.load %arg14[%c0_268, %c2_269, %c0_270, %c0_271, %c0_272] : memref<1x4x9x9x128xbf16, #tpu.memory_space<vmem>>, vector<1x1x8x8x128xbf16>
    %188 = vector.shape_cast %187 : vector<1x1x8x8x128xbf16> to vector<1x8x8x128xbf16>
    %189 = vector.shape_cast %188 : vector<1x8x8x128xbf16> to vector<64x128xbf16>
    %c0_273 = arith.constant 0 : index
    %c384_274 = arith.constant 384 : index
    %190 = vector.load %arg12[%c0_273, %c384_274] : memref<64x1152xbf16, #tpu.memory_space<vmem>>, vector<64x128xbf16>
    tpu.vector_store %arg12[%c0_273, %c384_274], %189 {strides = array<i32>} : memref<64x1152xbf16, #tpu.memory_space<vmem>>, vector<64x128xbf16>,
    %c0_275 = arith.constant 0 : index
    %c3_276 = arith.constant 3 : index
    %c0_277 = arith.constant 0 : index
    %c0_278 = arith.constant 0 : index
    %c0_279 = arith.constant 0 : index
    %191 = vector.load %arg14[%c0_275, %c3_276, %c0_277, %c0_278, %c0_279] : memref<1x4x9x9x128xbf16, #tpu.memory_space<vmem>>, vector<1x1x8x8x128xbf16>
    %192 = vector.shape_cast %191 : vector<1x1x8x8x128xbf16> to vector<1x8x8x128xbf16>
    %193 = vector.shape_cast %192 : vector<1x8x8x128xbf16> to vector<64x128xbf16>
    %c0_280 = arith.constant 0 : index
    %c512_281 = arith.constant 512 : index
    %194 = vector.load %arg12[%c0_280, %c512_281] : memref<64x1152xbf16, #tpu.memory_space<vmem>>, vector<64x128xbf16>
    tpu.vector_store %arg12[%c0_280, %c512_281], %193 {strides = array<i32>} : memref<64x1152xbf16, #tpu.memory_space<vmem>>, vector<64x128xbf16>,
    %c0_282 = arith.constant 0 : index
    %c2_283 = arith.constant 2 : index
    %c0_284 = arith.constant 0 : index
    %c1_285 = arith.constant 1 : index
    %c0_286 = arith.constant 0 : index
    %195 = vector.load %arg14[%c0_282, %c2_283, %c0_284, %c1_285, %c0_286] : memref<1x4x9x9x128xbf16, #tpu.memory_space<vmem>>, vector<1x1x8x8x128xbf16>
    %196 = vector.shape_cast %195 : vector<1x1x8x8x128xbf16> to vector<1x8x8x128xbf16>
    %197 = vector.shape_cast %196 : vector<1x8x8x128xbf16> to vector<64x128xbf16>
    %c0_287 = arith.constant 0 : index
    %c640_288 = arith.constant 640 : index
    %198 = vector.load %arg12[%c0_287, %c640_288] : memref<64x1152xbf16, #tpu.memory_space<vmem>>, vector<64x128xbf16>
    tpu.vector_store %arg12[%c0_287, %c640_288], %197 {strides = array<i32>} : memref<64x1152xbf16, #tpu.memory_space<vmem>>, vector<64x128xbf16>,
    %c0_289 = arith.constant 0 : index
    %c0_290 = arith.constant 0 : index
    %c1_291 = arith.constant 1 : index
    %c0_292 = arith.constant 0 : index
    %c0_293 = arith.constant 0 : index
    %199 = vector.load %arg14[%c0_289, %c0_290, %c1_291, %c0_292, %c0_293] : memref<1x4x9x9x128xbf16, #tpu.memory_space<vmem>>, vector<1x1x8x8x128xbf16>
    %200 = vector.shape_cast %199 : vector<1x1x8x8x128xbf16> to vector<1x8x8x128xbf16>
    %201 = vector.shape_cast %200 : vector<1x8x8x128xbf16> to vector<64x128xbf16>
    %c0_294 = arith.constant 0 : index
    %c768_295 = arith.constant 768 : index
    %202 = vector.load %arg12[%c0_294, %c768_295] : memref<64x1152xbf16, #tpu.memory_space<vmem>>, vector<64x128xbf16>
    tpu.vector_store %arg12[%c0_294, %c768_295], %201 {strides = array<i32>} : memref<64x1152xbf16, #tpu.memory_space<vmem>>, vector<64x128xbf16>,
    %c0_296 = arith.constant 0 : index
    %c1_297 = arith.constant 1 : index
    %c1_298 = arith.constant 1 : index
    %c0_299 = arith.constant 0 : index
    %c0_300 = arith.constant 0 : index
    %203 = vector.load %arg14[%c0_296, %c1_297, %c1_298, %c0_299, %c0_300] : memref<1x4x9x9x128xbf16, #tpu.memory_space<vmem>>, vector<1x1x8x8x128xbf16>
    %204 = vector.shape_cast %203 : vector<1x1x8x8x128xbf16> to vector<1x8x8x128xbf16>
    %205 = vector.shape_cast %204 : vector<1x8x8x128xbf16> to vector<64x128xbf16>
    %c0_301 = arith.constant 0 : index
    %c896_302 = arith.constant 896 : index
    %206 = vector.load %arg12[%c0_301, %c896_302] : memref<64x1152xbf16, #tpu.memory_space<vmem>>, vector<64x128xbf16>
    tpu.vector_store %arg12[%c0_301, %c896_302], %205 {strides = array<i32>} : memref<64x1152xbf16, #tpu.memory_space<vmem>>, vector<64x128xbf16>,
    %c0_303 = arith.constant 0 : index
    %c0_304 = arith.constant 0 : index
    %c1_305 = arith.constant 1 : index
    %c1_306 = arith.constant 1 : index
    %c0_307 = arith.constant 0 : index
    %207 = vector.load %arg14[%c0_303, %c0_304, %c1_305, %c1_306, %c0_307] : memref<1x4x9x9x128xbf16, #tpu.memory_space<vmem>>, vector<1x1x8x8x128xbf16>
    %208 = vector.shape_cast %207 : vector<1x1x8x8x128xbf16> to vector<1x8x8x128xbf16>
    %209 = vector.shape_cast %208 : vector<1x8x8x128xbf16> to vector<64x128xbf16>
    %c0_308 = arith.constant 0 : index
    %c1024_309 = arith.constant 1024 : index
    %210 = vector.load %arg12[%c0_308, %c1024_309] : memref<64x1152xbf16, #tpu.memory_space<vmem>>, vector<64x128xbf16>
    tpu.vector_store %arg12[%c0_308, %c1024_309], %209 {strides = array<i32>} : memref<64x1152xbf16, #tpu.memory_space<vmem>>, vector<64x128xbf16>,
    %c0_310 = arith.constant 0 : index
    %c0_311 = arith.constant 0 : index
    %211 = vector.load %arg12[%c0_310, %c0_311] : memref<64x1152xbf16, #tpu.memory_space<vmem>>, vector<64x1152xbf16>
    %c0_312 = arith.constant 0 : index
    %c0_313 = arith.constant 0 : index
    %212 = vector.load %arg4[%c0_312, %c0_313] : memref<1152x128xbf16, #tpu.memory_space<vmem>>, vector<1152x128xbf16>
    %cst_314 = arith.constant dense<0.000000e+00> : vector<64x128xf32>
    %213 = tpu.matmul %211, %212, %cst_314 {dimension_numbers = #tpu.dot_dimension_numbers<[1], [0], [0], [1], [0, 0, 1, 1], [], []>} : vector<64x1152xbf16>, vector<1152x128xbf16>, vector<64x128xf32> -> vector<64x128xf32>
    %214 = arith.addf %174, %213 : vector<64x128xf32>
    %215 = vector.shape_cast %214 : vector<64x128xf32> to vector<1x8x8x128xf32>
    %216 = arith.truncf %215 : vector<1x8x8x128xf32> to vector<1x8x8x128xbf16>
    %c0_315 = arith.constant 0 : index
    %c0_316 = arith.constant 0 : index
    %c0_317 = arith.constant 0 : index
    %c0_318 = arith.constant 0 : index
    %217 = vector.load %arg9[%c0_315, %c0_316, %c0_317, %c0_318] : memref<1x8x8x128xbf16, #tpu.memory_space<vmem>>, vector<1x8x8x128xbf16>
    tpu.vector_store %arg9[%c0_315, %c0_316, %c0_317, %c0_318], %216 {strides = array<i32>} : memref<1x8x8x128xbf16, #tpu.memory_space<vmem>>, vector<1x8x8x128xbf16>,
    return
  }
  func.func @transform_0(%arg0: i32) -> (i32, i32, i32, i32, i32) {
    %c0_i32 = arith.constant 0 : i32
    %c0_i32_0 = arith.constant 0 : i32
    %c0_i32_1 = arith.constant 0 : i32
    %c0_i32_2 = arith.constant 0 : i32
    %c0_i32_3 = arith.constant 0 : i32
    return %arg0, %c0_i32, %c0_i32_0, %c0_i32_1, %c0_i32_2 : i32, i32, i32, i32, i32
  }
  func.func @transform_1(%arg0: i32) -> (i32, i32) {
    %c0_i32 = arith.constant 0 : i32
    %c0_i32_0 = arith.constant 0 : i32
    %c0_i32_1 = arith.constant 0 : i32
    return %c0_i32, %c0_i32_0 : i32, i32
  }
  func.func @transform_2(%arg0: i32) -> (i32, i32) {
    %c0_i32 = arith.constant 0 : i32
    %c0_i32_0 = arith.constant 0 : i32
    %c0_i32_1 = arith.constant 0 : i32
    return %c0_i32, %c0_i32_0 : i32, i32
  }
  func.func @transform_3(%arg0: i32) -> (i32, i32) {
    %c0_i32 = arith.constant 0 : i32
    %c0_i32_0 = arith.constant 0 : i32
    %c0_i32_1 = arith.constant 0 : i32
    return %c0_i32, %c0_i32_0 : i32, i32
  }
  func.func @transform_4(%arg0: i32) -> (i32, i32) {
    %c0_i32 = arith.constant 0 : i32
    %c0_i32_0 = arith.constant 0 : i32
    %c0_i32_1 = arith.constant 0 : i32
    return %c0_i32, %c0_i32_0 : i32, i32
  }
  func.func @transform_5(%arg0: i32) -> (i32, i32) {
    %c0_i32 = arith.constant 0 : i32
    %c0_i32_0 = arith.constant 0 : i32
    %c0_i32_1 = arith.constant 0 : i32
    return %c0_i32, %c0_i32_0 : i32, i32
  }
  func.func @transform_6(%arg0: i32) -> (i32, i32) {
    %c0_i32 = arith.constant 0 : i32
    %c0_i32_0 = arith.constant 0 : i32
    %c0_i32_1 = arith.constant 0 : i32
    return %c0_i32, %c0_i32_0 : i32, i32
  }
  func.func @transform_7(%arg0: i32) -> (i32, i32) {
    %c0_i32 = arith.constant 0 : i32
    %c0_i32_0 = arith.constant 0 : i32
    %c0_i32_1 = arith.constant 0 : i32
    return %c0_i32, %c0_i32_0 : i32, i32
  }
  func.func @transform_8(%arg0: i32) -> (i32, i32, i32, i32) {
    %c0_i32 = arith.constant 0 : i32
    %c0_i32_0 = arith.constant 0 : i32
    %c0_i32_1 = arith.constant 0 : i32
    %c0_i32_2 = arith.constant 0 : i32
    return %arg0, %c0_i32, %c0_i32_0, %c0_i32_1 : i32, i32, i32, i32
  }
}

</mosaic_0001>

<llo_original>
// kernel: tpu_custom_call.1
$region0: #{tpu_custom_call.1}
  #allocation0 [shape = 'u32[]', space=smem, size = 0x4, offset = 0x4, fixed_abs, tag = 'smem constant byte address 0x4 - core index']
  #allocation1 [shape = 'u32[144,128]{1,0:T(1,128)}', space=vmem, size = 0x12000, scoped, tag = 'internal scratch']
  #allocation2 [shape = 'bf16[1,4,9,9,128]{4,3,2,1,0:T(8,128)(2,1)}', space=vmem, size = 0x24000, scoped, tag = 'scratch operand']
  #allocation3 [shape = 'bf16[1,1,10,10,128]{4,3,2,1,0:T(8,128)(2,1)}', space=vmem, size = 0xa000, scoped, tag = 'scratch operand']
  #allocation4 [shape = 'bf16[64,1152]{1,0:T(8,128)(2,1)}', space=vmem, size = 0x24000, scoped, tag = 'scratch operand']
  #allocation5 [shape = 'bf16[64,1152]{1,0:T(8,128)(2,1)}', space=vmem, size = 0x24000, scoped, tag = 'scratch operand']
  #allocation6 [shape = 'bf16[1,4,9,9,128]{4,3,2,1,0:T(8,128)(2,1)}', space=vmem, size = 0x24000, scoped, tag = 'scratch operand']
  %s0 = inlined_call_operand.hbm [shape: bf16[2,4,8,8,128], index: 0, kind: input, shape index: {}]
  %s1 = inlined_call_operand.hbm [shape: bf16[1152,128], index: 1, kind: input, shape index: {}]
  %s2 = inlined_call_operand.hbm [shape: bf16[1152,128], index: 2, kind: input, shape index: {}]
  %s3 = inlined_call_operand.hbm [shape: bf16[1152,128], index: 3, kind: input, shape index: {}]
  %s4 = inlined_call_operand.vmem [shape: f32[1,128], index: 4, kind: input, shape index: {}]
  %s5 = inlined_call_operand.vmem [shape: f32[1,128], index: 5, kind: input, shape index: {}]
  %s6 = inlined_call_operand.vmem [shape: f32[1,128], index: 6, kind: input, shape index: {}]
  %s7 = inlined_call_operand.vmem [shape: f32[1,128], index: 7, kind: input, shape index: {}]
  %s8 = inlined_call_operand.hbm [shape: bf16[2,8,8,128], index: 8, kind: output, shape index: {}]
  %s9 = sld [smem:[#allocation0]]
  $region81: #{tpu_custom_call.1} parent=0
    _
  %s11 = ssub.s32 1, %s9
  %s12 = scalar_select 0, %s11, %s9
  $region1: #{tpu_custom_call.1} parent=0
    #allocation7 [shape = 'u8[131072]{0}', space=vmem, size = 0x20000, scoped, tag = 'input window, operand 0']
    #allocation8 [shape = 's32[2]{0}', space=sflag, size = 0x8, scoped, tag = 'scoped memory for tpu_custom_call.1']
    #allocation9 [shape = 's32[2]{0}', space=sflag, size = 0x8, scoped, tag = 'scoped memory for tpu_custom_call.1']
    #allocation10 [shape = 'u8[294912]{0}', space=vmem, size = 0x48000, scoped, tag = 'input window, operand 1, single buffered']
    #allocation11 [shape = 's32[1]{0}', space=sflag, size = 0x4, scoped, tag = 'scoped memory for tpu_custom_call.1']
    #allocation12 [shape = 'u8[294912]{0}', space=vmem, size = 0x48000, scoped, tag = 'input window, operand 2, single buffered']
    #allocation13 [shape = 'u8[294912]{0}', space=vmem, size = 0x48000, scoped, tag = 'input window, operand 3, single buffered']
    #allocation14 [shape = 's32[1]{0}', space=sflag, size = 0x4, scoped, tag = 'scoped memory for tpu_custom_call.1']
    #allocation15 [shape = 'u8[32768]{0}', space=vmem, size = 0x8000, scoped, tag = 'output window, operand 0']
    %13 = vsyncpa [#allocation8], 0
    %s14 = scalar_lea.sflag [#allocation8], 1
    %15 = vsyncpa %s14, 0
    %16 = vsyncpa [#allocation11], 0
    %17 = vsyncpa [#allocation14], 0
    %18 = vsyncpa [#allocation9], 0
    %s19 = scalar_lea.sflag [#allocation9], 1
    %20 = vsyncpa %s19, 0
    loop: start=0, step=1, limit=4
    $region2: #{tpu_custom_call.1} parent=1 // loop_pre_header
      _
    $region3: #{tpu_custom_call.1} parent=1 // loop_header
      %s22 = sphi 0, %s26
      %p23 = scmp.ge.s32.totalorder %s22, 4
      %s32 = sphi 0, %s34
      %s35 = sphi 0, %s32
      %s36 = sphi 0, %s35
      %s52 = sphi 0, %s36
      %s56 = sphi 0, %s56
      %s58 = sphi 0, %s56
      %s59 = sphi 0, %s58
      %s73 = sphi 0, %s59
      %s77 = sphi 0, %s77
      %s79 = sphi 0, %s77
      %s80 = sphi 0, %s79
      %s94 = sphi 0, %s80
      %s98 = sphi 0, %s98
      %s100 = sphi 0, %s98
      %s101 = sphi 0, %s100
      %s115 = sphi 0, %s101
      %s119 = sphi 0, %s119
      %s121 = sphi 0, %s119
      %s122 = sphi 0, %s121
      %s136 = sphi 0, %s122
      %s140 = sphi 0, %s140
      %s142 = sphi 0, %s140
      %s143 = sphi 0, %s142
      %s157 = sphi 0, %s143
      %s161 = sphi 0, %s161
      %s163 = sphi 0, %s161
      %s164 = sphi 0, %s163
      %s178 = sphi 0, %s164
      %s182 = sphi 0, %s182
      %s184 = sphi 0, %s182
      %s185 = sphi 0, %s184
      %s199 = sphi 0, %s185
      %s205 = sphi 0, %s207
      %s208 = sphi 0, %s205
      %s209 = sphi 0, %s208
      %s225 = sphi 0, %s209
    $region4: #{tpu_custom_call.1} parent=1 // loop_header_branch
      %25 = sbr.rel (%p23) target = $region8
    $region5: #{tpu_custom_call.1} parent=1 // loop_body
      %s27 = ssub.s32 %s22, 1
      %s28 = ssub.s32 %s22, 2
      %s29 = sadd.s32 %s22, 1
      %s30 = ssub.s32 %s22, %s29
      %p31 = scmp.eq.s32.totalorder %s30, 0
      %s33 = sadd.s32 %s32, 1
      %s34 = scalar_select %p31, %s32, %s33
      %p37 = pneg %p31
      %p38 = scmp.eq.s32.totalorder %s22, 1
      %p39 = por %p37, %p38
      %p40 = scmp.ne.s32.totalorder %s32, %s35
      %p41 = scmp.eq.s32.totalorder %s22, 0
      %p42 = por %p40, %p41
      %p43 = scmp.ne.s32.totalorder %s32, %s35
      %p44 = scmp.eq.s32.totalorder %s27, 1
      %p45 = por %p43, %p44
      %p46 = scmp.ne.s32.totalorder %s35, %s36
      %p47 = scmp.eq.s32.totalorder %s27, 0
      %p48 = por %p46, %p47
      %p49 = scmp.ne.s32.totalorder %s35, %s36
      %p50 = scmp.eq.s32.totalorder %s28, 1
      %p51 = por %p49, %p50
      %p53 = scmp.ne.s32.totalorder %s36, %s52
      %p54 = scmp.eq.s32.totalorder %s28, 0
      %p55 = por %p53, %p54
      %s57 = sadd.s32 %s56, 1
      %p60 = scmp.eq.s32.totalorder %s22, 1
      %p61 = scmp.ne.s32.totalorder %s56, %s58
      %p62 = scmp.eq.s32.totalorder %s22, 0
      %p63 = por %p61, %p62
      %p64 = scmp.ne.s32.totalorder %s56, %s58
      %p65 = scmp.eq.s32.totalorder %s27, 1
      %p66 = por %p64, %p65
      %p67 = scmp.ne.s32.totalorder %s58, %s59
      %p68 = scmp.eq.s32.totalorder %s27, 0
      %p69 = por %p67, %p68
      %p70 = scmp.ne.s32.totalorder %s58, %s59
      %p71 = scmp.eq.s32.totalorder %s28, 1
      %p72 = por %p70, %p71
      %p74 = scmp.ne.s32.totalorder %s59, %s73
      %p75 = scmp.eq.s32.totalorder %s28, 0
      %p76 = por %p74, %p75
      %s78 = sadd.s32 %s77, 1
      %p81 = scmp.eq.s32.totalorder %s22, 1
      %p82 = scmp.ne.s32.totalorder %s77, %s79
      %p83 = scmp.eq.s32.totalorder %s22, 0
      %p84 = por %p82, %p83
      %p85 = scmp.ne.s32.totalorder %s77, %s79
      %p86 = scmp.eq.s32.totalorder %s27, 1
      %p87 = por %p85, %p86
      %p88 = scmp.ne.s32.totalorder %s79, %s80
      %p89 = scmp.eq.s32.totalorder %s27, 0
      %p90 = por %p88, %p89
      %p91 = scmp.ne.s32.totalorder %s79, %s80
      %p92 = scmp.eq.s32.totalorder %s28, 1
      %p93 = por %p91, %p92
      %p95 = scmp.ne.s32.totalorder %s80, %s94
      %p96 = scmp.eq.s32.totalorder %s28, 0
      %p97 = por %p95, %p96
      %s99 = sadd.s32 %s98, 1
      %p102 = scmp.eq.s32.totalorder %s22, 1
      %p103 = scmp.ne.s32.totalorder %s98, %s100
      %p104 = scmp.eq.s32.totalorder %s22, 0
      %p105 = por %p103, %p104
      %p106 = scmp.ne.s32.totalorder %s98, %s100
      %p107 = scmp.eq.s32.totalorder %s27, 1
      %p108 = por %p106, %p107
      %p109 = scmp.ne.s32.totalorder %s100, %s101
      %p110 = scmp.eq.s32.totalorder %s27, 0
      %p111 = por %p109, %p110
      %p112 = scmp.ne.s32.totalorder %s100, %s101
      %p113 = scmp.eq.s32.totalorder %s28, 1
      %p114 = por %p112, %p113
      %p116 = scmp.ne.s32.totalorder %s101, %s115
      %p117 = scmp.eq.s32.totalorder %s28, 0
      %p118 = por %p116, %p117
      %s120 = sadd.s32 %s119, 1
      %p123 = scmp.eq.s32.totalorder %s22, 1
      %p124 = scmp.ne.s32.totalorder %s119, %s121
      %p125 = scmp.eq.s32.totalorder %s22, 0
      %p126 = por %p124, %p125
      %p127 = scmp.ne.s32.totalorder %s119, %s121
      %p128 = scmp.eq.s32.totalorder %s27, 1
      %p129 = por %p127, %p128
      %p130 = scmp.ne.s32.totalorder %s121, %s122
      %p131 = scmp.eq.s32.totalorder %s27, 0
      %p132 = por %p130, %p131
      %p133 = scmp.ne.s32.totalorder %s121, %s122
      %p134 = scmp.eq.s32.totalorder %s28, 1
      %p135 = por %p133, %p134
      %p137 = scmp.ne.s32.totalorder %s122, %s136
      %p138 = scmp.eq.s32.totalorder %s28, 0
      %p139 = por %p137, %p138
      %s141 = sadd.s32 %s140, 1
      %p144 = scmp.eq.s32.totalorder %s22, 1
      %p145 = scmp.ne.s32.totalorder %s140, %s142
      %p146 = scmp.eq.s32.totalorder %s22, 0
      %p147 = por %p145, %p146
      %p148 = scmp.ne.s32.totalorder %s140, %s142
      %p149 = scmp.eq.s32.totalorder %s27, 1
      %p150 = por %p148, %p149
      %p151 = scmp.ne.s32.totalorder %s142, %s143
      %p152 = scmp.eq.s32.totalorder %s27, 0
      %p153 = por %p151, %p152
      %p154 = scmp.ne.s32.totalorder %s142, %s143
      %p155 = scmp.eq.s32.totalorder %s28, 1
      %p156 = por %p154, %p155
      %p158 = scmp.ne.s32.totalorder %s143, %s157
      %p159 = scmp.eq.s32.totalorder %s28, 0
      %p160 = por %p158, %p159
      %s162 = sadd.s32 %s161, 1
      %p165 = scmp.eq.s32.totalorder %s22, 1
      %p166 = scmp.ne.s32.totalorder %s161, %s163
      %p167 = scmp.eq.s32.totalorder %s22, 0
      %p168 = por %p166, %p167
      %p169 = scmp.ne.s32.totalorder %s161, %s163
      %p170 = scmp.eq.s32.totalorder %s27, 1
      %p171 = por %p169, %p170
      %p172 = scmp.ne.s32.totalorder %s163, %s164
      %p173 = scmp.eq.s32.totalorder %s27, 0
      %p174 = por %p172, %p173
      %p175 = scmp.ne.s32.totalorder %s163, %s164
      %p176 = scmp.eq.s32.totalorder %s28, 1
      %p177 = por %p175, %p176
      %p179 = scmp.ne.s32.totalorder %s164, %s178
      %p180 = scmp.eq.s32.totalorder %s28, 0
      %p181 = por %p179, %p180
      %s183 = sadd.s32 %s182, 1
      %p186 = scmp.eq.s32.totalorder %s22, 1
      %p187 = scmp.ne.s32.totalorder %s182, %s184
      %p188 = scmp.eq.s32.totalorder %s22, 0
      %p189 = por %p187, %p188
      %p190 = scmp.ne.s32.totalorder %s182, %s184
      %p191 = scmp.eq.s32.totalorder %s27, 1
      %p192 = por %p190, %p191
      %p193 = scmp.ne.s32.totalorder %s184, %s185
      %p194 = scmp.eq.s32.totalorder %s27, 0
      %p195 = por %p193, %p194
      %p196 = scmp.ne.s32.totalorder %s184, %s185
      %p197 = scmp.eq.s32.totalorder %s28, 1
      %p198 = por %p196, %p197
      %p200 = scmp.ne.s32.totalorder %s185, %s199
      %p201 = scmp.eq.s32.totalorder %s28, 0
      %p202 = por %p200, %p201
      %s203 = ssub.s32 %s22, %s29
      %p204 = scmp.eq.s32.totalorder %s203, 0
      %s206 = sadd.s32 %s205, 1
      %s207 = scalar_select %p204, %s205, %s206
      %p210 = pneg %p204
      %p211 = scmp.eq.s32.totalorder %s22, 1
      %p212 = por %p210, %p211
      %p213 = scmp.ne.s32.totalorder %s205, %s208
      %p214 = scmp.eq.s32.totalorder %s22, 0
      %p215 = por %p213, %p214
      %p216 = scmp.ne.s32.totalorder %s205, %s208
      %p217 = scmp.eq.s32.totalorder %s27, 1
      %p218 = por %p216, %p217
      %p219 = scmp.ne.s32.totalorder %s208, %s209
      %p220 = scmp.eq.s32.totalorder %s27, 0
      %p221 = por %p219, %p220
      %p222 = scmp.ne.s32.totalorder %s208, %s209
      %p223 = scmp.eq.s32.totalorder %s28, 1
      %p224 = por %p222, %p223
      %p226 = scmp.ne.s32.totalorder %s209, %s225
      %p227 = scmp.eq.s32.totalorder %s28, 0
      %p228 = por %p226, %p227
      %p229 = scmp.le.s32.totalorder 1, %s22
      %p230 = scmp.lt.s32.totalorder %s22, 3
      %p231 = pnand %p229, %p230
      %p232 = pneg %p231
      // Predicated region
      $region9: #{tpu_custom_call.1} parent=5 // pred_check
        _
      $region10: #{tpu_custom_call.1} parent=5 // pred_check_branch
        %234 = sbr.rel (%p231) target = $region12
      $region11: #{tpu_custom_call.1} parent=5 // pred_region
        %s235 = ssub.s32 %s22, 1
        // Predicated region
        $region13: #{tpu_custom_call.1} parent=11 // pred_check
          %p236 = pneg %p69
        $region14: #{tpu_custom_call.1} parent=11 // pred_check_branch
          %238 = sbr.rel (%p236) target = $region16
        $region15: #{tpu_custom_call.1} parent=11 // pred_region
          %s240 = ssub.s32 9216, 9216
          %241 = vsyncadd [#allocation11], %s240
          %s242 = sshll.u32 [#allocation10], 4
          %s243 = int_to_ptr.vmem [resolvable:$true] %s242
          %248 = dma.hbm_to_vmem [thread:$0]  %s1, 9216, %s243, [#allocation11], 64, 64, 4
        $region16: #{tpu_custom_call.1} parent=11 // pred_fallthru
          _
        // Predicated region
        $region17: #{tpu_custom_call.1} parent=11 // pred_check
          %p249 = pneg %p90
        $region18: #{tpu_custom_call.1} parent=11 // pred_check_branch
          %251 = sbr.rel (%p249) target = $region20
        $region19: #{tpu_custom_call.1} parent=11 // pred_region
          %s253 = ssub.s32 9216, 9216
          %254 = vsyncadd [#allocation11], %s253
          %s255 = sshll.u32 [#allocation12], 4
          %s256 = int_to_ptr.vmem [resolvable:$true] %s255
          %261 = dma.hbm_to_vmem [thread:$0]  %s2, 9216, %s256, [#allocation11], 64, 64, 4
        $region20: #{tpu_custom_call.1} parent=11 // pred_fallthru
          _
        // Predicated region
        $region21: #{tpu_custom_call.1} parent=11 // pred_check
          %p262 = pneg %p111
        $region22: #{tpu_custom_call.1} parent=11 // pred_check_branch
          %264 = sbr.rel (%p262) target = $region24
        $region23: #{tpu_custom_call.1} parent=11 // pred_region
          %s266 = ssub.s32 9216, 9216
          %267 = vsyncadd [#allocation14], %s266
          %s268 = sshll.u32 [#allocation13], 4
          %s269 = int_to_ptr.vmem [resolvable:$true] %s268
          %274 = dma.hbm_to_vmem [thread:$0]  %s3, 9216, %s269, [#allocation14], 64, 64, 4
        $region24: #{tpu_custom_call.1} parent=11 // pred_fallthru
          _
        // Predicated region
        $region25: #{tpu_custom_call.1} parent=11 // pred_check
          %p275 = pneg %p132
        $region26: #{tpu_custom_call.1} parent=11 // pred_check_branch
          %277 = sbr.rel (%p275) target = $region28
        $region27: #{tpu_custom_call.1} parent=11 // pred_region
          _
        $region28: #{tpu_custom_call.1} parent=11 // pred_fallthru
          _
        // Predicated region
        $region29: #{tpu_custom_call.1} parent=11 // pred_check
          %p278 = pneg %p153
        $region30: #{tpu_custom_call.1} parent=11 // pred_check_branch
          %280 = sbr.rel (%p278) target = $region32
        $region31: #{tpu_custom_call.1} parent=11 // pred_region
          _
        $region32: #{tpu_custom_call.1} parent=11 // pred_fallthru
          _
        // Predicated region
        $region33: #{tpu_custom_call.1} parent=11 // pred_check
          %p281 = pneg %p174
        $region34: #{tpu_custom_call.1} parent=11 // pred_check_branch
          %283 = sbr.rel (%p281) target = $region36
        $region35: #{tpu_custom_call.1} parent=11 // pred_region
          _
        $region36: #{tpu_custom_call.1} parent=11 // pred_fallthru
          _
        // Predicated region
        $region37: #{tpu_custom_call.1} parent=11 // pred_check
          %p284 = pneg %p195
        $region38: #{tpu_custom_call.1} parent=11 // pred_check_branch
          %286 = sbr.rel (%p284) target = $region40
        $region39: #{tpu_custom_call.1} parent=11 // pred_region
          _
        $region40: #{tpu_custom_call.1} parent=11 // pred_fallthru
          _
      $region12: #{tpu_custom_call.1} parent=5 // pred_fallthru
        _
      %p287 = scmp.lt.s32.totalorder %s22, 2
      // Predicated region
      $region41: #{tpu_custom_call.1} parent=5 // pred_check
        %p288 = pneg %p287
      $region42: #{tpu_custom_call.1} parent=5 // pred_check_branch
        %290 = sbr.rel (%p288) target = $region44
      $region43: #{tpu_custom_call.1} parent=5 // pred_region
        // Predicated region
        $region45: #{tpu_custom_call.1} parent=43 // pred_check
          %p291 = pneg %p42
        $region46: #{tpu_custom_call.1} parent=43 // pred_check_branch
          %293 = sbr.rel (%p291) target = $region48
        $region47: #{tpu_custom_call.1} parent=43 // pred_region
          %s294 = sand.u32 %s32, 1
          %s295 = scalar_lea.sflag [#allocation8], %s294
          %s296 = sand.u32 %s32, 1
          %s297 = smul.addr %s296, 128
          %s298 = scalar_lea.vmem [#allocation7], %s297
          %s300 = ssub.s32 2048, 2048
          %301 = vsyncadd %s295, %s300
          %s302 = smul.addr %s22, 32
          %s303 = smul.addr %s302, 64
          %s304 = scalar_lea.hbm %s0, %s303
          %s305 = sshll.u32 %s298, 4
          %s306 = int_to_ptr.vmem [resolvable:$true] %s305
          %311 = dma.hbm_to_vmem [thread:$0]  %s304, 2048, %s306, %s295, 64, 64, 4
        $region48: #{tpu_custom_call.1} parent=43 // pred_fallthru
          _
      $region44: #{tpu_custom_call.1} parent=5 // pred_fallthru
        _
      %p312 = scmp.le.s32.totalorder 1, %s22
      %p313 = scmp.lt.s32.totalorder %s22, 3
      %p314 = pnand %p312, %p313
      %p315 = pneg %p314
      // Predicated region
      $region49: #{tpu_custom_call.1} parent=5 // pred_check
        _
      $region50: #{tpu_custom_call.1} parent=5 // pred_check_branch
        %317 = sbr.rel (%p314) target = $region52
      $region51: #{tpu_custom_call.1} parent=5 // pred_region
        %s318 = ssub.s32 %s22, 1
        %s319 = sand.u32 %s35, 1
        %s320 = scalar_lea.sflag [#allocation8], %s319
        %s321 = sand.u32 %s35, 1
        %s322 = smul.addr %s321, 128
        %s323 = scalar_lea.vmem [#allocation7], %s322
        // Predicated region
        $region53: #{tpu_custom_call.1} parent=51 // pred_check
          %p324 = pneg %p48
        $region54: #{tpu_custom_call.1} parent=51 // pred_check_branch
          %326 = sbr.rel (%p324) target = $region56
        $region55: #{tpu_custom_call.1} parent=51 // pred_region
          %327 = dma.done %s320, 2048
        $region56: #{tpu_custom_call.1} parent=51 // pred_fallthru
          _
        // Predicated region
        $region57: #{tpu_custom_call.1} parent=51 // pred_check
          %p328 = pneg %p69
        $region58: #{tpu_custom_call.1} parent=51 // pred_check_branch
          %330 = sbr.rel (%p328) target = $region60
        $region59: #{tpu_custom_call.1} parent=51 // pred_region
          %331 = dma.done [#allocation11], 9216
        $region60: #{tpu_custom_call.1} parent=51 // pred_fallthru
          _
        // Predicated region
        $region61: #{tpu_custom_call.1} parent=51 // pred_check
          %p332 = pneg %p90
        $region62: #{tpu_custom_call.1} parent=51 // pred_check_branch
          %334 = sbr.rel (%p332) target = $region64
        $region63: #{tpu_custom_call.1} parent=51 // pred_region
          %335 = dma.done [#allocation11], 9216
        $region64: #{tpu_custom_call.1} parent=51 // pred_fallthru
          _
        // Predicated region
        $region65: #{tpu_custom_call.1} parent=51 // pred_check
          %p336 = pneg %p111
        $region66: #{tpu_custom_call.1} parent=51 // pred_check_branch
          %338 = sbr.rel (%p336) target = $region68
        $region67: #{tpu_custom_call.1} parent=51 // pred_region
          %339 = dma.done [#allocation14], 9216
        $region68: #{tpu_custom_call.1} parent=51 // pred_fallthru
          _
        %s340 = sand.u32 %s35, 1
        %s341 = scalar_lea.sflag [#allocation8], %s340
        %s342 = sand.u32 %s35, 1
        %s343 = smul.addr %s342, 128
        %s344 = scalar_lea.vmem [#allocation7], %s343
        %p345 = pneg %p48
        %p346 = pneg %p45
        %p347 = pneg %p69
        %p348 = pneg %p66
        %p349 = pneg %p90
        %p350 = pneg %p87
        %p351 = pneg %p111
        %p352 = pneg %p108
        %p353 = pneg %p132
        %p354 = pneg %p129
        %p355 = pneg %p153
        %p356 = pneg %p150
        %p357 = pneg %p174
        %p358 = pneg %p171
        %p359 = pneg %p195
        %p360 = pneg %p192
        %p361 = pneg %p221
        %p362 = pneg %p218
        %s363 = sand.u32 %s208, 1
        %s364 = scalar_lea.sflag [#allocation9], %s363
        %s365 = sand.u32 %s208, 1
        %s366 = smul.addr %s365, 32
        %s367 = scalar_lea.vmem [#allocation15], %s366
        %s369 = scalar_lea.vmem [#allocation2], 64
        %370 = vst [vmem:[%s369] sm:$0xf] 0
        %vm371 = vcmask 1040384
        %vm372 = vsmask.f32 256
        %vm373 = vmand %vm371, %vm372
        %v374 = vld [vmem:[%s369 + $0x4] sm:$0x1]
        %v375 = vsel %vm373, 0, %v374
        %376 = vst [vmem:[%s369 + $0x4] sm:$0x1] %v375
        %377 = vst [vmem:[%s369 + $0x48] sm:$0xf] 0
        %v378 = vld [vmem:[%s369 + $0x4c] sm:$0x1]
        %v379 = vsel %vm373, 0, %v378
        %380 = vst [vmem:[%s369 + $0x4c] sm:$0x1] %v379
        %381 = vst [vmem:[%s369 + $0x90] sm:$0xf] 0
        %v382 = vld [vmem:[%s369 + $0x94] sm:$0x1]
        %v383 = vsel %vm373, 0, %v382
        %384 = vst [vmem:[%s369 + $0x94] sm:$0x1] %v383
        %385 = vst [vmem:[%s369 + $0xd8] sm:$0xf] 0
        %v386 = vld [vmem:[%s369 + $0xdc] sm:$0x1]
        %v387 = vsel %vm373, 0, %v386
        %388 = vst [vmem:[%s369 + $0xdc] sm:$0x1] %v387
        %v389 = vld [vmem:[#allocation2 + $0x4] sm:$0x1]
        %v390 = vsel %vm373, 0, %v389
        %391 = vst [vmem:[#allocation2 + $0x4] sm:$0x1] %v390
        %v392 = vld [vmem:[#allocation2 + $0xc] sm:$0x1]
        %v393 = vsel %vm373, 0, %v392
        %394 = vst [vmem:[#allocation2 + $0xc] sm:$0x1] %v393
        %v395 = vld [vmem:[#allocation2 + $0x14] sm:$0x1]
        %v396 = vsel %vm373, 0, %v395
        %397 = vst [vmem:[#allocation2 + $0x14] sm:$0x1] %v396
        %v398 = vld [vmem:[#allocation2 + $0x1c] sm:$0x1]
        %v399 = vsel %vm373, 0, %v398
        %400 = vst [vmem:[#allocation2 + $0x1c] sm:$0x1] %v399
        %v401 = vld [vmem:[#allocation2 + $0x24] sm:$0x1]
        %v402 = vsel %vm373, 0, %v401
        %403 = vst [vmem:[#allocation2 + $0x24] sm:$0x1] %v402
        %v404 = vld [vmem:[#allocation2 + $0x2c] sm:$0x1]
        %v405 = vsel %vm373, 0, %v404
        %406 = vst [vmem:[#allocation2 + $0x2c] sm:$0x1] %v405
        %v407 = vld [vmem:[#allocation2 + $0x34] sm:$0x1]
        %v408 = vsel %vm373, 0, %v407
        %409 = vst [vmem:[#allocation2 + $0x34] sm:$0x1] %v408
        %v410 = vld [vmem:[#allocation2 + $0x3c] sm:$0x1]
        %v411 = vsel %vm373, 0, %v410
        %412 = vst [vmem:[#allocation2 + $0x3c] sm:$0x1] %v411
        %v413 = vld [vmem:[#allocation2 + $0x44] sm:$0x1]
        %v414 = vsel %vm373, 0, %v413
        %415 = vst [vmem:[#allocation2 + $0x44] sm:$0x1] %v414
        %v416 = vld [vmem:[#allocation2 + $0x4c] sm:$0x1]
        %v417 = vsel %vm373, 0, %v416
        %418 = vst [vmem:[#allocation2 + $0x4c] sm:$0x1] %v417
        %v419 = vld [vmem:[#allocation2 + $0x54] sm:$0x1]
        %v420 = vsel %vm373, 0, %v419
        %421 = vst [vmem:[#allocation2 + $0x54] sm:$0x1] %v420
        %v422 = vld [vmem:[#allocation2 + $0x5c] sm:$0x1]
        %v423 = vsel %vm373, 0, %v422
        %424 = vst [vmem:[#allocation2 + $0x5c] sm:$0x1] %v423
        %v425 = vld [vmem:[#allocation2 + $0x64] sm:$0x1]
        %v426 = vsel %vm373, 0, %v425
        %427 = vst [vmem:[#allocation2 + $0x64] sm:$0x1] %v426
        %v428 = vld [vmem:[#allocation2 + $0x6c] sm:$0x1]
        %v429 = vsel %vm373, 0, %v428
        %430 = vst [vmem:[#allocation2 + $0x6c] sm:$0x1] %v429
        %v431 = vld [vmem:[#allocation2 + $0x74] sm:$0x1]
        %v432 = vsel %vm373, 0, %v431
        %433 = vst [vmem:[#allocation2 + $0x74] sm:$0x1] %v432
        %v434 = vld [vmem:[#allocation2 + $0x7c] sm:$0x1]
        %v435 = vsel %vm373, 0, %v434
        %436 = vst [vmem:[#allocation2 + $0x7c] sm:$0x1] %v435
        %v437 = vld [vmem:[#allocation2 + $0x84] sm:$0x1]
        %v438 = vsel %vm373, 0, %v437
        %439 = vst [vmem:[#allocation2 + $0x84] sm:$0x1] %v438
        %v440 = vld [vmem:[#allocation2 + $0x8c] sm:$0x1]
        %v441 = vsel %vm373, 0, %v440
        %442 = vst [vmem:[#allocation2 + $0x8c] sm:$0x1] %v441
        %v443 = vld [vmem:[#allocation2 + $0x94] sm:$0x1]
        %v444 = vsel %vm373, 0, %v443
        %445 = vst [vmem:[#allocation2 + $0x94] sm:$0x1] %v444
        %v446 = vld [vmem:[#allocation2 + $0x9c] sm:$0x1]
        %v447 = vsel %vm373, 0, %v446
        %448 = vst [vmem:[#allocation2 + $0x9c] sm:$0x1] %v447
        %v449 = vld [vmem:[#allocation2 + $0xa4] sm:$0x1]
        %v450 = vsel %vm373, 0, %v449
        %451 = vst [vmem:[#allocation2 + $0xa4] sm:$0x1] %v450
        %v452 = vld [vmem:[#allocation2 + $0xac] sm:$0x1]
        %v453 = vsel %vm373, 0, %v452
        %454 = vst [vmem:[#allocation2 + $0xac] sm:$0x1] %v453
        %v455 = vld [vmem:[#allocation2 + $0xb4] sm:$0x1]
        %v456 = vsel %vm373, 0, %v455
        %457 = vst [vmem:[#allocation2 + $0xb4] sm:$0x1] %v456
        %v458 = vld [vmem:[#allocation2 + $0xbc] sm:$0x1]
        %v459 = vsel %vm373, 0, %v458
        %460 = vst [vmem:[#allocation2 + $0xbc] sm:$0x1] %v459
        %v461 = vld [vmem:[#allocation2 + $0xc4] sm:$0x1]
        %v462 = vsel %vm373, 0, %v461
        %463 = vst [vmem:[#allocation2 + $0xc4] sm:$0x1] %v462
        %v464 = vld [vmem:[#allocation2 + $0xcc] sm:$0x1]
        %v465 = vsel %vm373, 0, %v464
        %466 = vst [vmem:[#allocation2 + $0xcc] sm:$0x1] %v465
        %v467 = vld [vmem:[#allocation2 + $0xd4] sm:$0x1]
        %v468 = vsel %vm373, 0, %v467
        %469 = vst [vmem:[#allocation2 + $0xd4] sm:$0x1] %v468
        %v470 = vld [vmem:[#allocation2 + $0xdc] sm:$0x1]
        %v471 = vsel %vm373, 0, %v470
        %472 = vst [vmem:[#allocation2 + $0xdc] sm:$0x1] %v471
        %v473 = vld [vmem:[#allocation2 + $0xe4] sm:$0x1]
        %v474 = vsel %vm373, 0, %v473
        %475 = vst [vmem:[#allocation2 + $0xe4] sm:$0x1] %v474
        %v476 = vld [vmem:[#allocation2 + $0xec] sm:$0x1]
        %v477 = vsel %vm373, 0, %v476
        %478 = vst [vmem:[#allocation2 + $0xec] sm:$0x1] %v477
        %v479 = vld [vmem:[#allocation2 + $0xf4] sm:$0x1]
        %v480 = vsel %vm373, 0, %v479
        %481 = vst [vmem:[#allocation2 + $0xf4] sm:$0x1] %v480
        %v482 = vld [vmem:[#allocation2 + $0xfc] sm:$0x1]
        %v483 = vsel %vm373, 0, %v482
        %484 = vst [vmem:[#allocation2 + $0xfc] sm:$0x1] %v483
        %v485 = vld [vmem:[#allocation2 + $0x104] sm:$0x1]
        %v486 = vsel %vm373, 0, %v485
        %487 = vst [vmem:[#allocation2 + $0x104] sm:$0x1] %v486
        %v488 = vld [vmem:[#allocation2 + $0x10c] sm:$0x1]
        %v489 = vsel %vm373, 0, %v488
        %490 = vst [vmem:[#allocation2 + $0x10c] sm:$0x1] %v489
        %v491 = vld [vmem:[#allocation2 + $0x114] sm:$0x1]
        %v492 = vsel %vm373, 0, %v491
        %493 = vst [vmem:[#allocation2 + $0x114] sm:$0x1] %v492
        %v494 = vld [vmem:[#allocation2 + $0x11c] sm:$0x1]
        %v495 = vsel %vm373, 0, %v494
        %496 = vst [vmem:[#allocation2 + $0x11c] sm:$0x1] %v495
        %497 = vst [vmem:[#allocation3] sm:$0xf] 0
        %498 = vst [vmem:[#allocation3 + $0x4] sm:$0x1] 0
        %v499 = vld [vmem:[#allocation3] sm:$0x1]
        %v500 = vsel %vm373, 0, %v499
        %501 = vst [vmem:[#allocation3] sm:$0x1] %v500
        %v502 = vld [vmem:[#allocation3 + $0x8] sm:$0x1]
        %v503 = vsel %vm373, 0, %v502
        %504 = vst [vmem:[#allocation3 + $0x8] sm:$0x1] %v503
        %v505 = vld [vmem:[#allocation3 + $0x10] sm:$0x1]
        %v506 = vsel %vm373, 0, %v505
        %507 = vst [vmem:[#allocation3 + $0x10] sm:$0x1] %v506
        %v508 = vld [vmem:[#allocation3 + $0x18] sm:$0x1]
        %v509 = vsel %vm373, 0, %v508
        %510 = vst [vmem:[#allocation3 + $0x18] sm:$0x1] %v509
        %v511 = vld [vmem:[#allocation3 + $0x20] sm:$0x1]
        %v512 = vsel %vm373, 0, %v511
        %513 = vst [vmem:[#allocation3 + $0x20] sm:$0x1] %v512
        %v514 = vld [vmem:[#allocation3 + $0x28] sm:$0x1]
        %v515 = vsel %vm373, 0, %v514
        %516 = vst [vmem:[#allocation3 + $0x28] sm:$0x1] %v515
        %v517 = vld [vmem:[#allocation3 + $0x30] sm:$0x1]
        %v518 = vsel %vm373, 0, %v517
        %519 = vst [vmem:[#allocation3 + $0x30] sm:$0x1] %v518
        %v520 = vld [vmem:[#allocation3 + $0x38] sm:$0x1]
        %v521 = vsel %vm373, 0, %v520
        %522 = vst [vmem:[#allocation3 + $0x38] sm:$0x1] %v521
        %v523 = vld [vmem:[#allocation3 + $0x40] sm:$0x1]
        %v524 = vsel %vm373, 0, %v523
        %525 = vst [vmem:[#allocation3 + $0x40] sm:$0x1] %v524
        %v526 = vld [vmem:[#allocation3 + $0x48] sm:$0x1]
        %v527 = vsel %vm373, 0, %v526
        %528 = vst [vmem:[#allocation3 + $0x48] sm:$0x1] %v527
        %s529 = scalar_lea.vmem [#allocation3], 72
        %530 = vst [vmem:[%s529] sm:$0xf] 0
        %531 = vst [vmem:[%s529 + $0x4] sm:$0x1] 0
        %vm532 = vsmask.f32 7938
        %vm533 = vmand %vm371, %vm532
        %v534 = vld [vmem:[#allocation3 + $0x4] sm:$0x1]
        %v535 = vsel %vm533, 0, %v534
        %536 = vst [vmem:[#allocation3 + $0x4] sm:$0x1] %v535
        %v537 = vld [vmem:[#allocation3 + $0xc] sm:$0x1]
        %v538 = vsel %vm533, 0, %v537
        %539 = vst [vmem:[#allocation3 + $0xc] sm:$0x1] %v538
        %v540 = vld [vmem:[#allocation3 + $0x14] sm:$0x1]
        %v541 = vsel %vm533, 0, %v540
        %542 = vst [vmem:[#allocation3 + $0x14] sm:$0x1] %v541
        %v543 = vld [vmem:[#allocation3 + $0x1c] sm:$0x1]
        %v544 = vsel %vm533, 0, %v543
        %545 = vst [vmem:[#allocation3 + $0x1c] sm:$0x1] %v544
        %v546 = vld [vmem:[#allocation3 + $0x24] sm:$0x1]
        %v547 = vsel %vm533, 0, %v546
        %548 = vst [vmem:[#allocation3 + $0x24] sm:$0x1] %v547
        %v549 = vld [vmem:[#allocation3 + $0x2c] sm:$0x1]
        %v550 = vsel %vm533, 0, %v549
        %551 = vst [vmem:[#allocation3 + $0x2c] sm:$0x1] %v550
        %v552 = vld [vmem:[#allocation3 + $0x34] sm:$0x1]
        %v553 = vsel %vm533, 0, %v552
        %554 = vst [vmem:[#allocation3 + $0x34] sm:$0x1] %v553
        %v555 = vld [vmem:[#allocation3 + $0x3c] sm:$0x1]
        %v556 = vsel %vm533, 0, %v555
        %557 = vst [vmem:[#allocation3 + $0x3c] sm:$0x1] %v556
        %v558 = vld [vmem:[#allocation3 + $0x44] sm:$0x1]
        %v559 = vsel %vm533, 0, %v558
        %560 = vst [vmem:[#allocation3 + $0x44] sm:$0x1] %v559
        %v561 = vld [vmem:[#allocation3 + $0x4c] sm:$0x1]
        %v562 = vsel %vm533, 0, %v561
        %563 = vst [vmem:[#allocation3 + $0x4c] sm:$0x1] %v562
        %s564 = scalar_lea.vmem [#allocation6], 64
        %565 = vst [vmem:[%s564] sm:$0xf] 0
        %v566 = vld [vmem:[%s564 + $0x4] sm:$0x1]
        %v567 = vsel %vm373, 0, %v566
        %568 = vst [vmem:[%s564 + $0x4] sm:$0x1] %v567
        %569 = vst [vmem:[%s564 + $0x48] sm:$0xf] 0
        %v570 = vld [vmem:[%s564 + $0x4c] sm:$0x1]
        %v571 = vsel %vm373, 0, %v570
        %572 = vst [vmem:[%s564 + $0x4c] sm:$0x1] %v571
        %573 = vst [vmem:[%s564 + $0x90] sm:$0xf] 0
        %v574 = vld [vmem:[%s564 + $0x94] sm:$0x1]
        %v575 = vsel %vm373, 0, %v574
        %576 = vst [vmem:[%s564 + $0x94] sm:$0x1] %v575
        %577 = vst [vmem:[%s564 + $0xd8] sm:$0xf] 0
        %v578 = vld [vmem:[%s564 + $0xdc] sm:$0x1]
        %v579 = vsel %vm373, 0, %v578
        %580 = vst [vmem:[%s564 + $0xdc] sm:$0x1] %v579
        %v581 = vld [vmem:[#allocation6 + $0x4] sm:$0x1]
        %v582 = vsel %vm373, 0, %v581
        %583 = vst [vmem:[#allocation6 + $0x4] sm:$0x1] %v582
        %v584 = vld [vmem:[#allocation6 + $0xc] sm:$0x1]
        %v585 = vsel %vm373, 0, %v584
        %586 = vst [vmem:[#allocation6 + $0xc] sm:$0x1] %v585
        %v587 = vld [vmem:[#allocation6 + $0x14] sm:$0x1]
        %v588 = vsel %vm373, 0, %v587
        %589 = vst [vmem:[#allocation6 + $0x14] sm:$0x1] %v588
        %v590 = vld [vmem:[#allocation6 + $0x1c] sm:$0x1]
        %v591 = vsel %vm373, 0, %v590
        %592 = vst [vmem:[#allocation6 + $0x1c] sm:$0x1] %v591
        %v593 = vld [vmem:[#allocation6 + $0x24] sm:$0x1]
        %v594 = vsel %vm373, 0, %v593
        %595 = vst [vmem:[#allocation6 + $0x24] sm:$0x1] %v594
        %v596 = vld [vmem:[#allocation6 + $0x2c] sm:$0x1]
        %v597 = vsel %vm373, 0, %v596
        %598 = vst [vmem:[#allocation6 + $0x2c] sm:$0x1] %v597
        %v599 = vld [vmem:[#allocation6 + $0x34] sm:$0x1]
        %v600 = vsel %vm373, 0, %v599
        %601 = vst [vmem:[#allocation6 + $0x34] sm:$0x1] %v600
        %v602 = vld [vmem:[#allocation6 + $0x3c] sm:$0x1]
        %v603 = vsel %vm373, 0, %v602
        %604 = vst [vmem:[#allocation6 + $0x3c] sm:$0x1] %v603
        %v605 = vld [vmem:[#allocation6 + $0x44] sm:$0x1]
        %v606 = vsel %vm373, 0, %v605
        %607 = vst [vmem:[#allocation6 + $0x44] sm:$0x1] %v606
        %v608 = vld [vmem:[#allocation6 + $0x4c] sm:$0x1]
        %v609 = vsel %vm373, 0, %v608
        %610 = vst [vmem:[#allocation6 + $0x4c] sm:$0x1] %v609
        %v611 = vld [vmem:[#allocation6 + $0x54] sm:$0x1]
        %v612 = vsel %vm373, 0, %v611
        %613 = vst [vmem:[#allocation6 + $0x54] sm:$0x1] %v612
        %v614 = vld [vmem:[#allocation6 + $0x5c] sm:$0x1]
        %v615 = vsel %vm373, 0, %v614
        %616 = vst [vmem:[#allocation6 + $0x5c] sm:$0x1] %v615
        %v617 = vld [vmem:[#allocation6 + $0x64] sm:$0x1]
        %v618 = vsel %vm373, 0, %v617
        %619 = vst [vmem:[#allocation6 + $0x64] sm:$0x1] %v618
        %v620 = vld [vmem:[#allocation6 + $0x6c] sm:$0x1]
        %v621 = vsel %vm373, 0, %v620
        %622 = vst [vmem:[#allocation6 + $0x6c] sm:$0x1] %v621
        %v623 = vld [vmem:[#allocation6 + $0x74] sm:$0x1]
        %v624 = vsel %vm373, 0, %v623
        %625 = vst [vmem:[#allocation6 + $0x74] sm:$0x1] %v624
        %v626 = vld [vmem:[#allocation6 + $0x7c] sm:$0x1]
        %v627 = vsel %vm373, 0, %v626
        %628 = vst [vmem:[#allocation6 + $0x7c] sm:$0x1] %v627
        %v629 = vld [vmem:[#allocation6 + $0x84] sm:$0x1]
        %v630 = vsel %vm373, 0, %v629
        %631 = vst [vmem:[#allocation6 + $0x84] sm:$0x1] %v630
        %v632 = vld [vmem:[#allocation6 + $0x8c] sm:$0x1]
        %v633 = vsel %vm373, 0, %v632
        %634 = vst [vmem:[#allocation6 + $0x8c] sm:$0x1] %v633
        %v635 = vld [vmem:[#allocation6 + $0x94] sm:$0x1]
        %v636 = vsel %vm373, 0, %v635
        %637 = vst [vmem:[#allocation6 + $0x94] sm:$0x1] %v636
        %v638 = vld [vmem:[#allocation6 + $0x9c] sm:$0x1]
        %v639 = vsel %vm373, 0, %v638
        %640 = vst [vmem:[#allocation6 + $0x9c] sm:$0x1] %v639
        %v641 = vld [vmem:[#allocation6 + $0xa4] sm:$0x1]
        %v642 = vsel %vm373, 0, %v641
        %643 = vst [vmem:[#allocation6 + $0xa4] sm:$0x1] %v642
        %v644 = vld [vmem:[#allocation6 + $0xac] sm:$0x1]
        %v645 = vsel %vm373, 0, %v644
        %646 = vst [vmem:[#allocation6 + $0xac] sm:$0x1] %v645
        %v647 = vld [vmem:[#allocation6 + $0xb4] sm:$0x1]
        %v648 = vsel %vm373, 0, %v647
        %649 = vst [vmem:[#allocation6 + $0xb4] sm:$0x1] %v648
        %v650 = vld [vmem:[#allocation6 + $0xbc] sm:$0x1]
        %v651 = vsel %vm373, 0, %v650
        %652 = vst [vmem:[#allocation6 + $0xbc] sm:$0x1] %v651
        %v653 = vld [vmem:[#allocation6 + $0xc4] sm:$0x1]
        %v654 = vsel %vm373, 0, %v653
        %655 = vst [vmem:[#allocation6 + $0xc4] sm:$0x1] %v654
        %v656 = vld [vmem:[#allocation6 + $0xcc] sm:$0x1]
        %v657 = vsel %vm373, 0, %v656
        %658 = vst [vmem:[#allocation6 + $0xcc] sm:$0x1] %v657
        %v659 = vld [vmem:[#allocation6 + $0xd4] sm:$0x1]
        %v660 = vsel %vm373, 0, %v659
        %661 = vst [vmem:[#allocation6 + $0xd4] sm:$0x1] %v660
        %v662 = vld [vmem:[#allocation6 + $0xdc] sm:$0x1]
        %v663 = vsel %vm373, 0, %v662
        %664 = vst [vmem:[#allocation6 + $0xdc] sm:$0x1] %v663
        %v665 = vld [vmem:[#allocation6 + $0xe4] sm:$0x1]
        %v666 = vsel %vm373, 0, %v665
        %667 = vst [vmem:[#allocation6 + $0xe4] sm:$0x1] %v666
        %v668 = vld [vmem:[#allocation6 + $0xec] sm:$0x1]
        %v669 = vsel %vm373, 0, %v668
        %670 = vst [vmem:[#allocation6 + $0xec] sm:$0x1] %v669
        %v671 = vld [vmem:[#allocation6 + $0xf4] sm:$0x1]
        %v672 = vsel %vm373, 0, %v671
        %673 = vst [vmem:[#allocation6 + $0xf4] sm:$0x1] %v672
        %v674 = vld [vmem:[#allocation6 + $0xfc] sm:$0x1]
        %v675 = vsel %vm373, 0, %v674
        %676 = vst [vmem:[#allocation6 + $0xfc] sm:$0x1] %v675
        %v677 = vld [vmem:[#allocation6 + $0x104] sm:$0x1]
        %v678 = vsel %vm373, 0, %v677
        %679 = vst [vmem:[#allocation6 + $0x104] sm:$0x1] %v678
        %v680 = vld [vmem:[#allocation6 + $0x10c] sm:$0x1]
        %v681 = vsel %vm373, 0, %v680
        %682 = vst [vmem:[#allocation6 + $0x10c] sm:$0x1] %v681
        %v683 = vld [vmem:[#allocation6 + $0x114] sm:$0x1]
        %v684 = vsel %vm373, 0, %v683
        %685 = vst [vmem:[#allocation6 + $0x114] sm:$0x1] %v684
        %v686 = vld [vmem:[#allocation6 + $0x11c] sm:$0x1]
        %v687 = vsel %vm373, 0, %v686
        %688 = vst [vmem:[#allocation6 + $0x11c] sm:$0x1] %v687
        %v689 = vld [vmem:[%s4] sm:$0x1]
        %v690 = vld [vmem:[%s5] sm:$0x1]
        %v691 = vld [vmem:[%s323] sm:$0xf]
        %v692 = vld [vmem:[%s323 + $0x4] sm:$0xf]
        %v693 = vld [vmem:[%s323 + $0x8] sm:$0xf]
        %v694 = vld [vmem:[%s323 + $0xc] sm:$0xf]
        %v695 = vld [vmem:[%s323 + $0x10] sm:$0xf]
        %v696 = vld [vmem:[%s323 + $0x14] sm:$0xf]
        %v697 = vld [vmem:[%s323 + $0x18] sm:$0xf]
        %v698 = vld [vmem:[%s323 + $0x1c] sm:$0xf]
        %v699 = vunpack.c.l.bf16 %v691
        %v700 = vunpack.c.l.bf16 %v692
        %v701 = vunpack.c.l.bf16 %v693
        %v702 = vunpack.c.l.bf16 %v694
        %v703 = vunpack.c.l.bf16 %v695
        %v704 = vunpack.c.l.bf16 %v696
        %v705 = vunpack.c.l.bf16 %v697
        %v706 = vunpack.c.l.bf16 %v698
        %v708 = vlaneseq
        %v709 = vshrl.u32 %v708, 7
        %v710 = vsub.s32 0, %v709
        %v711 = vrot.slane %v689, %v710
        %v713 = vmul.f32 %v699, %v711
        %v714 = vmul.f32 %v700, %v711
        %v715 = vmul.f32 %v701, %v711
        %v716 = vmul.f32 %v702, %v711
        %v717 = vmul.f32 %v703, %v711
        %v718 = vmul.f32 %v704, %v711
        %v719 = vmul.f32 %v705, %v711
        %v720 = vmul.f32 %v706, %v711
        %v722 = vlaneseq
        %v723 = vshrl.u32 %v722, 7
        %v724 = vsub.s32 0, %v723
        %v725 = vrot.slane %v690, %v724
        %v727 = vadd.f32 %v713, %v725
        %v728 = vadd.f32 %v714, %v725
        %v729 = vadd.f32 %v715, %v725
        %v730 = vadd.f32 %v716, %v725
        %v731 = vadd.f32 %v717, %v725
        %v732 = vadd.f32 %v718, %v725
        %v733 = vadd.f32 %v719, %v725
        %v734 = vadd.f32 %v720, %v725
        %v735 = vmax.f32 %v727, 0.0
        %v736 = vmax.f32 %v728, 0.0
        %v737 = vmax.f32 %v729, 0.0
        %v738 = vmax.f32 %v730, 0.0
        %v739 = vmax.f32 %v731, 0.0
        %v740 = vmax.f32 %v732, 0.0
        %v741 = vmax.f32 %v733, 0.0
        %v742 = vmax.f32 %v734, 0.0
        %v743 = vpack.c.bf16 %v735, %v735
        %v744 = vpack.c.bf16 %v736, %v736
        %v745 = vpack.c.bf16 %v737, %v737
        %v746 = vpack.c.bf16 %v738, %v738
        %v747 = vpack.c.bf16 %v739, %v739
        %v748 = vpack.c.bf16 %v740, %v740
        %v749 = vpack.c.bf16 %v741, %v741
        %v750 = vpack.c.bf16 %v742, %v742
        %751 = vst [vmem:[#allocation2] sm:$0xf] %v743
        %752 = vst [vmem:[#allocation2 + $0x8] sm:$0xf] %v744
        %753 = vst [vmem:[#allocation2 + $0x10] sm:$0xf] %v745
        %754 = vst [vmem:[#allocation2 + $0x18] sm:$0xf] %v746
        %755 = vst [vmem:[#allocation2 + $0x20] sm:$0xf] %v747
        %756 = vst [vmem:[#allocation2 + $0x28] sm:$0xf] %v748
        %757 = vst [vmem:[#allocation2 + $0x30] sm:$0xf] %v749
        %758 = vst [vmem:[#allocation2 + $0x38] sm:$0xf] %v750
        %759 = vst [vmem:[#allocation6] sm:$0xf] %v691
        %760 = vst [vmem:[#allocation6 + $0x8] sm:$0xf] %v692
        %761 = vst [vmem:[#allocation6 + $0x10] sm:$0xf] %v693
        %762 = vst [vmem:[#allocation6 + $0x18] sm:$0xf] %v694
        %763 = vst [vmem:[#allocation6 + $0x20] sm:$0xf] %v695
        %764 = vst [vmem:[#allocation6 + $0x28] sm:$0xf] %v696
        %765 = vst [vmem:[#allocation6 + $0x30] sm:$0xf] %v697
        %766 = vst [vmem:[#allocation6 + $0x38] sm:$0xf] %v698
        %s767 = scalar_lea.vmem %s323, 32 [#allocation7]
        %v768 = vld [vmem:[%s767] sm:$0xf]
        %v769 = vld [vmem:[%s767 + $0x4] sm:$0xf]
        %v770 = vld [vmem:[%s767 + $0x8] sm:$0xf]
        %v771 = vld [vmem:[%s767 + $0xc] sm:$0xf]
        %v772 = vld [vmem:[%s767 + $0x10] sm:$0xf]
        %v773 = vld [vmem:[%s767 + $0x14] sm:$0xf]
        %v774 = vld [vmem:[%s767 + $0x18] sm:$0xf]
        %v775 = vld [vmem:[%s767 + $0x1c] sm:$0xf]
        %v776 = vunpack.c.l.bf16 %v768
        %v777 = vunpack.c.l.bf16 %v769
        %v778 = vunpack.c.l.bf16 %v770
        %v779 = vunpack.c.l.bf16 %v771
        %v780 = vunpack.c.l.bf16 %v772
        %v781 = vunpack.c.l.bf16 %v773
        %v782 = vunpack.c.l.bf16 %v774
        %v783 = vunpack.c.l.bf16 %v775
        %v784 = vmul.f32 %v776, %v711
        %v785 = vmul.f32 %v777, %v711
        %v786 = vmul.f32 %v778, %v711
        %v787 = vmul.f32 %v779, %v711
        %v788 = vmul.f32 %v780, %v711
        %v789 = vmul.f32 %v781, %v711
        %v790 = vmul.f32 %v782, %v711
        %v791 = vmul.f32 %v783, %v711
        %v792 = vadd.f32 %v784, %v725
        %v793 = vadd.f32 %v785, %v725
        %v794 = vadd.f32 %v786, %v725
        %v795 = vadd.f32 %v787, %v725
        %v796 = vadd.f32 %v788, %v725
        %v797 = vadd.f32 %v789, %v725
        %v798 = vadd.f32 %v790, %v725
        %v799 = vadd.f32 %v791, %v725
        %v800 = vmax.f32 %v792, 0.0
        %v801 = vmax.f32 %v793, 0.0
        %v802 = vmax.f32 %v794, 0.0
        %v803 = vmax.f32 %v795, 0.0
        %v804 = vmax.f32 %v796, 0.0
        %v805 = vmax.f32 %v797, 0.0
        %v806 = vmax.f32 %v798, 0.0
        %v807 = vmax.f32 %v799, 0.0
        %v808 = vpack.c.bf16 %v800, %v800
        %v809 = vpack.c.bf16 %v801, %v801
        %v810 = vpack.c.bf16 %v802, %v802
        %v811 = vpack.c.bf16 %v803, %v803
        %v812 = vpack.c.bf16 %v804, %v804
        %v813 = vpack.c.bf16 %v805, %v805
        %v814 = vpack.c.bf16 %v806, %v806
        %v815 = vpack.c.bf16 %v807, %v807
        %s816 = scalar_lea.vmem [#allocation2], 72
        %817 = vst [vmem:[%s816] sm:$0xf] %v808
        %818 = vst [vmem:[%s816 + $0x8] sm:$0xf] %v809
        %819 = vst [vmem:[%s816 + $0x10] sm:$0xf] %v810
        %820 = vst [vmem:[%s816 + $0x18] sm:$0xf] %v811
        %821 = vst [vmem:[%s816 + $0x20] sm:$0xf] %v812
        %822 = vst [vmem:[%s816 + $0x28] sm:$0xf] %v813
        %823 = vst [vmem:[%s816 + $0x30] sm:$0xf] %v814
        %824 = vst [vmem:[%s816 + $0x38] sm:$0xf] %v815
        %s825 = scalar_lea.vmem [#allocation6], 72
        %826 = vst [vmem:[%s825] sm:$0xf] %v768
        %827 = vst [vmem:[%s825 + $0x8] sm:$0xf] %v769
        %828 = vst [vmem:[%s825 + $0x10] sm:$0xf] %v770
        %829 = vst [vmem:[%s825 + $0x18] sm:$0xf] %v771
        %830 = vst [vmem:[%s825 + $0x20] sm:$0xf] %v772
        %831 = vst [vmem:[%s825 + $0x28] sm:$0xf] %v773
        %832 = vst [vmem:[%s825 + $0x30] sm:$0xf] %v774
        %833 = vst [vmem:[%s825 + $0x38] sm:$0xf] %v775
        %s834 = scalar_lea.vmem %s323, 64 [#allocation7]
        %v835 = vld [vmem:[%s834] sm:$0xf]
        %v836 = vld [vmem:[%s834 + $0x4] sm:$0xf]
        %v837 = vld [vmem:[%s834 + $0x8] sm:$0xf]
        %v838 = vld [vmem:[%s834 + $0xc] sm:$0xf]
        %v839 = vld [vmem:[%s834 + $0x10] sm:$0xf]
        %v840 = vld [vmem:[%s834 + $0x14] sm:$0xf]
        %v841 = vld [vmem:[%s834 + $0x18] sm:$0xf]
        %v842 = vld [vmem:[%s834 + $0x1c] sm:$0xf]
        %v843 = vunpack.c.l.bf16 %v835
        %v844 = vunpack.c.l.bf16 %v836
        %v845 = vunpack.c.l.bf16 %v837
        %v846 = vunpack.c.l.bf16 %v838
        %v847 = vunpack.c.l.bf16 %v839
        %v848 = vunpack.c.l.bf16 %v840
        %v849 = vunpack.c.l.bf16 %v841
        %v850 = vunpack.c.l.bf16 %v842
        %v851 = vmul.f32 %v843, %v711
        %v852 = vmul.f32 %v844, %v711
        %v853 = vmul.f32 %v845, %v711
        %v854 = vmul.f32 %v846, %v711
        %v855 = vmul.f32 %v847, %v711
        %v856 = vmul.f32 %v848, %v711
        %v857 = vmul.f32 %v849, %v711
        %v858 = vmul.f32 %v850, %v711
        %v859 = vadd.f32 %v851, %v725
        %v860 = vadd.f32 %v852, %v725
        %v861 = vadd.f32 %v853, %v725
        %v862 = vadd.f32 %v854, %v725
        %v863 = vadd.f32 %v855, %v725
        %v864 = vadd.f32 %v856, %v725
        %v865 = vadd.f32 %v857, %v725
        %v866 = vadd.f32 %v858, %v725
        %v867 = vmax.f32 %v859, 0.0
        %v868 = vmax.f32 %v860, 0.0
        %v869 = vmax.f32 %v861, 0.0
        %v870 = vmax.f32 %v862, 0.0
        %v871 = vmax.f32 %v863, 0.0
        %v872 = vmax.f32 %v864, 0.0
        %v873 = vmax.f32 %v865, 0.0
        %v874 = vmax.f32 %v866, 0.0
        %v875 = vpack.c.bf16 %v867, %v867
        %v876 = vpack.c.bf16 %v868, %v868
        %v877 = vpack.c.bf16 %v869, %v869
        %v878 = vpack.c.bf16 %v870, %v870
        %v879 = vpack.c.bf16 %v871, %v871
        %v880 = vpack.c.bf16 %v872, %v872
        %v881 = vpack.c.bf16 %v873, %v873
        %v882 = vpack.c.bf16 %v874, %v874
        %s883 = scalar_lea.vmem [#allocation2], 144
        %884 = vst [vmem:[%s883] sm:$0xf] %v875
        %885 = vst [vmem:[%s883 + $0x8] sm:$0xf] %v876
        %886 = vst [vmem:[%s883 + $0x10] sm:$0xf] %v877
        %887 = vst [vmem:[%s883 + $0x18] sm:$0xf] %v878
        %888 = vst [vmem:[%s883 + $0x20] sm:$0xf] %v879
        %889 = vst [vmem:[%s883 + $0x28] sm:$0xf] %v880
        %890 = vst [vmem:[%s883 + $0x30] sm:$0xf] %v881
        %891 = vst [vmem:[%s883 + $0x38] sm:$0xf] %v882
        %s892 = scalar_lea.vmem [#allocation6], 144
        %893 = vst [vmem:[%s892] sm:$0xf] %v835
        %894 = vst [vmem:[%s892 + $0x8] sm:$0xf] %v836
        %895 = vst [vmem:[%s892 + $0x10] sm:$0xf] %v837
        %896 = vst [vmem:[%s892 + $0x18] sm:$0xf] %v838
        %897 = vst [vmem:[%s892 + $0x20] sm:$0xf] %v839
        %898 = vst [vmem:[%s892 + $0x28] sm:$0xf] %v840
        %899 = vst [vmem:[%s892 + $0x30] sm:$0xf] %v841
        %900 = vst [vmem:[%s892 + $0x38] sm:$0xf] %v842
        %s901 = scalar_lea.vmem %s323, 96 [#allocation7]
        %v902 = vld [vmem:[%s901] sm:$0xf]
        %v903 = vld [vmem:[%s901 + $0x4] sm:$0xf]
        %v904 = vld [vmem:[%s901 + $0x8] sm:$0xf]
        %v905 = vld [vmem:[%s901 + $0xc] sm:$0xf]
        %v906 = vld [vmem:[%s901 + $0x10] sm:$0xf]
        %v907 = vld [vmem:[%s901 + $0x14] sm:$0xf]
        %v908 = vld [vmem:[%s901 + $0x18] sm:$0xf]
        %v909 = vld [vmem:[%s901 + $0x1c] sm:$0xf]
        %v910 = vunpack.c.l.bf16 %v902
        %v911 = vunpack.c.l.bf16 %v903
        %v912 = vunpack.c.l.bf16 %v904
        %v913 = vunpack.c.l.bf16 %v905
        %v914 = vunpack.c.l.bf16 %v906
        %v915 = vunpack.c.l.bf16 %v907
        %v916 = vunpack.c.l.bf16 %v908
        %v917 = vunpack.c.l.bf16 %v909
        %v918 = vmul.f32 %v910, %v711
        %v919 = vmul.f32 %v911, %v711
        %v920 = vmul.f32 %v912, %v711
        %v921 = vmul.f32 %v913, %v711
        %v922 = vmul.f32 %v914, %v711
        %v923 = vmul.f32 %v915, %v711
        %v924 = vmul.f32 %v916, %v711
        %v925 = vmul.f32 %v917, %v711
        %v926 = vadd.f32 %v918, %v725
        %v927 = vadd.f32 %v919, %v725
        %v928 = vadd.f32 %v920, %v725
        %v929 = vadd.f32 %v921, %v725
        %v930 = vadd.f32 %v922, %v725
        %v931 = vadd.f32 %v923, %v725
        %v932 = vadd.f32 %v924, %v725
        %v933 = vadd.f32 %v925, %v725
        %v934 = vmax.f32 %v926, 0.0
        %v935 = vmax.f32 %v927, 0.0
        %v936 = vmax.f32 %v928, 0.0
        %v937 = vmax.f32 %v929, 0.0
        %v938 = vmax.f32 %v930, 0.0
        %v939 = vmax.f32 %v931, 0.0
        %v940 = vmax.f32 %v932, 0.0
        %v941 = vmax.f32 %v933, 0.0
        %v942 = vpack.c.bf16 %v934, %v934
        %v943 = vpack.c.bf16 %v935, %v935
        %v944 = vpack.c.bf16 %v936, %v936
        %v945 = vpack.c.bf16 %v937, %v937
        %v946 = vpack.c.bf16 %v938, %v938
        %v947 = vpack.c.bf16 %v939, %v939
        %v948 = vpack.c.bf16 %v940, %v940
        %v949 = vpack.c.bf16 %v941, %v941
        %s950 = scalar_lea.vmem [#allocation2], 216
        %951 = vst [vmem:[%s950] sm:$0xf] %v942
        %952 = vst [vmem:[%s950 + $0x8] sm:$0xf] %v943
        %953 = vst [vmem:[%s950 + $0x10] sm:$0xf] %v944
        %954 = vst [vmem:[%s950 + $0x18] sm:$0xf] %v945
        %955 = vst [vmem:[%s950 + $0x20] sm:$0xf] %v946
        %956 = vst [vmem:[%s950 + $0x28] sm:$0xf] %v947
        %957 = vst [vmem:[%s950 + $0x30] sm:$0xf] %v948
        %958 = vst [vmem:[%s950 + $0x38] sm:$0xf] %v949
        %s959 = scalar_lea.vmem [#allocation6], 216
        %960 = vst [vmem:[%s959] sm:$0xf] %v902
        %961 = vst [vmem:[%s959 + $0x8] sm:$0xf] %v903
        %962 = vst [vmem:[%s959 + $0x10] sm:$0xf] %v904
        %963 = vst [vmem:[%s959 + $0x18] sm:$0xf] %v905
        %964 = vst [vmem:[%s959 + $0x20] sm:$0xf] %v906
        %965 = vst [vmem:[%s959 + $0x28] sm:$0xf] %v907
        %966 = vst [vmem:[%s959 + $0x30] sm:$0xf] %v908
        %967 = vst [vmem:[%s959 + $0x38] sm:$0xf] %v909
        %v968 = vld [vmem:[#allocation2] sm:$0xf]
        %v969 = vld [vmem:[#allocation2 + $0x8] sm:$0xf]
        %v970 = vld [vmem:[#allocation2 + $0x10] sm:$0xf]
        %v971 = vld [vmem:[#allocation2 + $0x18] sm:$0xf]
        %v972 = vld [vmem:[#allocation2 + $0x20] sm:$0xf]
        %v973 = vld [vmem:[#allocation2 + $0x28] sm:$0xf]
        %v974 = vld [vmem:[#allocation2 + $0x30] sm:$0xf]
        %v975 = vld [vmem:[#allocation2 + $0x38] sm:$0xf]
        %976 = vst [vmem:[#allocation4] sm:$0xf] %v968
        %977 = vst [vmem:[#allocation4 + $0x24] sm:$0xf] %v969
        %978 = vst [vmem:[#allocation4 + $0x48] sm:$0xf] %v970
        %979 = vst [vmem:[#allocation4 + $0x6c] sm:$0xf] %v971
        %980 = vst [vmem:[#allocation4 + $0x90] sm:$0xf] %v972
        %981 = vst [vmem:[#allocation4 + $0xb4] sm:$0xf] %v973
        %982 = vst [vmem:[#allocation4 + $0xd8] sm:$0xf] %v974
        %983 = vst [vmem:[#allocation4 + $0xfc] sm:$0xf] %v975
        %v984 = vld [vmem:[%s816] sm:$0xf]
        %v985 = vld [vmem:[%s816 + $0x8] sm:$0xf]
        %v986 = vld [vmem:[%s816 + $0x10] sm:$0xf]
        %v987 = vld [vmem:[%s816 + $0x18] sm:$0xf]
        %v988 = vld [vmem:[%s816 + $0x20] sm:$0xf]
        %v989 = vld [vmem:[%s816 + $0x28] sm:$0xf]
        %v990 = vld [vmem:[%s816 + $0x30] sm:$0xf]
        %v991 = vld [vmem:[%s816 + $0x38] sm:$0xf]
        %992 = vst [vmem:[#allocation4 + $0x4] sm:$0xf] %v984
        %993 = vst [vmem:[#allocation4 + $0x28] sm:$0xf] %v985
        %994 = vst [vmem:[#allocation4 + $0x4c] sm:$0xf] %v986
        %995 = vst [vmem:[#allocation4 + $0x70] sm:$0xf] %v987
        %996 = vst [vmem:[#allocation4 + $0x94] sm:$0xf] %v988
        %997 = vst [vmem:[#allocation4 + $0xb8] sm:$0xf] %v989
        %998 = vst [vmem:[#allocation4 + $0xdc] sm:$0xf] %v990
        %999 = vst [vmem:[#allocation4 + $0x100] sm:$0xf] %v991
        %v1000 = vld [vmem:[#allocation2] sm:$0xf]
        %v1001 = vld [vmem:[#allocation2 + $0x4] sm:$0x1]
        %v1002 = vld [vmem:[#allocation2 + $0x8] sm:$0xf]
        %v1003 = vld [vmem:[#allocation2 + $0xc] sm:$0x1]
        %v1004 = vld [vmem:[#allocation2 + $0x10] sm:$0xf]
        %v1005 = vld [vmem:[#allocation2 + $0x14] sm:$0x1]
        %v1006 = vld [vmem:[#allocation2 + $0x18] sm:$0xf]
        %v1007 = vld [vmem:[#allocation2 + $0x1c] sm:$0x1]
        %v1008 = vld [vmem:[#allocation2 + $0x20] sm:$0xf]
        %v1009 = vld [vmem:[#allocation2 + $0x24] sm:$0x1]
        %v1010 = vld [vmem:[#allocation2 + $0x28] sm:$0xf]
        %v1011 = vld [vmem:[#allocation2 + $0x2c] sm:$0x1]
        %v1012 = vld [vmem:[#allocation2 + $0x30] sm:$0xf]
        %v1013 = vld [vmem:[#allocation2 + $0x34] sm:$0x1]
        %v1014 = vld [vmem:[#allocation2 + $0x38] sm:$0xf]
        %v1015 = vld [vmem:[#allocation2 + $0x3c] sm:$0x1]
        %vm1016 = vsmask.f32 3328
        %vm1017 = vsmask.f32 7440
        %vm1018 = vmor %vm1016, %vm1017
        %v1020 = vshrl.u32 %v1000, 16
        %v1022 = vrot.slane %v1020, 4
        %v1023 = vshll.u32 %v1000, 16
        %v1025 = vrot.slane %v1023, 5
        %v1026 = vor.u32 %v1022, %v1025
        %v1027 = vrot.slane %v1026, 4
        %v1029 = vshll.u32 %v1001, 16
        %v1031 = vrot.slane %v1029, 5
        %v1032 = vsel %vm1018, %v1027, %v1031
        %v1034 = vshrl.u32 %v1002, 16
        %v1036 = vrot.slane %v1034, 4
        %v1037 = vshll.u32 %v1002, 16
        %v1039 = vrot.slane %v1037, 5
        %v1040 = vor.u32 %v1036, %v1039
        %v1041 = vrot.slane %v1040, 4
        %v1043 = vshll.u32 %v1003, 16
        %v1045 = vrot.slane %v1043, 5
        %v1046 = vsel %vm1018, %v1041, %v1045
        %v1048 = vshrl.u32 %v1004, 16
        %v1050 = vrot.slane %v1048, 4
        %v1051 = vshll.u32 %v1004, 16
        %v1053 = vrot.slane %v1051, 5
        %v1054 = vor.u32 %v1050, %v1053
        %v1055 = vrot.slane %v1054, 4
        %v1057 = vshll.u32 %v1005, 16
        %v1059 = vrot.slane %v1057, 5
        %v1060 = vsel %vm1018, %v1055, %v1059
        %v1062 = vshrl.u32 %v1006, 16
        %v1064 = vrot.slane %v1062, 4
        %v1065 = vshll.u32 %v1006, 16
        %v1067 = vrot.slane %v1065, 5
        %v1068 = vor.u32 %v1064, %v1067
        %v1069 = vrot.slane %v1068, 4
        %v1071 = vshll.u32 %v1007, 16
        %v1073 = vrot.slane %v1071, 5
        %v1074 = vsel %vm1018, %v1069, %v1073
        %v1076 = vshrl.u32 %v1008, 16
        %v1078 = vrot.slane %v1076, 4
        %v1079 = vshll.u32 %v1008, 16
        %v1081 = vrot.slane %v1079, 5
        %v1082 = vor.u32 %v1078, %v1081
        %v1083 = vrot.slane %v1082, 4
        %v1085 = vshll.u32 %v1009, 16
        %v1087 = vrot.slane %v1085, 5
        %v1088 = vsel %vm1018, %v1083, %v1087
        %v1090 = vshrl.u32 %v1010, 16
        %v1092 = vrot.slane %v1090, 4
        %v1093 = vshll.u32 %v1010, 16
        %v1095 = vrot.slane %v1093, 5
        %v1096 = vor.u32 %v1092, %v1095
        %v1097 = vrot.slane %v1096, 4
        %v1099 = vshll.u32 %v1011, 16
        %v1101 = vrot.slane %v1099, 5
        %v1102 = vsel %vm1018, %v1097, %v1101
        %v1104 = vshrl.u32 %v1012, 16
        %v1106 = vrot.slane %v1104, 4
        %v1107 = vshll.u32 %v1012, 16
        %v1109 = vrot.slane %v1107, 5
        %v1110 = vor.u32 %v1106, %v1109
        %v1111 = vrot.slane %v1110, 4
        %v1113 = vshll.u32 %v1013, 16
        %v1115 = vrot.slane %v1113, 5
        %v1116 = vsel %vm1018, %v1111, %v1115
        %v1118 = vshrl.u32 %v1014, 16
        %v1120 = vrot.slane %v1118, 4
        %v1121 = vshll.u32 %v1014, 16
        %v1123 = vrot.slane %v1121, 5
        %v1124 = vor.u32 %v1120, %v1123
        %v1125 = vrot.slane %v1124, 4
        %v1127 = vshll.u32 %v1015, 16
        %v1129 = vrot.slane %v1127, 5
        %v1130 = vsel %vm1018, %v1125, %v1129
        %1139 = vst [vmem:[#allocation4 + $0x8] sm:$0xf] %v1032
        %1140 = vst [vmem:[#allocation4 + $0x2c] sm:$0xf] %v1046
        %1141 = vst [vmem:[#allocation4 + $0x50] sm:$0xf] %v1060
        %1142 = vst [vmem:[#allocation4 + $0x74] sm:$0xf] %v1074
        %1143 = vst [vmem:[#allocation4 + $0x98] sm:$0xf] %v1088
        %1144 = vst [vmem:[#allocation4 + $0xbc] sm:$0xf] %v1102
        %1145 = vst [vmem:[#allocation4 + $0xe0] sm:$0xf] %v1116
        %1146 = vst [vmem:[#allocation4 + $0x104] sm:$0xf] %v1130
        %v1147 = vld [vmem:[%s883] sm:$0xf]
        %v1148 = vld [vmem:[%s883 + $0x8] sm:$0xf]
        %v1149 = vld [vmem:[%s883 + $0x10] sm:$0xf]
        %v1150 = vld [vmem:[%s883 + $0x18] sm:$0xf]
        %v1151 = vld [vmem:[%s883 + $0x20] sm:$0xf]
        %v1152 = vld [vmem:[%s883 + $0x28] sm:$0xf]
        %v1153 = vld [vmem:[%s883 + $0x30] sm:$0xf]
        %v1154 = vld [vmem:[%s883 + $0x38] sm:$0xf]
        %1155 = vst [vmem:[#allocation4 + $0xc] sm:$0xf] %v1147
        %1156 = vst [vmem:[#allocation4 + $0x30] sm:$0xf] %v1148
        %1157 = vst [vmem:[#allocation4 + $0x54] sm:$0xf] %v1149
        %1158 = vst [vmem:[#allocation4 + $0x78] sm:$0xf] %v1150
        %1159 = vst [vmem:[#allocation4 + $0x9c] sm:$0xf] %v1151
        %1160 = vst [vmem:[#allocation4 + $0xc0] sm:$0xf] %v1152
        %1161 = vst [vmem:[#allocation4 + $0xe4] sm:$0xf] %v1153
        %1162 = vst [vmem:[#allocation4 + $0x108] sm:$0xf] %v1154
        %v1163 = vld [vmem:[%s950] sm:$0xf]
        %v1164 = vld [vmem:[%s950 + $0x8] sm:$0xf]
        %v1165 = vld [vmem:[%s950 + $0x10] sm:$0xf]
        %v1166 = vld [vmem:[%s950 + $0x18] sm:$0xf]
        %v1167 = vld [vmem:[%s950 + $0x20] sm:$0xf]
        %v1168 = vld [vmem:[%s950 + $0x28] sm:$0xf]
        %v1169 = vld [vmem:[%s950 + $0x30] sm:$0xf]
        %v1170 = vld [vmem:[%s950 + $0x38] sm:$0xf]
        %1171 = vst [vmem:[#allocation4 + $0x10] sm:$0xf] %v1163
        %1172 = vst [vmem:[#allocation4 + $0x34] sm:$0xf] %v1164
        %1173 = vst [vmem:[#allocation4 + $0x58] sm:$0xf] %v1165
        %1174 = vst [vmem:[#allocation4 + $0x7c] sm:$0xf] %v1166
        %1175 = vst [vmem:[#allocation4 + $0xa0] sm:$0xf] %v1167
        %1176 = vst [vmem:[#allocation4 + $0xc4] sm:$0xf] %v1168
        %1177 = vst [vmem:[#allocation4 + $0xe8] sm:$0xf] %v1169
        %1178 = vst [vmem:[#allocation4 + $0x10c] sm:$0xf] %v1170
        %v1179 = vld [vmem:[%s883] sm:$0xf]
        %v1180 = vld [vmem:[%s883 + $0x4] sm:$0x1]
        %v1181 = vld [vmem:[%s883 + $0x8] sm:$0xf]
        %v1182 = vld [vmem:[%s883 + $0xc] sm:$0x1]
        %v1183 = vld [vmem:[%s883 + $0x10] sm:$0xf]
        %v1184 = vld [vmem:[%s883 + $0x14] sm:$0x1]
        %v1185 = vld [vmem:[%s883 + $0x18] sm:$0xf]
        %v1186 = vld [vmem:[%s883 + $0x1c] sm:$0x1]
        %v1187 = vld [vmem:[%s883 + $0x20] sm:$0xf]
        %v1188 = vld [vmem:[%s883 + $0x24] sm:$0x1]
        %v1189 = vld [vmem:[%s883 + $0x28] sm:$0xf]
        %v1190 = vld [vmem:[%s883 + $0x2c] sm:$0x1]
        %v1191 = vld [vmem:[%s883 + $0x30] sm:$0xf]
        %v1192 = vld [vmem:[%s883 + $0x34] sm:$0x1]
        %v1193 = vld [vmem:[%s883 + $0x38] sm:$0xf]
        %v1194 = vld [vmem:[%s883 + $0x3c] sm:$0x1]
        %v1196 = vshrl.u32 %v1179, 16
        %v1198 = vrot.slane %v1196, 4
        %v1199 = vshll.u32 %v1179, 16
        %v1201 = vrot.slane %v1199, 5
        %v1202 = vor.u32 %v1198, %v1201
        %v1203 = vrot.slane %v1202, 4
        %v1205 = vshll.u32 %v1180, 16
        %v1207 = vrot.slane %v1205, 5
        %v1208 = vsel %vm1018, %v1203, %v1207
        %v1210 = vshrl.u32 %v1181, 16
        %v1212 = vrot.slane %v1210, 4
        %v1213 = vshll.u32 %v1181, 16
        %v1215 = vrot.slane %v1213, 5
        %v1216 = vor.u32 %v1212, %v1215
        %v1217 = vrot.slane %v1216, 4
        %v1219 = vshll.u32 %v1182, 16
        %v1221 = vrot.slane %v1219, 5
        %v1222 = vsel %vm1018, %v1217, %v1221
        %v1224 = vshrl.u32 %v1183, 16
        %v1226 = vrot.slane %v1224, 4
        %v1227 = vshll.u32 %v1183, 16
        %v1229 = vrot.slane %v1227, 5
        %v1230 = vor.u32 %v1226, %v1229
        %v1231 = vrot.slane %v1230, 4
        %v1233 = vshll.u32 %v1184, 16
        %v1235 = vrot.slane %v1233, 5
        %v1236 = vsel %vm1018, %v1231, %v1235
        %v1238 = vshrl.u32 %v1185, 16
        %v1240 = vrot.slane %v1238, 4
        %v1241 = vshll.u32 %v1185, 16
        %v1243 = vrot.slane %v1241, 5
        %v1244 = vor.u32 %v1240, %v1243
        %v1245 = vrot.slane %v1244, 4
        %v1247 = vshll.u32 %v1186, 16
        %v1249 = vrot.slane %v1247, 5
        %v1250 = vsel %vm1018, %v1245, %v1249
        %v1252 = vshrl.u32 %v1187, 16
        %v1254 = vrot.slane %v1252, 4
        %v1255 = vshll.u32 %v1187, 16
        %v1257 = vrot.slane %v1255, 5
        %v1258 = vor.u32 %v1254, %v1257
        %v1259 = vrot.slane %v1258, 4
        %v1261 = vshll.u32 %v1188, 16
        %v1263 = vrot.slane %v1261, 5
        %v1264 = vsel %vm1018, %v1259, %v1263
        %v1266 = vshrl.u32 %v1189, 16
        %v1268 = vrot.slane %v1266, 4
        %v1269 = vshll.u32 %v1189, 16
        %v1271 = vrot.slane %v1269, 5
        %v1272 = vor.u32 %v1268, %v1271
        %v1273 = vrot.slane %v1272, 4
        %v1275 = vshll.u32 %v1190, 16
        %v1277 = vrot.slane %v1275, 5
        %v1278 = vsel %vm1018, %v1273, %v1277
        %v1280 = vshrl.u32 %v1191, 16
        %v1282 = vrot.slane %v1280, 4
        %v1283 = vshll.u32 %v1191, 16
        %v1285 = vrot.slane %v1283, 5
        %v1286 = vor.u32 %v1282, %v1285
        %v1287 = vrot.slane %v1286, 4
        %v1289 = vshll.u32 %v1192, 16
        %v1291 = vrot.slane %v1289, 5
        %v1292 = vsel %vm1018, %v1287, %v1291
        %v1294 = vshrl.u32 %v1193, 16
        %v1296 = vrot.slane %v1294, 4
        %v1297 = vshll.u32 %v1193, 16
        %v1299 = vrot.slane %v1297, 5
        %v1300 = vor.u32 %v1296, %v1299
        %v1301 = vrot.slane %v1300, 4
        %v1303 = vshll.u32 %v1194, 16
        %v1305 = vrot.slane %v1303, 5
        %v1306 = vsel %vm1018, %v1301, %v1305
        %1315 = vst [vmem:[#allocation4 + $0x14] sm:$0xf] %v1208
        %1316 = vst [vmem:[#allocation4 + $0x38] sm:$0xf] %v1222
        %1317 = vst [vmem:[#allocation4 + $0x5c] sm:$0xf] %v1236
        %1318 = vst [vmem:[#allocation4 + $0x80] sm:$0xf] %v1250
        %1319 = vst [vmem:[#allocation4 + $0xa4] sm:$0xf] %v1264
        %1320 = vst [vmem:[#allocation4 + $0xc8] sm:$0xf] %v1278
        %1321 = vst [vmem:[#allocation4 + $0xec] sm:$0xf] %v1292
        %1322 = vst [vmem:[#allocation4 + $0x110] sm:$0xf] %v1306
        %s1323 = scalar_lea.vmem [#allocation2], 8
        %v1324 = vld [vmem:[%s1323] sm:$0xf]
        %v1325 = vld [vmem:[%s1323 + $0x8] sm:$0xf]
        %v1326 = vld [vmem:[%s1323 + $0x10] sm:$0xf]
        %v1327 = vld [vmem:[%s1323 + $0x18] sm:$0xf]
        %v1328 = vld [vmem:[%s1323 + $0x20] sm:$0xf]
        %v1329 = vld [vmem:[%s1323 + $0x28] sm:$0xf]
        %v1330 = vld [vmem:[%s1323 + $0x30] sm:$0xf]
        %v1331 = vld [vmem:[%s1323 + $0x38] sm:$0xf]
        %1332 = vst [vmem:[#allocation4 + $0x18] sm:$0xf] %v1324
        %1333 = vst [vmem:[#allocation4 + $0x3c] sm:$0xf] %v1325
        %1334 = vst [vmem:[#allocation4 + $0x60] sm:$0xf] %v1326
        %1335 = vst [vmem:[#allocation4 + $0x84] sm:$0xf] %v1327
        %1336 = vst [vmem:[#allocation4 + $0xa8] sm:$0xf] %v1328
        %1337 = vst [vmem:[#allocation4 + $0xcc] sm:$0xf] %v1329
        %1338 = vst [vmem:[#allocation4 + $0xf0] sm:$0xf] %v1330
        %1339 = vst [vmem:[#allocation4 + $0x114] sm:$0xf] %v1331
        %s1340 = scalar_lea.vmem [#allocation2], 80
        %v1341 = vld [vmem:[%s1340] sm:$0xf]
        %v1342 = vld [vmem:[%s1340 + $0x8] sm:$0xf]
        %v1343 = vld [vmem:[%s1340 + $0x10] sm:$0xf]
        %v1344 = vld [vmem:[%s1340 + $0x18] sm:$0xf]
        %v1345 = vld [vmem:[%s1340 + $0x20] sm:$0xf]
        %v1346 = vld [vmem:[%s1340 + $0x28] sm:$0xf]
        %v1347 = vld [vmem:[%s1340 + $0x30] sm:$0xf]
        %v1348 = vld [vmem:[%s1340 + $0x38] sm:$0xf]
        %1349 = vst [vmem:[#allocation4 + $0x1c] sm:$0xf] %v1341
        %1350 = vst [vmem:[#allocation4 + $0x40] sm:$0xf] %v1342
        %1351 = vst [vmem:[#allocation4 + $0x64] sm:$0xf] %v1343
        %1352 = vst [vmem:[#allocation4 + $0x88] sm:$0xf] %v1344
        %1353 = vst [vmem:[#allocation4 + $0xac] sm:$0xf] %v1345
        %1354 = vst [vmem:[#allocation4 + $0xd0] sm:$0xf] %v1346
        %1355 = vst [vmem:[#allocation4 + $0xf4] sm:$0xf] %v1347
        %1356 = vst [vmem:[#allocation4 + $0x118] sm:$0xf] %v1348
        %v1357 = vld [vmem:[%s1323] sm:$0xf]
        %v1358 = vld [vmem:[%s1323 + $0x4] sm:$0x1]
        %v1359 = vld [vmem:[%s1323 + $0x8] sm:$0xf]
        %v1360 = vld [vmem:[%s1323 + $0xc] sm:$0x1]
        %v1361 = vld [vmem:[%s1323 + $0x10] sm:$0xf]
        %v1362 = vld [vmem:[%s1323 + $0x14] sm:$0x1]
        %v1363 = vld [vmem:[%s1323 + $0x18] sm:$0xf]
        %v1364 = vld [vmem:[%s1323 + $0x1c] sm:$0x1]
        %v1365 = vld [vmem:[%s1323 + $0x20] sm:$0xf]
        %v1366 = vld [vmem:[%s1323 + $0x24] sm:$0x1]
        %v1367 = vld [vmem:[%s1323 + $0x28] sm:$0xf]
        %v1368 = vld [vmem:[%s1323 + $0x2c] sm:$0x1]
        %v1369 = vld [vmem:[%s1323 + $0x30] sm:$0xf]
        %v1370 = vld [vmem:[%s1323 + $0x34] sm:$0x1]
        %v1371 = vld [vmem:[%s1323 + $0x38] sm:$0xf]
        %v1372 = vld [vmem:[%s1323 + $0x3c] sm:$0x1]
        %v1374 = vshrl.u32 %v1357, 16
        %v1376 = vrot.slane %v1374, 4
        %v1377 = vshll.u32 %v1357, 16
        %v1379 = vrot.slane %v1377, 5
        %v1380 = vor.u32 %v1376, %v1379
        %v1381 = vrot.slane %v1380, 4
        %v1383 = vshll.u32 %v1358, 16
        %v1385 = vrot.slane %v1383, 5
        %v1386 = vsel %vm1018, %v1381, %v1385
        %v1388 = vshrl.u32 %v1359, 16
        %v1390 = vrot.slane %v1388, 4
        %v1391 = vshll.u32 %v1359, 16
        %v1393 = vrot.slane %v1391, 5
        %v1394 = vor.u32 %v1390, %v1393
        %v1395 = vrot.slane %v1394, 4
        %v1397 = vshll.u32 %v1360, 16
        %v1399 = vrot.slane %v1397, 5
        %v1400 = vsel %vm1018, %v1395, %v1399
        %v1402 = vshrl.u32 %v1361, 16
        %v1404 = vrot.slane %v1402, 4
        %v1405 = vshll.u32 %v1361, 16
        %v1407 = vrot.slane %v1405, 5
        %v1408 = vor.u32 %v1404, %v1407
        %v1409 = vrot.slane %v1408, 4
        %v1411 = vshll.u32 %v1362, 16
        %v1413 = vrot.slane %v1411, 5
        %v1414 = vsel %vm1018, %v1409, %v1413
        %v1416 = vshrl.u32 %v1363, 16
        %v1418 = vrot.slane %v1416, 4
        %v1419 = vshll.u32 %v1363, 16
        %v1421 = vrot.slane %v1419, 5
        %v1422 = vor.u32 %v1418, %v1421
        %v1423 = vrot.slane %v1422, 4
        %v1425 = vshll.u32 %v1364, 16
        %v1427 = vrot.slane %v1425, 5
        %v1428 = vsel %vm1018, %v1423, %v1427
        %v1430 = vshrl.u32 %v1365, 16
        %v1432 = vrot.slane %v1430, 4
        %v1433 = vshll.u32 %v1365, 16
        %v1435 = vrot.slane %v1433, 5
        %v1436 = vor.u32 %v1432, %v1435
        %v1437 = vrot.slane %v1436, 4
        %v1439 = vshll.u32 %v1366, 16
        %v1441 = vrot.slane %v1439, 5
        %v1442 = vsel %vm1018, %v1437, %v1441
        %v1444 = vshrl.u32 %v1367, 16
        %v1446 = vrot.slane %v1444, 4
        %v1447 = vshll.u32 %v1367, 16
        %v1449 = vrot.slane %v1447, 5
        %v1450 = vor.u32 %v1446, %v1449
        %v1451 = vrot.slane %v1450, 4
        %v1453 = vshll.u32 %v1368, 16
        %v1455 = vrot.slane %v1453, 5
        %v1456 = vsel %vm1018, %v1451, %v1455
        %v1458 = vshrl.u32 %v1369, 16
        %v1460 = vrot.slane %v1458, 4
        %v1461 = vshll.u32 %v1369, 16
        %v1463 = vrot.slane %v1461, 5
        %v1464 = vor.u32 %v1460, %v1463
        %v1465 = vrot.slane %v1464, 4
        %v1467 = vshll.u32 %v1370, 16
        %v1469 = vrot.slane %v1467, 5
        %v1470 = vsel %vm1018, %v1465, %v1469
        %v1472 = vshrl.u32 %v1371, 16
        %v1474 = vrot.slane %v1472, 4
        %v1475 = vshll.u32 %v1371, 16
        %v1477 = vrot.slane %v1475, 5
        %v1478 = vor.u32 %v1474, %v1477
        %v1479 = vrot.slane %v1478, 4
        %v1481 = vshll.u32 %v1372, 16
        %v1483 = vrot.slane %v1481, 5
        %v1484 = vsel %vm1018, %v1479, %v1483
        %1493 = vst [vmem:[#allocation4 + $0x20] sm:$0xf] %v1386
        %1494 = vst [vmem:[#allocation4 + $0x44] sm:$0xf] %v1400
        %1495 = vst [vmem:[#allocation4 + $0x68] sm:$0xf] %v1414
        %1496 = vst [vmem:[#allocation4 + $0x8c] sm:$0xf] %v1428
        %1497 = vst [vmem:[#allocation4 + $0xb0] sm:$0xf] %v1442
        %1498 = vst [vmem:[#allocation4 + $0xd4] sm:$0xf] %v1456
        %1499 = vst [vmem:[#allocation4 + $0xf8] sm:$0xf] %v1470
        %1500 = vst [vmem:[#allocation4 + $0x11c] sm:$0xf] %v1484
        %v1501 = vld [vmem:[#allocation4] sm:$0xff]
        %v1502 = vld [vmem:[#allocation4 + $0x8] sm:$0xff]
        %v1503 = vld [vmem:[#allocation4 + $0x10] sm:$0xff]
        %v1504 = vld [vmem:[#allocation4 + $0x18] sm:$0xff]
        %v1505 = vld [vmem:[#allocation4 + $0x20] sm:$0xf]
        %v1506 = vld [vmem:[#allocation4 + $0x24] sm:$0xff]
        %v1507 = vld [vmem:[#allocation4 + $0x2c] sm:$0xff]
        %v1508 = vld [vmem:[#allocation4 + $0x34] sm:$0xff]
        %v1509 = vld [vmem:[#allocation4 + $0x3c] sm:$0xff]
        %v1510 = vld [vmem:[#allocation4 + $0x44] sm:$0xf]
        %v1511 = vld [vmem:[#allocation4 + $0x48] sm:$0xff]
        %v1512 = vld [vmem:[#allocation4 + $0x50] sm:$0xff]
        %v1513 = vld [vmem:[#allocation4 + $0x58] sm:$0xff]
        %v1514 = vld [vmem:[#allocation4 + $0x60] sm:$0xff]
        %v1515 = vld [vmem:[#allocation4 + $0x68] sm:$0xf]
        %v1516 = vld [vmem:[#allocation4 + $0x6c] sm:$0xff]
        %v1517 = vld [vmem:[#allocation4 + $0x74] sm:$0xff]
        %v1518 = vld [vmem:[#allocation4 + $0x7c] sm:$0xff]
        %v1519 = vld [vmem:[#allocation4 + $0x84] sm:$0xff]
        %v1520 = vld [vmem:[#allocation4 + $0x8c] sm:$0xf]
        %v1521 = vld [vmem:[#allocation4 + $0x90] sm:$0xff]
        %v1522 = vld [vmem:[#allocation4 + $0x98] sm:$0xff]
        %v1523 = vld [vmem:[#allocation4 + $0xa0] sm:$0xff]
        %v1524 = vld [vmem:[#allocation4 + $0xa8] sm:$0xff]
        %v1525 = vld [vmem:[#allocation4 + $0xb0] sm:$0xf]
        %v1526 = vld [vmem:[#allocation4 + $0xb4] sm:$0xff]
        %v1527 = vld [vmem:[#allocation4 + $0xbc] sm:$0xff]
        %v1528 = vld [vmem:[#allocation4 + $0xc4] sm:$0xff]
        %v1529 = vld [vmem:[#allocation4 + $0xcc] sm:$0xff]
        %v1530 = vld [vmem:[#allocation4 + $0xd4] sm:$0xf]
        %v1531 = vld [vmem:[#allocation4 + $0xd8] sm:$0xff]
        %v1532 = vld [vmem:[#allocation4 + $0xe0] sm:$0xff]
        %v1533 = vld [vmem:[#allocation4 + $0xe8] sm:$0xff]
        %v1534 = vld [vmem:[#allocation4 + $0xf0] sm:$0xff]
        %v1535 = vld [vmem:[#allocation4 + $0xf8] sm:$0xf]
        %v1536 = vld [vmem:[#allocation4 + $0xfc] sm:$0xff]
        %v1537 = vld [vmem:[#allocation4 + $0x104] sm:$0xff]
        %v1538 = vld [vmem:[#allocation4 + $0x10c] sm:$0xff]
        %v1539 = vld [vmem:[#allocation4 + $0x114] sm:$0xff]
        %v1540 = vld [vmem:[#allocation4 + $0x11c] sm:$0xf]
        %v1541 = vld [vmem:[#allocation10] sm:$0xf]
        %v1542 = vld [vmem:[#allocation10 + $0x4] sm:$0xf]
        %v1543 = vld [vmem:[#allocation10 + $0x8] sm:$0xf]
        %v1544 = vld [vmem:[#allocation10 + $0xc] sm:$0xf]
        %v1545 = vld [vmem:[#allocation10 + $0x10] sm:$0xf]
        %v1546 = vld [vmem:[#allocation10 + $0x14] sm:$0xf]
        %v1547 = vld [vmem:[#allocation10 + $0x18] sm:$0xf]
        %v1548 = vld [vmem:[#allocation10 + $0x1c] sm:$0xf]
        %v1549 = vld [vmem:[#allocation10 + $0x20] sm:$0xf]
        %v1550 = vld [vmem:[#allocation10 + $0x24] sm:$0xf]
        %v1551 = vld [vmem:[#allocation10 + $0x28] sm:$0xf]
        %v1552 = vld [vmem:[#allocation10 + $0x2c] sm:$0xf]
        %v1553 = vld [vmem:[#allocation10 + $0x30] sm:$0xf]
        %v1554 = vld [vmem:[#allocation10 + $0x34] sm:$0xf]
        %v1555 = vld [vmem:[#allocation10 + $0x38] sm:$0xf]
        %v1556 = vld [vmem:[#allocation10 + $0x3c] sm:$0xf]
        %v1557 = vld [vmem:[#allocation10 + $0x40] sm:$0xf]
        %v1558 = vld [vmem:[#allocation10 + $0x44] sm:$0xf]
        %v1559 = vld [vmem:[#allocation10 + $0x48] sm:$0xf]
        %v1560 = vld [vmem:[#allocation10 + $0x4c] sm:$0xf]
        %v1561 = vld [vmem:[#allocation10 + $0x50] sm:$0xf]
        %v1562 = vld [vmem:[#allocation10 + $0x54] sm:$0xf]
        %v1563 = vld [vmem:[#allocation10 + $0x58] sm:$0xf]
        %v1564 = vld [vmem:[#allocation10 + $0x5c] sm:$0xf]
        %v1565 = vld [vmem:[#allocation10 + $0x60] sm:$0xf]
        %v1566 = vld [vmem:[#allocation10 + $0x64] sm:$0xf]
        %v1567 = vld [vmem:[#allocation10 + $0x68] sm:$0xf]
        %v1568 = vld [vmem:[#allocation10 + $0x6c] sm:$0xf]
        %v1569 = vld [vmem:[#allocation10 + $0x70] sm:$0xf]
        %v1570 = vld [vmem:[#allocation10 + $0x74] sm:$0xf]
        %v1571 = vld [vmem:[#allocation10 + $0x78] sm:$0xf]
        %v1572 = vld [vmem:[#allocation10 + $0x7c] sm:$0xf]
        %v1573 = vld [vmem:[#allocation10 + $0x80] sm:$0xf]
        %v1574 = vld [vmem:[#allocation10 + $0x84] sm:$0xf]
        %v1575 = vld [vmem:[#allocation10 + $0x88] sm:$0xf]
        %v1576 = vld [vmem:[#allocation10 + $0x8c] sm:$0xf]
        %v1577 = vld [vmem:[#allocation10 + $0x90] sm:$0xf]
        %v1578 = vld [vmem:[#allocation10 + $0x94] sm:$0xf]
        %v1579 = vld [vmem:[#allocation10 + $0x98] sm:$0xf]
        %v1580 = vld [vmem:[#allocation10 + $0x9c] sm:$0xf]
        %v1581 = vld [vmem:[#allocation10 + $0xa0] sm:$0xf]
        %v1582 = vld [vmem:[#allocation10 + $0xa4] sm:$0xf]
        %v1583 = vld [vmem:[#allocation10 + $0xa8] sm:$0xf]
        %v1584 = vld [vmem:[#allocation10 + $0xac] sm:$0xf]
        %v1585 = vld [vmem:[#allocation10 + $0xb0] sm:$0xf]
        %v1586 = vld [vmem:[#allocation10 + $0xb4] sm:$0xf]
        %v1587 = vld [vmem:[#allocation10 + $0xb8] sm:$0xf]
        %v1588 = vld [vmem:[#allocation10 + $0xbc] sm:$0xf]
        %v1589 = vld [vmem:[#allocation10 + $0xc0] sm:$0xf]
        %v1590 = vld [vmem:[#allocation10 + $0xc4] sm:$0xf]
        %v1591 = vld [vmem:[#allocation10 + $0xc8] sm:$0xf]
        %v1592 = vld [vmem:[#allocation10 + $0xcc] sm:$0xf]
        %v1593 = vld [vmem:[#allocation10 + $0xd0] sm:$0xf]
        %v1594 = vld [vmem:[#allocation10 + $0xd4] sm:$0xf]
        %v1595 = vld [vmem:[#allocation10 + $0xd8] sm:$0xf]
        %v1596 = vld [vmem:[#allocation10 + $0xdc] sm:$0xf]
        %v1597 = vld [vmem:[#allocation10 + $0xe0] sm:$0xf]
        %v1598 = vld [vmem:[#allocation10 + $0xe4] sm:$0xf]
        %v1599 = vld [vmem:[#allocation10 + $0xe8] sm:$0xf]
        %v1600 = vld [vmem:[#allocation10 + $0xec] sm:$0xf]
        %v1601 = vld [vmem:[#allocation10 + $0xf0] sm:$0xf]
        %v1602 = vld [vmem:[#allocation10 + $0xf4] sm:$0xf]
        %v1603 = vld [vmem:[#allocation10 + $0xf8] sm:$0xf]
        %v1604 = vld [vmem:[#allocation10 + $0xfc] sm:$0xf]
        %v1605 = vld [vmem:[#allocation10 + $0x100] sm:$0xf]
        %v1606 = vld [vmem:[#allocation10 + $0x104] sm:$0xf]
        %v1607 = vld [vmem:[#allocation10 + $0x108] sm:$0xf]
        %v1608 = vld [vmem:[#allocation10 + $0x10c] sm:$0xf]
        %v1609 = vld [vmem:[#allocation10 + $0x110] sm:$0xf]
        %v1610 = vld [vmem:[#allocation10 + $0x114] sm:$0xf]
        %v1611 = vld [vmem:[#allocation10 + $0x118] sm:$0xf]
        %v1612 = vld [vmem:[#allocation10 + $0x11c] sm:$0xf]
        %v1613 = vld [vmem:[#allocation10 + $0x120] sm:$0xf]
        %v1614 = vld [vmem:[#allocation10 + $0x124] sm:$0xf]
        %v1615 = vld [vmem:[#allocation10 + $0x128] sm:$0xf]
        %v1616 = vld [vmem:[#allocation10 + $0x12c] sm:$0xf]
        %v1617 = vld [vmem:[#allocation10 + $0x130] sm:$0xf]
        %v1618 = vld [vmem:[#allocation10 + $0x134] sm:$0xf]
        %v1619 = vld [vmem:[#allocation10 + $0x138] sm:$0xf]
        %v1620 = vld [vmem:[#allocation10 + $0x13c] sm:$0xf]
        %v1621 = vld [vmem:[#allocation10 + $0x140] sm:$0xf]
        %v1622 = vld [vmem:[#allocation10 + $0x144] sm:$0xf]
        %v1623 = vld [vmem:[#allocation10 + $0x148] sm:$0xf]
        %v1624 = vld [vmem:[#allocation10 + $0x14c] sm:$0xf]
        %v1625 = vld [vmem:[#allocation10 + $0x150] sm:$0xf]
        %v1626 = vld [vmem:[#allocation10 + $0x154] sm:$0xf]
        %v1627 = vld [vmem:[#allocation10 + $0x158] sm:$0xf]
        %v1628 = vld [vmem:[#allocation10 + $0x15c] sm:$0xf]
        %v1629 = vld [vmem:[#allocation10 + $0x160] sm:$0xf]
        %v1630 = vld [vmem:[#allocation10 + $0x164] sm:$0xf]
        %v1631 = vld [vmem:[#allocation10 + $0x168] sm:$0xf]
        %v1632 = vld [vmem:[#allocation10 + $0x16c] sm:$0xf]
        %v1633 = vld [vmem:[#allocation10 + $0x170] sm:$0xf]
        %v1634 = vld [vmem:[#allocation10 + $0x174] sm:$0xf]
        %v1635 = vld [vmem:[#allocation10 + $0x178] sm:$0xf]
        %v1636 = vld [vmem:[#allocation10 + $0x17c] sm:$0xf]
        %v1637 = vld [vmem:[#allocation10 + $0x180] sm:$0xf]
        %v1638 = vld [vmem:[#allocation10 + $0x184] sm:$0xf]
        %v1639 = vld [vmem:[#allocation10 + $0x188] sm:$0xf]
        %v1640 = vld [vmem:[#allocation10 + $0x18c] sm:$0xf]
        %v1641 = vld [vmem:[#allocation10 + $0x190] sm:$0xf]
        %v1642 = vld [vmem:[#allocation10 + $0x194] sm:$0xf]
        %v1643 = vld [vmem:[#allocation10 + $0x198] sm:$0xf]
        %v1644 = vld [vmem:[#allocation10 + $0x19c] sm:$0xf]
        %v1645 = vld [vmem:[#allocation10 + $0x1a0] sm:$0xf]
        %v1646 = vld [vmem:[#allocation10 + $0x1a4] sm:$0xf]
        %v1647 = vld [vmem:[#allocation10 + $0x1a8] sm:$0xf]
        %v1648 = vld [vmem:[#allocation10 + $0x1ac] sm:$0xf]
        %v1649 = vld [vmem:[#allocation10 + $0x1b0] sm:$0xf]
        %v1650 = vld [vmem:[#allocation10 + $0x1b4] sm:$0xf]
        %v1651 = vld [vmem:[#allocation10 + $0x1b8] sm:$0xf]
        %v1652 = vld [vmem:[#allocation10 + $0x1bc] sm:$0xf]
        %v1653 = vld [vmem:[#allocation10 + $0x1c0] sm:$0xf]
        %v1654 = vld [vmem:[#allocation10 + $0x1c4] sm:$0xf]
        %v1655 = vld [vmem:[#allocation10 + $0x1c8] sm:$0xf]
        %v1656 = vld [vmem:[#allocation10 + $0x1cc] sm:$0xf]
        %v1657 = vld [vmem:[#allocation10 + $0x1d0] sm:$0xf]
        %v1658 = vld [vmem:[#allocation10 + $0x1d4] sm:$0xf]
        %v1659 = vld [vmem:[#allocation10 + $0x1d8] sm:$0xf]
        %v1660 = vld [vmem:[#allocation10 + $0x1dc] sm:$0xf]
        %v1661 = vld [vmem:[#allocation10 + $0x1e0] sm:$0xf]
        %v1662 = vld [vmem:[#allocation10 + $0x1e4] sm:$0xf]
        %v1663 = vld [vmem:[#allocation10 + $0x1e8] sm:$0xf]
        %v1664 = vld [vmem:[#allocation10 + $0x1ec] sm:$0xf]
        %v1665 = vld [vmem:[#allocation10 + $0x1f0] sm:$0xf]
        %v1666 = vld [vmem:[#allocation10 + $0x1f4] sm:$0xf]
        %v1667 = vld [vmem:[#allocation10 + $0x1f8] sm:$0xf]
        %v1668 = vld [vmem:[#allocation10 + $0x1fc] sm:$0xf]
        %v1669 = vld [vmem:[#allocation10 + $0x200] sm:$0xf]
        %v1670 = vld [vmem:[#allocation10 + $0x204] sm:$0xf]
        %v1671 = vld [vmem:[#allocation10 + $0x208] sm:$0xf]
        %v1672 = vld [vmem:[#allocation10 + $0x20c] sm:$0xf]
        %v1673 = vld [vmem:[#allocation10 + $0x210] sm:$0xf]
        %v1674 = vld [vmem:[#allocation10 + $0x214] sm:$0xf]
        %v1675 = vld [vmem:[#allocation10 + $0x218] sm:$0xf]
        %v1676 = vld [vmem:[#allocation10 + $0x21c] sm:$0xf]
        %v1677 = vld [vmem:[#allocation10 + $0x220] sm:$0xf]
        %v1678 = vld [vmem:[#allocation10 + $0x224] sm:$0xf]
        %v1679 = vld [vmem:[#allocation10 + $0x228] sm:$0xf]
        %v1680 = vld [vmem:[#allocation10 + $0x22c] sm:$0xf]
        %v1681 = vld [vmem:[#allocation10 + $0x230] sm:$0xf]
        %v1682 = vld [vmem:[#allocation10 + $0x234] sm:$0xf]
        %v1683 = vld [vmem:[#allocation10 + $0x238] sm:$0xf]
        %v1684 = vld [vmem:[#allocation10 + $0x23c] sm:$0xf]
        %v1725 = vunpack.c.l.b16 %v1501
        %v1726 = vunpack.c.h.b16 %v1501
        %v1727 = vunpack.c.l.b16 %v1502
        %v1728 = vunpack.c.h.b16 %v1502
        %v1729 = vunpack.c.l.b16 %v1503
        %v1730 = vunpack.c.h.b16 %v1503
        %v1731 = vunpack.c.l.b16 %v1504
        %v1732 = vunpack.c.h.b16 %v1504
        %v1733 = vunpack.c.l.b16 %v1505
        %v1734 = vunpack.c.l.b16 %v1506
        %v1735 = vunpack.c.h.b16 %v1506
        %v1736 = vunpack.c.l.b16 %v1507
        %v1737 = vunpack.c.h.b16 %v1507
        %v1738 = vunpack.c.l.b16 %v1508
        %v1739 = vunpack.c.h.b16 %v1508
        %v1740 = vunpack.c.l.b16 %v1509
        %v1741 = vunpack.c.h.b16 %v1509
        %v1742 = vunpack.c.l.b16 %v1510
        %v1743 = vunpack.c.l.b16 %v1511
        %v1744 = vunpack.c.h.b16 %v1511
        %v1745 = vunpack.c.l.b16 %v1512
        %v1746 = vunpack.c.h.b16 %v1512
        %v1747 = vunpack.c.l.b16 %v1513
        %v1748 = vunpack.c.h.b16 %v1513
        %v1749 = vunpack.c.l.b16 %v1514
        %v1750 = vunpack.c.h.b16 %v1514
        %v1751 = vunpack.c.l.b16 %v1515
        %v1752 = vunpack.c.l.b16 %v1516
        %v1753 = vunpack.c.h.b16 %v1516
        %v1754 = vunpack.c.l.b16 %v1517
        %v1755 = vunpack.c.h.b16 %v1517
        %v1756 = vunpack.c.l.b16 %v1518
        %v1757 = vunpack.c.h.b16 %v1518
        %v1758 = vunpack.c.l.b16 %v1519
        %v1759 = vunpack.c.h.b16 %v1519
        %v1760 = vunpack.c.l.b16 %v1520
        %v1761 = vunpack.c.l.b16 %v1521
        %v1762 = vunpack.c.h.b16 %v1521
        %v1763 = vunpack.c.l.b16 %v1522
        %v1764 = vunpack.c.h.b16 %v1522
        %v1765 = vunpack.c.l.b16 %v1523
        %v1766 = vunpack.c.h.b16 %v1523
        %v1767 = vunpack.c.l.b16 %v1524
        %v1768 = vunpack.c.h.b16 %v1524
        %v1769 = vunpack.c.l.b16 %v1525
        %v1770 = vunpack.c.l.b16 %v1526
        %v1771 = vunpack.c.h.b16 %v1526
        %v1772 = vunpack.c.l.b16 %v1527
        %v1773 = vunpack.c.h.b16 %v1527
        %v1774 = vunpack.c.l.b16 %v1528
        %v1775 = vunpack.c.h.b16 %v1528
        %v1776 = vunpack.c.l.b16 %v1529
        %v1777 = vunpack.c.h.b16 %v1529
        %v1778 = vunpack.c.l.b16 %v1530
        %v1779 = vunpack.c.l.b16 %v1531
        %v1780 = vunpack.c.h.b16 %v1531
        %v1781 = vunpack.c.l.b16 %v1532
        %v1782 = vunpack.c.h.b16 %v1532
        %v1783 = vunpack.c.l.b16 %v1533
        %v1784 = vunpack.c.h.b16 %v1533
        %v1785 = vunpack.c.l.b16 %v1534
        %v1786 = vunpack.c.h.b16 %v1534
        %v1787 = vunpack.c.l.b16 %v1535
        %v1788 = vunpack.c.l.b16 %v1536
        %v1789 = vunpack.c.h.b16 %v1536
        %v1790 = vunpack.c.l.b16 %v1537
        %v1791 = vunpack.c.h.b16 %v1537
        %v1792 = vunpack.c.l.b16 %v1538
        %v1793 = vunpack.c.h.b16 %v1538
        %v1794 = vunpack.c.l.b16 %v1539
        %v1795 = vunpack.c.h.b16 %v1539
        %v1796 = vunpack.c.l.b16 %v1540
        %v1797 = vpack.c.b16 %v1734, %v1725
        %v1798 = vpack.c.b16 %v1735, %v1726
        %v1799 = vpack.c.b16 %v1736, %v1727
        %v1800 = vpack.c.b16 %v1737, %v1728
        %v1801 = vpack.c.b16 %v1738, %v1729
        %v1802 = vpack.c.b16 %v1739, %v1730
        %v1803 = vpack.c.b16 %v1740, %v1731
        %v1804 = vpack.c.b16 %v1741, %v1732
        %v1805 = vpack.c.b16 %v1742, %v1733
        %v1806 = vpack.c.b16 %v1752, %v1743
        %v1807 = vpack.c.b16 %v1753, %v1744
        %v1808 = vpack.c.b16 %v1754, %v1745
        %v1809 = vpack.c.b16 %v1755, %v1746
        %v1810 = vpack.c.b16 %v1756, %v1747
        %v1811 = vpack.c.b16 %v1757, %v1748
        %v1812 = vpack.c.b16 %v1758, %v1749
        %v1813 = vpack.c.b16 %v1759, %v1750
        %v1814 = vpack.c.b16 %v1760, %v1751
        %v1815 = vpack.c.b16 %v1770, %v1761
        %v1816 = vpack.c.b16 %v1771, %v1762
        %v1817 = vpack.c.b16 %v1772, %v1763
        %v1818 = vpack.c.b16 %v1773, %v1764
        %v1819 = vpack.c.b16 %v1774, %v1765
        %v1820 = vpack.c.b16 %v1775, %v1766
        %v1821 = vpack.c.b16 %v1776, %v1767
        %v1822 = vpack.c.b16 %v1777, %v1768
        %v1823 = vpack.c.b16 %v1778, %v1769
        %v1824 = vpack.c.b16 %v1788, %v1779
        %v1825 = vpack.c.b16 %v1789, %v1780
        %v1826 = vpack.c.b16 %v1790, %v1781
        %v1827 = vpack.c.b16 %v1791, %v1782
        %v1828 = vpack.c.b16 %v1792, %v1783
        %v1829 = vpack.c.b16 %v1793, %v1784
        %v1830 = vpack.c.b16 %v1794, %v1785
        %v1831 = vpack.c.b16 %v1795, %v1786
        %v1832 = vpack.c.b16 %v1796, %v1787
        %v2013 = vunpack.c.l.b16 %v1541
        %v2014 = vunpack.c.l.b16 %v1542
        %v2015 = vunpack.c.l.b16 %v1543
        %v2016 = vunpack.c.l.b16 %v1544
        %v2017 = vunpack.c.l.b16 %v1545
        %v2018 = vunpack.c.l.b16 %v1546
        %v2019 = vunpack.c.l.b16 %v1547
        %v2020 = vunpack.c.l.b16 %v1548
        %v2021 = vunpack.c.l.b16 %v1549
        %v2022 = vunpack.c.l.b16 %v1550
        %v2023 = vunpack.c.l.b16 %v1551
        %v2024 = vunpack.c.l.b16 %v1552
        %v2025 = vunpack.c.l.b16 %v1553
        %v2026 = vunpack.c.l.b16 %v1554
        %v2027 = vunpack.c.l.b16 %v1555
        %v2028 = vunpack.c.l.b16 %v1556
        %v2029 = vunpack.c.l.b16 %v1557
        %v2030 = vunpack.c.l.b16 %v1558
        %v2031 = vunpack.c.l.b16 %v1559
        %v2032 = vunpack.c.l.b16 %v1560
        %v2033 = vunpack.c.l.b16 %v1561
        %v2034 = vunpack.c.l.b16 %v1562
        %v2035 = vunpack.c.l.b16 %v1563
        %v2036 = vunpack.c.l.b16 %v1564
        %v2037 = vunpack.c.l.b16 %v1565
        %v2038 = vunpack.c.l.b16 %v1566
        %v2039 = vunpack.c.l.b16 %v1567
        %v2040 = vunpack.c.l.b16 %v1568
        %v2041 = vunpack.c.l.b16 %v1569
        %v2042 = vunpack.c.l.b16 %v1570
        %v2043 = vunpack.c.l.b16 %v1571
        %v2044 = vunpack.c.l.b16 %v1572
        %v2045 = vunpack.c.l.b16 %v1573
        %v2046 = vunpack.c.l.b16 %v1574
        %v2047 = vunpack.c.l.b16 %v1575
        %v2048 = vunpack.c.l.b16 %v1576
        %v2049 = vunpack.c.l.b16 %v1577
        %v2050 = vunpack.c.l.b16 %v1578
        %v2051 = vunpack.c.l.b16 %v1579
        %v2052 = vunpack.c.l.b16 %v1580
        %v2053 = vunpack.c.l.b16 %v1581
        %v2054 = vunpack.c.l.b16 %v1582
        %v2055 = vunpack.c.l.b16 %v1583
        %v2056 = vunpack.c.l.b16 %v1584
        %v2057 = vunpack.c.l.b16 %v1585
        %v2058 = vunpack.c.l.b16 %v1586
        %v2059 = vunpack.c.l.b16 %v1587
        %v2060 = vunpack.c.l.b16 %v1588
        %v2061 = vunpack.c.l.b16 %v1589
        %v2062 = vunpack.c.l.b16 %v1590
        %v2063 = vunpack.c.l.b16 %v1591
        %v2064 = vunpack.c.l.b16 %v1592
        %v2065 = vunpack.c.l.b16 %v1593
        %v2066 = vunpack.c.l.b16 %v1594
        %v2067 = vunpack.c.l.b16 %v1595
        %v2068 = vunpack.c.l.b16 %v1596
        %v2069 = vunpack.c.l.b16 %v1597
        %v2070 = vunpack.c.l.b16 %v1598
        %v2071 = vunpack.c.l.b16 %v1599
        %v2072 = vunpack.c.l.b16 %v1600
        %v2073 = vunpack.c.l.b16 %v1601
        %v2074 = vunpack.c.l.b16 %v1602
        %v2075 = vunpack.c.l.b16 %v1603
        %v2076 = vunpack.c.l.b16 %v1604
        %v2077 = vunpack.c.l.b16 %v1605
        %v2078 = vunpack.c.l.b16 %v1606
        %v2079 = vunpack.c.l.b16 %v1607
        %v2080 = vunpack.c.l.b16 %v1608
        %v2081 = vunpack.c.l.b16 %v1609
        %v2082 = vunpack.c.l.b16 %v1610
        %v2083 = vunpack.c.l.b16 %v1611
        %v2084 = vunpack.c.l.b16 %v1612
        %v2085 = vunpack.c.l.b16 %v1613
        %v2086 = vunpack.c.l.b16 %v1614
        %v2087 = vunpack.c.l.b16 %v1615
        %v2088 = vunpack.c.l.b16 %v1616
        %v2089 = vunpack.c.l.b16 %v1617
        %v2090 = vunpack.c.l.b16 %v1618
        %v2091 = vunpack.c.l.b16 %v1619
        %v2092 = vunpack.c.l.b16 %v1620
        %v2093 = vunpack.c.l.b16 %v1621
        %v2094 = vunpack.c.l.b16 %v1622
        %v2095 = vunpack.c.l.b16 %v1623
        %v2096 = vunpack.c.l.b16 %v1624
        %v2097 = vunpack.c.l.b16 %v1625
        %v2098 = vunpack.c.l.b16 %v1626
        %v2099 = vunpack.c.l.b16 %v1627
        %v2100 = vunpack.c.l.b16 %v1628
        %v2101 = vunpack.c.l.b16 %v1629
        %v2102 = vunpack.c.l.b16 %v1630
        %v2103 = vunpack.c.l.b16 %v1631
        %v2104 = vunpack.c.l.b16 %v1632
        %v2105 = vunpack.c.l.b16 %v1633
        %v2106 = vunpack.c.l.b16 %v1634
        %v2107 = vunpack.c.l.b16 %v1635
        %v2108 = vunpack.c.l.b16 %v1636
        %v2109 = vunpack.c.l.b16 %v1637
        %v2110 = vunpack.c.l.b16 %v1638
        %v2111 = vunpack.c.l.b16 %v1639
        %v2112 = vunpack.c.l.b16 %v1640
        %v2113 = vunpack.c.l.b16 %v1641
        %v2114 = vunpack.c.l.b16 %v1642
        %v2115 = vunpack.c.l.b16 %v1643
        %v2116 = vunpack.c.l.b16 %v1644
        %v2117 = vunpack.c.l.b16 %v1645
        %v2118 = vunpack.c.l.b16 %v1646
        %v2119 = vunpack.c.l.b16 %v1647
        %v2120 = vunpack.c.l.b16 %v1648
        %v2121 = vunpack.c.l.b16 %v1649
        %v2122 = vunpack.c.l.b16 %v1650
        %v2123 = vunpack.c.l.b16 %v1651
        %v2124 = vunpack.c.l.b16 %v1652
        %v2125 = vunpack.c.l.b16 %v1653
        %v2126 = vunpack.c.l.b16 %v1654
        %v2127 = vunpack.c.l.b16 %v1655
        %v2128 = vunpack.c.l.b16 %v1656
        %v2129 = vunpack.c.l.b16 %v1657
        %v2130 = vunpack.c.l.b16 %v1658
        %v2131 = vunpack.c.l.b16 %v1659
        %v2132 = vunpack.c.l.b16 %v1660
        %v2133 = vunpack.c.l.b16 %v1661
        %v2134 = vunpack.c.l.b16 %v1662
        %v2135 = vunpack.c.l.b16 %v1663
        %v2136 = vunpack.c.l.b16 %v1664
        %v2137 = vunpack.c.l.b16 %v1665
        %v2138 = vunpack.c.l.b16 %v1666
        %v2139 = vunpack.c.l.b16 %v1667
        %v2140 = vunpack.c.l.b16 %v1668
        %v2141 = vunpack.c.l.b16 %v1669
        %v2142 = vunpack.c.l.b16 %v1670
        %v2143 = vunpack.c.l.b16 %v1671
        %v2144 = vunpack.c.l.b16 %v1672
        %v2145 = vunpack.c.l.b16 %v1673
        %v2146 = vunpack.c.l.b16 %v1674
        %v2147 = vunpack.c.l.b16 %v1675
        %v2148 = vunpack.c.l.b16 %v1676
        %v2149 = vunpack.c.l.b16 %v1677
        %v2150 = vunpack.c.l.b16 %v1678
        %v2151 = vunpack.c.l.b16 %v1679
        %v2152 = vunpack.c.l.b16 %v1680
        %v2153 = vunpack.c.l.b16 %v1681
        %v2154 = vunpack.c.l.b16 %v1682
        %v2155 = vunpack.c.l.b16 %v1683
        %v2156 = vunpack.c.l.b16 %v1684
        %v2157 = vpack.c.b16 %v2014, %v2013
        %v2158 = vpack.c.b16 %v2016, %v2015
        %v2159 = vpack.c.b16 %v2018, %v2017
        %v2160 = vpack.c.b16 %v2020, %v2019
        %v2161 = vpack.c.b16 %v2022, %v2021
        %v2162 = vpack.c.b16 %v2024, %v2023
        %v2163 = vpack.c.b16 %v2026, %v2025
        %v2164 = vpack.c.b16 %v2028, %v2027
        %v2165 = vpack.c.b16 %v2030, %v2029
        %v2166 = vpack.c.b16 %v2032, %v2031
        %v2167 = vpack.c.b16 %v2034, %v2033
        %v2168 = vpack.c.b16 %v2036, %v2035
        %v2169 = vpack.c.b16 %v2038, %v2037
        %v2170 = vpack.c.b16 %v2040, %v2039
        %v2171 = vpack.c.b16 %v2042, %v2041
        %v2172 = vpack.c.b16 %v2044, %v2043
        %v2173 = vpack.c.b16 %v2046, %v2045
        %v2174 = vpack.c.b16 %v2048, %v2047
        %v2175 = vpack.c.b16 %v2050, %v2049
        %v2176 = vpack.c.b16 %v2052, %v2051
        %v2177 = vpack.c.b16 %v2054, %v2053
        %v2178 = vpack.c.b16 %v2056, %v2055
        %v2179 = vpack.c.b16 %v2058, %v2057
        %v2180 = vpack.c.b16 %v2060, %v2059
        %v2181 = vpack.c.b16 %v2062, %v2061
        %v2182 = vpack.c.b16 %v2064, %v2063
        %v2183 = vpack.c.b16 %v2066, %v2065
        %v2184 = vpack.c.b16 %v2068, %v2067
        %v2185 = vpack.c.b16 %v2070, %v2069
        %v2186 = vpack.c.b16 %v2072, %v2071
        %v2187 = vpack.c.b16 %v2074, %v2073
        %v2188 = vpack.c.b16 %v2076, %v2075
        %v2189 = vpack.c.b16 %v2078, %v2077
        %v2190 = vpack.c.b16 %v2080, %v2079
        %v2191 = vpack.c.b16 %v2082, %v2081
        %v2192 = vpack.c.b16 %v2084, %v2083
        %v2193 = vpack.c.b16 %v2086, %v2085
        %v2194 = vpack.c.b16 %v2088, %v2087
        %v2195 = vpack.c.b16 %v2090, %v2089
        %v2196 = vpack.c.b16 %v2092, %v2091
        %v2197 = vpack.c.b16 %v2094, %v2093
        %v2198 = vpack.c.b16 %v2096, %v2095
        %v2199 = vpack.c.b16 %v2098, %v2097
        %v2200 = vpack.c.b16 %v2100, %v2099
        %v2201 = vpack.c.b16 %v2102, %v2101
        %v2202 = vpack.c.b16 %v2104, %v2103
        %v2203 = vpack.c.b16 %v2106, %v2105
        %v2204 = vpack.c.b16 %v2108, %v2107
        %v2205 = vpack.c.b16 %v2110, %v2109
        %v2206 = vpack.c.b16 %v2112, %v2111
        %v2207 = vpack.c.b16 %v2114, %v2113
        %v2208 = vpack.c.b16 %v2116, %v2115
        %v2209 = vpack.c.b16 %v2118, %v2117
        %v2210 = vpack.c.b16 %v2120, %v2119
        %v2211 = vpack.c.b16 %v2122, %v2121
        %v2212 = vpack.c.b16 %v2124, %v2123
        %v2213 = vpack.c.b16 %v2126, %v2125
        %v2214 = vpack.c.b16 %v2128, %v2127
        %v2215 = vpack.c.b16 %v2130, %v2129
        %v2216 = vpack.c.b16 %v2132, %v2131
        %v2217 = vpack.c.b16 %v2134, %v2133
        %v2218 = vpack.c.b16 %v2136, %v2135
        %v2219 = vpack.c.b16 %v2138, %v2137
        %v2220 = vpack.c.b16 %v2140, %v2139
        %v2221 = vpack.c.b16 %v2142, %v2141
        %v2222 = vpack.c.b16 %v2144, %v2143
        %v2223 = vpack.c.b16 %v2146, %v2145
        %v2224 = vpack.c.b16 %v2148, %v2147
        %v2225 = vpack.c.b16 %v2150, %v2149
        %v2226 = vpack.c.b16 %v2152, %v2151
        %v2227 = vpack.c.b16 %v2154, %v2153
        %v2228 = vpack.c.b16 %v2156, %v2155
        %2301 = vmatprep.subr.bf16.mxu0 0
        %2302 = vmatpush1.bf16.msra.mxu0 %v2164
        %2303 = vmatprep.subr.bf16.mxu0 0
        %2304 = vmatpush1.bf16.msra.mxu0 %v2163
        %2305 = vmatprep.subr.bf16.mxu0 0
        %2306 = vmatpush1.bf16.msra.mxu0 %v2162
        %2307 = vmatprep.subr.bf16.mxu0 0
        %2308 = vmatpush1.bf16.msra.mxu0 %v2161
        %2309 = vmatprep.subr.bf16.mxu0 0
        %2310 = vmatpush1.bf16.msra.mxu0 %v2160
        %2311 = vmatprep.subr.bf16.mxu0 0
        %2312 = vmatpush1.bf16.msra.mxu0 %v2159
        %2313 = vmatprep.subr.bf16.mxu0 0
        %2314 = vmatpush1.bf16.msra.mxu0 %v2158
        %2315 = vmatprep.subr.bf16.mxu0 0
        %2316 = vmatpush1.bf16.msra.mxu0 %v2157
        %2317 = vmatprep.subr.bf16.mxu0 0
        %2318 = vmatpush2.bf16.msra.mxu0 %v2172
        %2319 = vmatprep.subr.bf16.mxu0 0
        %2320 = vmatpush2.bf16.msra.mxu0 %v2171
        %2321 = vmatprep.subr.bf16.mxu0 0
        %2322 = vmatpush2.bf16.msra.mxu0 %v2170
        %2323 = vmatprep.subr.bf16.mxu0 0
        %2324 = vmatpush2.bf16.msra.mxu0 %v2169
        %2325 = vmatprep.subr.bf16.mxu0 0
        %2326 = vmatpush2.bf16.msra.mxu0 %v2168
        %2327 = vmatprep.subr.bf16.mxu0 0
        %2328 = vmatpush2.bf16.msra.mxu0 %v2167
        %2329 = vmatprep.subr.bf16.mxu0 0
        %2330 = vmatpush2.bf16.msra.mxu0 %v2166
        %2331 = vmatprep.subr.bf16.mxu0 0
        %2332 = vmatpush2.bf16.msra.mxu0 %v2165
        %2333 = vmatprep.mubr.bf16.mxu0 %v1798
        %2334 = vmatmul.mubr.bf16.gmra.mxu0 %v1797
        %v2335 = vpop.f32.mrf.mxu0
        %v2336 = vadd.f32 0.0, %v2335
        %v2337 = vpop.f32.mrf.mxu0
        %v2338 = vpop.f32.mrf.mxu0
        %v2339 = vadd.f32 0.0, %v2338
        %v2340 = vpop.f32.mrf.mxu0
        %2341 = vmatprep.mubr.bf16.mxu0 %v1807
        %2342 = vmatmul.mubr.bf16.gmra.mxu0 %v1806
        %v2343 = vpop.f32.mrf.mxu0
        %v2344 = vadd.f32 0.0, %v2343
        %v2345 = vpop.f32.mrf.mxu0
        %v2346 = vpop.f32.mrf.mxu0
        %v2347 = vadd.f32 0.0, %v2346
        %v2348 = vpop.f32.mrf.mxu0
        %2349 = vmatprep.mubr.bf16.mxu0 %v1816
        %2350 = vmatmul.mubr.bf16.gmra.mxu0 %v1815
        %v2351 = vpop.f32.mrf.mxu0
        %v2352 = vadd.f32 0.0, %v2351
        %v2353 = vpop.f32.mrf.mxu0
        %v2354 = vpop.f32.mrf.mxu0
        %v2355 = vadd.f32 0.0, %v2354
        %v2356 = vpop.f32.mrf.mxu0
        %2357 = vmatprep.mubr.bf16.mxu0 %v1825
        %2358 = vmatmul.mubr.bf16.gmra.mxu0 %v1824
        %v2359 = vpop.f32.mrf.mxu0
        %v2360 = vadd.f32 0.0, %v2359
        %v2361 = vpop.f32.mrf.mxu0
        %v2362 = vpop.f32.mrf.mxu0
        %v2363 = vadd.f32 0.0, %v2362
        %v2364 = vpop.f32.mrf.mxu0
        %2365 = vdwg.mxu0
        %2366 = vmatprep.subr.bf16.mxu0 0
        %2367 = vmatpush1.bf16.msra.mxu0 %v2180
        %2368 = vmatprep.subr.bf16.mxu0 0
        %2369 = vmatpush1.bf16.msra.mxu0 %v2179
        %2370 = vmatprep.subr.bf16.mxu0 0
        %2371 = vmatpush1.bf16.msra.mxu0 %v2178
        %2372 = vmatprep.subr.bf16.mxu0 0
        %2373 = vmatpush1.bf16.msra.mxu0 %v2177
        %2374 = vmatprep.subr.bf16.mxu0 0
        %2375 = vmatpush1.bf16.msra.mxu0 %v2176
        %2376 = vmatprep.subr.bf16.mxu0 0
        %2377 = vmatpush1.bf16.msra.mxu0 %v2175
        %2378 = vmatprep.subr.bf16.mxu0 0
        %2379 = vmatpush1.bf16.msra.mxu0 %v2174
        %2380 = vmatprep.subr.bf16.mxu0 0
        %2381 = vmatpush1.bf16.msra.mxu0 %v2173
        %2382 = vmatprep.subr.bf16.mxu0 0
        %2383 = vmatpush2.bf16.msra.mxu0 %v2188
        %2384 = vmatprep.subr.bf16.mxu0 0
        %2385 = vmatpush2.bf16.msra.mxu0 %v2187
        %2386 = vmatprep.subr.bf16.mxu0 0
        %2387 = vmatpush2.bf16.msra.mxu0 %v2186
        %2388 = vmatprep.subr.bf16.mxu0 0
        %2389 = vmatpush2.bf16.msra.mxu0 %v2185
        %2390 = vmatprep.subr.bf16.mxu0 0
        %2391 = vmatpush2.bf16.msra.mxu0 %v2184
        %2392 = vmatprep.subr.bf16.mxu0 0
        %2393 = vmatpush2.bf16.msra.mxu0 %v2183
        %2394 = vmatprep.subr.bf16.mxu0 0
        %2395 = vmatpush2.bf16.msra.mxu0 %v2182
        %2396 = vmatprep.subr.bf16.mxu0 0
        %2397 = vmatpush2.bf16.msra.mxu0 %v2181
        %2398 = vmatprep.mubr.bf16.mxu0 %v1800
        %2399 = vmatmul.mubr.bf16.gmra.mxu0 %v1799
        %v2400 = vpop.f32.mrf.mxu0
        %v2401 = vadd.f32 %v2336, %v2400
        %v2402 = vpop.f32.mrf.mxu0
        %v2403 = vpop.f32.mrf.mxu0
        %v2404 = vadd.f32 %v2339, %v2403
        %v2405 = vpop.f32.mrf.mxu0
        %2406 = vmatprep.mubr.bf16.mxu0 %v1809
        %2407 = vmatmul.mubr.bf16.gmra.mxu0 %v1808
        %v2408 = vpop.f32.mrf.mxu0
        %v2409 = vadd.f32 %v2344, %v2408
        %v2410 = vpop.f32.mrf.mxu0
        %v2411 = vpop.f32.mrf.mxu0
        %v2412 = vadd.f32 %v2347, %v2411
        %v2413 = vpop.f32.mrf.mxu0
        %2414 = vmatprep.mubr.bf16.mxu0 %v1818
        %2415 = vmatmul.mubr.bf16.gmra.mxu0 %v1817
        %v2416 = vpop.f32.mrf.mxu0
        %v2417 = vadd.f32 %v2352, %v2416
        %v2418 = vpop.f32.mrf.mxu0
        %v2419 = vpop.f32.mrf.mxu0
        %v2420 = vadd.f32 %v2355, %v2419
        %v2421 = vpop.f32.mrf.mxu0
        %2422 = vmatprep.mubr.bf16.mxu0 %v1827
        %2423 = vmatmul.mubr.bf16.gmra.mxu0 %v1826
        %v2424 = vpop.f32.mrf.mxu0
        %v2425 = vadd.f32 %v2360, %v2424
        %v2426 = vpop.f32.mrf.mxu0
        %v2427 = vpop.f32.mrf.mxu0
        %v2428 = vadd.f32 %v2363, %v2427
        %v2429 = vpop.f32.mrf.mxu0
        %2430 = vdwg.mxu0
        %2431 = vmatprep.subr.bf16.mxu0 0
        %2432 = vmatpush1.bf16.msra.mxu0 %v2196
        %2433 = vmatprep.subr.bf16.mxu0 0
        %2434 = vmatpush1.bf16.msra.mxu0 %v2195
        %2435 = vmatprep.subr.bf16.mxu0 0
        %2436 = vmatpush1.bf16.msra.mxu0 %v2194
        %2437 = vmatprep.subr.bf16.mxu0 0
        %2438 = vmatpush1.bf16.msra.mxu0 %v2193
        %2439 = vmatprep.subr.bf16.mxu0 0
        %2440 = vmatpush1.bf16.msra.mxu0 %v2192
        %2441 = vmatprep.subr.bf16.mxu0 0
        %2442 = vmatpush1.bf16.msra.mxu0 %v2191
        %2443 = vmatprep.subr.bf16.mxu0 0
        %2444 = vmatpush1.bf16.msra.mxu0 %v2190
        %2445 = vmatprep.subr.bf16.mxu0 0
        %2446 = vmatpush1.bf16.msra.mxu0 %v2189
        %2447 = vmatprep.subr.bf16.mxu0 0
        %2448 = vmatpush2.bf16.msra.mxu0 %v2204
        %2449 = vmatprep.subr.bf16.mxu0 0
        %2450 = vmatpush2.bf16.msra.mxu0 %v2203
        %2451 = vmatprep.subr.bf16.mxu0 0
        %2452 = vmatpush2.bf16.msra.mxu0 %v2202
        %2453 = vmatprep.subr.bf16.mxu0 0
        %2454 = vmatpush2.bf16.msra.mxu0 %v2201
        %2455 = vmatprep.subr.bf16.mxu0 0
        %2456 = vmatpush2.bf16.msra.mxu0 %v2200
        %2457 = vmatprep.subr.bf16.mxu0 0
        %2458 = vmatpush2.bf16.msra.mxu0 %v2199
        %2459 = vmatprep.subr.bf16.mxu0 0
        %2460 = vmatpush2.bf16.msra.mxu0 %v2198
        %2461 = vmatprep.subr.bf16.mxu0 0
        %2462 = vmatpush2.bf16.msra.mxu0 %v2197
        %2463 = vmatprep.mubr.bf16.mxu0 %v1802
        %2464 = vmatmul.mubr.bf16.gmra.mxu0 %v1801
        %v2465 = vpop.f32.mrf.mxu0
        %v2466 = vadd.f32 %v2401, %v2465
        %v2467 = vpop.f32.mrf.mxu0
        %v2468 = vpop.f32.mrf.mxu0
        %v2469 = vadd.f32 %v2404, %v2468
        %v2470 = vpop.f32.mrf.mxu0
        %2471 = vmatprep.mubr.bf16.mxu0 %v1811
        %2472 = vmatmul.mubr.bf16.gmra.mxu0 %v1810
        %v2473 = vpop.f32.mrf.mxu0
        %v2474 = vadd.f32 %v2409, %v2473
        %v2475 = vpop.f32.mrf.mxu0
        %v2476 = vpop.f32.mrf.mxu0
        %v2477 = vadd.f32 %v2412, %v2476
        %v2478 = vpop.f32.mrf.mxu0
        %2479 = vmatprep.mubr.bf16.mxu0 %v1820
        %2480 = vmatmul.mubr.bf16.gmra.mxu0 %v1819
        %v2481 = vpop.f32.mrf.mxu0
        %v2482 = vadd.f32 %v2417, %v2481
        %v2483 = vpop.f32.mrf.mxu0
        %v2484 = vpop.f32.mrf.mxu0
        %v2485 = vadd.f32 %v2420, %v2484
        %v2486 = vpop.f32.mrf.mxu0
        %2487 = vmatprep.mubr.bf16.mxu0 %v1829
        %2488 = vmatmul.mubr.bf16.gmra.mxu0 %v1828
        %v2489 = vpop.f32.mrf.mxu0
        %v2490 = vadd.f32 %v2425, %v2489
        %v2491 = vpop.f32.mrf.mxu0
        %v2492 = vpop.f32.mrf.mxu0
        %v2493 = vadd.f32 %v2428, %v2492
        %v2494 = vpop.f32.mrf.mxu0
        %2495 = vdwg.mxu0
        %2496 = vmatprep.subr.bf16.mxu0 0
        %2497 = vmatpush1.bf16.msra.mxu0 %v2212
        %2498 = vmatprep.subr.bf16.mxu0 0
        %2499 = vmatpush1.bf16.msra.mxu0 %v2211
        %2500 = vmatprep.subr.bf16.mxu0 0
        %2501 = vmatpush1.bf16.msra.mxu0 %v2210
        %2502 = vmatprep.subr.bf16.mxu0 0
        %2503 = vmatpush1.bf16.msra.mxu0 %v2209
        %2504 = vmatprep.subr.bf16.mxu0 0
        %2505 = vmatpush1.bf16.msra.mxu0 %v2208
        %2506 = vmatprep.subr.bf16.mxu0 0
        %2507 = vmatpush1.bf16.msra.mxu0 %v2207
        %2508 = vmatprep.subr.bf16.mxu0 0
        %2509 = vmatpush1.bf16.msra.mxu0 %v2206
        %2510 = vmatprep.subr.bf16.mxu0 0
        %2511 = vmatpush1.bf16.msra.mxu0 %v2205
        %2512 = vmatprep.subr.bf16.mxu0 0
        %2513 = vmatpush2.bf16.msra.mxu0 %v2220
        %2514 = vmatprep.subr.bf16.mxu0 0
        %2515 = vmatpush2.bf16.msra.mxu0 %v2219
        %2516 = vmatprep.subr.bf16.mxu0 0
        %2517 = vmatpush2.bf16.msra.mxu0 %v2218
        %2518 = vmatprep.subr.bf16.mxu0 0
        %2519 = vmatpush2.bf16.msra.mxu0 %v2217
        %2520 = vmatprep.subr.bf16.mxu0 0
        %2521 = vmatpush2.bf16.msra.mxu0 %v2216
        %2522 = vmatprep.subr.bf16.mxu0 0
        %2523 = vmatpush2.bf16.msra.mxu0 %v2215
        %2524 = vmatprep.subr.bf16.mxu0 0
        %2525 = vmatpush2.bf16.msra.mxu0 %v2214
        %2526 = vmatprep.subr.bf16.mxu0 0
        %2527 = vmatpush2.bf16.msra.mxu0 %v2213
        %2528 = vmatprep.mubr.bf16.mxu0 %v1804
        %2529 = vmatmul.mubr.bf16.gmra.mxu0 %v1803
        %v2530 = vpop.f32.mrf.mxu0
        %v2531 = vadd.f32 %v2466, %v2530
        %v2532 = vpop.f32.mrf.mxu0
        %v2533 = vpop.f32.mrf.mxu0
        %v2534 = vadd.f32 %v2469, %v2533
        %v2535 = vpop.f32.mrf.mxu0
        %2536 = vmatprep.mubr.bf16.mxu0 %v1813
        %2537 = vmatmul.mubr.bf16.gmra.mxu0 %v1812
        %v2538 = vpop.f32.mrf.mxu0
        %v2539 = vadd.f32 %v2474, %v2538
        %v2540 = vpop.f32.mrf.mxu0
        %v2541 = vpop.f32.mrf.mxu0
        %v2542 = vadd.f32 %v2477, %v2541
        %v2543 = vpop.f32.mrf.mxu0
        %2544 = vmatprep.mubr.bf16.mxu0 %v1822
        %2545 = vmatmul.mubr.bf16.gmra.mxu0 %v1821
        %v2546 = vpop.f32.mrf.mxu0
        %v2547 = vadd.f32 %v2482, %v2546
        %v2548 = vpop.f32.mrf.mxu0
        %v2549 = vpop.f32.mrf.mxu0
        %v2550 = vadd.f32 %v2485, %v2549
        %v2551 = vpop.f32.mrf.mxu0
        %2552 = vmatprep.mubr.bf16.mxu0 %v1831
        %2553 = vmatmul.mubr.bf16.gmra.mxu0 %v1830
        %v2554 = vpop.f32.mrf.mxu0
        %v2555 = vadd.f32 %v2490, %v2554
        %v2556 = vpop.f32.mrf.mxu0
        %v2557 = vpop.f32.mrf.mxu0
        %v2558 = vadd.f32 %v2493, %v2557
        %v2559 = vpop.f32.mrf.mxu0
        %2560 = vdwg.mxu0
        %2561 = vmatprep.subr.bf16.mxu0 0
        %2562 = vmatpush1.bf16.msra.mxu0 %v2228
        %2563 = vmatprep.subr.bf16.mxu0 0
        %2564 = vmatpush1.bf16.msra.mxu0 %v2227
        %2565 = vmatprep.subr.bf16.mxu0 0
        %2566 = vmatpush1.bf16.msra.mxu0 %v2226
        %2567 = vmatprep.subr.bf16.mxu0 0
        %2568 = vmatpush1.bf16.msra.mxu0 %v2225
        %2569 = vmatprep.subr.bf16.mxu0 0
        %2570 = vmatpush1.bf16.msra.mxu0 %v2224
        %2571 = vmatprep.subr.bf16.mxu0 0
        %2572 = vmatpush1.bf16.msra.mxu0 %v2223
        %2573 = vmatprep.subr.bf16.mxu0 0
        %2574 = vmatpush1.bf16.msra.mxu0 %v2222
        %2575 = vmatprep.subr.bf16.mxu0 0
        %2576 = vmatpush1.bf16.msra.mxu0 %v2221
        %2577 = vmatprep.subr.bf16.mxu0 0
        %2578 = vmatpush2.bf16.msra.mxu0 0
        %2579 = vmatprep.subr.bf16.mxu0 0
        %2580 = vmatpush2.bf16.msra.mxu0 0
        %2581 = vmatprep.subr.bf16.mxu0 0
        %2582 = vmatpush2.bf16.msra.mxu0 0
        %2583 = vmatprep.subr.bf16.mxu0 0
        %2584 = vmatpush2.bf16.msra.mxu0 0
        %2585 = vmatprep.subr.bf16.mxu0 0
        %2586 = vmatpush2.bf16.msra.mxu0 0
        %2587 = vmatprep.subr.bf16.mxu0 0
        %2588 = vmatpush2.bf16.msra.mxu0 0
        %2589 = vmatprep.subr.bf16.mxu0 0
        %2590 = vmatpush2.bf16.msra.mxu0 0
        %2591 = vmatprep.subr.bf16.mxu0 0
        %2592 = vmatpush2.bf16.msra.mxu0 0
        %2593 = vmatprep.mubr.bf16.mxu0 0
        %2594 = vmatmul.mubr.bf16.gmra.mxu0 %v1805
        %v2595 = vpop.f32.mrf.mxu0
        %v2596 = vadd.f32 %v2531, %v2595
        %v2597 = vpop.f32.mrf.mxu0
        %v2598 = vpop.f32.mrf.mxu0
        %v2599 = vadd.f32 %v2534, %v2598
        %v2600 = vpop.f32.mrf.mxu0
        %2601 = vmatprep.mubr.bf16.mxu0 0
        %2602 = vmatmul.mubr.bf16.gmra.mxu0 %v1814
        %v2603 = vpop.f32.mrf.mxu0
        %v2604 = vadd.f32 %v2539, %v2603
        %v2605 = vpop.f32.mrf.mxu0
        %v2606 = vpop.f32.mrf.mxu0
        %v2607 = vadd.f32 %v2542, %v2606
        %v2608 = vpop.f32.mrf.mxu0
        %2609 = vmatprep.mubr.bf16.mxu0 0
        %2610 = vmatmul.mubr.bf16.gmra.mxu0 %v1823
        %v2611 = vpop.f32.mrf.mxu0
        %v2612 = vadd.f32 %v2547, %v2611
        %v2613 = vpop.f32.mrf.mxu0
        %v2614 = vpop.f32.mrf.mxu0
        %v2615 = vadd.f32 %v2550, %v2614
        %v2616 = vpop.f32.mrf.mxu0
        %2617 = vmatprep.mubr.bf16.mxu0 0
        %2618 = vmatmul.mubr.bf16.gmra.mxu0 %v1832
        %v2619 = vpop.f32.mrf.mxu0
        %v2620 = vadd.f32 %v2555, %v2619
        %v2621 = vpop.f32.mrf.mxu0
        %v2622 = vpop.f32.mrf.mxu0
        %v2623 = vadd.f32 %v2558, %v2622
        %v2624 = vpop.f32.mrf.mxu0
        %2625 = vdwg.mxu0
        %v2626 = vld [vmem:[%s6] sm:$0x1]
        %v2628 = vlaneseq
        %v2629 = vshrl.u32 %v2628, 7
        %v2630 = vsub.s32 0, %v2629
        %v2631 = vrot.slane %v2626, %v2630
        %v2633 = vmul.f32 %v2596, %v2631
        %v2634 = vmul.f32 %v2599, %v2631
        %v2635 = vmul.f32 %v2604, %v2631
        %v2636 = vmul.f32 %v2607, %v2631
        %v2637 = vmul.f32 %v2612, %v2631
        %v2638 = vmul.f32 %v2615, %v2631
        %v2639 = vmul.f32 %v2620, %v2631
        %v2640 = vmul.f32 %v2623, %v2631
        %v2641 = vld [vmem:[%s7] sm:$0x1]
        %v2643 = vlaneseq
        %v2644 = vshrl.u32 %v2643, 7
        %v2645 = vsub.s32 0, %v2644
        %v2646 = vrot.slane %v2641, %v2645
        %v2648 = vadd.f32 %v2633, %v2646
        %v2649 = vadd.f32 %v2634, %v2646
        %v2650 = vadd.f32 %v2635, %v2646
        %v2651 = vadd.f32 %v2636, %v2646
        %v2652 = vadd.f32 %v2637, %v2646
        %v2653 = vadd.f32 %v2638, %v2646
        %v2654 = vadd.f32 %v2639, %v2646
        %v2655 = vadd.f32 %v2640, %v2646
        %v2656 = vmax.f32 %v2648, 0.0
        %v2657 = vmax.f32 %v2649, 0.0
        %v2658 = vmax.f32 %v2650, 0.0
        %v2659 = vmax.f32 %v2651, 0.0
        %v2660 = vmax.f32 %v2652, 0.0
        %v2661 = vmax.f32 %v2653, 0.0
        %v2662 = vmax.f32 %v2654, 0.0
        %v2663 = vmax.f32 %v2655, 0.0
        %v2664 = vpack.c.bf16 %v2657, %v2656
        %v2665 = vpack.c.bf16 %v2659, %v2658
        %v2666 = vpack.c.bf16 %v2661, %v2660
        %v2667 = vpack.c.bf16 %v2663, %v2662
        %v2672 = vunpack.c.l.b16 %v2664
        %v2673 = vunpack.c.h.b16 %v2664
        %v2674 = vunpack.c.l.b16 %v2665
        %v2675 = vunpack.c.h.b16 %v2665
        %v2676 = vunpack.c.l.b16 %v2666
        %v2677 = vunpack.c.h.b16 %v2666
        %v2678 = vunpack.c.l.b16 %v2667
        %v2679 = vunpack.c.h.b16 %v2667
        %v2680 = vpack.c.b16 %v2672, %v2672
        %v2681 = vpack.c.b16 %v2673, %v2673
        %v2682 = vpack.c.b16 %v2674, %v2674
        %v2683 = vpack.c.b16 %v2675, %v2675
        %v2684 = vpack.c.b16 %v2676, %v2676
        %v2685 = vpack.c.b16 %v2677, %v2677
        %v2686 = vpack.c.b16 %v2678, %v2678
        %v2687 = vpack.c.b16 %v2679, %v2679
        %v2689 = vshrl.u32 %v2680, 16
        %v2691 = vrot.slane %v2689, 7
        %v2692 = vshll.u32 %v2680, 16
        %v2694 = vor.u32 %v2691, %v2692
        %v2695 = vrot.slane %v2691, 4
        %v2697 = vshrl.u32 %v2681, 16
        %v2699 = vrot.slane %v2697, 7
        %v2700 = vshll.u32 %v2681, 16
        %v2702 = vor.u32 %v2699, %v2700
        %v2703 = vrot.slane %v2699, 4
        %v2705 = vshrl.u32 %v2682, 16
        %v2707 = vrot.slane %v2705, 7
        %v2708 = vshll.u32 %v2682, 16
        %v2710 = vor.u32 %v2707, %v2708
        %v2711 = vrot.slane %v2707, 4
        %v2713 = vshrl.u32 %v2683, 16
        %v2715 = vrot.slane %v2713, 7
        %v2716 = vshll.u32 %v2683, 16
        %v2718 = vor.u32 %v2715, %v2716
        %v2719 = vrot.slane %v2715, 4
        %v2721 = vshrl.u32 %v2684, 16
        %v2723 = vrot.slane %v2721, 7
        %v2724 = vshll.u32 %v2684, 16
        %v2726 = vor.u32 %v2723, %v2724
        %v2727 = vrot.slane %v2723, 4
        %v2729 = vshrl.u32 %v2685, 16
        %v2731 = vrot.slane %v2729, 7
        %v2732 = vshll.u32 %v2685, 16
        %v2734 = vor.u32 %v2731, %v2732
        %v2735 = vrot.slane %v2731, 4
        %v2737 = vshrl.u32 %v2686, 16
        %v2739 = vrot.slane %v2737, 7
        %v2740 = vshll.u32 %v2686, 16
        %v2742 = vor.u32 %v2739, %v2740
        %v2743 = vrot.slane %v2739, 4
        %v2745 = vshrl.u32 %v2687, 16
        %v2747 = vrot.slane %v2745, 7
        %v2748 = vshll.u32 %v2687, 16
        %v2750 = vor.u32 %v2747, %v2748
        %v2751 = vrot.slane %v2747, 4
        %s2768 = scalar_lea.vmem [#allocation3], 8
        %vm2769 = vcmask 1043456
        %vm2770 = vmand %vm2769, %vm532
        %v2771 = vld [vmem:[%s2768] sm:$0xf]
        %v2772 = vsel %vm2770, %v2694, %v2771
        %2773 = vst [vmem:[%s2768] sm:$0xf] %v2772
        %v2774 = vld [vmem:[%s2768 + $0x4] sm:$0x1]
        %v2775 = vsel %vm373, %v2695, %v2774
        %2776 = vst [vmem:[%s2768 + $0x4] sm:$0x1] %v2775
        %v2777 = vld [vmem:[%s2768 + $0x8] sm:$0xf]
        %v2778 = vsel %vm2770, %v2702, %v2777
        %2779 = vst [vmem:[%s2768 + $0x8] sm:$0xf] %v2778
        %v2780 = vld [vmem:[%s2768 + $0xc] sm:$0x1]
        %v2781 = vsel %vm373, %v2703, %v2780
        %2782 = vst [vmem:[%s2768 + $0xc] sm:$0x1] %v2781
        %v2783 = vld [vmem:[%s2768 + $0x10] sm:$0xf]
        %v2784 = vsel %vm2770, %v2710, %v2783
        %2785 = vst [vmem:[%s2768 + $0x10] sm:$0xf] %v2784
        %v2786 = vld [vmem:[%s2768 + $0x14] sm:$0x1]
        %v2787 = vsel %vm373, %v2711, %v2786
        %2788 = vst [vmem:[%s2768 + $0x14] sm:$0x1] %v2787
        %v2789 = vld [vmem:[%s2768 + $0x18] sm:$0xf]
        %v2790 = vsel %vm2770, %v2718, %v2789
        %2791 = vst [vmem:[%s2768 + $0x18] sm:$0xf] %v2790
        %v2792 = vld [vmem:[%s2768 + $0x1c] sm:$0x1]
        %v2793 = vsel %vm373, %v2719, %v2792
        %2794 = vst [vmem:[%s2768 + $0x1c] sm:$0x1] %v2793
        %v2795 = vld [vmem:[%s2768 + $0x20] sm:$0xf]
        %v2796 = vsel %vm2770, %v2726, %v2795
        %2797 = vst [vmem:[%s2768 + $0x20] sm:$0xf] %v2796
        %v2798 = vld [vmem:[%s2768 + $0x24] sm:$0x1]
        %v2799 = vsel %vm373, %v2727, %v2798
        %2800 = vst [vmem:[%s2768 + $0x24] sm:$0x1] %v2799
        %v2801 = vld [vmem:[%s2768 + $0x28] sm:$0xf]
        %v2802 = vsel %vm2770, %v2734, %v2801
        %2803 = vst [vmem:[%s2768 + $0x28] sm:$0xf] %v2802
        %v2804 = vld [vmem:[%s2768 + $0x2c] sm:$0x1]
        %v2805 = vsel %vm373, %v2735, %v2804
        %2806 = vst [vmem:[%s2768 + $0x2c] sm:$0x1] %v2805
        %v2807 = vld [vmem:[%s2768 + $0x30] sm:$0xf]
        %v2808 = vsel %vm2770, %v2742, %v2807
        %2809 = vst [vmem:[%s2768 + $0x30] sm:$0xf] %v2808
        %v2810 = vld [vmem:[%s2768 + $0x34] sm:$0x1]
        %v2811 = vsel %vm373, %v2743, %v2810
        %2812 = vst [vmem:[%s2768 + $0x34] sm:$0x1] %v2811
        %v2813 = vld [vmem:[%s2768 + $0x38] sm:$0xf]
        %v2814 = vsel %vm2770, %v2750, %v2813
        %2815 = vst [vmem:[%s2768 + $0x38] sm:$0xf] %v2814
        %v2816 = vld [vmem:[%s2768 + $0x3c] sm:$0x1]
        %v2817 = vsel %vm373, %v2751, %v2816
        %2818 = vst [vmem:[%s2768 + $0x3c] sm:$0x1] %v2817
        %v2819 = vld [vmem:[#allocation3] sm:$0xf]
        %v2820 = vld [vmem:[#allocation3 + $0x8] sm:$0xf]
        %v2821 = vld [vmem:[#allocation3 + $0x10] sm:$0xf]
        %v2822 = vld [vmem:[#allocation3 + $0x18] sm:$0xf]
        %v2823 = vld [vmem:[#allocation3 + $0x20] sm:$0xf]
        %v2824 = vld [vmem:[#allocation3 + $0x28] sm:$0xf]
        %v2825 = vld [vmem:[#allocation3 + $0x30] sm:$0xf]
        %v2826 = vld [vmem:[#allocation3 + $0x38] sm:$0xf]
        %2827 = vst [vmem:[#allocation5] sm:$0xf] %v2819
        %2828 = vst [vmem:[#allocation5 + $0x24] sm:$0xf] %v2820
        %2829 = vst [vmem:[#allocation5 + $0x48] sm:$0xf] %v2821
        %2830 = vst [vmem:[#allocation5 + $0x6c] sm:$0xf] %v2822
        %2831 = vst [vmem:[#allocation5 + $0x90] sm:$0xf] %v2823
        %2832 = vst [vmem:[#allocation5 + $0xb4] sm:$0xf] %v2824
        %2833 = vst [vmem:[#allocation5 + $0xd8] sm:$0xf] %v2825
        %2834 = vst [vmem:[#allocation5 + $0xfc] sm:$0xf] %v2826
        %v2835 = vld [vmem:[#allocation3] sm:$0xf]
        %v2836 = vld [vmem:[#allocation3 + $0x4] sm:$0x1]
        %v2837 = vld [vmem:[#allocation3 + $0x8] sm:$0xf]
        %v2838 = vld [vmem:[#allocation3 + $0xc] sm:$0x1]
        %v2839 = vld [vmem:[#allocation3 + $0x10] sm:$0xf]
        %v2840 = vld [vmem:[#allocation3 + $0x14] sm:$0x1]
        %v2841 = vld [vmem:[#allocation3 + $0x18] sm:$0xf]
        %v2842 = vld [vmem:[#allocation3 + $0x1c] sm:$0x1]
        %v2843 = vld [vmem:[#allocation3 + $0x20] sm:$0xf]
        %v2844 = vld [vmem:[#allocation3 + $0x24] sm:$0x1]
        %v2845 = vld [vmem:[#allocation3 + $0x28] sm:$0xf]
        %v2846 = vld [vmem:[#allocation3 + $0x2c] sm:$0x1]
        %v2847 = vld [vmem:[#allocation3 + $0x30] sm:$0xf]
        %v2848 = vld [vmem:[#allocation3 + $0x34] sm:$0x1]
        %v2849 = vld [vmem:[#allocation3 + $0x38] sm:$0xf]
        %v2850 = vld [vmem:[#allocation3 + $0x3c] sm:$0x1]
        %v2852 = vshrl.u32 %v2835, 16
        %v2854 = vrot.slane %v2852, 4
        %v2855 = vshll.u32 %v2835, 16
        %v2857 = vrot.slane %v2855, 5
        %v2858 = vor.u32 %v2854, %v2857
        %v2859 = vrot.slane %v2858, 4
        %v2861 = vshll.u32 %v2836, 16
        %v2863 = vrot.slane %v2861, 5
        %v2864 = vsel %vm1018, %v2859, %v2863
        %v2866 = vshrl.u32 %v2837, 16
        %v2868 = vrot.slane %v2866, 4
        %v2869 = vshll.u32 %v2837, 16
        %v2871 = vrot.slane %v2869, 5
        %v2872 = vor.u32 %v2868, %v2871
        %v2873 = vrot.slane %v2872, 4
        %v2875 = vshll.u32 %v2838, 16
        %v2877 = vrot.slane %v2875, 5
        %v2878 = vsel %vm1018, %v2873, %v2877
        %v2880 = vshrl.u32 %v2839, 16
        %v2882 = vrot.slane %v2880, 4
        %v2883 = vshll.u32 %v2839, 16
        %v2885 = vrot.slane %v2883, 5
        %v2886 = vor.u32 %v2882, %v2885
        %v2887 = vrot.slane %v2886, 4
        %v2889 = vshll.u32 %v2840, 16
        %v2891 = vrot.slane %v2889, 5
        %v2892 = vsel %vm1018, %v2887, %v2891
        %v2894 = vshrl.u32 %v2841, 16
        %v2896 = vrot.slane %v2894, 4
        %v2897 = vshll.u32 %v2841, 16
        %v2899 = vrot.slane %v2897, 5
        %v2900 = vor.u32 %v2896, %v2899
        %v2901 = vrot.slane %v2900, 4
        %v2903 = vshll.u32 %v2842, 16
        %v2905 = vrot.slane %v2903, 5
        %v2906 = vsel %vm1018, %v2901, %v2905
        %v2908 = vshrl.u32 %v2843, 16
        %v2910 = vrot.slane %v2908, 4
        %v2911 = vshll.u32 %v2843, 16
        %v2913 = vrot.slane %v2911, 5
        %v2914 = vor.u32 %v2910, %v2913
        %v2915 = vrot.slane %v2914, 4
        %v2917 = vshll.u32 %v2844, 16
        %v2919 = vrot.slane %v2917, 5
        %v2920 = vsel %vm1018, %v2915, %v2919
        %v2922 = vshrl.u32 %v2845, 16
        %v2924 = vrot.slane %v2922, 4
        %v2925 = vshll.u32 %v2845, 16
        %v2927 = vrot.slane %v2925, 5
        %v2928 = vor.u32 %v2924, %v2927
        %v2929 = vrot.slane %v2928, 4
        %v2931 = vshll.u32 %v2846, 16
        %v2933 = vrot.slane %v2931, 5
        %v2934 = vsel %vm1018, %v2929, %v2933
        %v2936 = vshrl.u32 %v2847, 16
        %v2938 = vrot.slane %v2936, 4
        %v2939 = vshll.u32 %v2847, 16
        %v2941 = vrot.slane %v2939, 5
        %v2942 = vor.u32 %v2938, %v2941
        %v2943 = vrot.slane %v2942, 4
        %v2945 = vshll.u32 %v2848, 16
        %v2947 = vrot.slane %v2945, 5
        %v2948 = vsel %vm1018, %v2943, %v2947
        %v2950 = vshrl.u32 %v2849, 16
        %v2952 = vrot.slane %v2950, 4
        %v2953 = vshll.u32 %v2849, 16
        %v2955 = vrot.slane %v2953, 5
        %v2956 = vor.u32 %v2952, %v2955
        %v2957 = vrot.slane %v2956, 4
        %v2959 = vshll.u32 %v2850, 16
        %v2961 = vrot.slane %v2959, 5
        %v2962 = vsel %vm1018, %v2957, %v2961
        %2971 = vst [vmem:[#allocation5 + $0x4] sm:$0xf] %v2864
        %2972 = vst [vmem:[#allocation5 + $0x28] sm:$0xf] %v2878
        %2973 = vst [vmem:[#allocation5 + $0x4c] sm:$0xf] %v2892
        %2974 = vst [vmem:[#allocation5 + $0x70] sm:$0xf] %v2906
        %2975 = vst [vmem:[#allocation5 + $0x94] sm:$0xf] %v2920
        %2976 = vst [vmem:[#allocation5 + $0xb8] sm:$0xf] %v2934
        %2977 = vst [vmem:[#allocation5 + $0xdc] sm:$0xf] %v2948
        %2978 = vst [vmem:[#allocation5 + $0x100] sm:$0xf] %v2962
        %v2979 = vld [vmem:[#allocation3] sm:$0xe]
        %v2980 = vld [vmem:[#allocation3 + $0x4] sm:$0x1]
        %v2981 = vld [vmem:[#allocation3 + $0x8] sm:$0xe]
        %v2982 = vld [vmem:[#allocation3 + $0xc] sm:$0x1]
        %v2983 = vld [vmem:[#allocation3 + $0x10] sm:$0xe]
        %v2984 = vld [vmem:[#allocation3 + $0x14] sm:$0x1]
        %v2985 = vld [vmem:[#allocation3 + $0x18] sm:$0xe]
        %v2986 = vld [vmem:[#allocation3 + $0x1c] sm:$0x1]
        %v2987 = vld [vmem:[#allocation3 + $0x20] sm:$0xe]
        %v2988 = vld [vmem:[#allocation3 + $0x24] sm:$0x1]
        %v2989 = vld [vmem:[#allocation3 + $0x28] sm:$0xe]
        %v2990 = vld [vmem:[#allocation3 + $0x2c] sm:$0x1]
        %v2991 = vld [vmem:[#allocation3 + $0x30] sm:$0xe]
        %v2992 = vld [vmem:[#allocation3 + $0x34] sm:$0x1]
        %v2993 = vld [vmem:[#allocation3 + $0x38] sm:$0xe]
        %v2994 = vld [vmem:[#allocation3 + $0x3c] sm:$0x1]
        %vm3011 = vcmask 1042432
        %vm3012 = vcmask 1046532
        %vm3013 = vmor %vm3011, %vm3012
        %v3014 = vrot.slane %v2979, 5
        %v3015 = vrot.slane %v3014, 4
        %v3016 = vrot.slane %v2980, 5
        %v3017 = vsel %vm3013, %v3015, %v3016
        %v3018 = vrot.slane %v2981, 5
        %v3019 = vrot.slane %v3018, 4
        %v3020 = vrot.slane %v2982, 5
        %v3021 = vsel %vm3013, %v3019, %v3020
        %v3022 = vrot.slane %v2983, 5
        %v3023 = vrot.slane %v3022, 4
        %v3024 = vrot.slane %v2984, 5
        %v3025 = vsel %vm3013, %v3023, %v3024
        %v3026 = vrot.slane %v2985, 5
        %v3027 = vrot.slane %v3026, 4
        %v3028 = vrot.slane %v2986, 5
        %v3029 = vsel %vm3013, %v3027, %v3028
        %v3030 = vrot.slane %v2987, 5
        %v3031 = vrot.slane %v3030, 4
        %v3032 = vrot.slane %v2988, 5
        %v3033 = vsel %vm3013, %v3031, %v3032
        %v3034 = vrot.slane %v2989, 5
        %v3035 = vrot.slane %v3034, 4
        %v3036 = vrot.slane %v2990, 5
        %v3037 = vsel %vm3013, %v3035, %v3036
        %v3038 = vrot.slane %v2991, 5
        %v3039 = vrot.slane %v3038, 4
        %v3040 = vrot.slane %v2992, 5
        %v3041 = vsel %vm3013, %v3039, %v3040
        %v3042 = vrot.slane %v2993, 5
        %v3043 = vrot.slane %v3042, 4
        %v3044 = vrot.slane %v2994, 5
        %v3045 = vsel %vm3013, %v3043, %v3044
        %3054 = vst [vmem:[#allocation5 + $0x8] sm:$0xf] %v3017
        %3055 = vst [vmem:[#allocation5 + $0x2c] sm:$0xf] %v3021
        %3056 = vst [vmem:[#allocation5 + $0x50] sm:$0xf] %v3025
        %3057 = vst [vmem:[#allocation5 + $0x74] sm:$0xf] %v3029
        %3058 = vst [vmem:[#allocation5 + $0x98] sm:$0xf] %v3033
        %3059 = vst [vmem:[#allocation5 + $0xbc] sm:$0xf] %v3037
        %3060 = vst [vmem:[#allocation5 + $0xe0] sm:$0xf] %v3041
        %3061 = vst [vmem:[#allocation5 + $0x104] sm:$0xf] %v3045
        %v3062 = vld [vmem:[%s2768] sm:$0xf]
        %v3063 = vld [vmem:[%s2768 + $0x8] sm:$0xf]
        %v3064 = vld [vmem:[%s2768 + $0x10] sm:$0xf]
        %v3065 = vld [vmem:[%s2768 + $0x18] sm:$0xf]
        %v3066 = vld [vmem:[%s2768 + $0x20] sm:$0xf]
        %v3067 = vld [vmem:[%s2768 + $0x28] sm:$0xf]
        %v3068 = vld [vmem:[%s2768 + $0x30] sm:$0xf]
        %v3069 = vld [vmem:[%s2768 + $0x38] sm:$0xf]
        %3070 = vst [vmem:[#allocation5 + $0xc] sm:$0xf] %v3062
        %3071 = vst [vmem:[#allocation5 + $0x30] sm:$0xf] %v3063
        %3072 = vst [vmem:[#allocation5 + $0x54] sm:$0xf] %v3064
        %3073 = vst [vmem:[#allocation5 + $0x78] sm:$0xf] %v3065
        %3074 = vst [vmem:[#allocation5 + $0x9c] sm:$0xf] %v3066
        %3075 = vst [vmem:[#allocation5 + $0xc0] sm:$0xf] %v3067
        %3076 = vst [vmem:[#allocation5 + $0xe4] sm:$0xf] %v3068
        %3077 = vst [vmem:[#allocation5 + $0x108] sm:$0xf] %v3069
        %v3078 = vld [vmem:[%s2768] sm:$0xf]
        %v3079 = vld [vmem:[%s2768 + $0x4] sm:$0x1]
        %v3080 = vld [vmem:[%s2768 + $0x8] sm:$0xf]
        %v3081 = vld [vmem:[%s2768 + $0xc] sm:$0x1]
        %v3082 = vld [vmem:[%s2768 + $0x10] sm:$0xf]
        %v3083 = vld [vmem:[%s2768 + $0x14] sm:$0x1]
        %v3084 = vld [vmem:[%s2768 + $0x18] sm:$0xf]
        %v3085 = vld [vmem:[%s2768 + $0x1c] sm:$0x1]
        %v3086 = vld [vmem:[%s2768 + $0x20] sm:$0xf]
        %v3087 = vld [vmem:[%s2768 + $0x24] sm:$0x1]
        %v3088 = vld [vmem:[%s2768 + $0x28] sm:$0xf]
        %v3089 = vld [vmem:[%s2768 + $0x2c] sm:$0x1]
        %v3090 = vld [vmem:[%s2768 + $0x30] sm:$0xf]
        %v3091 = vld [vmem:[%s2768 + $0x34] sm:$0x1]
        %v3092 = vld [vmem:[%s2768 + $0x38] sm:$0xf]
        %v3093 = vld [vmem:[%s2768 + $0x3c] sm:$0x1]
        %v3095 = vshrl.u32 %v3078, 16
        %v3097 = vrot.slane %v3095, 4
        %v3098 = vshll.u32 %v3078, 16
        %v3100 = vrot.slane %v3098, 5
        %v3101 = vor.u32 %v3097, %v3100
        %v3102 = vrot.slane %v3101, 4
        %v3104 = vshll.u32 %v3079, 16
        %v3106 = vrot.slane %v3104, 5
        %v3107 = vsel %vm1018, %v3102, %v3106
        %v3109 = vshrl.u32 %v3080, 16
        %v3111 = vrot.slane %v3109, 4
        %v3112 = vshll.u32 %v3080, 16
        %v3114 = vrot.slane %v3112, 5
        %v3115 = vor.u32 %v3111, %v3114
        %v3116 = vrot.slane %v3115, 4
        %v3118 = vshll.u32 %v3081, 16
        %v3120 = vrot.slane %v3118, 5
        %v3121 = vsel %vm1018, %v3116, %v3120
        %v3123 = vshrl.u32 %v3082, 16
        %v3125 = vrot.slane %v3123, 4
        %v3126 = vshll.u32 %v3082, 16
        %v3128 = vrot.slane %v3126, 5
        %v3129 = vor.u32 %v3125, %v3128
        %v3130 = vrot.slane %v3129, 4
        %v3132 = vshll.u32 %v3083, 16
        %v3134 = vrot.slane %v3132, 5
        %v3135 = vsel %vm1018, %v3130, %v3134
        %v3137 = vshrl.u32 %v3084, 16
        %v3139 = vrot.slane %v3137, 4
        %v3140 = vshll.u32 %v3084, 16
        %v3142 = vrot.slane %v3140, 5
        %v3143 = vor.u32 %v3139, %v3142
        %v3144 = vrot.slane %v3143, 4
        %v3146 = vshll.u32 %v3085, 16
        %v3148 = vrot.slane %v3146, 5
        %v3149 = vsel %vm1018, %v3144, %v3148
        %v3151 = vshrl.u32 %v3086, 16
        %v3153 = vrot.slane %v3151, 4
        %v3154 = vshll.u32 %v3086, 16
        %v3156 = vrot.slane %v3154, 5
        %v3157 = vor.u32 %v3153, %v3156
        %v3158 = vrot.slane %v3157, 4
        %v3160 = vshll.u32 %v3087, 16
        %v3162 = vrot.slane %v3160, 5
        %v3163 = vsel %vm1018, %v3158, %v3162
        %v3165 = vshrl.u32 %v3088, 16
        %v3167 = vrot.slane %v3165, 4
        %v3168 = vshll.u32 %v3088, 16
        %v3170 = vrot.slane %v3168, 5
        %v3171 = vor.u32 %v3167, %v3170
        %v3172 = vrot.slane %v3171, 4
        %v3174 = vshll.u32 %v3089, 16
        %v3176 = vrot.slane %v3174, 5
        %v3177 = vsel %vm1018, %v3172, %v3176
        %v3179 = vshrl.u32 %v3090, 16
        %v3181 = vrot.slane %v3179, 4
        %v3182 = vshll.u32 %v3090, 16
        %v3184 = vrot.slane %v3182, 5
        %v3185 = vor.u32 %v3181, %v3184
        %v3186 = vrot.slane %v3185, 4
        %v3188 = vshll.u32 %v3091, 16
        %v3190 = vrot.slane %v3188, 5
        %v3191 = vsel %vm1018, %v3186, %v3190
        %v3193 = vshrl.u32 %v3092, 16
        %v3195 = vrot.slane %v3193, 4
        %v3196 = vshll.u32 %v3092, 16
        %v3198 = vrot.slane %v3196, 5
        %v3199 = vor.u32 %v3195, %v3198
        %v3200 = vrot.slane %v3199, 4
        %v3202 = vshll.u32 %v3093, 16
        %v3204 = vrot.slane %v3202, 5
        %v3205 = vsel %vm1018, %v3200, %v3204
        %3214 = vst [vmem:[#allocation5 + $0x10] sm:$0xf] %v3107
        %3215 = vst [vmem:[#allocation5 + $0x34] sm:$0xf] %v3121
        %3216 = vst [vmem:[#allocation5 + $0x58] sm:$0xf] %v3135
        %3217 = vst [vmem:[#allocation5 + $0x7c] sm:$0xf] %v3149
        %3218 = vst [vmem:[#allocation5 + $0xa0] sm:$0xf] %v3163
        %3219 = vst [vmem:[#allocation5 + $0xc4] sm:$0xf] %v3177
        %3220 = vst [vmem:[#allocation5 + $0xe8] sm:$0xf] %v3191
        %3221 = vst [vmem:[#allocation5 + $0x10c] sm:$0xf] %v3205
        %v3222 = vld [vmem:[%s2768] sm:$0xe]
        %v3223 = vld [vmem:[%s2768 + $0x4] sm:$0x1]
        %v3224 = vld [vmem:[%s2768 + $0x8] sm:$0xe]
        %v3225 = vld [vmem:[%s2768 + $0xc] sm:$0x1]
        %v3226 = vld [vmem:[%s2768 + $0x10] sm:$0xe]
        %v3227 = vld [vmem:[%s2768 + $0x14] sm:$0x1]
        %v3228 = vld [vmem:[%s2768 + $0x18] sm:$0xe]
        %v3229 = vld [vmem:[%s2768 + $0x1c] sm:$0x1]
        %v3230 = vld [vmem:[%s2768 + $0x20] sm:$0xe]
        %v3231 = vld [vmem:[%s2768 + $0x24] sm:$0x1]
        %v3232 = vld [vmem:[%s2768 + $0x28] sm:$0xe]
        %v3233 = vld [vmem:[%s2768 + $0x2c] sm:$0x1]
        %v3234 = vld [vmem:[%s2768 + $0x30] sm:$0xe]
        %v3235 = vld [vmem:[%s2768 + $0x34] sm:$0x1]
        %v3236 = vld [vmem:[%s2768 + $0x38] sm:$0xe]
        %v3237 = vld [vmem:[%s2768 + $0x3c] sm:$0x1]
        %v3254 = vrot.slane %v3222, 5
        %v3255 = vrot.slane %v3254, 4
        %v3256 = vrot.slane %v3223, 5
        %v3257 = vsel %vm3013, %v3255, %v3256
        %v3258 = vrot.slane %v3224, 5
        %v3259 = vrot.slane %v3258, 4
        %v3260 = vrot.slane %v3225, 5
        %v3261 = vsel %vm3013, %v3259, %v3260
        %v3262 = vrot.slane %v3226, 5
        %v3263 = vrot.slane %v3262, 4
        %v3264 = vrot.slane %v3227, 5
        %v3265 = vsel %vm3013, %v3263, %v3264
        %v3266 = vrot.slane %v3228, 5
        %v3267 = vrot.slane %v3266, 4
        %v3268 = vrot.slane %v3229, 5
        %v3269 = vsel %vm3013, %v3267, %v3268
        %v3270 = vrot.slane %v3230, 5
        %v3271 = vrot.slane %v3270, 4
        %v3272 = vrot.slane %v3231, 5
        %v3273 = vsel %vm3013, %v3271, %v3272
        %v3274 = vrot.slane %v3232, 5
        %v3275 = vrot.slane %v3274, 4
        %v3276 = vrot.slane %v3233, 5
        %v3277 = vsel %vm3013, %v3275, %v3276
        %v3278 = vrot.slane %v3234, 5
        %v3279 = vrot.slane %v3278, 4
        %v3280 = vrot.slane %v3235, 5
        %v3281 = vsel %vm3013, %v3279, %v3280
        %v3282 = vrot.slane %v3236, 5
        %v3283 = vrot.slane %v3282, 4
        %v3284 = vrot.slane %v3237, 5
        %v3285 = vsel %vm3013, %v3283, %v3284
        %3294 = vst [vmem:[#allocation5 + $0x14] sm:$0xf] %v3257
        %3295 = vst [vmem:[#allocation5 + $0x38] sm:$0xf] %v3261
        %3296 = vst [vmem:[#allocation5 + $0x5c] sm:$0xf] %v3265
        %3297 = vst [vmem:[#allocation5 + $0x80] sm:$0xf] %v3269
        %3298 = vst [vmem:[#allocation5 + $0xa4] sm:$0xf] %v3273
        %3299 = vst [vmem:[#allocation5 + $0xc8] sm:$0xf] %v3277
        %3300 = vst [vmem:[#allocation5 + $0xec] sm:$0xf] %v3281
        %3301 = vst [vmem:[#allocation5 + $0x110] sm:$0xf] %v3285
        %s3302 = scalar_lea.vmem [#allocation3], 16
        %v3303 = vld [vmem:[%s3302] sm:$0xf]
        %v3304 = vld [vmem:[%s3302 + $0x8] sm:$0xf]
        %v3305 = vld [vmem:[%s3302 + $0x10] sm:$0xf]
        %v3306 = vld [vmem:[%s3302 + $0x18] sm:$0xf]
        %v3307 = vld [vmem:[%s3302 + $0x20] sm:$0xf]
        %v3308 = vld [vmem:[%s3302 + $0x28] sm:$0xf]
        %v3309 = vld [vmem:[%s3302 + $0x30] sm:$0xf]
        %v3310 = vld [vmem:[%s3302 + $0x38] sm:$0xf]
        %3311 = vst [vmem:[#allocation5 + $0x18] sm:$0xf] %v3303
        %3312 = vst [vmem:[#allocation5 + $0x3c] sm:$0xf] %v3304
        %3313 = vst [vmem:[#allocation5 + $0x60] sm:$0xf] %v3305
        %3314 = vst [vmem:[#allocation5 + $0x84] sm:$0xf] %v3306
        %3315 = vst [vmem:[#allocation5 + $0xa8] sm:$0xf] %v3307
        %3316 = vst [vmem:[#allocation5 + $0xcc] sm:$0xf] %v3308
        %3317 = vst [vmem:[#allocation5 + $0xf0] sm:$0xf] %v3309
        %3318 = vst [vmem:[#allocation5 + $0x114] sm:$0xf] %v3310
        %v3319 = vld [vmem:[%s3302] sm:$0xf]
        %v3320 = vld [vmem:[%s3302 + $0x4] sm:$0x1]
        %v3321 = vld [vmem:[%s3302 + $0x8] sm:$0xf]
        %v3322 = vld [vmem:[%s3302 + $0xc] sm:$0x1]
        %v3323 = vld [vmem:[%s3302 + $0x10] sm:$0xf]
        %v3324 = vld [vmem:[%s3302 + $0x14] sm:$0x1]
        %v3325 = vld [vmem:[%s3302 + $0x18] sm:$0xf]
        %v3326 = vld [vmem:[%s3302 + $0x1c] sm:$0x1]
        %v3327 = vld [vmem:[%s3302 + $0x20] sm:$0xf]
        %v3328 = vld [vmem:[%s3302 + $0x24] sm:$0x1]
        %v3329 = vld [vmem:[%s3302 + $0x28] sm:$0xf]
        %v3330 = vld [vmem:[%s3302 + $0x2c] sm:$0x1]
        %v3331 = vld [vmem:[%s3302 + $0x30] sm:$0xf]
        %v3332 = vld [vmem:[%s3302 + $0x34] sm:$0x1]
        %v3333 = vld [vmem:[%s3302 + $0x38] sm:$0xf]
        %v3334 = vld [vmem:[%s3302 + $0x3c] sm:$0x1]
        %v3336 = vshrl.u32 %v3319, 16
        %v3338 = vrot.slane %v3336, 4
        %v3339 = vshll.u32 %v3319, 16
        %v3341 = vrot.slane %v3339, 5
        %v3342 = vor.u32 %v3338, %v3341
        %v3343 = vrot.slane %v3342, 4
        %v3345 = vshll.u32 %v3320, 16
        %v3347 = vrot.slane %v3345, 5
        %v3348 = vsel %vm1018, %v3343, %v3347
        %v3350 = vshrl.u32 %v3321, 16
        %v3352 = vrot.slane %v3350, 4
        %v3353 = vshll.u32 %v3321, 16
        %v3355 = vrot.slane %v3353, 5
        %v3356 = vor.u32 %v3352, %v3355
        %v3357 = vrot.slane %v3356, 4
        %v3359 = vshll.u32 %v3322, 16
        %v3361 = vrot.slane %v3359, 5
        %v3362 = vsel %vm1018, %v3357, %v3361
        %v3364 = vshrl.u32 %v3323, 16
        %v3366 = vrot.slane %v3364, 4
        %v3367 = vshll.u32 %v3323, 16
        %v3369 = vrot.slane %v3367, 5
        %v3370 = vor.u32 %v3366, %v3369
        %v3371 = vrot.slane %v3370, 4
        %v3373 = vshll.u32 %v3324, 16
        %v3375 = vrot.slane %v3373, 5
        %v3376 = vsel %vm1018, %v3371, %v3375
        %v3378 = vshrl.u32 %v3325, 16
        %v3380 = vrot.slane %v3378, 4
        %v3381 = vshll.u32 %v3325, 16
        %v3383 = vrot.slane %v3381, 5
        %v3384 = vor.u32 %v3380, %v3383
        %v3385 = vrot.slane %v3384, 4
        %v3387 = vshll.u32 %v3326, 16
        %v3389 = vrot.slane %v3387, 5
        %v3390 = vsel %vm1018, %v3385, %v3389
        %v3392 = vshrl.u32 %v3327, 16
        %v3394 = vrot.slane %v3392, 4
        %v3395 = vshll.u32 %v3327, 16
        %v3397 = vrot.slane %v3395, 5
        %v3398 = vor.u32 %v3394, %v3397
        %v3399 = vrot.slane %v3398, 4
        %v3401 = vshll.u32 %v3328, 16
        %v3403 = vrot.slane %v3401, 5
        %v3404 = vsel %vm1018, %v3399, %v3403
        %v3406 = vshrl.u32 %v3329, 16
        %v3408 = vrot.slane %v3406, 4
        %v3409 = vshll.u32 %v3329, 16
        %v3411 = vrot.slane %v3409, 5
        %v3412 = vor.u32 %v3408, %v3411
        %v3413 = vrot.slane %v3412, 4
        %v3415 = vshll.u32 %v3330, 16
        %v3417 = vrot.slane %v3415, 5
        %v3418 = vsel %vm1018, %v3413, %v3417
        %v3420 = vshrl.u32 %v3331, 16
        %v3422 = vrot.slane %v3420, 4
        %v3423 = vshll.u32 %v3331, 16
        %v3425 = vrot.slane %v3423, 5
        %v3426 = vor.u32 %v3422, %v3425
        %v3427 = vrot.slane %v3426, 4
        %v3429 = vshll.u32 %v3332, 16
        %v3431 = vrot.slane %v3429, 5
        %v3432 = vsel %vm1018, %v3427, %v3431
        %v3434 = vshrl.u32 %v3333, 16
        %v3436 = vrot.slane %v3434, 4
        %v3437 = vshll.u32 %v3333, 16
        %v3439 = vrot.slane %v3437, 5
        %v3440 = vor.u32 %v3436, %v3439
        %v3441 = vrot.slane %v3440, 4
        %v3443 = vshll.u32 %v3334, 16
        %v3445 = vrot.slane %v3443, 5
        %v3446 = vsel %vm1018, %v3441, %v3445
        %3455 = vst [vmem:[#allocation5 + $0x1c] sm:$0xf] %v3348
        %3456 = vst [vmem:[#allocation5 + $0x40] sm:$0xf] %v3362
        %3457 = vst [vmem:[#allocation5 + $0x64] sm:$0xf] %v3376
        %3458 = vst [vmem:[#allocation5 + $0x88] sm:$0xf] %v3390
        %3459 = vst [vmem:[#allocation5 + $0xac] sm:$0xf] %v3404
        %3460 = vst [vmem:[#allocation5 + $0xd0] sm:$0xf] %v3418
        %3461 = vst [vmem:[#allocation5 + $0xf4] sm:$0xf] %v3432
        %3462 = vst [vmem:[#allocation5 + $0x118] sm:$0xf] %v3446
        %v3463 = vld [vmem:[%s3302] sm:$0xe]
        %v3464 = vld [vmem:[%s3302 + $0x4] sm:$0x1]
        %v3465 = vld [vmem:[%s3302 + $0x8] sm:$0xe]
        %v3466 = vld [vmem:[%s3302 + $0xc] sm:$0x1]
        %v3467 = vld [vmem:[%s3302 + $0x10] sm:$0xe]
        %v3468 = vld [vmem:[%s3302 + $0x14] sm:$0x1]
        %v3469 = vld [vmem:[%s3302 + $0x18] sm:$0xe]
        %v3470 = vld [vmem:[%s3302 + $0x1c] sm:$0x1]
        %v3471 = vld [vmem:[%s3302 + $0x20] sm:$0xe]
        %v3472 = vld [vmem:[%s3302 + $0x24] sm:$0x1]
        %v3473 = vld [vmem:[%s3302 + $0x28] sm:$0xe]
        %v3474 = vld [vmem:[%s3302 + $0x2c] sm:$0x1]
        %v3475 = vld [vmem:[%s3302 + $0x30] sm:$0xe]
        %v3476 = vld [vmem:[%s3302 + $0x34] sm:$0x1]
        %v3477 = vld [vmem:[%s3302 + $0x38] sm:$0xe]
        %v3478 = vld [vmem:[%s3302 + $0x3c] sm:$0x1]
        %v3495 = vrot.slane %v3463, 5
        %v3496 = vrot.slane %v3495, 4
        %v3497 = vrot.slane %v3464, 5
        %v3498 = vsel %vm3013, %v3496, %v3497
        %v3499 = vrot.slane %v3465, 5
        %v3500 = vrot.slane %v3499, 4
        %v3501 = vrot.slane %v3466, 5
        %v3502 = vsel %vm3013, %v3500, %v3501
        %v3503 = vrot.slane %v3467, 5
        %v3504 = vrot.slane %v3503, 4
        %v3505 = vrot.slane %v3468, 5
        %v3506 = vsel %vm3013, %v3504, %v3505
        %v3507 = vrot.slane %v3469, 5
        %v3508 = vrot.slane %v3507, 4
        %v3509 = vrot.slane %v3470, 5
        %v3510 = vsel %vm3013, %v3508, %v3509
        %v3511 = vrot.slane %v3471, 5
        %v3512 = vrot.slane %v3511, 4
        %v3513 = vrot.slane %v3472, 5
        %v3514 = vsel %vm3013, %v3512, %v3513
        %v3515 = vrot.slane %v3473, 5
        %v3516 = vrot.slane %v3515, 4
        %v3517 = vrot.slane %v3474, 5
        %v3518 = vsel %vm3013, %v3516, %v3517
        %v3519 = vrot.slane %v3475, 5
        %v3520 = vrot.slane %v3519, 4
        %v3521 = vrot.slane %v3476, 5
        %v3522 = vsel %vm3013, %v3520, %v3521
        %v3523 = vrot.slane %v3477, 5
        %v3524 = vrot.slane %v3523, 4
        %v3525 = vrot.slane %v3478, 5
        %v3526 = vsel %vm3013, %v3524, %v3525
        %3535 = vst [vmem:[#allocation5 + $0x20] sm:$0xf] %v3498
        %3536 = vst [vmem:[#allocation5 + $0x44] sm:$0xf] %v3502
        %3537 = vst [vmem:[#allocation5 + $0x68] sm:$0xf] %v3506
        %3538 = vst [vmem:[#allocation5 + $0x8c] sm:$0xf] %v3510
        %3539 = vst [vmem:[#allocation5 + $0xb0] sm:$0xf] %v3514
        %3540 = vst [vmem:[#allocation5 + $0xd4] sm:$0xf] %v3518
        %3541 = vst [vmem:[#allocation5 + $0xf8] sm:$0xf] %v3522
        %3542 = vst [vmem:[#allocation5 + $0x11c] sm:$0xf] %v3526
        %v3543 = vld [vmem:[#allocation5] sm:$0xff]
        %v3544 = vld [vmem:[#allocation5 + $0x8] sm:$0xff]
        %v3545 = vld [vmem:[#allocation5 + $0x10] sm:$0xff]
        %v3546 = vld [vmem:[#allocation5 + $0x18] sm:$0xff]
        %v3547 = vld [vmem:[#allocation5 + $0x20] sm:$0xf]
        %v3548 = vld [vmem:[#allocation5 + $0x24] sm:$0xff]
        %v3549 = vld [vmem:[#allocation5 + $0x2c] sm:$0xff]
        %v3550 = vld [vmem:[#allocation5 + $0x34] sm:$0xff]
        %v3551 = vld [vmem:[#allocation5 + $0x3c] sm:$0xff]
        %v3552 = vld [vmem:[#allocation5 + $0x44] sm:$0xf]
        %v3553 = vld [vmem:[#allocation5 + $0x48] sm:$0xff]
        %v3554 = vld [vmem:[#allocation5 + $0x50] sm:$0xff]
        %v3555 = vld [vmem:[#allocation5 + $0x58] sm:$0xff]
        %v3556 = vld [vmem:[#allocation5 + $0x60] sm:$0xff]
        %v3557 = vld [vmem:[#allocation5 + $0x68] sm:$0xf]
        %v3558 = vld [vmem:[#allocation5 + $0x6c] sm:$0xff]
        %v3559 = vld [vmem:[#allocation5 + $0x74] sm:$0xff]
        %v3560 = vld [vmem:[#allocation5 + $0x7c] sm:$0xff]
        %v3561 = vld [vmem:[#allocation5 + $0x84] sm:$0xff]
        %v3562 = vld [vmem:[#allocation5 + $0x8c] sm:$0xf]
        %v3563 = vld [vmem:[#allocation5 + $0x90] sm:$0xff]
        %v3564 = vld [vmem:[#allocation5 + $0x98] sm:$0xff]
        %v3565 = vld [vmem:[#allocation5 + $0xa0] sm:$0xff]
        %v3566 = vld [vmem:[#allocation5 + $0xa8] sm:$0xff]
        %v3567 = vld [vmem:[#allocation5 + $0xb0] sm:$0xf]
        %v3568 = vld [vmem:[#allocation5 + $0xb4] sm:$0xff]
        %v3569 = vld [vmem:[#allocation5 + $0xbc] sm:$0xff]
        %v3570 = vld [vmem:[#allocation5 + $0xc4] sm:$0xff]
        %v3571 = vld [vmem:[#allocation5 + $0xcc] sm:$0xff]
        %v3572 = vld [vmem:[#allocation5 + $0xd4] sm:$0xf]
        %v3573 = vld [vmem:[#allocation5 + $0xd8] sm:$0xff]
        %v3574 = vld [vmem:[#allocation5 + $0xe0] sm:$0xff]
        %v3575 = vld [vmem:[#allocation5 + $0xe8] sm:$0xff]
        %v3576 = vld [vmem:[#allocation5 + $0xf0] sm:$0xff]
        %v3577 = vld [vmem:[#allocation5 + $0xf8] sm:$0xf]
        %v3578 = vld [vmem:[#allocation5 + $0xfc] sm:$0xff]
        %v3579 = vld [vmem:[#allocation5 + $0x104] sm:$0xff]
        %v3580 = vld [vmem:[#allocation5 + $0x10c] sm:$0xff]
        %v3581 = vld [vmem:[#allocation5 + $0x114] sm:$0xff]
        %v3582 = vld [vmem:[#allocation5 + $0x11c] sm:$0xf]
        %v3583 = vld [vmem:[#allocation12] sm:$0xf]
        %v3584 = vld [vmem:[#allocation12 + $0x4] sm:$0xf]
        %v3585 = vld [vmem:[#allocation12 + $0x8] sm:$0xf]
        %v3586 = vld [vmem:[#allocation12 + $0xc] sm:$0xf]
        %v3587 = vld [vmem:[#allocation12 + $0x10] sm:$0xf]
        %v3588 = vld [vmem:[#allocation12 + $0x14] sm:$0xf]
        %v3589 = vld [vmem:[#allocation12 + $0x18] sm:$0xf]
        %v3590 = vld [vmem:[#allocation12 + $0x1c] sm:$0xf]
        %v3591 = vld [vmem:[#allocation12 + $0x20] sm:$0xf]
        %v3592 = vld [vmem:[#allocation12 + $0x24] sm:$0xf]
        %v3593 = vld [vmem:[#allocation12 + $0x28] sm:$0xf]
        %v3594 = vld [vmem:[#allocation12 + $0x2c] sm:$0xf]
        %v3595 = vld [vmem:[#allocation12 + $0x30] sm:$0xf]
        %v3596 = vld [vmem:[#allocation12 + $0x34] sm:$0xf]
        %v3597 = vld [vmem:[#allocation12 + $0x38] sm:$0xf]
        %v3598 = vld [vmem:[#allocation12 + $0x3c] sm:$0xf]
        %v3599 = vld [vmem:[#allocation12 + $0x40] sm:$0xf]
        %v3600 = vld [vmem:[#allocation12 + $0x44] sm:$0xf]
        %v3601 = vld [vmem:[#allocation12 + $0x48] sm:$0xf]
        %v3602 = vld [vmem:[#allocation12 + $0x4c] sm:$0xf]
        %v3603 = vld [vmem:[#allocation12 + $0x50] sm:$0xf]
        %v3604 = vld [vmem:[#allocation12 + $0x54] sm:$0xf]
        %v3605 = vld [vmem:[#allocation12 + $0x58] sm:$0xf]
        %v3606 = vld [vmem:[#allocation12 + $0x5c] sm:$0xf]
        %v3607 = vld [vmem:[#allocation12 + $0x60] sm:$0xf]
        %v3608 = vld [vmem:[#allocation12 + $0x64] sm:$0xf]
        %v3609 = vld [vmem:[#allocation12 + $0x68] sm:$0xf]
        %v3610 = vld [vmem:[#allocation12 + $0x6c] sm:$0xf]
        %v3611 = vld [vmem:[#allocation12 + $0x70] sm:$0xf]
        %v3612 = vld [vmem:[#allocation12 + $0x74] sm:$0xf]
        %v3613 = vld [vmem:[#allocation12 + $0x78] sm:$0xf]
        %v3614 = vld [vmem:[#allocation12 + $0x7c] sm:$0xf]
        %v3615 = vld [vmem:[#allocation12 + $0x80] sm:$0xf]
        %v3616 = vld [vmem:[#allocation12 + $0x84] sm:$0xf]
        %v3617 = vld [vmem:[#allocation12 + $0x88] sm:$0xf]
        %v3618 = vld [vmem:[#allocation12 + $0x8c] sm:$0xf]
        %v3619 = vld [vmem:[#allocation12 + $0x90] sm:$0xf]
        %v3620 = vld [vmem:[#allocation12 + $0x94] sm:$0xf]
        %v3621 = vld [vmem:[#allocation12 + $0x98] sm:$0xf]
        %v3622 = vld [vmem:[#allocation12 + $0x9c] sm:$0xf]
        %v3623 = vld [vmem:[#allocation12 + $0xa0] sm:$0xf]
        %v3624 = vld [vmem:[#allocation12 + $0xa4] sm:$0xf]
        %v3625 = vld [vmem:[#allocation12 + $0xa8] sm:$0xf]
        %v3626 = vld [vmem:[#allocation12 + $0xac] sm:$0xf]
        %v3627 = vld [vmem:[#allocation12 + $0xb0] sm:$0xf]
        %v3628 = vld [vmem:[#allocation12 + $0xb4] sm:$0xf]
        %v3629 = vld [vmem:[#allocation12 + $0xb8] sm:$0xf]
        %v3630 = vld [vmem:[#allocation12 + $0xbc] sm:$0xf]
        %v3631 = vld [vmem:[#allocation12 + $0xc0] sm:$0xf]
        %v3632 = vld [vmem:[#allocation12 + $0xc4] sm:$0xf]
        %v3633 = vld [vmem:[#allocation12 + $0xc8] sm:$0xf]
        %v3634 = vld [vmem:[#allocation12 + $0xcc] sm:$0xf]
        %v3635 = vld [vmem:[#allocation12 + $0xd0] sm:$0xf]
        %v3636 = vld [vmem:[#allocation12 + $0xd4] sm:$0xf]
        %v3637 = vld [vmem:[#allocation12 + $0xd8] sm:$0xf]
        %v3638 = vld [vmem:[#allocation12 + $0xdc] sm:$0xf]
        %v3639 = vld [vmem:[#allocation12 + $0xe0] sm:$0xf]
        %v3640 = vld [vmem:[#allocation12 + $0xe4] sm:$0xf]
        %v3641 = vld [vmem:[#allocation12 + $0xe8] sm:$0xf]
        %v3642 = vld [vmem:[#allocation12 + $0xec] sm:$0xf]
        %v3643 = vld [vmem:[#allocation12 + $0xf0] sm:$0xf]
        %v3644 = vld [vmem:[#allocation12 + $0xf4] sm:$0xf]
        %v3645 = vld [vmem:[#allocation12 + $0xf8] sm:$0xf]
        %v3646 = vld [vmem:[#allocation12 + $0xfc] sm:$0xf]
        %v3647 = vld [vmem:[#allocation12 + $0x100] sm:$0xf]
        %v3648 = vld [vmem:[#allocation12 + $0x104] sm:$0xf]
        %v3649 = vld [vmem:[#allocation12 + $0x108] sm:$0xf]
        %v3650 = vld [vmem:[#allocation12 + $0x10c] sm:$0xf]
        %v3651 = vld [vmem:[#allocation12 + $0x110] sm:$0xf]
        %v3652 = vld [vmem:[#allocation12 + $0x114] sm:$0xf]
        %v3653 = vld [vmem:[#allocation12 + $0x118] sm:$0xf]
        %v3654 = vld [vmem:[#allocation12 + $0x11c] sm:$0xf]
        %v3655 = vld [vmem:[#allocation12 + $0x120] sm:$0xf]
        %v3656 = vld [vmem:[#allocation12 + $0x124] sm:$0xf]
        %v3657 = vld [vmem:[#allocation12 + $0x128] sm:$0xf]
        %v3658 = vld [vmem:[#allocation12 + $0x12c] sm:$0xf]
        %v3659 = vld [vmem:[#allocation12 + $0x130] sm:$0xf]
        %v3660 = vld [vmem:[#allocation12 + $0x134] sm:$0xf]
        %v3661 = vld [vmem:[#allocation12 + $0x138] sm:$0xf]
        %v3662 = vld [vmem:[#allocation12 + $0x13c] sm:$0xf]
        %v3663 = vld [vmem:[#allocation12 + $0x140] sm:$0xf]
        %v3664 = vld [vmem:[#allocation12 + $0x144] sm:$0xf]
        %v3665 = vld [vmem:[#allocation12 + $0x148] sm:$0xf]
        %v3666 = vld [vmem:[#allocation12 + $0x14c] sm:$0xf]
        %v3667 = vld [vmem:[#allocation12 + $0x150] sm:$0xf]
        %v3668 = vld [vmem:[#allocation12 + $0x154] sm:$0xf]
        %v3669 = vld [vmem:[#allocation12 + $0x158] sm:$0xf]
        %v3670 = vld [vmem:[#allocation12 + $0x15c] sm:$0xf]
        %v3671 = vld [vmem:[#allocation12 + $0x160] sm:$0xf]
        %v3672 = vld [vmem:[#allocation12 + $0x164] sm:$0xf]
        %v3673 = vld [vmem:[#allocation12 + $0x168] sm:$0xf]
        %v3674 = vld [vmem:[#allocation12 + $0x16c] sm:$0xf]
        %v3675 = vld [vmem:[#allocation12 + $0x170] sm:$0xf]
        %v3676 = vld [vmem:[#allocation12 + $0x174] sm:$0xf]
        %v3677 = vld [vmem:[#allocation12 + $0x178] sm:$0xf]
        %v3678 = vld [vmem:[#allocation12 + $0x17c] sm:$0xf]
        %v3679 = vld [vmem:[#allocation12 + $0x180] sm:$0xf]
        %v3680 = vld [vmem:[#allocation12 + $0x184] sm:$0xf]
        %v3681 = vld [vmem:[#allocation12 + $0x188] sm:$0xf]
        %v3682 = vld [vmem:[#allocation12 + $0x18c] sm:$0xf]
        %v3683 = vld [vmem:[#allocation12 + $0x190] sm:$0xf]
        %v3684 = vld [vmem:[#allocation12 + $0x194] sm:$0xf]
        %v3685 = vld [vmem:[#allocation12 + $0x198] sm:$0xf]
        %v3686 = vld [vmem:[#allocation12 + $0x19c] sm:$0xf]
        %v3687 = vld [vmem:[#allocation12 + $0x1a0] sm:$0xf]
        %v3688 = vld [vmem:[#allocation12 + $0x1a4] sm:$0xf]
        %v3689 = vld [vmem:[#allocation12 + $0x1a8] sm:$0xf]
        %v3690 = vld [vmem:[#allocation12 + $0x1ac] sm:$0xf]
        %v3691 = vld [vmem:[#allocation12 + $0x1b0] sm:$0xf]
        %v3692 = vld [vmem:[#allocation12 + $0x1b4] sm:$0xf]
        %v3693 = vld [vmem:[#allocation12 + $0x1b8] sm:$0xf]
        %v3694 = vld [vmem:[#allocation12 + $0x1bc] sm:$0xf]
        %v3695 = vld [vmem:[#allocation12 + $0x1c0] sm:$0xf]
        %v3696 = vld [vmem:[#allocation12 + $0x1c4] sm:$0xf]
        %v3697 = vld [vmem:[#allocation12 + $0x1c8] sm:$0xf]
        %v3698 = vld [vmem:[#allocation12 + $0x1cc] sm:$0xf]
        %v3699 = vld [vmem:[#allocation12 + $0x1d0] sm:$0xf]
        %v3700 = vld [vmem:[#allocation12 + $0x1d4] sm:$0xf]
        %v3701 = vld [vmem:[#allocation12 + $0x1d8] sm:$0xf]
        %v3702 = vld [vmem:[#allocation12 + $0x1dc] sm:$0xf]
        %v3703 = vld [vmem:[#allocation12 + $0x1e0] sm:$0xf]
        %v3704 = vld [vmem:[#allocation12 + $0x1e4] sm:$0xf]
        %v3705 = vld [vmem:[#allocation12 + $0x1e8] sm:$0xf]
        %v3706 = vld [vmem:[#allocation12 + $0x1ec] sm:$0xf]
        %v3707 = vld [vmem:[#allocation12 + $0x1f0] sm:$0xf]
        %v3708 = vld [vmem:[#allocation12 + $0x1f4] sm:$0xf]
        %v3709 = vld [vmem:[#allocation12 + $0x1f8] sm:$0xf]
        %v3710 = vld [vmem:[#allocation12 + $0x1fc] sm:$0xf]
        %v3711 = vld [vmem:[#allocation12 + $0x200] sm:$0xf]
        %v3712 = vld [vmem:[#allocation12 + $0x204] sm:$0xf]
        %v3713 = vld [vmem:[#allocation12 + $0x208] sm:$0xf]
        %v3714 = vld [vmem:[#allocation12 + $0x20c] sm:$0xf]
        %v3715 = vld [vmem:[#allocation12 + $0x210] sm:$0xf]
        %v3716 = vld [vmem:[#allocation12 + $0x214] sm:$0xf]
        %v3717 = vld [vmem:[#allocation12 + $0x218] sm:$0xf]
        %v3718 = vld [vmem:[#allocation12 + $0x21c] sm:$0xf]
        %v3719 = vld [vmem:[#allocation12 + $0x220] sm:$0xf]
        %v3720 = vld [vmem:[#allocation12 + $0x224] sm:$0xf]
        %v3721 = vld [vmem:[#allocation12 + $0x228] sm:$0xf]
        %v3722 = vld [vmem:[#allocation12 + $0x22c] sm:$0xf]
        %v3723 = vld [vmem:[#allocation12 + $0x230] sm:$0xf]
        %v3724 = vld [vmem:[#allocation12 + $0x234] sm:$0xf]
        %v3725 = vld [vmem:[#allocation12 + $0x238] sm:$0xf]
        %v3726 = vld [vmem:[#allocation12 + $0x23c] sm:$0xf]
        %v3727 = vld [vmem:[#allocation6] sm:$0xf]
        %v3728 = vld [vmem:[#allocation6 + $0x8] sm:$0xf]
        %v3729 = vld [vmem:[#allocation6 + $0x10] sm:$0xf]
        %v3730 = vld [vmem:[#allocation6 + $0x18] sm:$0xf]
        %v3731 = vld [vmem:[#allocation6 + $0x20] sm:$0xf]
        %v3732 = vld [vmem:[#allocation6 + $0x28] sm:$0xf]
        %v3733 = vld [vmem:[#allocation6 + $0x30] sm:$0xf]
        %v3734 = vld [vmem:[#allocation6 + $0x38] sm:$0xf]
        %3735 = vst [vmem:[#allocation4] sm:$0xf] %v3727
        %3736 = vst [vmem:[#allocation4 + $0x24] sm:$0xf] %v3728
        %3737 = vst [vmem:[#allocation4 + $0x48] sm:$0xf] %v3729
        %3738 = vst [vmem:[#allocation4 + $0x6c] sm:$0xf] %v3730
        %3739 = vst [vmem:[#allocation4 + $0x90] sm:$0xf] %v3731
        %3740 = vst [vmem:[#allocation4 + $0xb4] sm:$0xf] %v3732
        %3741 = vst [vmem:[#allocation4 + $0xd8] sm:$0xf] %v3733
        %3742 = vst [vmem:[#allocation4 + $0xfc] sm:$0xf] %v3734
        %v3743 = vld [vmem:[%s825] sm:$0xf]
        %v3744 = vld [vmem:[%s825 + $0x8] sm:$0xf]
        %v3745 = vld [vmem:[%s825 + $0x10] sm:$0xf]
        %v3746 = vld [vmem:[%s825 + $0x18] sm:$0xf]
        %v3747 = vld [vmem:[%s825 + $0x20] sm:$0xf]
        %v3748 = vld [vmem:[%s825 + $0x28] sm:$0xf]
        %v3749 = vld [vmem:[%s825 + $0x30] sm:$0xf]
        %v3750 = vld [vmem:[%s825 + $0x38] sm:$0xf]
        %3751 = vst [vmem:[#allocation4 + $0x4] sm:$0xf] %v3743
        %3752 = vst [vmem:[#allocation4 + $0x28] sm:$0xf] %v3744
        %3753 = vst [vmem:[#allocation4 + $0x4c] sm:$0xf] %v3745
        %3754 = vst [vmem:[#allocation4 + $0x70] sm:$0xf] %v3746
        %3755 = vst [vmem:[#allocation4 + $0x94] sm:$0xf] %v3747
        %3756 = vst [vmem:[#allocation4 + $0xb8] sm:$0xf] %v3748
        %3757 = vst [vmem:[#allocation4 + $0xdc] sm:$0xf] %v3749
        %3758 = vst [vmem:[#allocation4 + $0x100] sm:$0xf] %v3750
        %v3759 = vld [vmem:[#allocation6] sm:$0xf]
        %v3760 = vld [vmem:[#allocation6 + $0x4] sm:$0x1]
        %v3761 = vld [vmem:[#allocation6 + $0x8] sm:$0xf]
        %v3762 = vld [vmem:[#allocation6 + $0xc] sm:$0x1]
        %v3763 = vld [vmem:[#allocation6 + $0x10] sm:$0xf]
        %v3764 = vld [vmem:[#allocation6 + $0x14] sm:$0x1]
        %v3765 = vld [vmem:[#allocation6 + $0x18] sm:$0xf]
        %v3766 = vld [vmem:[#allocation6 + $0x1c] sm:$0x1]
        %v3767 = vld [vmem:[#allocation6 + $0x20] sm:$0xf]
        %v3768 = vld [vmem:[#allocation6 + $0x24] sm:$0x1]
        %v3769 = vld [vmem:[#allocation6 + $0x28] sm:$0xf]
        %v3770 = vld [vmem:[#allocation6 + $0x2c] sm:$0x1]
        %v3771 = vld [vmem:[#allocation6 + $0x30] sm:$0xf]
        %v3772 = vld [vmem:[#allocation6 + $0x34] sm:$0x1]
        %v3773 = vld [vmem:[#allocation6 + $0x38] sm:$0xf]
        %v3774 = vld [vmem:[#allocation6 + $0x3c] sm:$0x1]
        %v3776 = vshrl.u32 %v3759, 16
        %v3778 = vrot.slane %v3776, 4
        %v3779 = vshll.u32 %v3759, 16
        %v3781 = vrot.slane %v3779, 5
        %v3782 = vor.u32 %v3778, %v3781
        %v3783 = vrot.slane %v3782, 4
        %v3785 = vshll.u32 %v3760, 16
        %v3787 = vrot.slane %v3785, 5
        %v3788 = vsel %vm1018, %v3783, %v3787
        %v3790 = vshrl.u32 %v3761, 16
        %v3792 = vrot.slane %v3790, 4
        %v3793 = vshll.u32 %v3761, 16
        %v3795 = vrot.slane %v3793, 5
        %v3796 = vor.u32 %v3792, %v3795
        %v3797 = vrot.slane %v3796, 4
        %v3799 = vshll.u32 %v3762, 16
        %v3801 = vrot.slane %v3799, 5
        %v3802 = vsel %vm1018, %v3797, %v3801
        %v3804 = vshrl.u32 %v3763, 16
        %v3806 = vrot.slane %v3804, 4
        %v3807 = vshll.u32 %v3763, 16
        %v3809 = vrot.slane %v3807, 5
        %v3810 = vor.u32 %v3806, %v3809
        %v3811 = vrot.slane %v3810, 4
        %v3813 = vshll.u32 %v3764, 16
        %v3815 = vrot.slane %v3813, 5
        %v3816 = vsel %vm1018, %v3811, %v3815
        %v3818 = vshrl.u32 %v3765, 16
        %v3820 = vrot.slane %v3818, 4
        %v3821 = vshll.u32 %v3765, 16
        %v3823 = vrot.slane %v3821, 5
        %v3824 = vor.u32 %v3820, %v3823
        %v3825 = vrot.slane %v3824, 4
        %v3827 = vshll.u32 %v3766, 16
        %v3829 = vrot.slane %v3827, 5
        %v3830 = vsel %vm1018, %v3825, %v3829
        %v3832 = vshrl.u32 %v3767, 16
        %v3834 = vrot.slane %v3832, 4
        %v3835 = vshll.u32 %v3767, 16
        %v3837 = vrot.slane %v3835, 5
        %v3838 = vor.u32 %v3834, %v3837
        %v3839 = vrot.slane %v3838, 4
        %v3841 = vshll.u32 %v3768, 16
        %v3843 = vrot.slane %v3841, 5
        %v3844 = vsel %vm1018, %v3839, %v3843
        %v3846 = vshrl.u32 %v3769, 16
        %v3848 = vrot.slane %v3846, 4
        %v3849 = vshll.u32 %v3769, 16
        %v3851 = vrot.slane %v3849, 5
        %v3852 = vor.u32 %v3848, %v3851
        %v3853 = vrot.slane %v3852, 4
        %v3855 = vshll.u32 %v3770, 16
        %v3857 = vrot.slane %v3855, 5
        %v3858 = vsel %vm1018, %v3853, %v3857
        %v3860 = vshrl.u32 %v3771, 16
        %v3862 = vrot.slane %v3860, 4
        %v3863 = vshll.u32 %v3771, 16
        %v3865 = vrot.slane %v3863, 5
        %v3866 = vor.u32 %v3862, %v3865
        %v3867 = vrot.slane %v3866, 4
        %v3869 = vshll.u32 %v3772, 16
        %v3871 = vrot.slane %v3869, 5
        %v3872 = vsel %vm1018, %v3867, %v3871
        %v3874 = vshrl.u32 %v3773, 16
        %v3876 = vrot.slane %v3874, 4
        %v3877 = vshll.u32 %v3773, 16
        %v3879 = vrot.slane %v3877, 5
        %v3880 = vor.u32 %v3876, %v3879
        %v3881 = vrot.slane %v3880, 4
        %v3883 = vshll.u32 %v3774, 16
        %v3885 = vrot.slane %v3883, 5
        %v3886 = vsel %vm1018, %v3881, %v3885
        %3895 = vst [vmem:[#allocation4 + $0x8] sm:$0xf] %v3788
        %3896 = vst [vmem:[#allocation4 + $0x2c] sm:$0xf] %v3802
        %3897 = vst [vmem:[#allocation4 + $0x50] sm:$0xf] %v3816
        %3898 = vst [vmem:[#allocation4 + $0x74] sm:$0xf] %v3830
        %3899 = vst [vmem:[#allocation4 + $0x98] sm:$0xf] %v3844
        %3900 = vst [vmem:[#allocation4 + $0xbc] sm:$0xf] %v3858
        %3901 = vst [vmem:[#allocation4 + $0xe0] sm:$0xf] %v3872
        %3902 = vst [vmem:[#allocation4 + $0x104] sm:$0xf] %v3886
        %v3903 = vld [vmem:[%s892] sm:$0xf]
        %v3904 = vld [vmem:[%s892 + $0x8] sm:$0xf]
        %v3905 = vld [vmem:[%s892 + $0x10] sm:$0xf]
        %v3906 = vld [vmem:[%s892 + $0x18] sm:$0xf]
        %v3907 = vld [vmem:[%s892 + $0x20] sm:$0xf]
        %v3908 = vld [vmem:[%s892 + $0x28] sm:$0xf]
        %v3909 = vld [vmem:[%s892 + $0x30] sm:$0xf]
        %v3910 = vld [vmem:[%s892 + $0x38] sm:$0xf]
        %3911 = vst [vmem:[#allocation4 + $0xc] sm:$0xf] %v3903
        %3912 = vst [vmem:[#allocation4 + $0x30] sm:$0xf] %v3904
        %3913 = vst [vmem:[#allocation4 + $0x54] sm:$0xf] %v3905
        %3914 = vst [vmem:[#allocation4 + $0x78] sm:$0xf] %v3906
        %3915 = vst [vmem:[#allocation4 + $0x9c] sm:$0xf] %v3907
        %3916 = vst [vmem:[#allocation4 + $0xc0] sm:$0xf] %v3908
        %3917 = vst [vmem:[#allocation4 + $0xe4] sm:$0xf] %v3909
        %3918 = vst [vmem:[#allocation4 + $0x108] sm:$0xf] %v3910
        %v3919 = vld [vmem:[%s959] sm:$0xf]
        %v3920 = vld [vmem:[%s959 + $0x8] sm:$0xf]
        %v3921 = vld [vmem:[%s959 + $0x10] sm:$0xf]
        %v3922 = vld [vmem:[%s959 + $0x18] sm:$0xf]
        %v3923 = vld [vmem:[%s959 + $0x20] sm:$0xf]
        %v3924 = vld [vmem:[%s959 + $0x28] sm:$0xf]
        %v3925 = vld [vmem:[%s959 + $0x30] sm:$0xf]
        %v3926 = vld [vmem:[%s959 + $0x38] sm:$0xf]
        %3927 = vst [vmem:[#allocation4 + $0x10] sm:$0xf] %v3919
        %3928 = vst [vmem:[#allocation4 + $0x34] sm:$0xf] %v3920
        %3929 = vst [vmem:[#allocation4 + $0x58] sm:$0xf] %v3921
        %3930 = vst [vmem:[#allocation4 + $0x7c] sm:$0xf] %v3922
        %3931 = vst [vmem:[#allocation4 + $0xa0] sm:$0xf] %v3923
        %3932 = vst [vmem:[#allocation4 + $0xc4] sm:$0xf] %v3924
        %3933 = vst [vmem:[#allocation4 + $0xe8] sm:$0xf] %v3925
        %3934 = vst [vmem:[#allocation4 + $0x10c] sm:$0xf] %v3926
        %v3935 = vld [vmem:[%s892] sm:$0xf]
        %v3936 = vld [vmem:[%s892 + $0x4] sm:$0x1]
        %v3937 = vld [vmem:[%s892 + $0x8] sm:$0xf]
        %v3938 = vld [vmem:[%s892 + $0xc] sm:$0x1]
        %v3939 = vld [vmem:[%s892 + $0x10] sm:$0xf]
        %v3940 = vld [vmem:[%s892 + $0x14] sm:$0x1]
        %v3941 = vld [vmem:[%s892 + $0x18] sm:$0xf]
        %v3942 = vld [vmem:[%s892 + $0x1c] sm:$0x1]
        %v3943 = vld [vmem:[%s892 + $0x20] sm:$0xf]
        %v3944 = vld [vmem:[%s892 + $0x24] sm:$0x1]
        %v3945 = vld [vmem:[%s892 + $0x28] sm:$0xf]
        %v3946 = vld [vmem:[%s892 + $0x2c] sm:$0x1]
        %v3947 = vld [vmem:[%s892 + $0x30] sm:$0xf]
        %v3948 = vld [vmem:[%s892 + $0x34] sm:$0x1]
        %v3949 = vld [vmem:[%s892 + $0x38] sm:$0xf]
        %v3950 = vld [vmem:[%s892 + $0x3c] sm:$0x1]
        %v3952 = vshrl.u32 %v3935, 16
        %v3954 = vrot.slane %v3952, 4
        %v3955 = vshll.u32 %v3935, 16
        %v3957 = vrot.slane %v3955, 5
        %v3958 = vor.u32 %v3954, %v3957
        %v3959 = vrot.slane %v3958, 4
        %v3961 = vshll.u32 %v3936, 16
        %v3963 = vrot.slane %v3961, 5
        %v3964 = vsel %vm1018, %v3959, %v3963
        %v3966 = vshrl.u32 %v3937, 16
        %v3968 = vrot.slane %v3966, 4
        %v3969 = vshll.u32 %v3937, 16
        %v3971 = vrot.slane %v3969, 5
        %v3972 = vor.u32 %v3968, %v3971
        %v3973 = vrot.slane %v3972, 4
        %v3975 = vshll.u32 %v3938, 16
        %v3977 = vrot.slane %v3975, 5
        %v3978 = vsel %vm1018, %v3973, %v3977
        %v3980 = vshrl.u32 %v3939, 16
        %v3982 = vrot.slane %v3980, 4
        %v3983 = vshll.u32 %v3939, 16
        %v3985 = vrot.slane %v3983, 5
        %v3986 = vor.u32 %v3982, %v3985
        %v3987 = vrot.slane %v3986, 4
        %v3989 = vshll.u32 %v3940, 16
        %v3991 = vrot.slane %v3989, 5
        %v3992 = vsel %vm1018, %v3987, %v3991
        %v3994 = vshrl.u32 %v3941, 16
        %v3996 = vrot.slane %v3994, 4
        %v3997 = vshll.u32 %v3941, 16
        %v3999 = vrot.slane %v3997, 5
        %v4000 = vor.u32 %v3996, %v3999
        %v4001 = vrot.slane %v4000, 4
        %v4003 = vshll.u32 %v3942, 16
        %v4005 = vrot.slane %v4003, 5
        %v4006 = vsel %vm1018, %v4001, %v4005
        %v4008 = vshrl.u32 %v3943, 16
        %v4010 = vrot.slane %v4008, 4
        %v4011 = vshll.u32 %v3943, 16
        %v4013 = vrot.slane %v4011, 5
        %v4014 = vor.u32 %v4010, %v4013
        %v4015 = vrot.slane %v4014, 4
        %v4017 = vshll.u32 %v3944, 16
        %v4019 = vrot.slane %v4017, 5
        %v4020 = vsel %vm1018, %v4015, %v4019
        %v4022 = vshrl.u32 %v3945, 16
        %v4024 = vrot.slane %v4022, 4
        %v4025 = vshll.u32 %v3945, 16
        %v4027 = vrot.slane %v4025, 5
        %v4028 = vor.u32 %v4024, %v4027
        %v4029 = vrot.slane %v4028, 4
        %v4031 = vshll.u32 %v3946, 16
        %v4033 = vrot.slane %v4031, 5
        %v4034 = vsel %vm1018, %v4029, %v4033
        %v4036 = vshrl.u32 %v3947, 16
        %v4038 = vrot.slane %v4036, 4
        %v4039 = vshll.u32 %v3947, 16
        %v4041 = vrot.slane %v4039, 5
        %v4042 = vor.u32 %v4038, %v4041
        %v4043 = vrot.slane %v4042, 4
        %v4045 = vshll.u32 %v3948, 16
        %v4047 = vrot.slane %v4045, 5
        %v4048 = vsel %vm1018, %v4043, %v4047
        %v4050 = vshrl.u32 %v3949, 16
        %v4052 = vrot.slane %v4050, 4
        %v4053 = vshll.u32 %v3949, 16
        %v4055 = vrot.slane %v4053, 5
        %v4056 = vor.u32 %v4052, %v4055
        %v4057 = vrot.slane %v4056, 4
        %v4059 = vshll.u32 %v3950, 16
        %v4061 = vrot.slane %v4059, 5
        %v4062 = vsel %vm1018, %v4057, %v4061
        %4071 = vst [vmem:[#allocation4 + $0x14] sm:$0xf] %v3964
        %4072 = vst [vmem:[#allocation4 + $0x38] sm:$0xf] %v3978
        %4073 = vst [vmem:[#allocation4 + $0x5c] sm:$0xf] %v3992
        %4074 = vst [vmem:[#allocation4 + $0x80] sm:$0xf] %v4006
        %4075 = vst [vmem:[#allocation4 + $0xa4] sm:$0xf] %v4020
        %4076 = vst [vmem:[#allocation4 + $0xc8] sm:$0xf] %v4034
        %4077 = vst [vmem:[#allocation4 + $0xec] sm:$0xf] %v4048
        %4078 = vst [vmem:[#allocation4 + $0x110] sm:$0xf] %v4062
        %s4079 = scalar_lea.vmem [#allocation6], 8
        %v4080 = vld [vmem:[%s4079] sm:$0xf]
        %v4081 = vld [vmem:[%s4079 + $0x8] sm:$0xf]
        %v4082 = vld [vmem:[%s4079 + $0x10] sm:$0xf]
        %v4083 = vld [vmem:[%s4079 + $0x18] sm:$0xf]
        %v4084 = vld [vmem:[%s4079 + $0x20] sm:$0xf]
        %v4085 = vld [vmem:[%s4079 + $0x28] sm:$0xf]
        %v4086 = vld [vmem:[%s4079 + $0x30] sm:$0xf]
        %v4087 = vld [vmem:[%s4079 + $0x38] sm:$0xf]
        %4088 = vst [vmem:[#allocation4 + $0x18] sm:$0xf] %v4080
        %4089 = vst [vmem:[#allocation4 + $0x3c] sm:$0xf] %v4081
        %4090 = vst [vmem:[#allocation4 + $0x60] sm:$0xf] %v4082
        %4091 = vst [vmem:[#allocation4 + $0x84] sm:$0xf] %v4083
        %4092 = vst [vmem:[#allocation4 + $0xa8] sm:$0xf] %v4084
        %4093 = vst [vmem:[#allocation4 + $0xcc] sm:$0xf] %v4085
        %4094 = vst [vmem:[#allocation4 + $0xf0] sm:$0xf] %v4086
        %4095 = vst [vmem:[#allocation4 + $0x114] sm:$0xf] %v4087
        %s4096 = scalar_lea.vmem [#allocation6], 80
        %v4097 = vld [vmem:[%s4096] sm:$0xf]
        %v4098 = vld [vmem:[%s4096 + $0x8] sm:$0xf]
        %v4099 = vld [vmem:[%s4096 + $0x10] sm:$0xf]
        %v4100 = vld [vmem:[%s4096 + $0x18] sm:$0xf]
        %v4101 = vld [vmem:[%s4096 + $0x20] sm:$0xf]
        %v4102 = vld [vmem:[%s4096 + $0x28] sm:$0xf]
        %v4103 = vld [vmem:[%s4096 + $0x30] sm:$0xf]
        %v4104 = vld [vmem:[%s4096 + $0x38] sm:$0xf]
        %4105 = vst [vmem:[#allocation4 + $0x1c] sm:$0xf] %v4097
        %4106 = vst [vmem:[#allocation4 + $0x40] sm:$0xf] %v4098
        %4107 = vst [vmem:[#allocation4 + $0x64] sm:$0xf] %v4099
        %4108 = vst [vmem:[#allocation4 + $0x88] sm:$0xf] %v4100
        %4109 = vst [vmem:[#allocation4 + $0xac] sm:$0xf] %v4101
        %4110 = vst [vmem:[#allocation4 + $0xd0] sm:$0xf] %v4102
        %4111 = vst [vmem:[#allocation4 + $0xf4] sm:$0xf] %v4103
        %4112 = vst [vmem:[#allocation4 + $0x118] sm:$0xf] %v4104
        %v4113 = vld [vmem:[%s4079] sm:$0xf]
        %v4114 = vld [vmem:[%s4079 + $0x4] sm:$0x1]
        %v4115 = vld [vmem:[%s4079 + $0x8] sm:$0xf]
        %v4116 = vld [vmem:[%s4079 + $0xc] sm:$0x1]
        %v4117 = vld [vmem:[%s4079 + $0x10] sm:$0xf]
        %v4118 = vld [vmem:[%s4079 + $0x14] sm:$0x1]
        %v4119 = vld [vmem:[%s4079 + $0x18] sm:$0xf]
        %v4120 = vld [vmem:[%s4079 + $0x1c] sm:$0x1]
        %v4121 = vld [vmem:[%s4079 + $0x20] sm:$0xf]
        %v4122 = vld [vmem:[%s4079 + $0x24] sm:$0x1]
        %v4123 = vld [vmem:[%s4079 + $0x28] sm:$0xf]
        %v4124 = vld [vmem:[%s4079 + $0x2c] sm:$0x1]
        %v4125 = vld [vmem:[%s4079 + $0x30] sm:$0xf]
        %v4126 = vld [vmem:[%s4079 + $0x34] sm:$0x1]
        %v4127 = vld [vmem:[%s4079 + $0x38] sm:$0xf]
        %v4128 = vld [vmem:[%s4079 + $0x3c] sm:$0x1]
        %v4130 = vshrl.u32 %v4113, 16
        %v4132 = vrot.slane %v4130, 4
        %v4133 = vshll.u32 %v4113, 16
        %v4135 = vrot.slane %v4133, 5
        %v4136 = vor.u32 %v4132, %v4135
        %v4137 = vrot.slane %v4136, 4
        %v4139 = vshll.u32 %v4114, 16
        %v4141 = vrot.slane %v4139, 5
        %v4142 = vsel %vm1018, %v4137, %v4141
        %v4144 = vshrl.u32 %v4115, 16
        %v4146 = vrot.slane %v4144, 4
        %v4147 = vshll.u32 %v4115, 16
        %v4149 = vrot.slane %v4147, 5
        %v4150 = vor.u32 %v4146, %v4149
        %v4151 = vrot.slane %v4150, 4
        %v4153 = vshll.u32 %v4116, 16
        %v4155 = vrot.slane %v4153, 5
        %v4156 = vsel %vm1018, %v4151, %v4155
        %v4158 = vshrl.u32 %v4117, 16
        %v4160 = vrot.slane %v4158, 4
        %v4161 = vshll.u32 %v4117, 16
        %v4163 = vrot.slane %v4161, 5
        %v4164 = vor.u32 %v4160, %v4163
        %v4165 = vrot.slane %v4164, 4
        %v4167 = vshll.u32 %v4118, 16
        %v4169 = vrot.slane %v4167, 5
        %v4170 = vsel %vm1018, %v4165, %v4169
        %v4172 = vshrl.u32 %v4119, 16
        %v4174 = vrot.slane %v4172, 4
        %v4175 = vshll.u32 %v4119, 16
        %v4177 = vrot.slane %v4175, 5
        %v4178 = vor.u32 %v4174, %v4177
        %v4179 = vrot.slane %v4178, 4
        %v4181 = vshll.u32 %v4120, 16
        %v4183 = vrot.slane %v4181, 5
        %v4184 = vsel %vm1018, %v4179, %v4183
        %v4186 = vshrl.u32 %v4121, 16
        %v4188 = vrot.slane %v4186, 4
        %v4189 = vshll.u32 %v4121, 16
        %v4191 = vrot.slane %v4189, 5
        %v4192 = vor.u32 %v4188, %v4191
        %v4193 = vrot.slane %v4192, 4
        %v4195 = vshll.u32 %v4122, 16
        %v4197 = vrot.slane %v4195, 5
        %v4198 = vsel %vm1018, %v4193, %v4197
        %v4200 = vshrl.u32 %v4123, 16
        %v4202 = vrot.slane %v4200, 4
        %v4203 = vshll.u32 %v4123, 16
        %v4205 = vrot.slane %v4203, 5
        %v4206 = vor.u32 %v4202, %v4205
        %v4207 = vrot.slane %v4206, 4
        %v4209 = vshll.u32 %v4124, 16
        %v4211 = vrot.slane %v4209, 5
        %v4212 = vsel %vm1018, %v4207, %v4211
        %v4214 = vshrl.u32 %v4125, 16
        %v4216 = vrot.slane %v4214, 4
        %v4217 = vshll.u32 %v4125, 16
        %v4219 = vrot.slane %v4217, 5
        %v4220 = vor.u32 %v4216, %v4219
        %v4221 = vrot.slane %v4220, 4
        %v4223 = vshll.u32 %v4126, 16
        %v4225 = vrot.slane %v4223, 5
        %v4226 = vsel %vm1018, %v4221, %v4225
        %v4228 = vshrl.u32 %v4127, 16
        %v4230 = vrot.slane %v4228, 4
        %v4231 = vshll.u32 %v4127, 16
        %v4233 = vrot.slane %v4231, 5
        %v4234 = vor.u32 %v4230, %v4233
        %v4235 = vrot.slane %v4234, 4
        %v4237 = vshll.u32 %v4128, 16
        %v4239 = vrot.slane %v4237, 5
        %v4240 = vsel %vm1018, %v4235, %v4239
        %4249 = vst [vmem:[#allocation4 + $0x20] sm:$0xf] %v4142
        %4250 = vst [vmem:[#allocation4 + $0x44] sm:$0xf] %v4156
        %4251 = vst [vmem:[#allocation4 + $0x68] sm:$0xf] %v4170
        %4252 = vst [vmem:[#allocation4 + $0x8c] sm:$0xf] %v4184
        %4253 = vst [vmem:[#allocation4 + $0xb0] sm:$0xf] %v4198
        %4254 = vst [vmem:[#allocation4 + $0xd4] sm:$0xf] %v4212
        %4255 = vst [vmem:[#allocation4 + $0xf8] sm:$0xf] %v4226
        %4256 = vst [vmem:[#allocation4 + $0x11c] sm:$0xf] %v4240
        %v4257 = vld [vmem:[#allocation4] sm:$0xff]
        %v4258 = vld [vmem:[#allocation4 + $0x8] sm:$0xff]
        %v4259 = vld [vmem:[#allocation4 + $0x10] sm:$0xff]
        %v4260 = vld [vmem:[#allocation4 + $0x18] sm:$0xff]
        %v4261 = vld [vmem:[#allocation4 + $0x20] sm:$0xf]
        %v4262 = vld [vmem:[#allocation4 + $0x24] sm:$0xff]
        %v4263 = vld [vmem:[#allocation4 + $0x2c] sm:$0xff]
        %v4264 = vld [vmem:[#allocation4 + $0x34] sm:$0xff]
        %v4265 = vld [vmem:[#allocation4 + $0x3c] sm:$0xff]
        %v4266 = vld [vmem:[#allocation4 + $0x44] sm:$0xf]
        %v4267 = vld [vmem:[#allocation4 + $0x48] sm:$0xff]
        %v4268 = vld [vmem:[#allocation4 + $0x50] sm:$0xff]
        %v4269 = vld [vmem:[#allocation4 + $0x58] sm:$0xff]
        %v4270 = vld [vmem:[#allocation4 + $0x60] sm:$0xff]
        %v4271 = vld [vmem:[#allocation4 + $0x68] sm:$0xf]
        %v4272 = vld [vmem:[#allocation4 + $0x6c] sm:$0xff]
        %v4273 = vld [vmem:[#allocation4 + $0x74] sm:$0xff]
        %v4274 = vld [vmem:[#allocation4 + $0x7c] sm:$0xff]
        %v4275 = vld [vmem:[#allocation4 + $0x84] sm:$0xff]
        %v4276 = vld [vmem:[#allocation4 + $0x8c] sm:$0xf]
        %v4277 = vld [vmem:[#allocation4 + $0x90] sm:$0xff]
        %v4278 = vld [vmem:[#allocation4 + $0x98] sm:$0xff]
        %v4279 = vld [vmem:[#allocation4 + $0xa0] sm:$0xff]
        %v4280 = vld [vmem:[#allocation4 + $0xa8] sm:$0xff]
        %v4281 = vld [vmem:[#allocation4 + $0xb0] sm:$0xf]
        %v4282 = vld [vmem:[#allocation4 + $0xb4] sm:$0xff]
        %v4283 = vld [vmem:[#allocation4 + $0xbc] sm:$0xff]
        %v4284 = vld [vmem:[#allocation4 + $0xc4] sm:$0xff]
        %v4285 = vld [vmem:[#allocation4 + $0xcc] sm:$0xff]
        %v4286 = vld [vmem:[#allocation4 + $0xd4] sm:$0xf]
        %v4287 = vld [vmem:[#allocation4 + $0xd8] sm:$0xff]
        %v4288 = vld [vmem:[#allocation4 + $0xe0] sm:$0xff]
        %v4289 = vld [vmem:[#allocation4 + $0xe8] sm:$0xff]
        %v4290 = vld [vmem:[#allocation4 + $0xf0] sm:$0xff]
        %v4291 = vld [vmem:[#allocation4 + $0xf8] sm:$0xf]
        %v4292 = vld [vmem:[#allocation4 + $0xfc] sm:$0xff]
        %v4293 = vld [vmem:[#allocation4 + $0x104] sm:$0xff]
        %v4294 = vld [vmem:[#allocation4 + $0x10c] sm:$0xff]
        %v4295 = vld [vmem:[#allocation4 + $0x114] sm:$0xff]
        %v4296 = vld [vmem:[#allocation4 + $0x11c] sm:$0xf]
        %v4297 = vld [vmem:[#allocation13] sm:$0xf]
        %v4298 = vld [vmem:[#allocation13 + $0x4] sm:$0xf]
        %v4299 = vld [vmem:[#allocation13 + $0x8] sm:$0xf]
        %v4300 = vld [vmem:[#allocation13 + $0xc] sm:$0xf]
        %v4301 = vld [vmem:[#allocation13 + $0x10] sm:$0xf]
        %v4302 = vld [vmem:[#allocation13 + $0x14] sm:$0xf]
        %v4303 = vld [vmem:[#allocation13 + $0x18] sm:$0xf]
        %v4304 = vld [vmem:[#allocation13 + $0x1c] sm:$0xf]
        %v4305 = vld [vmem:[#allocation13 + $0x20] sm:$0xf]
        %v4306 = vld [vmem:[#allocation13 + $0x24] sm:$0xf]
        %v4307 = vld [vmem:[#allocation13 + $0x28] sm:$0xf]
        %v4308 = vld [vmem:[#allocation13 + $0x2c] sm:$0xf]
        %v4309 = vld [vmem:[#allocation13 + $0x30] sm:$0xf]
        %v4310 = vld [vmem:[#allocation13 + $0x34] sm:$0xf]
        %v4311 = vld [vmem:[#allocation13 + $0x38] sm:$0xf]
        %v4312 = vld [vmem:[#allocation13 + $0x3c] sm:$0xf]
        %v4313 = vld [vmem:[#allocation13 + $0x40] sm:$0xf]
        %v4314 = vld [vmem:[#allocation13 + $0x44] sm:$0xf]
        %v4315 = vld [vmem:[#allocation13 + $0x48] sm:$0xf]
        %v4316 = vld [vmem:[#allocation13 + $0x4c] sm:$0xf]
        %v4317 = vld [vmem:[#allocation13 + $0x50] sm:$0xf]
        %v4318 = vld [vmem:[#allocation13 + $0x54] sm:$0xf]
        %v4319 = vld [vmem:[#allocation13 + $0x58] sm:$0xf]
        %v4320 = vld [vmem:[#allocation13 + $0x5c] sm:$0xf]
        %v4321 = vld [vmem:[#allocation13 + $0x60] sm:$0xf]
        %v4322 = vld [vmem:[#allocation13 + $0x64] sm:$0xf]
        %v4323 = vld [vmem:[#allocation13 + $0x68] sm:$0xf]
        %v4324 = vld [vmem:[#allocation13 + $0x6c] sm:$0xf]
        %v4325 = vld [vmem:[#allocation13 + $0x70] sm:$0xf]
        %v4326 = vld [vmem:[#allocation13 + $0x74] sm:$0xf]
        %v4327 = vld [vmem:[#allocation13 + $0x78] sm:$0xf]
        %v4328 = vld [vmem:[#allocation13 + $0x7c] sm:$0xf]
        %v4329 = vld [vmem:[#allocation13 + $0x80] sm:$0xf]
        %v4330 = vld [vmem:[#allocation13 + $0x84] sm:$0xf]
        %v4331 = vld [vmem:[#allocation13 + $0x88] sm:$0xf]
        %v4332 = vld [vmem:[#allocation13 + $0x8c] sm:$0xf]
        %v4333 = vld [vmem:[#allocation13 + $0x90] sm:$0xf]
        %v4334 = vld [vmem:[#allocation13 + $0x94] sm:$0xf]
        %v4335 = vld [vmem:[#allocation13 + $0x98] sm:$0xf]
        %v4336 = vld [vmem:[#allocation13 + $0x9c] sm:$0xf]
        %v4337 = vld [vmem:[#allocation13 + $0xa0] sm:$0xf]
        %v4338 = vld [vmem:[#allocation13 + $0xa4] sm:$0xf]
        %v4339 = vld [vmem:[#allocation13 + $0xa8] sm:$0xf]
        %v4340 = vld [vmem:[#allocation13 + $0xac] sm:$0xf]
        %v4341 = vld [vmem:[#allocation13 + $0xb0] sm:$0xf]
        %v4342 = vld [vmem:[#allocation13 + $0xb4] sm:$0xf]
        %v4343 = vld [vmem:[#allocation13 + $0xb8] sm:$0xf]
        %v4344 = vld [vmem:[#allocation13 + $0xbc] sm:$0xf]
        %v4345 = vld [vmem:[#allocation13 + $0xc0] sm:$0xf]
        %v4346 = vld [vmem:[#allocation13 + $0xc4] sm:$0xf]
        %v4347 = vld [vmem:[#allocation13 + $0xc8] sm:$0xf]
        %v4348 = vld [vmem:[#allocation13 + $0xcc] sm:$0xf]
        %v4349 = vld [vmem:[#allocation13 + $0xd0] sm:$0xf]
        %v4350 = vld [vmem:[#allocation13 + $0xd4] sm:$0xf]
        %v4351 = vld [vmem:[#allocation13 + $0xd8] sm:$0xf]
        %v4352 = vld [vmem:[#allocation13 + $0xdc] sm:$0xf]
        %v4353 = vld [vmem:[#allocation13 + $0xe0] sm:$0xf]
        %v4354 = vld [vmem:[#allocation13 + $0xe4] sm:$0xf]
        %v4355 = vld [vmem:[#allocation13 + $0xe8] sm:$0xf]
        %v4356 = vld [vmem:[#allocation13 + $0xec] sm:$0xf]
        %v4357 = vld [vmem:[#allocation13 + $0xf0] sm:$0xf]
        %v4358 = vld [vmem:[#allocation13 + $0xf4] sm:$0xf]
        %v4359 = vld [vmem:[#allocation13 + $0xf8] sm:$0xf]
        %v4360 = vld [vmem:[#allocation13 + $0xfc] sm:$0xf]
        %v4361 = vld [vmem:[#allocation13 + $0x100] sm:$0xf]
        %v4362 = vld [vmem:[#allocation13 + $0x104] sm:$0xf]
        %v4363 = vld [vmem:[#allocation13 + $0x108] sm:$0xf]
        %v4364 = vld [vmem:[#allocation13 + $0x10c] sm:$0xf]
        %v4365 = vld [vmem:[#allocation13 + $0x110] sm:$0xf]
        %v4366 = vld [vmem:[#allocation13 + $0x114] sm:$0xf]
        %v4367 = vld [vmem:[#allocation13 + $0x118] sm:$0xf]
        %v4368 = vld [vmem:[#allocation13 + $0x11c] sm:$0xf]
        %v4369 = vld [vmem:[#allocation13 + $0x120] sm:$0xf]
        %v4370 = vld [vmem:[#allocation13 + $0x124] sm:$0xf]
        %v4371 = vld [vmem:[#allocation13 + $0x128] sm:$0xf]
        %v4372 = vld [vmem:[#allocation13 + $0x12c] sm:$0xf]
        %v4373 = vld [vmem:[#allocation13 + $0x130] sm:$0xf]
        %v4374 = vld [vmem:[#allocation13 + $0x134] sm:$0xf]
        %v4375 = vld [vmem:[#allocation13 + $0x138] sm:$0xf]
        %v4376 = vld [vmem:[#allocation13 + $0x13c] sm:$0xf]
        %v4377 = vld [vmem:[#allocation13 + $0x140] sm:$0xf]
        %v4378 = vld [vmem:[#allocation13 + $0x144] sm:$0xf]
        %v4379 = vld [vmem:[#allocation13 + $0x148] sm:$0xf]
        %v4380 = vld [vmem:[#allocation13 + $0x14c] sm:$0xf]
        %v4381 = vld [vmem:[#allocation13 + $0x150] sm:$0xf]
        %v4382 = vld [vmem:[#allocation13 + $0x154] sm:$0xf]
        %v4383 = vld [vmem:[#allocation13 + $0x158] sm:$0xf]
        %v4384 = vld [vmem:[#allocation13 + $0x15c] sm:$0xf]
        %v4385 = vld [vmem:[#allocation13 + $0x160] sm:$0xf]
        %v4386 = vld [vmem:[#allocation13 + $0x164] sm:$0xf]
        %v4387 = vld [vmem:[#allocation13 + $0x168] sm:$0xf]
        %v4388 = vld [vmem:[#allocation13 + $0x16c] sm:$0xf]
        %v4389 = vld [vmem:[#allocation13 + $0x170] sm:$0xf]
        %v4390 = vld [vmem:[#allocation13 + $0x174] sm:$0xf]
        %v4391 = vld [vmem:[#allocation13 + $0x178] sm:$0xf]
        %v4392 = vld [vmem:[#allocation13 + $0x17c] sm:$0xf]
        %v4393 = vld [vmem:[#allocation13 + $0x180] sm:$0xf]
        %v4394 = vld [vmem:[#allocation13 + $0x184] sm:$0xf]
        %v4395 = vld [vmem:[#allocation13 + $0x188] sm:$0xf]
        %v4396 = vld [vmem:[#allocation13 + $0x18c] sm:$0xf]
        %v4397 = vld [vmem:[#allocation13 + $0x190] sm:$0xf]
        %v4398 = vld [vmem:[#allocation13 + $0x194] sm:$0xf]
        %v4399 = vld [vmem:[#allocation13 + $0x198] sm:$0xf]
        %v4400 = vld [vmem:[#allocation13 + $0x19c] sm:$0xf]
        %v4401 = vld [vmem:[#allocation13 + $0x1a0] sm:$0xf]
        %v4402 = vld [vmem:[#allocation13 + $0x1a4] sm:$0xf]
        %v4403 = vld [vmem:[#allocation13 + $0x1a8] sm:$0xf]
        %v4404 = vld [vmem:[#allocation13 + $0x1ac] sm:$0xf]
        %v4405 = vld [vmem:[#allocation13 + $0x1b0] sm:$0xf]
        %v4406 = vld [vmem:[#allocation13 + $0x1b4] sm:$0xf]
        %v4407 = vld [vmem:[#allocation13 + $0x1b8] sm:$0xf]
        %v4408 = vld [vmem:[#allocation13 + $0x1bc] sm:$0xf]
        %v4409 = vld [vmem:[#allocation13 + $0x1c0] sm:$0xf]
        %v4410 = vld [vmem:[#allocation13 + $0x1c4] sm:$0xf]
        %v4411 = vld [vmem:[#allocation13 + $0x1c8] sm:$0xf]
        %v4412 = vld [vmem:[#allocation13 + $0x1cc] sm:$0xf]
        %v4413 = vld [vmem:[#allocation13 + $0x1d0] sm:$0xf]
        %v4414 = vld [vmem:[#allocation13 + $0x1d4] sm:$0xf]
        %v4415 = vld [vmem:[#allocation13 + $0x1d8] sm:$0xf]
        %v4416 = vld [vmem:[#allocation13 + $0x1dc] sm:$0xf]
        %v4417 = vld [vmem:[#allocation13 + $0x1e0] sm:$0xf]
        %v4418 = vld [vmem:[#allocation13 + $0x1e4] sm:$0xf]
        %v4419 = vld [vmem:[#allocation13 + $0x1e8] sm:$0xf]
        %v4420 = vld [vmem:[#allocation13 + $0x1ec] sm:$0xf]
        %v4421 = vld [vmem:[#allocation13 + $0x1f0] sm:$0xf]
        %v4422 = vld [vmem:[#allocation13 + $0x1f4] sm:$0xf]
        %v4423 = vld [vmem:[#allocation13 + $0x1f8] sm:$0xf]
        %v4424 = vld [vmem:[#allocation13 + $0x1fc] sm:$0xf]
        %v4425 = vld [vmem:[#allocation13 + $0x200] sm:$0xf]
        %v4426 = vld [vmem:[#allocation13 + $0x204] sm:$0xf]
        %v4427 = vld [vmem:[#allocation13 + $0x208] sm:$0xf]
        %v4428 = vld [vmem:[#allocation13 + $0x20c] sm:$0xf]
        %v4429 = vld [vmem:[#allocation13 + $0x210] sm:$0xf]
        %v4430 = vld [vmem:[#allocation13 + $0x214] sm:$0xf]
        %v4431 = vld [vmem:[#allocation13 + $0x218] sm:$0xf]
        %v4432 = vld [vmem:[#allocation13 + $0x21c] sm:$0xf]
        %v4433 = vld [vmem:[#allocation13 + $0x220] sm:$0xf]
        %v4434 = vld [vmem:[#allocation13 + $0x224] sm:$0xf]
        %v4435 = vld [vmem:[#allocation13 + $0x228] sm:$0xf]
        %v4436 = vld [vmem:[#allocation13 + $0x22c] sm:$0xf]
        %v4437 = vld [vmem:[#allocation13 + $0x230] sm:$0xf]
        %v4438 = vld [vmem:[#allocation13 + $0x234] sm:$0xf]
        %v4439 = vld [vmem:[#allocation13 + $0x238] sm:$0xf]
        %v4440 = vld [vmem:[#allocation13 + $0x23c] sm:$0xf]
        %v4481 = vunpack.c.l.b16 %v4257
        %v4482 = vunpack.c.h.b16 %v4257
        %v4483 = vunpack.c.l.b16 %v4258
        %v4484 = vunpack.c.h.b16 %v4258
        %v4485 = vunpack.c.l.b16 %v4259
        %v4486 = vunpack.c.h.b16 %v4259
        %v4487 = vunpack.c.l.b16 %v4260
        %v4488 = vunpack.c.h.b16 %v4260
        %v4489 = vunpack.c.l.b16 %v4261
        %v4490 = vunpack.c.l.b16 %v4262
        %v4491 = vunpack.c.h.b16 %v4262
        %v4492 = vunpack.c.l.b16 %v4263
        %v4493 = vunpack.c.h.b16 %v4263
        %v4494 = vunpack.c.l.b16 %v4264
        %v4495 = vunpack.c.h.b16 %v4264
        %v4496 = vunpack.c.l.b16 %v4265
        %v4497 = vunpack.c.h.b16 %v4265
        %v4498 = vunpack.c.l.b16 %v4266
        %v4499 = vunpack.c.l.b16 %v4267
        %v4500 = vunpack.c.h.b16 %v4267
        %v4501 = vunpack.c.l.b16 %v4268
        %v4502 = vunpack.c.h.b16 %v4268
        %v4503 = vunpack.c.l.b16 %v4269
        %v4504 = vunpack.c.h.b16 %v4269
        %v4505 = vunpack.c.l.b16 %v4270
        %v4506 = vunpack.c.h.b16 %v4270
        %v4507 = vunpack.c.l.b16 %v4271
        %v4508 = vunpack.c.l.b16 %v4272
        %v4509 = vunpack.c.h.b16 %v4272
        %v4510 = vunpack.c.l.b16 %v4273
        %v4511 = vunpack.c.h.b16 %v4273
        %v4512 = vunpack.c.l.b16 %v4274
        %v4513 = vunpack.c.h.b16 %v4274
        %v4514 = vunpack.c.l.b16 %v4275
        %v4515 = vunpack.c.h.b16 %v4275
        %v4516 = vunpack.c.l.b16 %v4276
        %v4517 = vunpack.c.l.b16 %v4277
        %v4518 = vunpack.c.h.b16 %v4277
        %v4519 = vunpack.c.l.b16 %v4278
        %v4520 = vunpack.c.h.b16 %v4278
        %v4521 = vunpack.c.l.b16 %v4279
        %v4522 = vunpack.c.h.b16 %v4279
        %v4523 = vunpack.c.l.b16 %v4280
        %v4524 = vunpack.c.h.b16 %v4280
        %v4525 = vunpack.c.l.b16 %v4281
        %v4526 = vunpack.c.l.b16 %v4282
        %v4527 = vunpack.c.h.b16 %v4282
        %v4528 = vunpack.c.l.b16 %v4283
        %v4529 = vunpack.c.h.b16 %v4283
        %v4530 = vunpack.c.l.b16 %v4284
        %v4531 = vunpack.c.h.b16 %v4284
        %v4532 = vunpack.c.l.b16 %v4285
        %v4533 = vunpack.c.h.b16 %v4285
        %v4534 = vunpack.c.l.b16 %v4286
        %v4535 = vunpack.c.l.b16 %v4287
        %v4536 = vunpack.c.h.b16 %v4287
        %v4537 = vunpack.c.l.b16 %v4288
        %v4538 = vunpack.c.h.b16 %v4288
        %v4539 = vunpack.c.l.b16 %v4289
        %v4540 = vunpack.c.h.b16 %v4289
        %v4541 = vunpack.c.l.b16 %v4290
        %v4542 = vunpack.c.h.b16 %v4290
        %v4543 = vunpack.c.l.b16 %v4291
        %v4544 = vunpack.c.l.b16 %v4292
        %v4545 = vunpack.c.h.b16 %v4292
        %v4546 = vunpack.c.l.b16 %v4293
        %v4547 = vunpack.c.h.b16 %v4293
        %v4548 = vunpack.c.l.b16 %v4294
        %v4549 = vunpack.c.h.b16 %v4294
        %v4550 = vunpack.c.l.b16 %v4295
        %v4551 = vunpack.c.h.b16 %v4295
        %v4552 = vunpack.c.l.b16 %v4296
        %v4553 = vpack.c.b16 %v4490, %v4481
        %v4554 = vpack.c.b16 %v4491, %v4482
        %v4555 = vpack.c.b16 %v4492, %v4483
        %v4556 = vpack.c.b16 %v4493, %v4484
        %v4557 = vpack.c.b16 %v4494, %v4485
        %v4558 = vpack.c.b16 %v4495, %v4486
        %v4559 = vpack.c.b16 %v4496, %v4487
        %v4560 = vpack.c.b16 %v4497, %v4488
        %v4561 = vpack.c.b16 %v4498, %v4489
        %v4562 = vpack.c.b16 %v4508, %v4499
        %v4563 = vpack.c.b16 %v4509, %v4500
        %v4564 = vpack.c.b16 %v4510, %v4501
        %v4565 = vpack.c.b16 %v4511, %v4502
        %v4566 = vpack.c.b16 %v4512, %v4503
        %v4567 = vpack.c.b16 %v4513, %v4504
        %v4568 = vpack.c.b16 %v4514, %v4505
        %v4569 = vpack.c.b16 %v4515, %v4506
        %v4570 = vpack.c.b16 %v4516, %v4507
        %v4571 = vpack.c.b16 %v4526, %v4517
        %v4572 = vpack.c.b16 %v4527, %v4518
        %v4573 = vpack.c.b16 %v4528, %v4519
        %v4574 = vpack.c.b16 %v4529, %v4520
        %v4575 = vpack.c.b16 %v4530, %v4521
        %v4576 = vpack.c.b16 %v4531, %v4522
        %v4577 = vpack.c.b16 %v4532, %v4523
        %v4578 = vpack.c.b16 %v4533, %v4524
        %v4579 = vpack.c.b16 %v4534, %v4525
        %v4580 = vpack.c.b16 %v4544, %v4535
        %v4581 = vpack.c.b16 %v4545, %v4536
        %v4582 = vpack.c.b16 %v4546, %v4537
        %v4583 = vpack.c.b16 %v4547, %v4538
        %v4584 = vpack.c.b16 %v4548, %v4539
        %v4585 = vpack.c.b16 %v4549, %v4540
        %v4586 = vpack.c.b16 %v4550, %v4541
        %v4587 = vpack.c.b16 %v4551, %v4542
        %v4588 = vpack.c.b16 %v4552, %v4543
        %v4769 = vunpack.c.l.b16 %v4297
        %v4770 = vunpack.c.l.b16 %v4298
        %v4771 = vunpack.c.l.b16 %v4299
        %v4772 = vunpack.c.l.b16 %v4300
        %v4773 = vunpack.c.l.b16 %v4301
        %v4774 = vunpack.c.l.b16 %v4302
        %v4775 = vunpack.c.l.b16 %v4303
        %v4776 = vunpack.c.l.b16 %v4304
        %v4777 = vunpack.c.l.b16 %v4305
        %v4778 = vunpack.c.l.b16 %v4306
        %v4779 = vunpack.c.l.b16 %v4307
        %v4780 = vunpack.c.l.b16 %v4308
        %v4781 = vunpack.c.l.b16 %v4309
        %v4782 = vunpack.c.l.b16 %v4310
        %v4783 = vunpack.c.l.b16 %v4311
        %v4784 = vunpack.c.l.b16 %v4312
        %v4785 = vunpack.c.l.b16 %v4313
        %v4786 = vunpack.c.l.b16 %v4314
        %v4787 = vunpack.c.l.b16 %v4315
        %v4788 = vunpack.c.l.b16 %v4316
        %v4789 = vunpack.c.l.b16 %v4317
        %v4790 = vunpack.c.l.b16 %v4318
        %v4791 = vunpack.c.l.b16 %v4319
        %v4792 = vunpack.c.l.b16 %v4320
        %v4793 = vunpack.c.l.b16 %v4321
        %v4794 = vunpack.c.l.b16 %v4322
        %v4795 = vunpack.c.l.b16 %v4323
        %v4796 = vunpack.c.l.b16 %v4324
        %v4797 = vunpack.c.l.b16 %v4325
        %v4798 = vunpack.c.l.b16 %v4326
        %v4799 = vunpack.c.l.b16 %v4327
        %v4800 = vunpack.c.l.b16 %v4328
        %v4801 = vunpack.c.l.b16 %v4329
        %v4802 = vunpack.c.l.b16 %v4330
        %v4803 = vunpack.c.l.b16 %v4331
        %v4804 = vunpack.c.l.b16 %v4332
        %v4805 = vunpack.c.l.b16 %v4333
        %v4806 = vunpack.c.l.b16 %v4334
        %v4807 = vunpack.c.l.b16 %v4335
        %v4808 = vunpack.c.l.b16 %v4336
        %v4809 = vunpack.c.l.b16 %v4337
        %v4810 = vunpack.c.l.b16 %v4338
        %v4811 = vunpack.c.l.b16 %v4339
        %v4812 = vunpack.c.l.b16 %v4340
        %v4813 = vunpack.c.l.b16 %v4341
        %v4814 = vunpack.c.l.b16 %v4342
        %v4815 = vunpack.c.l.b16 %v4343
        %v4816 = vunpack.c.l.b16 %v4344
        %v4817 = vunpack.c.l.b16 %v4345
        %v4818 = vunpack.c.l.b16 %v4346
        %v4819 = vunpack.c.l.b16 %v4347
        %v4820 = vunpack.c.l.b16 %v4348
        %v4821 = vunpack.c.l.b16 %v4349
        %v4822 = vunpack.c.l.b16 %v4350
        %v4823 = vunpack.c.l.b16 %v4351
        %v4824 = vunpack.c.l.b16 %v4352
        %v4825 = vunpack.c.l.b16 %v4353
        %v4826 = vunpack.c.l.b16 %v4354
        %v4827 = vunpack.c.l.b16 %v4355
        %v4828 = vunpack.c.l.b16 %v4356
        %v4829 = vunpack.c.l.b16 %v4357
        %v4830 = vunpack.c.l.b16 %v4358
        %v4831 = vunpack.c.l.b16 %v4359
        %v4832 = vunpack.c.l.b16 %v4360
        %v4833 = vunpack.c.l.b16 %v4361
        %v4834 = vunpack.c.l.b16 %v4362
        %v4835 = vunpack.c.l.b16 %v4363
        %v4836 = vunpack.c.l.b16 %v4364
        %v4837 = vunpack.c.l.b16 %v4365
        %v4838 = vunpack.c.l.b16 %v4366
        %v4839 = vunpack.c.l.b16 %v4367
        %v4840 = vunpack.c.l.b16 %v4368
        %v4841 = vunpack.c.l.b16 %v4369
        %v4842 = vunpack.c.l.b16 %v4370
        %v4843 = vunpack.c.l.b16 %v4371
        %v4844 = vunpack.c.l.b16 %v4372
        %v4845 = vunpack.c.l.b16 %v4373
        %v4846 = vunpack.c.l.b16 %v4374
        %v4847 = vunpack.c.l.b16 %v4375
        %v4848 = vunpack.c.l.b16 %v4376
        %v4849 = vunpack.c.l.b16 %v4377
        %v4850 = vunpack.c.l.b16 %v4378
        %v4851 = vunpack.c.l.b16 %v4379
        %v4852 = vunpack.c.l.b16 %v4380
        %v4853 = vunpack.c.l.b16 %v4381
        %v4854 = vunpack.c.l.b16 %v4382
        %v4855 = vunpack.c.l.b16 %v4383
        %v4856 = vunpack.c.l.b16 %v4384
        %v4857 = vunpack.c.l.b16 %v4385
        %v4858 = vunpack.c.l.b16 %v4386
        %v4859 = vunpack.c.l.b16 %v4387
        %v4860 = vunpack.c.l.b16 %v4388
        %v4861 = vunpack.c.l.b16 %v4389
        %v4862 = vunpack.c.l.b16 %v4390
        %v4863 = vunpack.c.l.b16 %v4391
        %v4864 = vunpack.c.l.b16 %v4392
        %v4865 = vunpack.c.l.b16 %v4393
        %v4866 = vunpack.c.l.b16 %v4394
        %v4867 = vunpack.c.l.b16 %v4395
        %v4868 = vunpack.c.l.b16 %v4396
        %v4869 = vunpack.c.l.b16 %v4397
        %v4870 = vunpack.c.l.b16 %v4398
        %v4871 = vunpack.c.l.b16 %v4399
        %v4872 = vunpack.c.l.b16 %v4400
        %v4873 = vunpack.c.l.b16 %v4401
        %v4874 = vunpack.c.l.b16 %v4402
        %v4875 = vunpack.c.l.b16 %v4403
        %v4876 = vunpack.c.l.b16 %v4404
        %v4877 = vunpack.c.l.b16 %v4405
        %v4878 = vunpack.c.l.b16 %v4406
        %v4879 = vunpack.c.l.b16 %v4407
        %v4880 = vunpack.c.l.b16 %v4408
        %v4881 = vunpack.c.l.b16 %v4409
        %v4882 = vunpack.c.l.b16 %v4410
        %v4883 = vunpack.c.l.b16 %v4411
        %v4884 = vunpack.c.l.b16 %v4412
        %v4885 = vunpack.c.l.b16 %v4413
        %v4886 = vunpack.c.l.b16 %v4414
        %v4887 = vunpack.c.l.b16 %v4415
        %v4888 = vunpack.c.l.b16 %v4416
        %v4889 = vunpack.c.l.b16 %v4417
        %v4890 = vunpack.c.l.b16 %v4418
        %v4891 = vunpack.c.l.b16 %v4419
        %v4892 = vunpack.c.l.b16 %v4420
        %v4893 = vunpack.c.l.b16 %v4421
        %v4894 = vunpack.c.l.b16 %v4422
        %v4895 = vunpack.c.l.b16 %v4423
        %v4896 = vunpack.c.l.b16 %v4424
        %v4897 = vunpack.c.l.b16 %v4425
        %v4898 = vunpack.c.l.b16 %v4426
        %v4899 = vunpack.c.l.b16 %v4427
        %v4900 = vunpack.c.l.b16 %v4428
        %v4901 = vunpack.c.l.b16 %v4429
        %v4902 = vunpack.c.l.b16 %v4430
        %v4903 = vunpack.c.l.b16 %v4431
        %v4904 = vunpack.c.l.b16 %v4432
        %v4905 = vunpack.c.l.b16 %v4433
        %v4906 = vunpack.c.l.b16 %v4434
        %v4907 = vunpack.c.l.b16 %v4435
        %v4908 = vunpack.c.l.b16 %v4436
        %v4909 = vunpack.c.l.b16 %v4437
        %v4910 = vunpack.c.l.b16 %v4438
        %v4911 = vunpack.c.l.b16 %v4439
        %v4912 = vunpack.c.l.b16 %v4440
        %v4913 = vpack.c.b16 %v4770, %v4769
        %v4914 = vpack.c.b16 %v4772, %v4771
        %v4915 = vpack.c.b16 %v4774, %v4773
        %v4916 = vpack.c.b16 %v4776, %v4775
        %v4917 = vpack.c.b16 %v4778, %v4777
        %v4918 = vpack.c.b16 %v4780, %v4779
        %v4919 = vpack.c.b16 %v4782, %v4781
        %v4920 = vpack.c.b16 %v4784, %v4783
        %v4921 = vpack.c.b16 %v4786, %v4785
        %v4922 = vpack.c.b16 %v4788, %v4787
        %v4923 = vpack.c.b16 %v4790, %v4789
        %v4924 = vpack.c.b16 %v4792, %v4791
        %v4925 = vpack.c.b16 %v4794, %v4793
        %v4926 = vpack.c.b16 %v4796, %v4795
        %v4927 = vpack.c.b16 %v4798, %v4797
        %v4928 = vpack.c.b16 %v4800, %v4799
        %v4929 = vpack.c.b16 %v4802, %v4801
        %v4930 = vpack.c.b16 %v4804, %v4803
        %v4931 = vpack.c.b16 %v4806, %v4805
        %v4932 = vpack.c.b16 %v4808, %v4807
        %v4933 = vpack.c.b16 %v4810, %v4809
        %v4934 = vpack.c.b16 %v4812, %v4811
        %v4935 = vpack.c.b16 %v4814, %v4813
        %v4936 = vpack.c.b16 %v4816, %v4815
        %v4937 = vpack.c.b16 %v4818, %v4817
        %v4938 = vpack.c.b16 %v4820, %v4819
        %v4939 = vpack.c.b16 %v4822, %v4821
        %v4940 = vpack.c.b16 %v4824, %v4823
        %v4941 = vpack.c.b16 %v4826, %v4825
        %v4942 = vpack.c.b16 %v4828, %v4827
        %v4943 = vpack.c.b16 %v4830, %v4829
        %v4944 = vpack.c.b16 %v4832, %v4831
        %v4945 = vpack.c.b16 %v4834, %v4833
        %v4946 = vpack.c.b16 %v4836, %v4835
        %v4947 = vpack.c.b16 %v4838, %v4837
        %v4948 = vpack.c.b16 %v4840, %v4839
        %v4949 = vpack.c.b16 %v4842, %v4841
        %v4950 = vpack.c.b16 %v4844, %v4843
        %v4951 = vpack.c.b16 %v4846, %v4845
        %v4952 = vpack.c.b16 %v4848, %v4847
        %v4953 = vpack.c.b16 %v4850, %v4849
        %v4954 = vpack.c.b16 %v4852, %v4851
        %v4955 = vpack.c.b16 %v4854, %v4853
        %v4956 = vpack.c.b16 %v4856, %v4855
        %v4957 = vpack.c.b16 %v4858, %v4857
        %v4958 = vpack.c.b16 %v4860, %v4859
        %v4959 = vpack.c.b16 %v4862, %v4861
        %v4960 = vpack.c.b16 %v4864, %v4863
        %v4961 = vpack.c.b16 %v4866, %v4865
        %v4962 = vpack.c.b16 %v4868, %v4867
        %v4963 = vpack.c.b16 %v4870, %v4869
        %v4964 = vpack.c.b16 %v4872, %v4871
        %v4965 = vpack.c.b16 %v4874, %v4873
        %v4966 = vpack.c.b16 %v4876, %v4875
        %v4967 = vpack.c.b16 %v4878, %v4877
        %v4968 = vpack.c.b16 %v4880, %v4879
        %v4969 = vpack.c.b16 %v4882, %v4881
        %v4970 = vpack.c.b16 %v4884, %v4883
        %v4971 = vpack.c.b16 %v4886, %v4885
        %v4972 = vpack.c.b16 %v4888, %v4887
        %v4973 = vpack.c.b16 %v4890, %v4889
        %v4974 = vpack.c.b16 %v4892, %v4891
        %v4975 = vpack.c.b16 %v4894, %v4893
        %v4976 = vpack.c.b16 %v4896, %v4895
        %v4977 = vpack.c.b16 %v4898, %v4897
        %v4978 = vpack.c.b16 %v4900, %v4899
        %v4979 = vpack.c.b16 %v4902, %v4901
        %v4980 = vpack.c.b16 %v4904, %v4903
        %v4981 = vpack.c.b16 %v4906, %v4905
        %v4982 = vpack.c.b16 %v4908, %v4907
        %v4983 = vpack.c.b16 %v4910, %v4909
        %v4984 = vpack.c.b16 %v4912, %v4911
        %5057 = vmatprep.subr.bf16.mxu0 0
        %5058 = vmatpush1.bf16.msra.mxu0 %v4920
        %5059 = vmatprep.subr.bf16.mxu0 0
        %5060 = vmatpush1.bf16.msra.mxu0 %v4919
        %5061 = vmatprep.subr.bf16.mxu0 0
        %5062 = vmatpush1.bf16.msra.mxu0 %v4918
        %5063 = vmatprep.subr.bf16.mxu0 0
        %5064 = vmatpush1.bf16.msra.mxu0 %v4917
        %5065 = vmatprep.subr.bf16.mxu0 0
        %5066 = vmatpush1.bf16.msra.mxu0 %v4916
        %5067 = vmatprep.subr.bf16.mxu0 0
        %5068 = vmatpush1.bf16.msra.mxu0 %v4915
        %5069 = vmatprep.subr.bf16.mxu0 0
        %5070 = vmatpush1.bf16.msra.mxu0 %v4914
        %5071 = vmatprep.subr.bf16.mxu0 0
        %5072 = vmatpush1.bf16.msra.mxu0 %v4913
        %5073 = vmatprep.subr.bf16.mxu0 0
        %5074 = vmatpush2.bf16.msra.mxu0 %v4928
        %5075 = vmatprep.subr.bf16.mxu0 0
        %5076 = vmatpush2.bf16.msra.mxu0 %v4927
        %5077 = vmatprep.subr.bf16.mxu0 0
        %5078 = vmatpush2.bf16.msra.mxu0 %v4926
        %5079 = vmatprep.subr.bf16.mxu0 0
        %5080 = vmatpush2.bf16.msra.mxu0 %v4925
        %5081 = vmatprep.subr.bf16.mxu0 0
        %5082 = vmatpush2.bf16.msra.mxu0 %v4924
        %5083 = vmatprep.subr.bf16.mxu0 0
        %5084 = vmatpush2.bf16.msra.mxu0 %v4923
        %5085 = vmatprep.subr.bf16.mxu0 0
        %5086 = vmatpush2.bf16.msra.mxu0 %v4922
        %5087 = vmatprep.subr.bf16.mxu0 0
        %5088 = vmatpush2.bf16.msra.mxu0 %v4921
        %5089 = vmatprep.mubr.bf16.mxu0 %v4554
        %5090 = vmatmul.mubr.bf16.gmra.mxu0 %v4553
        %v5091 = vpop.f32.mrf.mxu0
        %v5092 = vadd.f32 0.0, %v5091
        %v5093 = vpop.f32.mrf.mxu0
        %v5094 = vpop.f32.mrf.mxu0
        %v5095 = vadd.f32 0.0, %v5094
        %v5096 = vpop.f32.mrf.mxu0
        %5097 = vmatprep.mubr.bf16.mxu0 %v4563
        %5098 = vmatmul.mubr.bf16.gmra.mxu0 %v4562
        %v5099 = vpop.f32.mrf.mxu0
        %v5100 = vadd.f32 0.0, %v5099
        %v5101 = vpop.f32.mrf.mxu0
        %v5102 = vpop.f32.mrf.mxu0
        %v5103 = vadd.f32 0.0, %v5102
        %v5104 = vpop.f32.mrf.mxu0
        %5105 = vmatprep.mubr.bf16.mxu0 %v4572
        %5106 = vmatmul.mubr.bf16.gmra.mxu0 %v4571
        %v5107 = vpop.f32.mrf.mxu0
        %v5108 = vadd.f32 0.0, %v5107
        %v5109 = vpop.f32.mrf.mxu0
        %v5110 = vpop.f32.mrf.mxu0
        %v5111 = vadd.f32 0.0, %v5110
        %v5112 = vpop.f32.mrf.mxu0
        %5113 = vmatprep.mubr.bf16.mxu0 %v4581
        %5114 = vmatmul.mubr.bf16.gmra.mxu0 %v4580
        %v5115 = vpop.f32.mrf.mxu0
        %v5116 = vadd.f32 0.0, %v5115
        %v5117 = vpop.f32.mrf.mxu0
        %v5118 = vpop.f32.mrf.mxu0
        %v5119 = vadd.f32 0.0, %v5118
        %v5120 = vpop.f32.mrf.mxu0
        %5121 = vdwg.mxu0
        %5122 = vmatprep.subr.bf16.mxu0 0
        %5123 = vmatpush1.bf16.msra.mxu0 %v4936
        %5124 = vmatprep.subr.bf16.mxu0 0
        %5125 = vmatpush1.bf16.msra.mxu0 %v4935
        %5126 = vmatprep.subr.bf16.mxu0 0
        %5127 = vmatpush1.bf16.msra.mxu0 %v4934
        %5128 = vmatprep.subr.bf16.mxu0 0
        %5129 = vmatpush1.bf16.msra.mxu0 %v4933
        %5130 = vmatprep.subr.bf16.mxu0 0
        %5131 = vmatpush1.bf16.msra.mxu0 %v4932
        %5132 = vmatprep.subr.bf16.mxu0 0
        %5133 = vmatpush1.bf16.msra.mxu0 %v4931
        %5134 = vmatprep.subr.bf16.mxu0 0
        %5135 = vmatpush1.bf16.msra.mxu0 %v4930
        %5136 = vmatprep.subr.bf16.mxu0 0
        %5137 = vmatpush1.bf16.msra.mxu0 %v4929
        %5138 = vmatprep.subr.bf16.mxu0 0
        %5139 = vmatpush2.bf16.msra.mxu0 %v4944
        %5140 = vmatprep.subr.bf16.mxu0 0
        %5141 = vmatpush2.bf16.msra.mxu0 %v4943
        %5142 = vmatprep.subr.bf16.mxu0 0
        %5143 = vmatpush2.bf16.msra.mxu0 %v4942
        %5144 = vmatprep.subr.bf16.mxu0 0
        %5145 = vmatpush2.bf16.msra.mxu0 %v4941
        %5146 = vmatprep.subr.bf16.mxu0 0
        %5147 = vmatpush2.bf16.msra.mxu0 %v4940
        %5148 = vmatprep.subr.bf16.mxu0 0
        %5149 = vmatpush2.bf16.msra.mxu0 %v4939
        %5150 = vmatprep.subr.bf16.mxu0 0
        %5151 = vmatpush2.bf16.msra.mxu0 %v4938
        %5152 = vmatprep.subr.bf16.mxu0 0
        %5153 = vmatpush2.bf16.msra.mxu0 %v4937
        %5154 = vmatprep.mubr.bf16.mxu0 %v4556
        %5155 = vmatmul.mubr.bf16.gmra.mxu0 %v4555
        %v5156 = vpop.f32.mrf.mxu0
        %v5157 = vadd.f32 %v5092, %v5156
        %v5158 = vpop.f32.mrf.mxu0
        %v5159 = vpop.f32.mrf.mxu0
        %v5160 = vadd.f32 %v5095, %v5159
        %v5161 = vpop.f32.mrf.mxu0
        %5162 = vmatprep.mubr.bf16.mxu0 %v4565
        %5163 = vmatmul.mubr.bf16.gmra.mxu0 %v4564
        %v5164 = vpop.f32.mrf.mxu0
        %v5165 = vadd.f32 %v5100, %v5164
        %v5166 = vpop.f32.mrf.mxu0
        %v5167 = vpop.f32.mrf.mxu0
        %v5168 = vadd.f32 %v5103, %v5167
        %v5169 = vpop.f32.mrf.mxu0
        %5170 = vmatprep.mubr.bf16.mxu0 %v4574
        %5171 = vmatmul.mubr.bf16.gmra.mxu0 %v4573
        %v5172 = vpop.f32.mrf.mxu0
        %v5173 = vadd.f32 %v5108, %v5172
        %v5174 = vpop.f32.mrf.mxu0
        %v5175 = vpop.f32.mrf.mxu0
        %v5176 = vadd.f32 %v5111, %v5175
        %v5177 = vpop.f32.mrf.mxu0
        %5178 = vmatprep.mubr.bf16.mxu0 %v4583
        %5179 = vmatmul.mubr.bf16.gmra.mxu0 %v4582
        %v5180 = vpop.f32.mrf.mxu0
        %v5181 = vadd.f32 %v5116, %v5180
        %v5182 = vpop.f32.mrf.mxu0
        %v5183 = vpop.f32.mrf.mxu0
        %v5184 = vadd.f32 %v5119, %v5183
        %v5185 = vpop.f32.mrf.mxu0
        %5186 = vdwg.mxu0
        %5187 = vmatprep.subr.bf16.mxu0 0
        %5188 = vmatpush1.bf16.msra.mxu0 %v4952
        %5189 = vmatprep.subr.bf16.mxu0 0
        %5190 = vmatpush1.bf16.msra.mxu0 %v4951
        %5191 = vmatprep.subr.bf16.mxu0 0
        %5192 = vmatpush1.bf16.msra.mxu0 %v4950
        %5193 = vmatprep.subr.bf16.mxu0 0
        %5194 = vmatpush1.bf16.msra.mxu0 %v4949
        %5195 = vmatprep.subr.bf16.mxu0 0
        %5196 = vmatpush1.bf16.msra.mxu0 %v4948
        %5197 = vmatprep.subr.bf16.mxu0 0
        %5198 = vmatpush1.bf16.msra.mxu0 %v4947
        %5199 = vmatprep.subr.bf16.mxu0 0
        %5200 = vmatpush1.bf16.msra.mxu0 %v4946
        %5201 = vmatprep.subr.bf16.mxu0 0
        %5202 = vmatpush1.bf16.msra.mxu0 %v4945
        %5203 = vmatprep.subr.bf16.mxu0 0
        %5204 = vmatpush2.bf16.msra.mxu0 %v4960
        %5205 = vmatprep.subr.bf16.mxu0 0
        %5206 = vmatpush2.bf16.msra.mxu0 %v4959
        %5207 = vmatprep.subr.bf16.mxu0 0
        %5208 = vmatpush2.bf16.msra.mxu0 %v4958
        %5209 = vmatprep.subr.bf16.mxu0 0
        %5210 = vmatpush2.bf16.msra.mxu0 %v4957
        %5211 = vmatprep.subr.bf16.mxu0 0
        %5212 = vmatpush2.bf16.msra.mxu0 %v4956
        %5213 = vmatprep.subr.bf16.mxu0 0
        %5214 = vmatpush2.bf16.msra.mxu0 %v4955
        %5215 = vmatprep.subr.bf16.mxu0 0
        %5216 = vmatpush2.bf16.msra.mxu0 %v4954
        %5217 = vmatprep.subr.bf16.mxu0 0
        %5218 = vmatpush2.bf16.msra.mxu0 %v4953
        %5219 = vmatprep.mubr.bf16.mxu0 %v4558
        %5220 = vmatmul.mubr.bf16.gmra.mxu0 %v4557
        %v5221 = vpop.f32.mrf.mxu0
        %v5222 = vadd.f32 %v5157, %v5221
        %v5223 = vpop.f32.mrf.mxu0
        %v5224 = vpop.f32.mrf.mxu0
        %v5225 = vadd.f32 %v5160, %v5224
        %v5226 = vpop.f32.mrf.mxu0
        %5227 = vmatprep.mubr.bf16.mxu0 %v4567
        %5228 = vmatmul.mubr.bf16.gmra.mxu0 %v4566
        %v5229 = vpop.f32.mrf.mxu0
        %v5230 = vadd.f32 %v5165, %v5229
        %v5231 = vpop.f32.mrf.mxu0
        %v5232 = vpop.f32.mrf.mxu0
        %v5233 = vadd.f32 %v5168, %v5232
        %v5234 = vpop.f32.mrf.mxu0
        %5235 = vmatprep.mubr.bf16.mxu0 %v4576
        %5236 = vmatmul.mubr.bf16.gmra.mxu0 %v4575
        %v5237 = vpop.f32.mrf.mxu0
        %v5238 = vadd.f32 %v5173, %v5237
        %v5239 = vpop.f32.mrf.mxu0
        %v5240 = vpop.f32.mrf.mxu0
        %v5241 = vadd.f32 %v5176, %v5240
        %v5242 = vpop.f32.mrf.mxu0
        %5243 = vmatprep.mubr.bf16.mxu0 %v4585
        %5244 = vmatmul.mubr.bf16.gmra.mxu0 %v4584
        %v5245 = vpop.f32.mrf.mxu0
        %v5246 = vadd.f32 %v5181, %v5245
        %v5247 = vpop.f32.mrf.mxu0
        %v5248 = vpop.f32.mrf.mxu0
        %v5249 = vadd.f32 %v5184, %v5248
        %v5250 = vpop.f32.mrf.mxu0
        %5251 = vdwg.mxu0
        %5252 = vmatprep.subr.bf16.mxu0 0
        %5253 = vmatpush1.bf16.msra.mxu0 %v4968
        %5254 = vmatprep.subr.bf16.mxu0 0
        %5255 = vmatpush1.bf16.msra.mxu0 %v4967
        %5256 = vmatprep.subr.bf16.mxu0 0
        %5257 = vmatpush1.bf16.msra.mxu0 %v4966
        %5258 = vmatprep.subr.bf16.mxu0 0
        %5259 = vmatpush1.bf16.msra.mxu0 %v4965
        %5260 = vmatprep.subr.bf16.mxu0 0
        %5261 = vmatpush1.bf16.msra.mxu0 %v4964
        %5262 = vmatprep.subr.bf16.mxu0 0
        %5263 = vmatpush1.bf16.msra.mxu0 %v4963
        %5264 = vmatprep.subr.bf16.mxu0 0
        %5265 = vmatpush1.bf16.msra.mxu0 %v4962
        %5266 = vmatprep.subr.bf16.mxu0 0
        %5267 = vmatpush1.bf16.msra.mxu0 %v4961
        %5268 = vmatprep.subr.bf16.mxu0 0
        %5269 = vmatpush2.bf16.msra.mxu0 %v4976
        %5270 = vmatprep.subr.bf16.mxu0 0
        %5271 = vmatpush2.bf16.msra.mxu0 %v4975
        %5272 = vmatprep.subr.bf16.mxu0 0
        %5273 = vmatpush2.bf16.msra.mxu0 %v4974
        %5274 = vmatprep.subr.bf16.mxu0 0
        %5275 = vmatpush2.bf16.msra.mxu0 %v4973
        %5276 = vmatprep.subr.bf16.mxu0 0
        %5277 = vmatpush2.bf16.msra.mxu0 %v4972
        %5278 = vmatprep.subr.bf16.mxu0 0
        %5279 = vmatpush2.bf16.msra.mxu0 %v4971
        %5280 = vmatprep.subr.bf16.mxu0 0
        %5281 = vmatpush2.bf16.msra.mxu0 %v4970
        %5282 = vmatprep.subr.bf16.mxu0 0
        %5283 = vmatpush2.bf16.msra.mxu0 %v4969
        %5284 = vmatprep.mubr.bf16.mxu0 %v4560
        %5285 = vmatmul.mubr.bf16.gmra.mxu0 %v4559
        %v5286 = vpop.f32.mrf.mxu0
        %v5287 = vadd.f32 %v5222, %v5286
        %v5288 = vpop.f32.mrf.mxu0
        %v5289 = vpop.f32.mrf.mxu0
        %v5290 = vadd.f32 %v5225, %v5289
        %v5291 = vpop.f32.mrf.mxu0
        %5292 = vmatprep.mubr.bf16.mxu0 %v4569
        %5293 = vmatmul.mubr.bf16.gmra.mxu0 %v4568
        %v5294 = vpop.f32.mrf.mxu0
        %v5295 = vadd.f32 %v5230, %v5294
        %v5296 = vpop.f32.mrf.mxu0
        %v5297 = vpop.f32.mrf.mxu0
        %v5298 = vadd.f32 %v5233, %v5297
        %v5299 = vpop.f32.mrf.mxu0
        %5300 = vmatprep.mubr.bf16.mxu0 %v4578
        %5301 = vmatmul.mubr.bf16.gmra.mxu0 %v4577
        %v5302 = vpop.f32.mrf.mxu0
        %v5303 = vadd.f32 %v5238, %v5302
        %v5304 = vpop.f32.mrf.mxu0
        %v5305 = vpop.f32.mrf.mxu0
        %v5306 = vadd.f32 %v5241, %v5305
        %v5307 = vpop.f32.mrf.mxu0
        %5308 = vmatprep.mubr.bf16.mxu0 %v4587
        %5309 = vmatmul.mubr.bf16.gmra.mxu0 %v4586
        %v5310 = vpop.f32.mrf.mxu0
        %v5311 = vadd.f32 %v5246, %v5310
        %v5312 = vpop.f32.mrf.mxu0
        %v5313 = vpop.f32.mrf.mxu0
        %v5314 = vadd.f32 %v5249, %v5313
        %v5315 = vpop.f32.mrf.mxu0
        %5316 = vdwg.mxu0
        %5317 = vmatprep.subr.bf16.mxu0 0
        %5318 = vmatpush1.bf16.msra.mxu0 %v4984
        %5319 = vmatprep.subr.bf16.mxu0 0
        %5320 = vmatpush1.bf16.msra.mxu0 %v4983
        %5321 = vmatprep.subr.bf16.mxu0 0
        %5322 = vmatpush1.bf16.msra.mxu0 %v4982
        %5323 = vmatprep.subr.bf16.mxu0 0
        %5324 = vmatpush1.bf16.msra.mxu0 %v4981
        %5325 = vmatprep.subr.bf16.mxu0 0
        %5326 = vmatpush1.bf16.msra.mxu0 %v4980
        %5327 = vmatprep.subr.bf16.mxu0 0
        %5328 = vmatpush1.bf16.msra.mxu0 %v4979
        %5329 = vmatprep.subr.bf16.mxu0 0
        %5330 = vmatpush1.bf16.msra.mxu0 %v4978
        %5331 = vmatprep.subr.bf16.mxu0 0
        %5332 = vmatpush1.bf16.msra.mxu0 %v4977
        %5333 = vmatprep.subr.bf16.mxu0 0
        %5334 = vmatpush2.bf16.msra.mxu0 0
        %5335 = vmatprep.subr.bf16.mxu0 0
        %5336 = vmatpush2.bf16.msra.mxu0 0
        %5337 = vmatprep.subr.bf16.mxu0 0
        %5338 = vmatpush2.bf16.msra.mxu0 0
        %5339 = vmatprep.subr.bf16.mxu0 0
        %5340 = vmatpush2.bf16.msra.mxu0 0
        %5341 = vmatprep.subr.bf16.mxu0 0
        %5342 = vmatpush2.bf16.msra.mxu0 0
        %5343 = vmatprep.subr.bf16.mxu0 0
        %5344 = vmatpush2.bf16.msra.mxu0 0
        %5345 = vmatprep.subr.bf16.mxu0 0
        %5346 = vmatpush2.bf16.msra.mxu0 0
        %5347 = vmatprep.subr.bf16.mxu0 0
        %5348 = vmatpush2.bf16.msra.mxu0 0
        %5349 = vmatprep.mubr.bf16.mxu0 0
        %5350 = vmatmul.mubr.bf16.gmra.mxu0 %v4561
        %v5351 = vpop.f32.mrf.mxu0
        %v5352 = vadd.f32 %v5287, %v5351
        %v5353 = vpop.f32.mrf.mxu0
        %v5354 = vpop.f32.mrf.mxu0
        %v5355 = vadd.f32 %v5290, %v5354
        %v5356 = vpop.f32.mrf.mxu0
        %5357 = vmatprep.mubr.bf16.mxu0 0
        %5358 = vmatmul.mubr.bf16.gmra.mxu0 %v4570
        %v5359 = vpop.f32.mrf.mxu0
        %v5360 = vadd.f32 %v5295, %v5359
        %v5361 = vpop.f32.mrf.mxu0
        %v5362 = vpop.f32.mrf.mxu0
        %v5363 = vadd.f32 %v5298, %v5362
        %v5364 = vpop.f32.mrf.mxu0
        %5365 = vmatprep.mubr.bf16.mxu0 0
        %5366 = vmatmul.mubr.bf16.gmra.mxu0 %v4579
        %v5367 = vpop.f32.mrf.mxu0
        %v5368 = vadd.f32 %v5303, %v5367
        %v5369 = vpop.f32.mrf.mxu0
        %v5370 = vpop.f32.mrf.mxu0
        %v5371 = vadd.f32 %v5306, %v5370
        %v5372 = vpop.f32.mrf.mxu0
        %5373 = vmatprep.mubr.bf16.mxu0 0
        %5374 = vmatmul.mubr.bf16.gmra.mxu0 %v4588
        %v5375 = vpop.f32.mrf.mxu0
        %v5376 = vadd.f32 %v5311, %v5375
        %v5377 = vpop.f32.mrf.mxu0
        %v5378 = vpop.f32.mrf.mxu0
        %v5379 = vadd.f32 %v5314, %v5378
        %v5380 = vpop.f32.mrf.mxu0
        %5381 = vdwg.mxu0
        %v5422 = vunpack.c.l.b16 %v3543
        %v5423 = vunpack.c.h.b16 %v3543
        %v5424 = vunpack.c.l.b16 %v3544
        %v5425 = vunpack.c.h.b16 %v3544
        %v5426 = vunpack.c.l.b16 %v3545
        %v5427 = vunpack.c.h.b16 %v3545
        %v5428 = vunpack.c.l.b16 %v3546
        %v5429 = vunpack.c.h.b16 %v3546
        %v5430 = vunpack.c.l.b16 %v3547
        %v5431 = vunpack.c.l.b16 %v3548
        %v5432 = vunpack.c.h.b16 %v3548
        %v5433 = vunpack.c.l.b16 %v3549
        %v5434 = vunpack.c.h.b16 %v3549
        %v5435 = vunpack.c.l.b16 %v3550
        %v5436 = vunpack.c.h.b16 %v3550
        %v5437 = vunpack.c.l.b16 %v3551
        %v5438 = vunpack.c.h.b16 %v3551
        %v5439 = vunpack.c.l.b16 %v3552
        %v5440 = vunpack.c.l.b16 %v3553
        %v5441 = vunpack.c.h.b16 %v3553
        %v5442 = vunpack.c.l.b16 %v3554
        %v5443 = vunpack.c.h.b16 %v3554
        %v5444 = vunpack.c.l.b16 %v3555
        %v5445 = vunpack.c.h.b16 %v3555
        %v5446 = vunpack.c.l.b16 %v3556
        %v5447 = vunpack.c.h.b16 %v3556
        %v5448 = vunpack.c.l.b16 %v3557
        %v5449 = vunpack.c.l.b16 %v3558
        %v5450 = vunpack.c.h.b16 %v3558
        %v5451 = vunpack.c.l.b16 %v3559
        %v5452 = vunpack.c.h.b16 %v3559
        %v5453 = vunpack.c.l.b16 %v3560
        %v5454 = vunpack.c.h.b16 %v3560
        %v5455 = vunpack.c.l.b16 %v3561
        %v5456 = vunpack.c.h.b16 %v3561
        %v5457 = vunpack.c.l.b16 %v3562
        %v5458 = vunpack.c.l.b16 %v3563
        %v5459 = vunpack.c.h.b16 %v3563
        %v5460 = vunpack.c.l.b16 %v3564
        %v5461 = vunpack.c.h.b16 %v3564
        %v5462 = vunpack.c.l.b16 %v3565
        %v5463 = vunpack.c.h.b16 %v3565
        %v5464 = vunpack.c.l.b16 %v3566
        %v5465 = vunpack.c.h.b16 %v3566
        %v5466 = vunpack.c.l.b16 %v3567
        %v5467 = vunpack.c.l.b16 %v3568
        %v5468 = vunpack.c.h.b16 %v3568
        %v5469 = vunpack.c.l.b16 %v3569
        %v5470 = vunpack.c.h.b16 %v3569
        %v5471 = vunpack.c.l.b16 %v3570
        %v5472 = vunpack.c.h.b16 %v3570
        %v5473 = vunpack.c.l.b16 %v3571
        %v5474 = vunpack.c.h.b16 %v3571
        %v5475 = vunpack.c.l.b16 %v3572
        %v5476 = vunpack.c.l.b16 %v3573
        %v5477 = vunpack.c.h.b16 %v3573
        %v5478 = vunpack.c.l.b16 %v3574
        %v5479 = vunpack.c.h.b16 %v3574
        %v5480 = vunpack.c.l.b16 %v3575
        %v5481 = vunpack.c.h.b16 %v3575
        %v5482 = vunpack.c.l.b16 %v3576
        %v5483 = vunpack.c.h.b16 %v3576
        %v5484 = vunpack.c.l.b16 %v3577
        %v5485 = vunpack.c.l.b16 %v3578
        %v5486 = vunpack.c.h.b16 %v3578
        %v5487 = vunpack.c.l.b16 %v3579
        %v5488 = vunpack.c.h.b16 %v3579
        %v5489 = vunpack.c.l.b16 %v3580
        %v5490 = vunpack.c.h.b16 %v3580
        %v5491 = vunpack.c.l.b16 %v3581
        %v5492 = vunpack.c.h.b16 %v3581
        %v5493 = vunpack.c.l.b16 %v3582
        %v5494 = vpack.c.b16 %v5431, %v5422
        %v5495 = vpack.c.b16 %v5432, %v5423
        %v5496 = vpack.c.b16 %v5433, %v5424
        %v5497 = vpack.c.b16 %v5434, %v5425
        %v5498 = vpack.c.b16 %v5435, %v5426
        %v5499 = vpack.c.b16 %v5436, %v5427
        %v5500 = vpack.c.b16 %v5437, %v5428
        %v5501 = vpack.c.b16 %v5438, %v5429
        %v5502 = vpack.c.b16 %v5439, %v5430
        %v5503 = vpack.c.b16 %v5449, %v5440
        %v5504 = vpack.c.b16 %v5450, %v5441
        %v5505 = vpack.c.b16 %v5451, %v5442
        %v5506 = vpack.c.b16 %v5452, %v5443
        %v5507 = vpack.c.b16 %v5453, %v5444
        %v5508 = vpack.c.b16 %v5454, %v5445
        %v5509 = vpack.c.b16 %v5455, %v5446
        %v5510 = vpack.c.b16 %v5456, %v5447
        %v5511 = vpack.c.b16 %v5457, %v5448
        %v5512 = vpack.c.b16 %v5467, %v5458
        %v5513 = vpack.c.b16 %v5468, %v5459
        %v5514 = vpack.c.b16 %v5469, %v5460
        %v5515 = vpack.c.b16 %v5470, %v5461
        %v5516 = vpack.c.b16 %v5471, %v5462
        %v5517 = vpack.c.b16 %v5472, %v5463
        %v5518 = vpack.c.b16 %v5473, %v5464
        %v5519 = vpack.c.b16 %v5474, %v5465
        %v5520 = vpack.c.b16 %v5475, %v5466
        %v5521 = vpack.c.b16 %v5485, %v5476
        %v5522 = vpack.c.b16 %v5486, %v5477
        %v5523 = vpack.c.b16 %v5487, %v5478
        %v5524 = vpack.c.b16 %v5488, %v5479
        %v5525 = vpack.c.b16 %v5489, %v5480
        %v5526 = vpack.c.b16 %v5490, %v5481
        %v5527 = vpack.c.b16 %v5491, %v5482
        %v5528 = vpack.c.b16 %v5492, %v5483
        %v5529 = vpack.c.b16 %v5493, %v5484
        %v5710 = vunpack.c.l.b16 %v3583
        %v5711 = vunpack.c.l.b16 %v3584
        %v5712 = vunpack.c.l.b16 %v3585
        %v5713 = vunpack.c.l.b16 %v3586
        %v5714 = vunpack.c.l.b16 %v3587
        %v5715 = vunpack.c.l.b16 %v3588
        %v5716 = vunpack.c.l.b16 %v3589
        %v5717 = vunpack.c.l.b16 %v3590
        %v5718 = vunpack.c.l.b16 %v3591
        %v5719 = vunpack.c.l.b16 %v3592
        %v5720 = vunpack.c.l.b16 %v3593
        %v5721 = vunpack.c.l.b16 %v3594
        %v5722 = vunpack.c.l.b16 %v3595
        %v5723 = vunpack.c.l.b16 %v3596
        %v5724 = vunpack.c.l.b16 %v3597
        %v5725 = vunpack.c.l.b16 %v3598
        %v5726 = vunpack.c.l.b16 %v3599
        %v5727 = vunpack.c.l.b16 %v3600
        %v5728 = vunpack.c.l.b16 %v3601
        %v5729 = vunpack.c.l.b16 %v3602
        %v5730 = vunpack.c.l.b16 %v3603
        %v5731 = vunpack.c.l.b16 %v3604
        %v5732 = vunpack.c.l.b16 %v3605
        %v5733 = vunpack.c.l.b16 %v3606
        %v5734 = vunpack.c.l.b16 %v3607
        %v5735 = vunpack.c.l.b16 %v3608
        %v5736 = vunpack.c.l.b16 %v3609
        %v5737 = vunpack.c.l.b16 %v3610
        %v5738 = vunpack.c.l.b16 %v3611
        %v5739 = vunpack.c.l.b16 %v3612
        %v5740 = vunpack.c.l.b16 %v3613
        %v5741 = vunpack.c.l.b16 %v3614
        %v5742 = vunpack.c.l.b16 %v3615
        %v5743 = vunpack.c.l.b16 %v3616
        %v5744 = vunpack.c.l.b16 %v3617
        %v5745 = vunpack.c.l.b16 %v3618
        %v5746 = vunpack.c.l.b16 %v3619
        %v5747 = vunpack.c.l.b16 %v3620
        %v5748 = vunpack.c.l.b16 %v3621
        %v5749 = vunpack.c.l.b16 %v3622
        %v5750 = vunpack.c.l.b16 %v3623
        %v5751 = vunpack.c.l.b16 %v3624
        %v5752 = vunpack.c.l.b16 %v3625
        %v5753 = vunpack.c.l.b16 %v3626
        %v5754 = vunpack.c.l.b16 %v3627
        %v5755 = vunpack.c.l.b16 %v3628
        %v5756 = vunpack.c.l.b16 %v3629
        %v5757 = vunpack.c.l.b16 %v3630
        %v5758 = vunpack.c.l.b16 %v3631
        %v5759 = vunpack.c.l.b16 %v3632
        %v5760 = vunpack.c.l.b16 %v3633
        %v5761 = vunpack.c.l.b16 %v3634
        %v5762 = vunpack.c.l.b16 %v3635
        %v5763 = vunpack.c.l.b16 %v3636
        %v5764 = vunpack.c.l.b16 %v3637
        %v5765 = vunpack.c.l.b16 %v3638
        %v5766 = vunpack.c.l.b16 %v3639
        %v5767 = vunpack.c.l.b16 %v3640
        %v5768 = vunpack.c.l.b16 %v3641
        %v5769 = vunpack.c.l.b16 %v3642
        %v5770 = vunpack.c.l.b16 %v3643
        %v5771 = vunpack.c.l.b16 %v3644
        %v5772 = vunpack.c.l.b16 %v3645
        %v5773 = vunpack.c.l.b16 %v3646
        %v5774 = vunpack.c.l.b16 %v3647
        %v5775 = vunpack.c.l.b16 %v3648
        %v5776 = vunpack.c.l.b16 %v3649
        %v5777 = vunpack.c.l.b16 %v3650
        %v5778 = vunpack.c.l.b16 %v3651
        %v5779 = vunpack.c.l.b16 %v3652
        %v5780 = vunpack.c.l.b16 %v3653
        %v5781 = vunpack.c.l.b16 %v3654
        %v5782 = vunpack.c.l.b16 %v3655
        %v5783 = vunpack.c.l.b16 %v3656
        %v5784 = vunpack.c.l.b16 %v3657
        %v5785 = vunpack.c.l.b16 %v3658
        %v5786 = vunpack.c.l.b16 %v3659
        %v5787 = vunpack.c.l.b16 %v3660
        %v5788 = vunpack.c.l.b16 %v3661
        %v5789 = vunpack.c.l.b16 %v3662
        %v5790 = vunpack.c.l.b16 %v3663
        %v5791 = vunpack.c.l.b16 %v3664
        %v5792 = vunpack.c.l.b16 %v3665
        %v5793 = vunpack.c.l.b16 %v3666
        %v5794 = vunpack.c.l.b16 %v3667
        %v5795 = vunpack.c.l.b16 %v3668
        %v5796 = vunpack.c.l.b16 %v3669
        %v5797 = vunpack.c.l.b16 %v3670
        %v5798 = vunpack.c.l.b16 %v3671
        %v5799 = vunpack.c.l.b16 %v3672
        %v5800 = vunpack.c.l.b16 %v3673
        %v5801 = vunpack.c.l.b16 %v3674
        %v5802 = vunpack.c.l.b16 %v3675
        %v5803 = vunpack.c.l.b16 %v3676
        %v5804 = vunpack.c.l.b16 %v3677
        %v5805 = vunpack.c.l.b16 %v3678
        %v5806 = vunpack.c.l.b16 %v3679
        %v5807 = vunpack.c.l.b16 %v3680
        %v5808 = vunpack.c.l.b16 %v3681
        %v5809 = vunpack.c.l.b16 %v3682
        %v5810 = vunpack.c.l.b16 %v3683
        %v5811 = vunpack.c.l.b16 %v3684
        %v5812 = vunpack.c.l.b16 %v3685
        %v5813 = vunpack.c.l.b16 %v3686
        %v5814 = vunpack.c.l.b16 %v3687
        %v5815 = vunpack.c.l.b16 %v3688
        %v5816 = vunpack.c.l.b16 %v3689
        %v5817 = vunpack.c.l.b16 %v3690
        %v5818 = vunpack.c.l.b16 %v3691
        %v5819 = vunpack.c.l.b16 %v3692
        %v5820 = vunpack.c.l.b16 %v3693
        %v5821 = vunpack.c.l.b16 %v3694
        %v5822 = vunpack.c.l.b16 %v3695
        %v5823 = vunpack.c.l.b16 %v3696
        %v5824 = vunpack.c.l.b16 %v3697
        %v5825 = vunpack.c.l.b16 %v3698
        %v5826 = vunpack.c.l.b16 %v3699
        %v5827 = vunpack.c.l.b16 %v3700
        %v5828 = vunpack.c.l.b16 %v3701
        %v5829 = vunpack.c.l.b16 %v3702
        %v5830 = vunpack.c.l.b16 %v3703
        %v5831 = vunpack.c.l.b16 %v3704
        %v5832 = vunpack.c.l.b16 %v3705
        %v5833 = vunpack.c.l.b16 %v3706
        %v5834 = vunpack.c.l.b16 %v3707
        %v5835 = vunpack.c.l.b16 %v3708
        %v5836 = vunpack.c.l.b16 %v3709
        %v5837 = vunpack.c.l.b16 %v3710
        %v5838 = vunpack.c.l.b16 %v3711
        %v5839 = vunpack.c.l.b16 %v3712
        %v5840 = vunpack.c.l.b16 %v3713
        %v5841 = vunpack.c.l.b16 %v3714
        %v5842 = vunpack.c.l.b16 %v3715
        %v5843 = vunpack.c.l.b16 %v3716
        %v5844 = vunpack.c.l.b16 %v3717
        %v5845 = vunpack.c.l.b16 %v3718
        %v5846 = vunpack.c.l.b16 %v3719
        %v5847 = vunpack.c.l.b16 %v3720
        %v5848 = vunpack.c.l.b16 %v3721
        %v5849 = vunpack.c.l.b16 %v3722
        %v5850 = vunpack.c.l.b16 %v3723
        %v5851 = vunpack.c.l.b16 %v3724
        %v5852 = vunpack.c.l.b16 %v3725
        %v5853 = vunpack.c.l.b16 %v3726
        %v5854 = vpack.c.b16 %v5711, %v5710
        %v5855 = vpack.c.b16 %v5713, %v5712
        %v5856 = vpack.c.b16 %v5715, %v5714
        %v5857 = vpack.c.b16 %v5717, %v5716
        %v5858 = vpack.c.b16 %v5719, %v5718
        %v5859 = vpack.c.b16 %v5721, %v5720
        %v5860 = vpack.c.b16 %v5723, %v5722
        %v5861 = vpack.c.b16 %v5725, %v5724
        %v5862 = vpack.c.b16 %v5727, %v5726
        %v5863 = vpack.c.b16 %v5729, %v5728
        %v5864 = vpack.c.b16 %v5731, %v5730
        %v5865 = vpack.c.b16 %v5733, %v5732
        %v5866 = vpack.c.b16 %v5735, %v5734
        %v5867 = vpack.c.b16 %v5737, %v5736
        %v5868 = vpack.c.b16 %v5739, %v5738
        %v5869 = vpack.c.b16 %v5741, %v5740
        %v5870 = vpack.c.b16 %v5743, %v5742
        %v5871 = vpack.c.b16 %v5745, %v5744
        %v5872 = vpack.c.b16 %v5747, %v5746
        %v5873 = vpack.c.b16 %v5749, %v5748
        %v5874 = vpack.c.b16 %v5751, %v5750
        %v5875 = vpack.c.b16 %v5753, %v5752
        %v5876 = vpack.c.b16 %v5755, %v5754
        %v5877 = vpack.c.b16 %v5757, %v5756
        %v5878 = vpack.c.b16 %v5759, %v5758
        %v5879 = vpack.c.b16 %v5761, %v5760
        %v5880 = vpack.c.b16 %v5763, %v5762
        %v5881 = vpack.c.b16 %v5765, %v5764
        %v5882 = vpack.c.b16 %v5767, %v5766
        %v5883 = vpack.c.b16 %v5769, %v5768
        %v5884 = vpack.c.b16 %v5771, %v5770
        %v5885 = vpack.c.b16 %v5773, %v5772
        %v5886 = vpack.c.b16 %v5775, %v5774
        %v5887 = vpack.c.b16 %v5777, %v5776
        %v5888 = vpack.c.b16 %v5779, %v5778
        %v5889 = vpack.c.b16 %v5781, %v5780
        %v5890 = vpack.c.b16 %v5783, %v5782
        %v5891 = vpack.c.b16 %v5785, %v5784
        %v5892 = vpack.c.b16 %v5787, %v5786
        %v5893 = vpack.c.b16 %v5789, %v5788
        %v5894 = vpack.c.b16 %v5791, %v5790
        %v5895 = vpack.c.b16 %v5793, %v5792
        %v5896 = vpack.c.b16 %v5795, %v5794
        %v5897 = vpack.c.b16 %v5797, %v5796
        %v5898 = vpack.c.b16 %v5799, %v5798
        %v5899 = vpack.c.b16 %v5801, %v5800
        %v5900 = vpack.c.b16 %v5803, %v5802
        %v5901 = vpack.c.b16 %v5805, %v5804
        %v5902 = vpack.c.b16 %v5807, %v5806
        %v5903 = vpack.c.b16 %v5809, %v5808
        %v5904 = vpack.c.b16 %v5811, %v5810
        %v5905 = vpack.c.b16 %v5813, %v5812
        %v5906 = vpack.c.b16 %v5815, %v5814
        %v5907 = vpack.c.b16 %v5817, %v5816
        %v5908 = vpack.c.b16 %v5819, %v5818
        %v5909 = vpack.c.b16 %v5821, %v5820
        %v5910 = vpack.c.b16 %v5823, %v5822
        %v5911 = vpack.c.b16 %v5825, %v5824
        %v5912 = vpack.c.b16 %v5827, %v5826
        %v5913 = vpack.c.b16 %v5829, %v5828
        %v5914 = vpack.c.b16 %v5831, %v5830
        %v5915 = vpack.c.b16 %v5833, %v5832
        %v5916 = vpack.c.b16 %v5835, %v5834
        %v5917 = vpack.c.b16 %v5837, %v5836
        %v5918 = vpack.c.b16 %v5839, %v5838
        %v5919 = vpack.c.b16 %v5841, %v5840
        %v5920 = vpack.c.b16 %v5843, %v5842
        %v5921 = vpack.c.b16 %v5845, %v5844
        %v5922 = vpack.c.b16 %v5847, %v5846
        %v5923 = vpack.c.b16 %v5849, %v5848
        %v5924 = vpack.c.b16 %v5851, %v5850
        %v5925 = vpack.c.b16 %v5853, %v5852
        %5998 = vmatprep.subr.bf16.mxu0 0
        %5999 = vmatpush1.bf16.msra.mxu0 %v5861
        %6000 = vmatprep.subr.bf16.mxu0 0
        %6001 = vmatpush1.bf16.msra.mxu0 %v5860
        %6002 = vmatprep.subr.bf16.mxu0 0
        %6003 = vmatpush1.bf16.msra.mxu0 %v5859
        %6004 = vmatprep.subr.bf16.mxu0 0
        %6005 = vmatpush1.bf16.msra.mxu0 %v5858
        %6006 = vmatprep.subr.bf16.mxu0 0
        %6007 = vmatpush1.bf16.msra.mxu0 %v5857
        %6008 = vmatprep.subr.bf16.mxu0 0
        %6009 = vmatpush1.bf16.msra.mxu0 %v5856
        %6010 = vmatprep.subr.bf16.mxu0 0
        %6011 = vmatpush1.bf16.msra.mxu0 %v5855
        %6012 = vmatprep.subr.bf16.mxu0 0
        %6013 = vmatpush1.bf16.msra.mxu0 %v5854
        %6014 = vmatprep.subr.bf16.mxu0 0
        %6015 = vmatpush2.bf16.msra.mxu0 %v5869
        %6016 = vmatprep.subr.bf16.mxu0 0
        %6017 = vmatpush2.bf16.msra.mxu0 %v5868
        %6018 = vmatprep.subr.bf16.mxu0 0
        %6019 = vmatpush2.bf16.msra.mxu0 %v5867
        %6020 = vmatprep.subr.bf16.mxu0 0
        %6021 = vmatpush2.bf16.msra.mxu0 %v5866
        %6022 = vmatprep.subr.bf16.mxu0 0
        %6023 = vmatpush2.bf16.msra.mxu0 %v5865
        %6024 = vmatprep.subr.bf16.mxu0 0
        %6025 = vmatpush2.bf16.msra.mxu0 %v5864
        %6026 = vmatprep.subr.bf16.mxu0 0
        %6027 = vmatpush2.bf16.msra.mxu0 %v5863
        %6028 = vmatprep.subr.bf16.mxu0 0
        %6029 = vmatpush2.bf16.msra.mxu0 %v5862
        %6030 = vmatprep.mubr.bf16.mxu0 %v5495
        %6031 = vmatmul.mubr.bf16.gmra.mxu0 %v5494
        %v6032 = vpop.f32.mrf.mxu0
        %v6033 = vadd.f32 %v5352, %v6032
        %v6034 = vpop.f32.mrf.mxu0
        %v6035 = vpop.f32.mrf.mxu0
        %v6036 = vadd.f32 %v5355, %v6035
        %v6037 = vpop.f32.mrf.mxu0
        %6038 = vmatprep.mubr.bf16.mxu0 %v5504
        %6039 = vmatmul.mubr.bf16.gmra.mxu0 %v5503
        %v6040 = vpop.f32.mrf.mxu0
        %v6041 = vadd.f32 %v5360, %v6040
        %v6042 = vpop.f32.mrf.mxu0
        %v6043 = vpop.f32.mrf.mxu0
        %v6044 = vadd.f32 %v5363, %v6043
        %v6045 = vpop.f32.mrf.mxu0
        %6046 = vmatprep.mubr.bf16.mxu0 %v5513
        %6047 = vmatmul.mubr.bf16.gmra.mxu0 %v5512
        %v6048 = vpop.f32.mrf.mxu0
        %v6049 = vadd.f32 %v5368, %v6048
        %v6050 = vpop.f32.mrf.mxu0
        %v6051 = vpop.f32.mrf.mxu0
        %v6052 = vadd.f32 %v5371, %v6051
        %v6053 = vpop.f32.mrf.mxu0
        %6054 = vmatprep.mubr.bf16.mxu0 %v5522
        %6055 = vmatmul.mubr.bf16.gmra.mxu0 %v5521
        %v6056 = vpop.f32.mrf.mxu0
        %v6057 = vadd.f32 %v5376, %v6056
        %v6058 = vpop.f32.mrf.mxu0
        %v6059 = vpop.f32.mrf.mxu0
        %v6060 = vadd.f32 %v5379, %v6059
        %v6061 = vpop.f32.mrf.mxu0
        %6062 = vdwg.mxu0
        %6063 = vmatprep.subr.bf16.mxu0 0
        %6064 = vmatpush1.bf16.msra.mxu0 %v5877
        %6065 = vmatprep.subr.bf16.mxu0 0
        %6066 = vmatpush1.bf16.msra.mxu0 %v5876
        %6067 = vmatprep.subr.bf16.mxu0 0
        %6068 = vmatpush1.bf16.msra.mxu0 %v5875
        %6069 = vmatprep.subr.bf16.mxu0 0
        %6070 = vmatpush1.bf16.msra.mxu0 %v5874
        %6071 = vmatprep.subr.bf16.mxu0 0
        %6072 = vmatpush1.bf16.msra.mxu0 %v5873
        %6073 = vmatprep.subr.bf16.mxu0 0
        %6074 = vmatpush1.bf16.msra.mxu0 %v5872
        %6075 = vmatprep.subr.bf16.mxu0 0
        %6076 = vmatpush1.bf16.msra.mxu0 %v5871
        %6077 = vmatprep.subr.bf16.mxu0 0
        %6078 = vmatpush1.bf16.msra.mxu0 %v5870
        %6079 = vmatprep.subr.bf16.mxu0 0
        %6080 = vmatpush2.bf16.msra.mxu0 %v5885
        %6081 = vmatprep.subr.bf16.mxu0 0
        %6082 = vmatpush2.bf16.msra.mxu0 %v5884
        %6083 = vmatprep.subr.bf16.mxu0 0
        %6084 = vmatpush2.bf16.msra.mxu0 %v5883
        %6085 = vmatprep.subr.bf16.mxu0 0
        %6086 = vmatpush2.bf16.msra.mxu0 %v5882
        %6087 = vmatprep.subr.bf16.mxu0 0
        %6088 = vmatpush2.bf16.msra.mxu0 %v5881
        %6089 = vmatprep.subr.bf16.mxu0 0
        %6090 = vmatpush2.bf16.msra.mxu0 %v5880
        %6091 = vmatprep.subr.bf16.mxu0 0
        %6092 = vmatpush2.bf16.msra.mxu0 %v5879
        %6093 = vmatprep.subr.bf16.mxu0 0
        %6094 = vmatpush2.bf16.msra.mxu0 %v5878
        %6095 = vmatprep.mubr.bf16.mxu0 %v5497
        %6096 = vmatmul.mubr.bf16.gmra.mxu0 %v5496
        %v6097 = vpop.f32.mrf.mxu0
        %v6098 = vadd.f32 %v6033, %v6097
        %v6099 = vpop.f32.mrf.mxu0
        %v6100 = vpop.f32.mrf.mxu0
        %v6101 = vadd.f32 %v6036, %v6100
        %v6102 = vpop.f32.mrf.mxu0
        %6103 = vmatprep.mubr.bf16.mxu0 %v5506
        %6104 = vmatmul.mubr.bf16.gmra.mxu0 %v5505
        %v6105 = vpop.f32.mrf.mxu0
        %v6106 = vadd.f32 %v6041, %v6105
        %v6107 = vpop.f32.mrf.mxu0
        %v6108 = vpop.f32.mrf.mxu0
        %v6109 = vadd.f32 %v6044, %v6108
        %v6110 = vpop.f32.mrf.mxu0
        %6111 = vmatprep.mubr.bf16.mxu0 %v5515
        %6112 = vmatmul.mubr.bf16.gmra.mxu0 %v5514
        %v6113 = vpop.f32.mrf.mxu0
        %v6114 = vadd.f32 %v6049, %v6113
        %v6115 = vpop.f32.mrf.mxu0
        %v6116 = vpop.f32.mrf.mxu0
        %v6117 = vadd.f32 %v6052, %v6116
        %v6118 = vpop.f32.mrf.mxu0
        %6119 = vmatprep.mubr.bf16.mxu0 %v5524
        %6120 = vmatmul.mubr.bf16.gmra.mxu0 %v5523
        %v6121 = vpop.f32.mrf.mxu0
        %v6122 = vadd.f32 %v6057, %v6121
        %v6123 = vpop.f32.mrf.mxu0
        %v6124 = vpop.f32.mrf.mxu0
        %v6125 = vadd.f32 %v6060, %v6124
        %v6126 = vpop.f32.mrf.mxu0
        %6127 = vdwg.mxu0
        %6128 = vmatprep.subr.bf16.mxu0 0
        %6129 = vmatpush1.bf16.msra.mxu0 %v5893
        %6130 = vmatprep.subr.bf16.mxu0 0
        %6131 = vmatpush1.bf16.msra.mxu0 %v5892
        %6132 = vmatprep.subr.bf16.mxu0 0
        %6133 = vmatpush1.bf16.msra.mxu0 %v5891
        %6134 = vmatprep.subr.bf16.mxu0 0
        %6135 = vmatpush1.bf16.msra.mxu0 %v5890
        %6136 = vmatprep.subr.bf16.mxu0 0
        %6137 = vmatpush1.bf16.msra.mxu0 %v5889
        %6138 = vmatprep.subr.bf16.mxu0 0
        %6139 = vmatpush1.bf16.msra.mxu0 %v5888
        %6140 = vmatprep.subr.bf16.mxu0 0
        %6141 = vmatpush1.bf16.msra.mxu0 %v5887
        %6142 = vmatprep.subr.bf16.mxu0 0
        %6143 = vmatpush1.bf16.msra.mxu0 %v5886
        %6144 = vmatprep.subr.bf16.mxu0 0
        %6145 = vmatpush2.bf16.msra.mxu0 %v5901
        %6146 = vmatprep.subr.bf16.mxu0 0
        %6147 = vmatpush2.bf16.msra.mxu0 %v5900
        %6148 = vmatprep.subr.bf16.mxu0 0
        %6149 = vmatpush2.bf16.msra.mxu0 %v5899
        %6150 = vmatprep.subr.bf16.mxu0 0
        %6151 = vmatpush2.bf16.msra.mxu0 %v5898
        %6152 = vmatprep.subr.bf16.mxu0 0
        %6153 = vmatpush2.bf16.msra.mxu0 %v5897
        %6154 = vmatprep.subr.bf16.mxu0 0
        %6155 = vmatpush2.bf16.msra.mxu0 %v5896
        %6156 = vmatprep.subr.bf16.mxu0 0
        %6157 = vmatpush2.bf16.msra.mxu0 %v5895
        %6158 = vmatprep.subr.bf16.mxu0 0
        %6159 = vmatpush2.bf16.msra.mxu0 %v5894
        %6160 = vmatprep.mubr.bf16.mxu0 %v5499
        %6161 = vmatmul.mubr.bf16.gmra.mxu0 %v5498
        %v6162 = vpop.f32.mrf.mxu0
        %v6163 = vadd.f32 %v6098, %v6162
        %v6164 = vpop.f32.mrf.mxu0
        %v6165 = vpop.f32.mrf.mxu0
        %v6166 = vadd.f32 %v6101, %v6165
        %v6167 = vpop.f32.mrf.mxu0
        %6168 = vmatprep.mubr.bf16.mxu0 %v5508
        %6169 = vmatmul.mubr.bf16.gmra.mxu0 %v5507
        %v6170 = vpop.f32.mrf.mxu0
        %v6171 = vadd.f32 %v6106, %v6170
        %v6172 = vpop.f32.mrf.mxu0
        %v6173 = vpop.f32.mrf.mxu0
        %v6174 = vadd.f32 %v6109, %v6173
        %v6175 = vpop.f32.mrf.mxu0
        %6176 = vmatprep.mubr.bf16.mxu0 %v5517
        %6177 = vmatmul.mubr.bf16.gmra.mxu0 %v5516
        %v6178 = vpop.f32.mrf.mxu0
        %v6179 = vadd.f32 %v6114, %v6178
        %v6180 = vpop.f32.mrf.mxu0
        %v6181 = vpop.f32.mrf.mxu0
        %v6182 = vadd.f32 %v6117, %v6181
        %v6183 = vpop.f32.mrf.mxu0
        %6184 = vmatprep.mubr.bf16.mxu0 %v5526
        %6185 = vmatmul.mubr.bf16.gmra.mxu0 %v5525
        %v6186 = vpop.f32.mrf.mxu0
        %v6187 = vadd.f32 %v6122, %v6186
        %v6188 = vpop.f32.mrf.mxu0
        %v6189 = vpop.f32.mrf.mxu0
        %v6190 = vadd.f32 %v6125, %v6189
        %v6191 = vpop.f32.mrf.mxu0
        %6192 = vdwg.mxu0
        %6193 = vmatprep.subr.bf16.mxu0 0
        %6194 = vmatpush1.bf16.msra.mxu0 %v5909
        %6195 = vmatprep.subr.bf16.mxu0 0
        %6196 = vmatpush1.bf16.msra.mxu0 %v5908
        %6197 = vmatprep.subr.bf16.mxu0 0
        %6198 = vmatpush1.bf16.msra.mxu0 %v5907
        %6199 = vmatprep.subr.bf16.mxu0 0
        %6200 = vmatpush1.bf16.msra.mxu0 %v5906
        %6201 = vmatprep.subr.bf16.mxu0 0
        %6202 = vmatpush1.bf16.msra.mxu0 %v5905
        %6203 = vmatprep.subr.bf16.mxu0 0
        %6204 = vmatpush1.bf16.msra.mxu0 %v5904
        %6205 = vmatprep.subr.bf16.mxu0 0
        %6206 = vmatpush1.bf16.msra.mxu0 %v5903
        %6207 = vmatprep.subr.bf16.mxu0 0
        %6208 = vmatpush1.bf16.msra.mxu0 %v5902
        %6209 = vmatprep.subr.bf16.mxu0 0
        %6210 = vmatpush2.bf16.msra.mxu0 %v5917
        %6211 = vmatprep.subr.bf16.mxu0 0
        %6212 = vmatpush2.bf16.msra.mxu0 %v5916
        %6213 = vmatprep.subr.bf16.mxu0 0
        %6214 = vmatpush2.bf16.msra.mxu0 %v5915
        %6215 = vmatprep.subr.bf16.mxu0 0
        %6216 = vmatpush2.bf16.msra.mxu0 %v5914
        %6217 = vmatprep.subr.bf16.mxu0 0
        %6218 = vmatpush2.bf16.msra.mxu0 %v5913
        %6219 = vmatprep.subr.bf16.mxu0 0
        %6220 = vmatpush2.bf16.msra.mxu0 %v5912
        %6221 = vmatprep.subr.bf16.mxu0 0
        %6222 = vmatpush2.bf16.msra.mxu0 %v5911
        %6223 = vmatprep.subr.bf16.mxu0 0
        %6224 = vmatpush2.bf16.msra.mxu0 %v5910
        %6225 = vmatprep.mubr.bf16.mxu0 %v5501
        %6226 = vmatmul.mubr.bf16.gmra.mxu0 %v5500
        %v6227 = vpop.f32.mrf.mxu0
        %v6228 = vadd.f32 %v6163, %v6227
        %v6229 = vpop.f32.mrf.mxu0
        %v6230 = vpop.f32.mrf.mxu0
        %v6231 = vadd.f32 %v6166, %v6230
        %v6232 = vpop.f32.mrf.mxu0
        %6233 = vmatprep.mubr.bf16.mxu0 %v5510
        %6234 = vmatmul.mubr.bf16.gmra.mxu0 %v5509
        %v6235 = vpop.f32.mrf.mxu0
        %v6236 = vadd.f32 %v6171, %v6235
        %v6237 = vpop.f32.mrf.mxu0
        %v6238 = vpop.f32.mrf.mxu0
        %v6239 = vadd.f32 %v6174, %v6238
        %v6240 = vpop.f32.mrf.mxu0
        %6241 = vmatprep.mubr.bf16.mxu0 %v5519
        %6242 = vmatmul.mubr.bf16.gmra.mxu0 %v5518
        %v6243 = vpop.f32.mrf.mxu0
        %v6244 = vadd.f32 %v6179, %v6243
        %v6245 = vpop.f32.mrf.mxu0
        %v6246 = vpop.f32.mrf.mxu0
        %v6247 = vadd.f32 %v6182, %v6246
        %v6248 = vpop.f32.mrf.mxu0
        %6249 = vmatprep.mubr.bf16.mxu0 %v5528
        %6250 = vmatmul.mubr.bf16.gmra.mxu0 %v5527
        %v6251 = vpop.f32.mrf.mxu0
        %v6252 = vadd.f32 %v6187, %v6251
        %v6253 = vpop.f32.mrf.mxu0
        %v6254 = vpop.f32.mrf.mxu0
        %v6255 = vadd.f32 %v6190, %v6254
        %v6256 = vpop.f32.mrf.mxu0
        %6257 = vdwg.mxu0
        %6258 = vmatprep.subr.bf16.mxu0 0
        %6259 = vmatpush1.bf16.msra.mxu0 %v5925
        %6260 = vmatprep.subr.bf16.mxu0 0
        %6261 = vmatpush1.bf16.msra.mxu0 %v5924
        %6262 = vmatprep.subr.bf16.mxu0 0
        %6263 = vmatpush1.bf16.msra.mxu0 %v5923
        %6264 = vmatprep.subr.bf16.mxu0 0
        %6265 = vmatpush1.bf16.msra.mxu0 %v5922
        %6266 = vmatprep.subr.bf16.mxu0 0
        %6267 = vmatpush1.bf16.msra.mxu0 %v5921
        %6268 = vmatprep.subr.bf16.mxu0 0
        %6269 = vmatpush1.bf16.msra.mxu0 %v5920
        %6270 = vmatprep.subr.bf16.mxu0 0
        %6271 = vmatpush1.bf16.msra.mxu0 %v5919
        %6272 = vmatprep.subr.bf16.mxu0 0
        %6273 = vmatpush1.bf16.msra.mxu0 %v5918
        %6274 = vmatprep.subr.bf16.mxu0 0
        %6275 = vmatpush2.bf16.msra.mxu0 0
        %6276 = vmatprep.subr.bf16.mxu0 0
        %6277 = vmatpush2.bf16.msra.mxu0 0
        %6278 = vmatprep.subr.bf16.mxu0 0
        %6279 = vmatpush2.bf16.msra.mxu0 0
        %6280 = vmatprep.subr.bf16.mxu0 0
        %6281 = vmatpush2.bf16.msra.mxu0 0
        %6282 = vmatprep.subr.bf16.mxu0 0
        %6283 = vmatpush2.bf16.msra.mxu0 0
        %6284 = vmatprep.subr.bf16.mxu0 0
        %6285 = vmatpush2.bf16.msra.mxu0 0
        %6286 = vmatprep.subr.bf16.mxu0 0
        %6287 = vmatpush2.bf16.msra.mxu0 0
        %6288 = vmatprep.subr.bf16.mxu0 0
        %6289 = vmatpush2.bf16.msra.mxu0 0
        %6290 = vmatprep.mubr.bf16.mxu0 0
        %6291 = vmatmul.mubr.bf16.gmra.mxu0 %v5502
        %v6292 = vpop.f32.mrf.mxu0
        %v6293 = vadd.f32 %v6228, %v6292
        %v6294 = vpop.f32.mrf.mxu0
        %v6295 = vpop.f32.mrf.mxu0
        %v6296 = vadd.f32 %v6231, %v6295
        %v6297 = vpop.f32.mrf.mxu0
        %6298 = vmatprep.mubr.bf16.mxu0 0
        %6299 = vmatmul.mubr.bf16.gmra.mxu0 %v5511
        %v6300 = vpop.f32.mrf.mxu0
        %v6301 = vadd.f32 %v6236, %v6300
        %v6302 = vpop.f32.mrf.mxu0
        %v6303 = vpop.f32.mrf.mxu0
        %v6304 = vadd.f32 %v6239, %v6303
        %v6305 = vpop.f32.mrf.mxu0
        %6306 = vmatprep.mubr.bf16.mxu0 0
        %6307 = vmatmul.mubr.bf16.gmra.mxu0 %v5520
        %v6308 = vpop.f32.mrf.mxu0
        %v6309 = vadd.f32 %v6244, %v6308
        %v6310 = vpop.f32.mrf.mxu0
        %v6311 = vpop.f32.mrf.mxu0
        %v6312 = vadd.f32 %v6247, %v6311
        %v6313 = vpop.f32.mrf.mxu0
        %6314 = vmatprep.mubr.bf16.mxu0 0
        %6315 = vmatmul.mubr.bf16.gmra.mxu0 %v5529
        %v6316 = vpop.f32.mrf.mxu0
        %v6317 = vadd.f32 %v6252, %v6316
        %v6318 = vpop.f32.mrf.mxu0
        %v6319 = vpop.f32.mrf.mxu0
        %v6320 = vadd.f32 %v6255, %v6319
        %v6321 = vpop.f32.mrf.mxu0
        %6322 = vdwg.mxu0
        %v6323 = vpack.c.bf16 %v6293, %v6293
        %v6324 = vpack.c.bf16 %v6296, %v6296
        %v6325 = vpack.c.bf16 %v6301, %v6301
        %v6326 = vpack.c.bf16 %v6304, %v6304
        %v6327 = vpack.c.bf16 %v6309, %v6309
        %v6328 = vpack.c.bf16 %v6312, %v6312
        %v6329 = vpack.c.bf16 %v6317, %v6317
        %v6330 = vpack.c.bf16 %v6320, %v6320
        %6331 = vst [vmem:[%s367] sm:$0xf] %v6323
        %6332 = vst [vmem:[%s367 + $0x4] sm:$0xf] %v6324
        %6333 = vst [vmem:[%s367 + $0x8] sm:$0xf] %v6325
        %6334 = vst [vmem:[%s367 + $0xc] sm:$0xf] %v6326
        %6335 = vst [vmem:[%s367 + $0x10] sm:$0xf] %v6327
        %6336 = vst [vmem:[%s367 + $0x14] sm:$0xf] %v6328
        %6337 = vst [vmem:[%s367 + $0x18] sm:$0xf] %v6329
        %6338 = vst [vmem:[%s367 + $0x1c] sm:$0xf] %v6330
        %s6339 = sand.u32 %s208, 1
        %s6340 = scalar_lea.sflag [#allocation9], %s6339
        %s6341 = sand.u32 %s208, 1
        %s6342 = smul.addr %s6341, 32
        %s6343 = scalar_lea.vmem [#allocation15], %s6342
        // Predicated region
        $region69: #{tpu_custom_call.1} parent=51 // pred_check
          %p6344 = pneg %p218
        $region70: #{tpu_custom_call.1} parent=51 // pred_check_branch
          %6346 = sbr.rel (%p6344) target = $region72
        $region71: #{tpu_custom_call.1} parent=51 // pred_region
          %s6348 = ssub.s32 512, 512
          %6349 = vsyncadd %s6340, %s6348
          %s6350 = smul.addr %s27, 8
          %s6351 = smul.addr %s6350, 64
          %s6352 = scalar_lea.hbm %s8, %s6351
          %s6353 = sshll.u32 %s6343, 4
          %s6354 = int_to_ptr.vmem [resolvable:$true] %s6353
          %6359 = dma.vmem_to_hbm [thread:$0]  %s6354, 512, %s6352, %s6340, 64, 64, 4
        $region72: #{tpu_custom_call.1} parent=51 // pred_fallthru
          _
      $region52: #{tpu_custom_call.1} parent=5 // pred_fallthru
        _
      %p6360 = scmp.le.s32.totalorder 2, %s22
      // Predicated region
      $region73: #{tpu_custom_call.1} parent=5 // pred_check
        %p6361 = pneg %p6360
      $region74: #{tpu_custom_call.1} parent=5 // pred_check_branch
        %6363 = sbr.rel (%p6361) target = $region76
      $region75: #{tpu_custom_call.1} parent=5 // pred_region
        %s6364 = ssub.s32 %s22, 2
        // Predicated region
        $region77: #{tpu_custom_call.1} parent=75 // pred_check
          %p6365 = pneg %p224
        $region78: #{tpu_custom_call.1} parent=75 // pred_check_branch
          %6367 = sbr.rel (%p6365) target = $region80
        $region79: #{tpu_custom_call.1} parent=75 // pred_region
          %s6368 = sand.u32 %s209, 1
          %s6369 = scalar_lea.sflag [#allocation9], %s6368
          %s6370 = sand.u32 %s209, 1
          %s6371 = smul.addr %s6370, 32
          %s6372 = scalar_lea.vmem [#allocation15], %s6371
          %6373 = dma.done %s6369, 512
        $region80: #{tpu_custom_call.1} parent=75 // pred_fallthru
          _
      $region76: #{tpu_custom_call.1} parent=5 // pred_fallthru
        _
    $region6: #{tpu_custom_call.1} parent=1 // loop_footer
      %s26 = sadd.s32 1, %s22
    $region7: #{tpu_custom_call.1} parent=1 // loop_footer_branch
      %21 = sbr.rel target = $region3
    $region8: #{tpu_custom_call.1} parent=1 // loop_exit
      _
    %6374 = vsyncpa [#allocation8], 1
    %s6375 = scalar_lea.sflag [#allocation8], 1
    %6376 = vsyncpa %s6375, 1
    %6377 = vsyncpa [#allocation11], 1
    %6378 = vsyncpa [#allocation14], 1
    %6379 = vsyncpa [#allocation9], 1
    %s6380 = scalar_lea.sflag [#allocation9], 1
    %6381 = vsyncpa %s6380, 1

</llo_original>
